<compile_context>
chip_gen: v5e
topology: v5e:2x2
jax: 0.10.0
libtpu: 0.0.40
codegen_flags: <defaults>
</compile_context>

<pallas_src>
import functools
import math

import jax
import jax.numpy as jnp
from jax.experimental import pallas as pl
from jax.experimental.pallas import tpu as pltpu


_VMEM_LIMIT_BYTES = 48 * 1024 * 1024   # <= v7x's 64 MiB physical; ample on v5e/v6e
_MAX_ROW_TILE = 512                    # 8-aligned; ~85% of HBM roofline per measurements


def _compiler_params():
    return pltpu.CompilerParams(
        dimension_semantics=("parallel",),
        vmem_limit_bytes=_VMEM_LIMIT_BYTES,
    )


def _row_tile(n, max_tile=_MAX_ROW_TILE):
    """Row-tile size: full array if small, otherwise a fixed 8-aligned tile."""
    return n if n <= max_tile else max_tile


# -----------------------------------------------------------------------------
# In-kernel math helpers (all called from inside Pallas kernels only)
# -----------------------------------------------------------------------------
def _erf_approx(x):
    # Abramowitz & Stegun 7.1.26 rational approximation, |error| < 1.5e-7
    # (matches F.gelu's exact-erf GELU for practical purposes).  The divide
    # goes to the EUP via pl.reciprocal so it stays off the VALU slots.
    a1, a2, a3, a4, a5 = (0.254829592, -0.284496736, 1.421413741,
                          -1.453152027, 1.061405429)
    p = 0.3275911
    ax = jnp.abs(x)
    t = pl.reciprocal(1.0 + p * ax, approx=True)
    poly = ((((a5 * t + a4) * t + a3) * t + a2) * t + a1) * t
    y = 1.0 - poly * jnp.exp(-ax * ax)
    return jnp.where(x < 0.0, -y, y)


def _gelu_exact(x):
    return 0.5 * x * (1.0 + _erf_approx(x * (1.0 / math.sqrt(2.0))))


def _layernorm_f32(y, gamma, beta, eps):
    mu = jnp.mean(y, axis=-1, keepdims=True)
    yc = y - mu
    var = jnp.mean(yc * yc, axis=-1, keepdims=True)   # biased var (PyTorch LN)
    return yc * jax.lax.rsqrt(var + eps) * gamma + beta


def _mha_heads(q, k, v, nhead, mask):
    """Heads-batched softmax attention.  q: (Tq, D) f32, k/v: (Tk, D) f32.
    The 1/sqrt(head_dim) scale is pre-folded into the Q projection weights.
    Heads become the batch dim of a single dot_general stream (no per-head
    Python loop / lane-slice concat)."""
    tq, d = q.shape
    tk = k.shape[0]
    hd = d // nhead
    q3 = q.reshape(tq, nhead, hd)
    k3 = k.reshape(tk, nhead, hd)
    v3 = v.reshape(tk, nhead, hd)
    s = jnp.einsum("qhd,khd->hqk", q3.astype(jnp.bfloat16),
                   k3.astype(jnp.bfloat16),
                   preferred_element_type=jnp.float32)        # (h, Tq, Tk) f32
    if mask is not None:
        s = s + mask[None, :, :]
    s = s - jnp.max(s, axis=-1, keepdims=True)
    p = jnp.exp(s)
    p = p * pl.reciprocal(jnp.sum(p, axis=-1, keepdims=True), approx=True)
    ctx = jnp.einsum("hqk,khd->qhd", p.astype(jnp.bfloat16),
                     v3.astype(jnp.bfloat16),
                     preferred_element_type=jnp.float32)      # (Tq, h, hd)
    return ctx.reshape(tq, d)


# -----------------------------------------------------------------------------
# Fused attention-block kernels (one batch element per grid step)
# TODO(synk): for long sequences / v7x VMEM, add a query-tile grid axis with
# flash-style online softmax over streamed K/V tiles instead of materializing
# the (nhead, S, S) scores per batch.
# -----------------------------------------------------------------------------
def _self_attn_block_kernel(x_ref, wqkv_ref, bqkv_ref, wo_ref, bo_ref,
                            g_ref, b_ref, o_ref, *, nhead, d_model, eps):
    x = x_ref[0].astype(jnp.float32)                          # (T, D)
    qkv = jnp.dot(x.astype(jnp.bfloat16), wqkv_ref[...],
                  preferred_element_type=jnp.float32) + bqkv_ref[...]
    attn = _mha_heads(qkv[:, :d_model], qkv[:, d_model:2 * d_model],
                      qkv[:, 2 * d_model:], nhead, None)
    y = jnp.dot(attn.astype(jnp.bfloat16), wo_ref[...],
                preferred_element_type=jnp.float32) + bo_ref[...]
    y = y + x                                                 # residual
    o_ref[0] = _layernorm_f32(y, g_ref[...], b_ref[...], eps).astype(o_ref.dtype)


def _self_attn_block_mask_kernel(x_ref, wqkv_ref, bqkv_ref, wo_ref, bo_ref,
                                 g_ref, b_ref, m_ref, o_ref,
                                 *, nhead, d_model, eps):
    x = x_ref[0].astype(jnp.float32)
    qkv = jnp.dot(x.astype(jnp.bfloat16), wqkv_ref[...],
                  preferred_element_type=jnp.float32) + bqkv_ref[...]
    attn = _mha_heads(qkv[:, :d_model], qkv[:, d_model:2 * d_model],
                      qkv[:, 2 * d_model:], nhead, m_ref[...])
    y = jnp.dot(attn.astype(jnp.bfloat16), wo_ref[...],
                preferred_element_type=jnp.float32) + bo_ref[...]
    y = y + x
    o_ref[0] = _layernorm_f32(y, g_ref[...], b_ref[...], eps).astype(o_ref.dtype)


def _cross_attn_block_kernel(x_ref, mem_ref, wq_ref, bq_ref, wkv_ref, bkv_ref,
                             wo_ref, bo_ref, g_ref, b_ref, o_ref,
                             *, nhead, d_model, eps):
    x = x_ref[0].astype(jnp.float32)                          # (Tq, D)
    mem = mem_ref[0].astype(jnp.float32)                      # (Tk, D)
    q = jnp.dot(x.astype(jnp.bfloat16), wq_ref[...],
                preferred_element_type=jnp.float32) + bq_ref[...]
    kv = jnp.dot(mem.astype(jnp.bfloat16), wkv_ref[...],
                 preferred_element_type=jnp.float32) + bkv_ref[...]
    attn = _mha_heads(q, kv[:, :d_model], kv[:, d_model:], nhead, None)
    y = jnp.dot(attn.astype(jnp.bfloat16), wo_ref[...],
                preferred_element_type=jnp.float32) + bo_ref[...]
    y = y + x
    o_ref[0] = _layernorm_f32(y, g_ref[...], b_ref[...], eps).astype(o_ref.dtype)


def pallas_self_attn_block(x, p, norm, nhead, mask=None, eps=1e-5):
    """LayerNorm(x + OutProj(MHA(QKVProj(x)))) fused, grid over batch."""
    b, t, d = x.shape
    gamma, beta = norm
    in_specs = [
        pl.BlockSpec((1, t, d), lambda i: (i, 0, 0)),
        pl.BlockSpec((d, 3 * d), lambda i: (0, 0)),     # resident weights
        pl.BlockSpec((1, 3 * d), lambda i: (0, 0)),
        pl.BlockSpec((d, d), lambda i: (0, 0)),
        pl.BlockSpec((1, d), lambda i: (0, 0)),
        pl.BlockSpec((1, d), lambda i: (0, 0)),
        pl.BlockSpec((1, d), lambda i: (0, 0)),
    ]
    args = [x, p["w_qkv"], p["b_qkv"].reshape(1, 3 * d),
            p["wo"], p["bo"].reshape(1, d),
            gamma.reshape(1, d), beta.reshape(1, d)]
    if mask is None:
        kern = functools.partial(_self_attn_block_kernel,
                                 nhead=nhead, d_model=d, eps=eps)
    else:
        kern = functools.partial(_self_attn_block_mask_kernel,
                                 nhead=nhead, d_model=d, eps=eps)
        in_specs.append(pl.BlockSpec((t, t), lambda i: (0, 0)))
        args.append(mask)
    return pl.pallas_call(
        kern,
        out_shape=jax.ShapeDtypeStruct((b, t, d), x.dtype),
        grid=(b,),
        in_specs=in_specs,
        out_specs=pl.BlockSpec((1, t, d), lambda i: (i, 0, 0)),
        compiler_params=_compiler_params(),
    )(*args)


def pallas_cross_attn_block(x, memory, p, norm, nhead, eps=1e-5):
    """LayerNorm(x + OutProj(MHA(QProj(x), KVProj(mem)))) fused, grid over batch.
    (memory_mask is always None in this module's forward.)"""
    b, tq, d = x.shape
    tk = memory.shape[1]
    gamma, beta = norm
    kern = functools.partial(_cross_attn_block_kernel,
                             nhead=nhead, d_model=d, eps=eps)
    return pl.pallas_call(
        kern,
        out_shape=jax.ShapeDtypeStruct((b, tq, d), x.dtype),
        grid=(b,),
        in_specs=[
            pl.BlockSpec((1, tq, d), lambda i: (i, 0, 0)),
            pl.BlockSpec((1, tk, d), lambda i: (i, 0, 0)),
            pl.BlockSpec((d, d), lambda i: (0, 0)),
            pl.BlockSpec((1, d), lambda i: (0, 0)),
            pl.BlockSpec((d, 2 * d), lambda i: (0, 0)),
            pl.BlockSpec((1, 2 * d), lambda i: (0, 0)),
            pl.BlockSpec((d, d), lambda i: (0, 0)),
            pl.BlockSpec((1, d), lambda i: (0, 0)),
            pl.BlockSpec((1, d), lambda i: (0, 0)),
            pl.BlockSpec((1, d), lambda i: (0, 0)),
        ],
        out_specs=pl.BlockSpec((1, tq, d), lambda i: (i, 0, 0)),
        compiler_params=_compiler_params(),
    )(x, memory, p["wq"], p["bq"].reshape(1, d),
      p["w_kv"], p["b_kv"].reshape(1, 2 * d),
      p["wo"], p["bo"].reshape(1, d),
      gamma.reshape(1, d), beta.reshape(1, d))


# -----------------------------------------------------------------------------
# Fused FFN block kernel (row-tiled) and the final LayerNorm kernel
# -----------------------------------------------------------------------------
def _ffn_block_kernel(x_ref, w1_ref, b1_ref, w2_ref, b2_ref, g_ref, bt_ref,
                      o_ref, *, eps):
    x = x_ref[...].astype(jnp.float32)                        # (tile, D)
    h = jnp.dot(x.astype(jnp.bfloat16), w1_ref[...],
                preferred_element_type=jnp.float32) + b1_ref[...]
    h = _gelu_exact(h)                                        # (tile, dff), VMEM-only
    y = jnp.dot(h.astype(jnp.bfloat16), w2_ref[...],
                preferred_element_type=jnp.float32) + b2_ref[...]
    y = y + x                                                 # residual
    o_ref[...] = _layernorm_f32(y, g_ref[...], bt_ref[...], eps).astype(o_ref.dtype)


def _layernorm_kernel(x_ref, g_ref, b_ref, o_ref, *, eps):
    x = x_ref[...].astype(jnp.float32)
    o_ref[...] = _layernorm_f32(x, g_ref[...], b_ref[...], eps).astype(o_ref.dtype)


def pallas_ffn_block(x, p, norm, eps=1e-5):
    """LayerNorm(x + Linear2(GELU(Linear1(x)))) fused; the (N, dff)
    intermediate never leaves VMEM.  x: (N, D)."""
    n, d = x.shape
    dff = p["w1"].shape[1]
    tile = _row_tile(n)
    gamma, beta = norm
    kern = functools.partial(_ffn_block_kernel, eps=eps)
    return pl.pallas_call(
        kern,
        out_shape=jax.ShapeDtypeStruct((n, d), x.dtype),
        grid=(pl.cdiv(n, tile),),
        in_specs=[
            pl.BlockSpec((tile, d), lambda i: (i, 0)),
            pl.BlockSpec((d, dff), lambda i: (0, 0)),         # resident weights
            pl.BlockSpec((1, dff), lambda i: (0, 0)),
            pl.BlockSpec((dff, d), lambda i: (0, 0)),
            pl.BlockSpec((1, d), lambda i: (0, 0)),
            pl.BlockSpec((1, d), lambda i: (0, 0)),
            pl.BlockSpec((1, d), lambda i: (0, 0)),
        ],
        out_specs=pl.BlockSpec((tile, d), lambda i: (i, 0)),
        compiler_params=_compiler_params(),
    )(x, p["w1"], p["b1"].reshape(1, dff), p["w2"], p["b2"].reshape(1, d),
      gamma.reshape(1, d), beta.reshape(1, d))


def pallas_layernorm(x, gamma, beta, eps=1e-5):
    """Plain LayerNorm over the last dim (final encoder/decoder norms)."""
    n, d = x.shape
    tile = _row_tile(n)
    kern = functools.partial(_layernorm_kernel, eps=eps)
    return pl.pallas_call(
        kern,
        out_shape=jax.ShapeDtypeStruct((n, d), x.dtype),
        grid=(pl.cdiv(n, tile),),
        in_specs=[
            pl.BlockSpec((tile, d), lambda i: (i, 0)),
            pl.BlockSpec((1, d), lambda i: (0, 0)),
            pl.BlockSpec((1, d), lambda i: (0, 0)),
        ],
        out_specs=pl.BlockSpec((tile, d), lambda i: (i, 0)),
        compiler_params=_compiler_params(),
    )(x, gamma.reshape(1, d), beta.reshape(1, d))


# -----------------------------------------------------------------------------
# Transformer layers (glue in plain JAX; all hot paths fused in Pallas)
# Internal layout is batch-first: x (B, T, D).  Dropout (p=0.1) is the
# eval-mode identity (deterministic forward).
# -----------------------------------------------------------------------------
def encoder_layer(x, p, nhead, src_mask):
    b, t, d = x.shape
    x = pallas_self_attn_block(x, p["self_attn"], p["norm1"], nhead, src_mask)
    xf = pallas_ffn_block(x.reshape(b * t, d), p["ffn"], p["norm2"])
    return xf.reshape(b, t, d)


def decoder_layer(x, memory, p, nhead, tgt_mask):
    b, t, d = x.shape
    x = pallas_self_attn_block(x, p["self_attn"], p["norm1"], nhead, tgt_mask)
    x = pallas_cross_attn_block(x, memory, p["cross_attn"], p["norm2"], nhead)
    xf = pallas_ffn_block(x.reshape(b * t, d), p["ffn"], p["norm3"])
    return xf.reshape(b, t, d)


def posenc_to_batch_first(x):
    """AbsolutePositionalEncoding + .squeeze(1).permute(2,0,1), delivered
    batch-first (B, T, D) for the internal slab layout."""
    b, c, d, t = x.shape
    pos = jnp.arange(c).astype(x.dtype)            # arange(x.shape[1]); C == 1
    x = x.at[:, :, 0].set(pos)                     # x[:, :, 0, :] = posencs
    x = jnp.squeeze(x, axis=1)                     # (B, D, T)
    return jnp.transpose(x, (0, 2, 1))             # (B, T, D)


def audio_transformer_enc_dec(params, src, tgt=None, src_mask=None,
                              tgt_mask=None, *, nhead):
    if tgt is None:
        tgt = src
        tgt_mask = src_mask
    # cast additive float masks to f32 once, outside the layer loops
    src_mask = None if src_mask is None else src_mask.astype(jnp.float32)
    tgt_mask = None if tgt_mask is None else tgt_mask.astype(jnp.float32)

    src_enc = posenc_to_batch_first(src)
    tgt_enc = posenc_to_batch_first(tgt)

    # encoder stack + final encoder LayerNorm (nn.Transformer default)
    mem = src_enc
    for lp in params["enc_layers"]:
        mem = encoder_layer(mem, lp, nhead, src_mask)
    b, tm, d = mem.shape
    mem = pallas_layernorm(mem.reshape(b * tm, d),
                           params["enc_norm"][0],
                           params["enc_norm"][1]).reshape(b, tm, d)

    # decoder stack + final decoder LayerNorm
    x = tgt_enc
    for lp in params["dec_layers"]:
        x = decoder_layer(x, mem, lp, nhead, tgt_mask)
    b, tq, d = x.shape
    x = pallas_layernorm(x.reshape(b * tq, d),
                         params["dec_norm"][0],
                         params["dec_norm"][1]).reshape(b, tq, d)

    # TODO(synk): fold this transpose into the final LN kernel's out_specs
    # (write (T, B, D) directly) — minor, left to plain XLA for robustness.
    return jnp.transpose(x, (1, 0, 2))             # (T, B, D) — PyTorch seq-first


# -----------------------------------------------------------------------------
# Deterministic synthetic parameter init.
# Weights stored bf16 (MXU-native); biases / LN params f32.  The 1/sqrt(hd)
# attention scale is folded into the Q projection.  Fused w_qkv/w_kv layouts
# correspond to PyTorch's in_proj_weight.T when loading real checkpoints.
# -----------------------------------------------------------------------------
def _init_linear(key, d_in, d_out, scale=0.05):
    kw, kb = jax.random.split(key)
    return (scale * jax.random.normal(kw, (d_in, d_out), jnp.float32),
            scale * jax.random.normal(kb, (d_out,), jnp.float32))


def _init_self_mha(key, d, nhead):
    kqkv, ko = jax.random.split(key)
    w_qkv, b_qkv = _init_linear(kqkv, d, 3 * d)
    wo, bo = _init_linear(ko, d, d)
    sc = 1.0 / math.sqrt(d // nhead)
    w_qkv = w_qkv.at[:, :d].multiply(sc)           # fold attention scale into Q
    b_qkv = b_qkv.at[:d].multiply(sc)
    return dict(w_qkv=w_qkv.astype(jnp.bfloat16), b_qkv=b_qkv,
                wo=wo.astype(jnp.bfloat16), bo=bo)


def _init_cross_mha(key, d, nhead):
    kq, kkv, ko = jax.random.split(key, 3)
    wq, bq = _init_linear(kq, d, d)
    w_kv, b_kv = _init_linear(kkv, d, 2 * d)
    wo, bo = _init_linear(ko, d, d)
    sc = 1.0 / math.sqrt(d // nhead)
    return dict(wq=(wq * sc).astype(jnp.bfloat16), bq=bq * sc,
                w_kv=w_kv.astype(jnp.bfloat16), b_kv=b_kv,
                wo=wo.astype(jnp.bfloat16), bo=bo)


def _init_ln(d):
    return (jnp.ones((d,), jnp.float32), jnp.zeros((d,), jnp.float32))


def init_params(key, d_model, nhead, dim_feedforward,
                num_encoder_layers, num_decoder_layers):
    params = {"enc_layers": [], "dec_layers": []}
    for _ in range(num_encoder_layers):
        key, ka, k1, k2 = jax.random.split(key, 4)
        w1, b1 = _init_linear(k1, d_model, dim_feedforward)
        w2, b2 = _init_linear(k2, dim_feedforward, d_model)
        params["enc_layers"].append(dict(
            self_attn=_init_self_mha(ka, d_model, nhead),
            ffn=dict(w1=w1.astype(jnp.bfloat16), b1=b1,
                     w2=w2.astype(jnp.bfloat16), b2=b2),
            norm1=_init_ln(d_model), norm2=_init_ln(d_model)))
    for _ in range(num_decoder_layers):
        key, ka, kc, k1, k2 = jax.random.split(key, 5)
        w1, b1 = _init_linear(k1, d_model, dim_feedforward)
        w2, b2 = _init_linear(k2, dim_feedforward, d_model)
        params["dec_layers"].append(dict(
            self_attn=_init_self_mha(ka, d_model, nhead),
            cross_attn=_init_cross_mha(kc, d_model, nhead),
            ffn=dict(w1=w1.astype(jnp.bfloat16), b1=b1,
                     w2=w2.astype(jnp.bfloat16), b2=b2),
            norm1=_init_ln(d_model), norm2=_init_ln(d_model),
            norm3=_init_ln(d_model)))
    params["enc_norm"] = _init_ln(d_model)
    params["dec_norm"] = _init_ln(d_model)
    return params


if __name__ == "__main__":
    # small config consistent with the module: d_model=128 (module default,
    # lane-dense), nhead=4, dff=256, 1 encoder + 1 decoder layer;
    # input (B, C=1, D, T) = (2, 1, 128, 8)
    B, C, D, T = 2, 1, 128, 8
    NHEAD, DFF = 4, 256

    key = jax.random.PRNGKey(0)
    kp, kx = jax.random.split(key)
    params = init_params(kp, D, NHEAD, DFF,
                         num_encoder_layers=1, num_decoder_layers=1)
    src = jax.random.normal(kx, (B, C, D, T), jnp.float32)

    fwd = jax.jit(functools.partial(audio_transformer_enc_dec, nhead=NHEAD))
    out = fwd(params, src)                         # tgt=None -> tgt=src
    out = jax.block_until_ready(out)

    assert out.shape == (T, B, D), out.shape
    assert bool(jnp.all(jnp.isfinite(out)))
    print("KERNEL_OK")
</pallas_src>

<mosaic_0001>
module attributes {stable_mosaic.version = 11 : i64} {
  func.func @_self_attn_block_kernel(%arg0: i32, %arg1: memref<1x8x128xf32, #tpu.memory_space<vmem>>, %arg2: memref<128x384xbf16, #tpu.memory_space<vmem>>, %arg3: memref<1x384xf32, #tpu.memory_space<vmem>>, %arg4: memref<128x128xbf16, #tpu.memory_space<vmem>>, %arg5: memref<1x128xf32, #tpu.memory_space<vmem>>, %arg6: memref<1x128xf32, #tpu.memory_space<vmem>>, %arg7: memref<1x128xf32, #tpu.memory_space<vmem>>, %arg8: memref<1x8x128xf32, #tpu.memory_space<vmem>>) attributes {dimension_semantics = [#tpu.dimension_semantics<parallel>], iteration_bounds = array<i64: 2>, scalar_prefetch = 0 : i64, scratch_operands = 0 : i64, tpu.core_type = #tpu.core_type<tc>, window_params = [{transform_indices = @transform_0, window_bounds = array<i64: 1, 8, 128>}, {pipeline_mode = #tpu.pipeline_mode<synchronous>, transform_indices = @transform_1, window_bounds = array<i64: 128, 384>}, {pipeline_mode = #tpu.pipeline_mode<synchronous>, transform_indices = @transform_2, window_bounds = array<i64: 1, 384>}, {pipeline_mode = #tpu.pipeline_mode<synchronous>, transform_indices = @transform_3, window_bounds = array<i64: 128, 128>}, {pipeline_mode = #tpu.pipeline_mode<synchronous>, transform_indices = @transform_4, window_bounds = array<i64: 1, 128>}, {pipeline_mode = #tpu.pipeline_mode<synchronous>, transform_indices = @transform_5, window_bounds = array<i64: 1, 128>}, {pipeline_mode = #tpu.pipeline_mode<synchronous>, transform_indices = @transform_6, window_bounds = array<i64: 1, 128>}, {transform_indices = @transform_7, window_bounds = array<i64: 1, 8, 128>}]} {
    %c0 = arith.constant 0 : index
    %c0_0 = arith.constant 0 : index
    %c0_1 = arith.constant 0 : index
    %0 = vector.load %arg1[%c0, %c0_0, %c0_1] : memref<1x8x128xf32, #tpu.memory_space<vmem>>, vector<1x8x128xf32>
    %1 = vector.shape_cast %0 : vector<1x8x128xf32> to vector<8x128xf32>
    %2 = arith.truncf %1 : vector<8x128xf32> to vector<8x128xbf16>
    %c0_2 = arith.constant 0 : index
    %c0_3 = arith.constant 0 : index
    %3 = vector.load %arg2[%c0_2, %c0_3] : memref<128x384xbf16, #tpu.memory_space<vmem>>, vector<128x384xbf16>
    %cst = arith.constant dense<0.000000e+00> : vector<8x384xf32>
    %4 = tpu.matmul %2, %3, %cst {dimension_numbers = #tpu.dot_dimension_numbers<[1], [0], [0], [1], [0, 0, 1, 1], [], []>} : vector<8x128xbf16>, vector<128x384xbf16>, vector<8x384xf32> -> vector<8x384xf32>
    %c0_4 = arith.constant 0 : index
    %c0_5 = arith.constant 0 : index
    %5 = vector.load %arg3[%c0_4, %c0_5] : memref<1x384xf32, #tpu.memory_space<vmem>>, vector<1x384xf32>
    %6 = vector.broadcast %5 : vector<1x384xf32> to vector<8x384xf32>
    %7 = arith.addf %4, %6 : vector<8x384xf32>
    %8 = vector.extract_strided_slice %7 {offsets = [0, 0], sizes = [8, 128], strides = [1, 1]} : vector<8x384xf32> to vector<8x128xf32>
    %9 = vector.extract_strided_slice %7 {offsets = [0, 128], sizes = [8, 128], strides = [1, 1]} : vector<8x384xf32> to vector<8x128xf32>
    %10 = vector.extract_strided_slice %7 {offsets = [0, 256], sizes = [8, 128], strides = [1, 1]} : vector<8x384xf32> to vector<8x128xf32>
    %11 = vector.shape_cast %8 : vector<8x128xf32> to vector<8x4x32xf32>
    %12 = vector.shape_cast %9 : vector<8x128xf32> to vector<8x4x32xf32>
    %13 = vector.shape_cast %10 : vector<8x128xf32> to vector<8x4x32xf32>
    %14 = arith.truncf %11 : vector<8x4x32xf32> to vector<8x4x32xbf16>
    %15 = arith.truncf %12 : vector<8x4x32xf32> to vector<8x4x32xbf16>
    "tpu.trace_start"() <{level = 10 : i32, message = "qhd,khd->hqk"}> : () -> ()
    %cst_6 = arith.constant dense<0.000000e+00> : vector<4x8x8xf32>
    %16 = tpu.matmul %14, %15, %cst_6 {dimension_numbers = #tpu.dot_dimension_numbers<[2], [2], [0], [0], [0, 1, 0, 0, 1, 0], [1], [1]>} : vector<8x4x32xbf16>, vector<8x4x32xbf16>, vector<4x8x8xf32> -> vector<4x8x8xf32>
    "tpu.trace_stop"() : () -> ()
    %cst_7 = arith.constant dense<0xFF800000> : vector<4x8xf32>
    %17 = vector.multi_reduction <maximumf>, %16, %cst_7 [2] : vector<4x8x8xf32> to vector<4x8xf32>
    %18 = vector.shape_cast %17 : vector<4x8xf32> to vector<4x8x1xf32>
    %19 = vector.broadcast %18 : vector<4x8x1xf32> to vector<4x8x8xf32>
    %20 = arith.subf %16, %19 : vector<4x8x8xf32>
    %21 = math.exp %20 : vector<4x8x8xf32>
    %cst_8 = arith.constant dense<0.000000e+00> : vector<4x8xf32>
    %22 = vector.multi_reduction <add>, %21, %cst_8 [2] : vector<4x8x8xf32> to vector<4x8xf32>
    %23 = vector.shape_cast %22 : vector<4x8xf32> to vector<4x8x1xf32>
    %24 = tpu.reciprocal %23 {approx = true} : vector<4x8x1xf32> -> vector<4x8x1xf32>
    %25 = vector.broadcast %24 : vector<4x8x1xf32> to vector<4x8x8xf32>
    %26 = arith.mulf %21, %25 : vector<4x8x8xf32>
    %27 = arith.truncf %26 : vector<4x8x8xf32> to vector<4x8x8xbf16>
    %28 = arith.truncf %13 : vector<8x4x32xf32> to vector<8x4x32xbf16>
    "tpu.trace_start"() <{level = 10 : i32, message = "hqk,khd->qhd"}> : () -> ()
    %cst_9 = arith.constant dense<0.000000e+00> : vector<4x32x8xf32>
    %29 = tpu.matmul %28, %27, %cst_9 {dimension_numbers = #tpu.dot_dimension_numbers<[0], [2], [2], [1], [0, 1, 0, 2, 1, 1], [1], [0]>} : vector<8x4x32xbf16>, vector<4x8x8xbf16>, vector<4x32x8xf32> -> vector<4x32x8xf32>
    %30 = tpu.transpose %29, [2, 0, 1] : vector<4x32x8xf32> -> vector<8x4x32xf32>
    "tpu.trace_stop"() : () -> ()
    %31 = vector.shape_cast %30 : vector<8x4x32xf32> to vector<8x128xf32>
    %32 = arith.truncf %31 : vector<8x128xf32> to vector<8x128xbf16>
    %c0_10 = arith.constant 0 : index
    %c0_11 = arith.constant 0 : index
    %33 = vector.load %arg4[%c0_10, %c0_11] : memref<128x128xbf16, #tpu.memory_space<vmem>>, vector<128x128xbf16>
    %cst_12 = arith.constant dense<0.000000e+00> : vector<8x128xf32>
    %34 = tpu.matmul %32, %33, %cst_12 {dimension_numbers = #tpu.dot_dimension_numbers<[1], [0], [0], [1], [0, 0, 1, 1], [], []>} : vector<8x128xbf16>, vector<128x128xbf16>, vector<8x128xf32> -> vector<8x128xf32>
    %c0_13 = arith.constant 0 : index
    %c0_14 = arith.constant 0 : index
    %35 = vector.load %arg5[%c0_13, %c0_14] : memref<1x128xf32, #tpu.memory_space<vmem>>, vector<1x128xf32>
    %36 = vector.broadcast %35 : vector<1x128xf32> to vector<8x128xf32>
    %37 = arith.addf %34, %36 : vector<8x128xf32>
    %38 = arith.addf %37, %1 : vector<8x128xf32>
    %c0_15 = arith.constant 0 : index
    %c0_16 = arith.constant 0 : index
    %39 = vector.load %arg6[%c0_15, %c0_16] : memref<1x128xf32, #tpu.memory_space<vmem>>, vector<1x128xf32>
    %c0_17 = arith.constant 0 : index
    %c0_18 = arith.constant 0 : index
    %40 = vector.load %arg7[%c0_17, %c0_18] : memref<1x128xf32, #tpu.memory_space<vmem>>, vector<1x128xf32>
    %cst_19 = arith.constant dense<0.000000e+00> : vector<8xf32>
    %41 = vector.multi_reduction <add>, %38, %cst_19 [1] : vector<8x128xf32> to vector<8xf32>
    %42 = vector.shape_cast %41 : vector<8xf32> to vector<8x1xf32>
    %cst_20 = arith.constant 1.280000e+02 : f32
    %43 = vector.broadcast %cst_20 : f32 to vector<8x1xf32>
    %44 = arith.divf %42, %43 : vector<8x1xf32>
    %45 = vector.broadcast %44 : vector<8x1xf32> to vector<8x128xf32>
    %46 = arith.subf %38, %45 : vector<8x128xf32>
    %47 = arith.mulf %46, %46 : vector<8x128xf32>
    %cst_21 = arith.constant dense<0.000000e+00> : vector<8xf32>
    %48 = vector.multi_reduction <add>, %47, %cst_21 [1] : vector<8x128xf32> to vector<8xf32>
    %49 = vector.shape_cast %48 : vector<8xf32> to vector<8x1xf32>
    %cst_22 = arith.constant 1.280000e+02 : f32
    %50 = vector.broadcast %cst_22 : f32 to vector<8x1xf32>
    %51 = arith.divf %49, %50 : vector<8x1xf32>
    %cst_23 = arith.constant 9.99999974E-6 : f32
    %52 = vector.broadcast %cst_23 : f32 to vector<8x1xf32>
    %53 = arith.addf %51, %52 : vector<8x1xf32>
    %54 = math.rsqrt %53 : vector<8x1xf32>
    %55 = vector.broadcast %54 : vector<8x1xf32> to vector<8x128xf32>
    %56 = arith.mulf %46, %55 : vector<8x128xf32>
    %57 = vector.broadcast %39 : vector<1x128xf32> to vector<8x128xf32>
    %58 = arith.mulf %56, %57 : vector<8x128xf32>
    %59 = vector.broadcast %40 : vector<1x128xf32> to vector<8x128xf32>
    %60 = arith.addf %58, %59 : vector<8x128xf32>
    %c0_24 = arith.constant 0 : index
    %c0_25 = arith.constant 0 : index
    %c0_26 = arith.constant 0 : index
    %61 = vector.load %arg8[%c0_24, %c0_25, %c0_26] : memref<1x8x128xf32, #tpu.memory_space<vmem>>, vector<1x8x128xf32>
    %62 = vector.shape_cast %61 : vector<1x8x128xf32> to vector<8x128xf32>
    %63 = vector.shape_cast %60 : vector<8x128xf32> to vector<1x8x128xf32>
    tpu.vector_store %arg8[%c0_24, %c0_25, %c0_26], %63 {strides = array<i32>} : memref<1x8x128xf32, #tpu.memory_space<vmem>>, vector<1x8x128xf32>,
    return
  }
  func.func @transform_0(%arg0: i32) -> (i32, i32, i32) {
    %c0_i32 = arith.constant 0 : i32
    %c0_i32_0 = arith.constant 0 : i32
    %c0_i32_1 = arith.constant 0 : i32
    return %arg0, %c0_i32, %c0_i32_0 : i32, i32, i32
  }
  func.func @transform_1(%arg0: i32) -> (i32, i32) {
    %c0_i32 = arith.constant 0 : i32
    %c0_i32_0 = arith.constant 0 : i32
    %c0_i32_1 = arith.constant 0 : i32
    return %c0_i32, %c0_i32_0 : i32, i32
  }
  func.func @transform_2(%arg0: i32) -> (i32, i32) {
    %c0_i32 = arith.constant 0 : i32
    %c0_i32_0 = arith.constant 0 : i32
    %c0_i32_1 = arith.constant 0 : i32
    return %c0_i32, %c0_i32_0 : i32, i32
  }
  func.func @transform_3(%arg0: i32) -> (i32, i32) {
    %c0_i32 = arith.constant 0 : i32
    %c0_i32_0 = arith.constant 0 : i32
    %c0_i32_1 = arith.constant 0 : i32
    return %c0_i32, %c0_i32_0 : i32, i32
  }
  func.func @transform_4(%arg0: i32) -> (i32, i32) {
    %c0_i32 = arith.constant 0 : i32
    %c0_i32_0 = arith.constant 0 : i32
    %c0_i32_1 = arith.constant 0 : i32
    return %c0_i32, %c0_i32_0 : i32, i32
  }
  func.func @transform_5(%arg0: i32) -> (i32, i32) {
    %c0_i32 = arith.constant 0 : i32
    %c0_i32_0 = arith.constant 0 : i32
    %c0_i32_1 = arith.constant 0 : i32
    return %c0_i32, %c0_i32_0 : i32, i32
  }
  func.func @transform_6(%arg0: i32) -> (i32, i32) {
    %c0_i32 = arith.constant 0 : i32
    %c0_i32_0 = arith.constant 0 : i32
    %c0_i32_1 = arith.constant 0 : i32
    return %c0_i32, %c0_i32_0 : i32, i32
  }
  func.func @transform_7(%arg0: i32) -> (i32, i32, i32) {
    %c0_i32 = arith.constant 0 : i32
    %c0_i32_0 = arith.constant 0 : i32
    %c0_i32_1 = arith.constant 0 : i32
    return %arg0, %c0_i32, %c0_i32_0 : i32, i32, i32
  }
}

module attributes {stable_mosaic.version = 11 : i64} {
  func.func @_layernorm_kernel(%arg0: i32, %arg1: memref<16x128xf32, #tpu.memory_space<vmem>>, %arg2: memref<1x128xf32, #tpu.memory_space<vmem>>, %arg3: memref<1x128xf32, #tpu.memory_space<vmem>>, %arg4: memref<16x128xf32, #tpu.memory_space<vmem>>) attributes {dimension_semantics = [#tpu.dimension_semantics<parallel>], iteration_bounds = array<i64: 1>, scalar_prefetch = 0 : i64, scratch_operands = 0 : i64, tpu.core_type = #tpu.core_type<tc>, window_params = [{transform_indices = @transform_0, window_bounds = array<i64: 16, 128>}, {pipeline_mode = #tpu.pipeline_mode<synchronous>, transform_indices = @transform_1, window_bounds = array<i64: 1, 128>}, {pipeline_mode = #tpu.pipeline_mode<synchronous>, transform_indices = @transform_2, window_bounds = array<i64: 1, 128>}, {transform_indices = @transform_3, window_bounds = array<i64: 16, 128>}]} {
    %c0 = arith.constant 0 : index
    %c0_0 = arith.constant 0 : index
    %0 = vector.load %arg1[%c0, %c0_0] : memref<16x128xf32, #tpu.memory_space<vmem>>, vector<16x128xf32>
    %c0_1 = arith.constant 0 : index
    %c0_2 = arith.constant 0 : index
    %1 = vector.load %arg2[%c0_1, %c0_2] : memref<1x128xf32, #tpu.memory_space<vmem>>, vector<1x128xf32>
    %c0_3 = arith.constant 0 : index
    %c0_4 = arith.constant 0 : index
    %2 = vector.load %arg3[%c0_3, %c0_4] : memref<1x128xf32, #tpu.memory_space<vmem>>, vector<1x128xf32>
    %cst = arith.constant dense<0.000000e+00> : vector<16xf32>
    %3 = vector.multi_reduction <add>, %0, %cst [1] : vector<16x128xf32> to vector<16xf32>
    %4 = vector.shape_cast %3 : vector<16xf32> to vector<16x1xf32>
    %cst_5 = arith.constant 1.280000e+02 : f32
    %5 = vector.broadcast %cst_5 : f32 to vector<16x1xf32>
    %6 = arith.divf %4, %5 : vector<16x1xf32>
    %7 = vector.broadcast %6 : vector<16x1xf32> to vector<16x128xf32>
    %8 = arith.subf %0, %7 : vector<16x128xf32>
    %9 = arith.mulf %8, %8 : vector<16x128xf32>
    %cst_6 = arith.constant dense<0.000000e+00> : vector<16xf32>
    %10 = vector.multi_reduction <add>, %9, %cst_6 [1] : vector<16x128xf32> to vector<16xf32>
    %11 = vector.shape_cast %10 : vector<16xf32> to vector<16x1xf32>
    %cst_7 = arith.constant 1.280000e+02 : f32
    %12 = vector.broadcast %cst_7 : f32 to vector<16x1xf32>
    %13 = arith.divf %11, %12 : vector<16x1xf32>
    %cst_8 = arith.constant 9.99999974E-6 : f32
    %14 = vector.broadcast %cst_8 : f32 to vector<16x1xf32>
    %15 = arith.addf %13, %14 : vector<16x1xf32>
    %16 = math.rsqrt %15 : vector<16x1xf32>
    %17 = vector.broadcast %16 : vector<16x1xf32> to vector<16x128xf32>
    %18 = arith.mulf %8, %17 : vector<16x128xf32>
    %19 = vector.broadcast %1 : vector<1x128xf32> to vector<16x128xf32>
    %20 = arith.mulf %18, %19 : vector<16x128xf32>
    %21 = vector.broadcast %2 : vector<1x128xf32> to vector<16x128xf32>
    %22 = arith.addf %20, %21 : vector<16x128xf32>
    %c0_9 = arith.constant 0 : index
    %c0_10 = arith.constant 0 : index
    %23 = vector.load %arg4[%c0_9, %c0_10] : memref<16x128xf32, #tpu.memory_space<vmem>>, vector<16x128xf32>
    tpu.vector_store %arg4[%c0_9, %c0_10], %22 {strides = array<i32>} : memref<16x128xf32, #tpu.memory_space<vmem>>, vector<16x128xf32>,
    return
  }
  func.func @transform_0(%arg0: i32) -> (i32, i32) {
    %c0_i32 = arith.constant 0 : i32
    %c0_i32_0 = arith.constant 0 : i32
    return %arg0, %c0_i32 : i32, i32
  }
  func.func @transform_1(%arg0: i32) -> (i32, i32) {
    %c0_i32 = arith.constant 0 : i32
    %c0_i32_0 = arith.constant 0 : i32
    %c0_i32_1 = arith.constant 0 : i32
    return %c0_i32, %c0_i32_0 : i32, i32
  }
  func.func @transform_2(%arg0: i32) -> (i32, i32) {
    %c0_i32 = arith.constant 0 : i32
    %c0_i32_0 = arith.constant 0 : i32
    %c0_i32_1 = arith.constant 0 : i32
    return %c0_i32, %c0_i32_0 : i32, i32
  }
  func.func @transform_3(%arg0: i32) -> (i32, i32) {
    %c0_i32 = arith.constant 0 : i32
    %c0_i32_0 = arith.constant 0 : i32
    return %arg0, %c0_i32 : i32, i32
  }
}

module attributes {stable_mosaic.version = 11 : i64} {
  func.func @_ffn_block_kernel(%arg0: i32, %arg1: memref<16x128xf32, #tpu.memory_space<vmem>>, %arg2: memref<128x256xbf16, #tpu.memory_space<vmem>>, %arg3: memref<1x256xf32, #tpu.memory_space<vmem>>, %arg4: memref<256x128xbf16, #tpu.memory_space<vmem>>, %arg5: memref<1x128xf32, #tpu.memory_space<vmem>>, %arg6: memref<1x128xf32, #tpu.memory_space<vmem>>, %arg7: memref<1x128xf32, #tpu.memory_space<vmem>>, %arg8: memref<16x128xf32, #tpu.memory_space<vmem>>) attributes {dimension_semantics = [#tpu.dimension_semantics<parallel>], iteration_bounds = array<i64: 1>, scalar_prefetch = 0 : i64, scratch_operands = 0 : i64, tpu.core_type = #tpu.core_type<tc>, window_params = [{transform_indices = @transform_0, window_bounds = array<i64: 16, 128>}, {pipeline_mode = #tpu.pipeline_mode<synchronous>, transform_indices = @transform_1, window_bounds = array<i64: 128, 256>}, {pipeline_mode = #tpu.pipeline_mode<synchronous>, transform_indices = @transform_2, window_bounds = array<i64: 1, 256>}, {pipeline_mode = #tpu.pipeline_mode<synchronous>, transform_indices = @transform_3, window_bounds = array<i64: 256, 128>}, {pipeline_mode = #tpu.pipeline_mode<synchronous>, transform_indices = @transform_4, window_bounds = array<i64: 1, 128>}, {pipeline_mode = #tpu.pipeline_mode<synchronous>, transform_indices = @transform_5, window_bounds = array<i64: 1, 128>}, {pipeline_mode = #tpu.pipeline_mode<synchronous>, transform_indices = @transform_6, window_bounds = array<i64: 1, 128>}, {transform_indices = @transform_7, window_bounds = array<i64: 16, 128>}]} {
    %c0 = arith.constant 0 : index
    %c0_0 = arith.constant 0 : index
    %0 = vector.load %arg1[%c0, %c0_0] : memref<16x128xf32, #tpu.memory_space<vmem>>, vector<16x128xf32>
    %1 = arith.truncf %0 : vector<16x128xf32> to vector<16x128xbf16>
    %c0_1 = arith.constant 0 : index
    %c0_2 = arith.constant 0 : index
    %2 = vector.load %arg2[%c0_1, %c0_2] : memref<128x256xbf16, #tpu.memory_space<vmem>>, vector<128x256xbf16>
    %cst = arith.constant dense<0.000000e+00> : vector<16x256xf32>
    %3 = tpu.matmul %1, %2, %cst {dimension_numbers = #tpu.dot_dimension_numbers<[1], [0], [0], [1], [0, 0, 1, 1], [], []>} : vector<16x128xbf16>, vector<128x256xbf16>, vector<16x256xf32> -> vector<16x256xf32>
    %c0_3 = arith.constant 0 : index
    %c0_4 = arith.constant 0 : index
    %4 = vector.load %arg3[%c0_3, %c0_4] : memref<1x256xf32, #tpu.memory_space<vmem>>, vector<1x256xf32>
    %5 = vector.broadcast %4 : vector<1x256xf32> to vector<16x256xf32>
    %6 = arith.addf %3, %5 : vector<16x256xf32>
    %cst_5 = arith.constant 5.000000e-01 : f32
    %7 = vector.broadcast %cst_5 : f32 to vector<16x256xf32>
    %8 = arith.mulf %7, %6 : vector<16x256xf32>
    %cst_6 = arith.constant 0.707106769 : f32
    %9 = vector.broadcast %cst_6 : f32 to vector<16x256xf32>
    %10 = arith.mulf %6, %9 : vector<16x256xf32>
    %11 = math.absf %10 : vector<16x256xf32>
    %cst_7 = arith.constant 0.327591091 : f32
    %12 = vector.broadcast %cst_7 : f32 to vector<16x256xf32>
    %13 = arith.mulf %12, %11 : vector<16x256xf32>
    %cst_8 = arith.constant 1.000000e+00 : f32
    %14 = vector.broadcast %cst_8 : f32 to vector<16x256xf32>
    %15 = arith.addf %14, %13 : vector<16x256xf32>
    %16 = tpu.reciprocal %15 {approx = true} : vector<16x256xf32> -> vector<16x256xf32>
    %cst_9 = arith.constant 1.06140542 : f32
    %17 = vector.broadcast %cst_9 : f32 to vector<16x256xf32>
    %18 = arith.mulf %17, %16 : vector<16x256xf32>
    %cst_10 = arith.constant -1.45315206 : f32
    %19 = vector.broadcast %cst_10 : f32 to vector<16x256xf32>
    %20 = arith.addf %18, %19 : vector<16x256xf32>
    %21 = arith.mulf %20, %16 : vector<16x256xf32>
    %cst_11 = arith.constant 1.42141378 : f32
    %22 = vector.broadcast %cst_11 : f32 to vector<16x256xf32>
    %23 = arith.addf %21, %22 : vector<16x256xf32>
    %24 = arith.mulf %23, %16 : vector<16x256xf32>
    %cst_12 = arith.constant -0.284496725 : f32
    %25 = vector.broadcast %cst_12 : f32 to vector<16x256xf32>
    %26 = arith.addf %24, %25 : vector<16x256xf32>
    %27 = arith.mulf %26, %16 : vector<16x256xf32>
    %cst_13 = arith.constant 0.254829586 : f32
    %28 = vector.broadcast %cst_13 : f32 to vector<16x256xf32>
    %29 = arith.addf %27, %28 : vector<16x256xf32>
    %30 = arith.mulf %29, %16 : vector<16x256xf32>
    %cst_14 = arith.constant 0.000000e+00 : f32
    %31 = vector.broadcast %cst_14 : f32 to vector<16x256xf32>
    %32 = arith.subf %31, %11 : vector<16x256xf32>
    %33 = arith.mulf %32, %11 : vector<16x256xf32>
    %34 = math.exp %33 : vector<16x256xf32>
    %35 = arith.mulf %30, %34 : vector<16x256xf32>
    %cst_15 = arith.constant 1.000000e+00 : f32
    %36 = vector.broadcast %cst_15 : f32 to vector<16x256xf32>
    %37 = arith.subf %36, %35 : vector<16x256xf32>
    %cst_16 = arith.constant 0.000000e+00 : f32
    %38 = vector.broadcast %cst_16 : f32 to vector<16x256xf32>
    %39 = arith.cmpf olt, %10, %38 : vector<16x256xf32>
    %cst_17 = arith.constant 0.000000e+00 : f32
    %40 = vector.broadcast %cst_17 : f32 to vector<16x256xf32>
    %41 = arith.subf %40, %37 : vector<16x256xf32>
    %42 = arith.select %39, %41, %37 : vector<16x256xi1>, vector<16x256xf32>
    %cst_18 = arith.constant 1.000000e+00 : f32
    %43 = vector.broadcast %cst_18 : f32 to vector<16x256xf32>
    %44 = arith.addf %43, %42 : vector<16x256xf32>
    %45 = arith.mulf %8, %44 : vector<16x256xf32>
    %46 = arith.truncf %45 : vector<16x256xf32> to vector<16x256xbf16>
    %c0_19 = arith.constant 0 : index
    %c0_20 = arith.constant 0 : index
    %47 = vector.load %arg4[%c0_19, %c0_20] : memref<256x128xbf16, #tpu.memory_space<vmem>>, vector<256x128xbf16>
    %cst_21 = arith.constant dense<0.000000e+00> : vector<16x128xf32>
    %48 = tpu.matmul %46, %47, %cst_21 {dimension_numbers = #tpu.dot_dimension_numbers<[1], [0], [0], [1], [0, 0, 1, 1], [], []>} : vector<16x256xbf16>, vector<256x128xbf16>, vector<16x128xf32> -> vector<16x128xf32>
    %c0_22 = arith.constant 0 : index
    %c0_23 = arith.constant 0 : index
    %49 = vector.load %arg5[%c0_22, %c0_23] : memref<1x128xf32, #tpu.memory_space<vmem>>, vector<1x128xf32>
    %50 = vector.broadcast %49 : vector<1x128xf32> to vector<16x128xf32>
    %51 = arith.addf %48, %50 : vector<16x128xf32>
    %52 = arith.addf %51, %0 : vector<16x128xf32>
    %c0_24 = arith.constant 0 : index
    %c0_25 = arith.constant 0 : index
    %53 = vector.load %arg6[%c0_24, %c0_25] : memref<1x128xf32, #tpu.memory_space<vmem>>, vector<1x128xf32>
    %c0_26 = arith.constant 0 : index
    %c0_27 = arith.constant 0 : index
    %54 = vector.load %arg7[%c0_26, %c0_27] : memref<1x128xf32, #tpu.memory_space<vmem>>, vector<1x128xf32>
    %cst_28 = arith.constant dense<0.000000e+00> : vector<16xf32>
    %55 = vector.multi_reduction <add>, %52, %cst_28 [1] : vector<16x128xf32> to vector<16xf32>
    %56 = vector.shape_cast %55 : vector<16xf32> to vector<16x1xf32>
    %cst_29 = arith.constant 1.280000e+02 : f32
    %57 = vector.broadcast %cst_29 : f32 to vector<16x1xf32>
    %58 = arith.divf %56, %57 : vector<16x1xf32>
    %59 = vector.broadcast %58 : vector<16x1xf32> to vector<16x128xf32>
    %60 = arith.subf %52, %59 : vector<16x128xf32>
    %61 = arith.mulf %60, %60 : vector<16x128xf32>
    %cst_30 = arith.constant dense<0.000000e+00> : vector<16xf32>
    %62 = vector.multi_reduction <add>, %61, %cst_30 [1] : vector<16x128xf32> to vector<16xf32>
    %63 = vector.shape_cast %62 : vector<16xf32> to vector<16x1xf32>
    %cst_31 = arith.constant 1.280000e+02 : f32
    %64 = vector.broadcast %cst_31 : f32 to vector<16x1xf32>
    %65 = arith.divf %63, %64 : vector<16x1xf32>
    %cst_32 = arith.constant 9.99999974E-6 : f32
    %66 = vector.broadcast %cst_32 : f32 to vector<16x1xf32>
    %67 = arith.addf %65, %66 : vector<16x1xf32>
    %68 = math.rsqrt %67 : vector<16x1xf32>
    %69 = vector.broadcast %68 : vector<16x1xf32> to vector<16x128xf32>
    %70 = arith.mulf %60, %69 : vector<16x128xf32>
    %71 = vector.broadcast %53 : vector<1x128xf32> to vector<16x128xf32>
    %72 = arith.mulf %70, %71 : vector<16x128xf32>
    %73 = vector.broadcast %54 : vector<1x128xf32> to vector<16x128xf32>
    %74 = arith.addf %72, %73 : vector<16x128xf32>
    %c0_33 = arith.constant 0 : index
    %c0_34 = arith.constant 0 : index
    %75 = vector.load %arg8[%c0_33, %c0_34] : memref<16x128xf32, #tpu.memory_space<vmem>>, vector<16x128xf32>
    tpu.vector_store %arg8[%c0_33, %c0_34], %74 {strides = array<i32>} : memref<16x128xf32, #tpu.memory_space<vmem>>, vector<16x128xf32>,
    return
  }
  func.func @transform_0(%arg0: i32) -> (i32, i32) {
    %c0_i32 = arith.constant 0 : i32
    %c0_i32_0 = arith.constant 0 : i32
    return %arg0, %c0_i32 : i32, i32
  }
  func.func @transform_1(%arg0: i32) -> (i32, i32) {
    %c0_i32 = arith.constant 0 : i32
    %c0_i32_0 = arith.constant 0 : i32
    %c0_i32_1 = arith.constant 0 : i32
    return %c0_i32, %c0_i32_0 : i32, i32
  }
  func.func @transform_2(%arg0: i32) -> (i32, i32) {
    %c0_i32 = arith.constant 0 : i32
    %c0_i32_0 = arith.constant 0 : i32
    %c0_i32_1 = arith.constant 0 : i32
    return %c0_i32, %c0_i32_0 : i32, i32
  }
  func.func @transform_3(%arg0: i32) -> (i32, i32) {
    %c0_i32 = arith.constant 0 : i32
    %c0_i32_0 = arith.constant 0 : i32
    %c0_i32_1 = arith.constant 0 : i32
    return %c0_i32, %c0_i32_0 : i32, i32
  }
  func.func @transform_4(%arg0: i32) -> (i32, i32) {
    %c0_i32 = arith.constant 0 : i32
    %c0_i32_0 = arith.constant 0 : i32
    %c0_i32_1 = arith.constant 0 : i32
    return %c0_i32, %c0_i32_0 : i32, i32
  }
  func.func @transform_5(%arg0: i32) -> (i32, i32) {
    %c0_i32 = arith.constant 0 : i32
    %c0_i32_0 = arith.constant 0 : i32
    %c0_i32_1 = arith.constant 0 : i32
    return %c0_i32, %c0_i32_0 : i32, i32
  }
  func.func @transform_6(%arg0: i32) -> (i32, i32) {
    %c0_i32 = arith.constant 0 : i32
    %c0_i32_0 = arith.constant 0 : i32
    %c0_i32_1 = arith.constant 0 : i32
    return %c0_i32, %c0_i32_0 : i32, i32
  }
  func.func @transform_7(%arg0: i32) -> (i32, i32) {
    %c0_i32 = arith.constant 0 : i32
    %c0_i32_0 = arith.constant 0 : i32
    return %arg0, %c0_i32 : i32, i32
  }
}

module attributes {stable_mosaic.version = 11 : i64} {
  func.func @_cross_attn_block_kernel(%arg0: i32, %arg1: memref<1x8x128xf32, #tpu.memory_space<vmem>>, %arg2: memref<1x8x128xf32, #tpu.memory_space<vmem>>, %arg3: memref<128x128xbf16, #tpu.memory_space<vmem>>, %arg4: memref<1x128xf32, #tpu.memory_space<vmem>>, %arg5: memref<128x256xbf16, #tpu.memory_space<vmem>>, %arg6: memref<1x256xf32, #tpu.memory_space<vmem>>, %arg7: memref<128x128xbf16, #tpu.memory_space<vmem>>, %arg8: memref<1x128xf32, #tpu.memory_space<vmem>>, %arg9: memref<1x128xf32, #tpu.memory_space<vmem>>, %arg10: memref<1x128xf32, #tpu.memory_space<vmem>>, %arg11: memref<1x8x128xf32, #tpu.memory_space<vmem>>) attributes {dimension_semantics = [#tpu.dimension_semantics<parallel>], iteration_bounds = array<i64: 2>, scalar_prefetch = 0 : i64, scratch_operands = 0 : i64, tpu.core_type = #tpu.core_type<tc>, window_params = [{transform_indices = @transform_0, window_bounds = array<i64: 1, 8, 128>}, {transform_indices = @transform_1, window_bounds = array<i64: 1, 8, 128>}, {pipeline_mode = #tpu.pipeline_mode<synchronous>, transform_indices = @transform_2, window_bounds = array<i64: 128, 128>}, {pipeline_mode = #tpu.pipeline_mode<synchronous>, transform_indices = @transform_3, window_bounds = array<i64: 1, 128>}, {pipeline_mode = #tpu.pipeline_mode<synchronous>, transform_indices = @transform_4, window_bounds = array<i64: 128, 256>}, {pipeline_mode = #tpu.pipeline_mode<synchronous>, transform_indices = @transform_5, window_bounds = array<i64: 1, 256>}, {pipeline_mode = #tpu.pipeline_mode<synchronous>, transform_indices = @transform_6, window_bounds = array<i64: 128, 128>}, {pipeline_mode = #tpu.pipeline_mode<synchronous>, transform_indices = @transform_7, window_bounds = array<i64: 1, 128>}, {pipeline_mode = #tpu.pipeline_mode<synchronous>, transform_indices = @transform_8, window_bounds = array<i64: 1, 128>}, {pipeline_mode = #tpu.pipeline_mode<synchronous>, transform_indices = @transform_9, window_bounds = array<i64: 1, 128>}, {transform_indices = @transform_10, window_bounds = array<i64: 1, 8, 128>}]} {
    %c0 = arith.constant 0 : index
    %c0_0 = arith.constant 0 : index
    %c0_1 = arith.constant 0 : index
    %0 = vector.load %arg1[%c0, %c0_0, %c0_1] : memref<1x8x128xf32, #tpu.memory_space<vmem>>, vector<1x8x128xf32>
    %1 = vector.shape_cast %0 : vector<1x8x128xf32> to vector<8x128xf32>
    %c0_2 = arith.constant 0 : index
    %c0_3 = arith.constant 0 : index
    %c0_4 = arith.constant 0 : index
    %2 = vector.load %arg2[%c0_2, %c0_3, %c0_4] : memref<1x8x128xf32, #tpu.memory_space<vmem>>, vector<1x8x128xf32>
    %3 = vector.shape_cast %2 : vector<1x8x128xf32> to vector<8x128xf32>
    %4 = arith.truncf %1 : vector<8x128xf32> to vector<8x128xbf16>
    %c0_5 = arith.constant 0 : index
    %c0_6 = arith.constant 0 : index
    %5 = vector.load %arg3[%c0_5, %c0_6] : memref<128x128xbf16, #tpu.memory_space<vmem>>, vector<128x128xbf16>
    %cst = arith.constant dense<0.000000e+00> : vector<8x128xf32>
    %6 = tpu.matmul %4, %5, %cst {dimension_numbers = #tpu.dot_dimension_numbers<[1], [0], [0], [1], [0, 0, 1, 1], [], []>} : vector<8x128xbf16>, vector<128x128xbf16>, vector<8x128xf32> -> vector<8x128xf32>
    %c0_7 = arith.constant 0 : index
    %c0_8 = arith.constant 0 : index
    %7 = vector.load %arg4[%c0_7, %c0_8] : memref<1x128xf32, #tpu.memory_space<vmem>>, vector<1x128xf32>
    %8 = vector.broadcast %7 : vector<1x128xf32> to vector<8x128xf32>
    %9 = arith.addf %6, %8 : vector<8x128xf32>
    %10 = arith.truncf %3 : vector<8x128xf32> to vector<8x128xbf16>
    %c0_9 = arith.constant 0 : index
    %c0_10 = arith.constant 0 : index
    %11 = vector.load %arg5[%c0_9, %c0_10] : memref<128x256xbf16, #tpu.memory_space<vmem>>, vector<128x256xbf16>
    %cst_11 = arith.constant dense<0.000000e+00> : vector<8x256xf32>
    %12 = tpu.matmul %10, %11, %cst_11 {dimension_numbers = #tpu.dot_dimension_numbers<[1], [0], [0], [1], [0, 0, 1, 1], [], []>} : vector<8x128xbf16>, vector<128x256xbf16>, vector<8x256xf32> -> vector<8x256xf32>
    %c0_12 = arith.constant 0 : index
    %c0_13 = arith.constant 0 : index
    %13 = vector.load %arg6[%c0_12, %c0_13] : memref<1x256xf32, #tpu.memory_space<vmem>>, vector<1x256xf32>
    %14 = vector.broadcast %13 : vector<1x256xf32> to vector<8x256xf32>
    %15 = arith.addf %12, %14 : vector<8x256xf32>
    %16 = vector.extract_strided_slice %15 {offsets = [0, 0], sizes = [8, 128], strides = [1, 1]} : vector<8x256xf32> to vector<8x128xf32>
    %17 = vector.extract_strided_slice %15 {offsets = [0, 128], sizes = [8, 128], strides = [1, 1]} : vector<8x256xf32> to vector<8x128xf32>
    %18 = vector.shape_cast %9 : vector<8x128xf32> to vector<8x4x32xf32>
    %19 = vector.shape_cast %16 : vector<8x128xf32> to vector<8x4x32xf32>
    %20 = vector.shape_cast %17 : vector<8x128xf32> to vector<8x4x32xf32>
    %21 = arith.truncf %18 : vector<8x4x32xf32> to vector<8x4x32xbf16>
    %22 = arith.truncf %19 : vector<8x4x32xf32> to vector<8x4x32xbf16>
    "tpu.trace_start"() <{level = 10 : i32, message = "qhd,khd->hqk"}> : () -> ()
    %cst_14 = arith.constant dense<0.000000e+00> : vector<4x8x8xf32>
    %23 = tpu.matmul %21, %22, %cst_14 {dimension_numbers = #tpu.dot_dimension_numbers<[2], [2], [0], [0], [0, 1, 0, 0, 1, 0], [1], [1]>} : vector<8x4x32xbf16>, vector<8x4x32xbf16>, vector<4x8x8xf32> -> vector<4x8x8xf32>
    "tpu.trace_stop"() : () -> ()
    %cst_15 = arith.constant dense<0xFF800000> : vector<4x8xf32>
    %24 = vector.multi_reduction <maximumf>, %23, %cst_15 [2] : vector<4x8x8xf32> to vector<4x8xf32>
    %25 = vector.shape_cast %24 : vector<4x8xf32> to vector<4x8x1xf32>
    %26 = vector.broadcast %25 : vector<4x8x1xf32> to vector<4x8x8xf32>
    %27 = arith.subf %23, %26 : vector<4x8x8xf32>
    %28 = math.exp %27 : vector<4x8x8xf32>
    %cst_16 = arith.constant dense<0.000000e+00> : vector<4x8xf32>
    %29 = vector.multi_reduction <add>, %28, %cst_16 [2] : vector<4x8x8xf32> to vector<4x8xf32>
    %30 = vector.shape_cast %29 : vector<4x8xf32> to vector<4x8x1xf32>
    %31 = tpu.reciprocal %30 {approx = true} : vector<4x8x1xf32> -> vector<4x8x1xf32>
    %32 = vector.broadcast %31 : vector<4x8x1xf32> to vector<4x8x8xf32>
    %33 = arith.mulf %28, %32 : vector<4x8x8xf32>
    %34 = arith.truncf %33 : vector<4x8x8xf32> to vector<4x8x8xbf16>
    %35 = arith.truncf %20 : vector<8x4x32xf32> to vector<8x4x32xbf16>
    "tpu.trace_start"() <{level = 10 : i32, message = "hqk,khd->qhd"}> : () -> ()
    %cst_17 = arith.constant dense<0.000000e+00> : vector<4x32x8xf32>
    %36 = tpu.matmul %35, %34, %cst_17 {dimension_numbers = #tpu.dot_dimension_numbers<[0], [2], [2], [1], [0, 1, 0, 2, 1, 1], [1], [0]>} : vector<8x4x32xbf16>, vector<4x8x8xbf16>, vector<4x32x8xf32> -> vector<4x32x8xf32>
    %37 = tpu.transpose %36, [2, 0, 1] : vector<4x32x8xf32> -> vector<8x4x32xf32>
    "tpu.trace_stop"() : () -> ()
    %38 = vector.shape_cast %37 : vector<8x4x32xf32> to vector<8x128xf32>
    %39 = arith.truncf %38 : vector<8x128xf32> to vector<8x128xbf16>
    %c0_18 = arith.constant 0 : index
    %c0_19 = arith.constant 0 : index
    %40 = vector.load %arg7[%c0_18, %c0_19] : memref<128x128xbf16, #tpu.memory_space<vmem>>, vector<128x128xbf16>
    %cst_20 = arith.constant dense<0.000000e+00> : vector<8x128xf32>
    %41 = tpu.matmul %39, %40, %cst_20 {dimension_numbers = #tpu.dot_dimension_numbers<[1], [0], [0], [1], [0, 0, 1, 1], [], []>} : vector<8x128xbf16>, vector<128x128xbf16>, vector<8x128xf32> -> vector<8x128xf32>
    %c0_21 = arith.constant 0 : index
    %c0_22 = arith.constant 0 : index
    %42 = vector.load %arg8[%c0_21, %c0_22] : memref<1x128xf32, #tpu.memory_space<vmem>>, vector<1x128xf32>
    %43 = vector.broadcast %42 : vector<1x128xf32> to vector<8x128xf32>
    %44 = arith.addf %41, %43 : vector<8x128xf32>
    %45 = arith.addf %44, %1 : vector<8x128xf32>
    %c0_23 = arith.constant 0 : index
    %c0_24 = arith.constant 0 : index
    %46 = vector.load %arg9[%c0_23, %c0_24] : memref<1x128xf32, #tpu.memory_space<vmem>>, vector<1x128xf32>
    %c0_25 = arith.constant 0 : index
    %c0_26 = arith.constant 0 : index
    %47 = vector.load %arg10[%c0_25, %c0_26] : memref<1x128xf32, #tpu.memory_space<vmem>>, vector<1x128xf32>
    %cst_27 = arith.constant dense<0.000000e+00> : vector<8xf32>
    %48 = vector.multi_reduction <add>, %45, %cst_27 [1] : vector<8x128xf32> to vector<8xf32>
    %49 = vector.shape_cast %48 : vector<8xf32> to vector<8x1xf32>
    %cst_28 = arith.constant 1.280000e+02 : f32
    %50 = vector.broadcast %cst_28 : f32 to vector<8x1xf32>
    %51 = arith.divf %49, %50 : vector<8x1xf32>
    %52 = vector.broadcast %51 : vector<8x1xf32> to vector<8x128xf32>
    %53 = arith.subf %45, %52 : vector<8x128xf32>
    %54 = arith.mulf %53, %53 : vector<8x128xf32>
    %cst_29 = arith.constant dense<0.000000e+00> : vector<8xf32>
    %55 = vector.multi_reduction <add>, %54, %cst_29 [1] : vector<8x128xf32> to vector<8xf32>
    %56 = vector.shape_cast %55 : vector<8xf32> to vector<8x1xf32>
    %cst_30 = arith.constant 1.280000e+02 : f32
    %57 = vector.broadcast %cst_30 : f32 to vector<8x1xf32>
    %58 = arith.divf %56, %57 : vector<8x1xf32>
    %cst_31 = arith.constant 9.99999974E-6 : f32
    %59 = vector.broadcast %cst_31 : f32 to vector<8x1xf32>
    %60 = arith.addf %58, %59 : vector<8x1xf32>
    %61 = math.rsqrt %60 : vector<8x1xf32>
    %62 = vector.broadcast %61 : vector<8x1xf32> to vector<8x128xf32>
    %63 = arith.mulf %53, %62 : vector<8x128xf32>
    %64 = vector.broadcast %46 : vector<1x128xf32> to vector<8x128xf32>
    %65 = arith.mulf %63, %64 : vector<8x128xf32>
    %66 = vector.broadcast %47 : vector<1x128xf32> to vector<8x128xf32>
    %67 = arith.addf %65, %66 : vector<8x128xf32>
    %c0_32 = arith.constant 0 : index
    %c0_33 = arith.constant 0 : index
    %c0_34 = arith.constant 0 : index
    %68 = vector.load %arg11[%c0_32, %c0_33, %c0_34] : memref<1x8x128xf32, #tpu.memory_space<vmem>>, vector<1x8x128xf32>
    %69 = vector.shape_cast %68 : vector<1x8x128xf32> to vector<8x128xf32>
    %70 = vector.shape_cast %67 : vector<8x128xf32> to vector<1x8x128xf32>
    tpu.vector_store %arg11[%c0_32, %c0_33, %c0_34], %70 {strides = array<i32>} : memref<1x8x128xf32, #tpu.memory_space<vmem>>, vector<1x8x128xf32>,
    return
  }
  func.func @transform_0(%arg0: i32) -> (i32, i32, i32) {
    %c0_i32 = arith.constant 0 : i32
    %c0_i32_0 = arith.constant 0 : i32
    %c0_i32_1 = arith.constant 0 : i32
    return %arg0, %c0_i32, %c0_i32_0 : i32, i32, i32
  }
  func.func @transform_1(%arg0: i32) -> (i32, i32, i32) {
    %c0_i32 = arith.constant 0 : i32
    %c0_i32_0 = arith.constant 0 : i32
    %c0_i32_1 = arith.constant 0 : i32
    return %arg0, %c0_i32, %c0_i32_0 : i32, i32, i32
  }
  func.func @transform_2(%arg0: i32) -> (i32, i32) {
    %c0_i32 = arith.constant 0 : i32
    %c0_i32_0 = arith.constant 0 : i32
    %c0_i32_1 = arith.constant 0 : i32
    return %c0_i32, %c0_i32_0 : i32, i32
  }
  func.func @transform_3(%arg0: i32) -> (i32, i32) {
    %c0_i32 = arith.constant 0 : i32
    %c0_i32_0 = arith.constant 0 : i32
    %c0_i32_1 = arith.constant 0 : i32
    return %c0_i32, %c0_i32_0 : i32, i32
  }
  func.func @transform_4(%arg0: i32) -> (i32, i32) {
    %c0_i32 = arith.constant 0 : i32
    %c0_i32_0 = arith.constant 0 : i32
    %c0_i32_1 = arith.constant 0 : i32
    return %c0_i32, %c0_i32_0 : i32, i32
  }
  func.func @transform_5(%arg0: i32) -> (i32, i32) {
    %c0_i32 = arith.constant 0 : i32
    %c0_i32_0 = arith.constant 0 : i32
    %c0_i32_1 = arith.constant 0 : i32
    return %c0_i32, %c0_i32_0 : i32, i32
  }
  func.func @transform_6(%arg0: i32) -> (i32, i32) {
    %c0_i32 = arith.constant 0 : i32
    %c0_i32_0 = arith.constant 0 : i32
    %c0_i32_1 = arith.constant 0 : i32
    return %c0_i32, %c0_i32_0 : i32, i32
  }
  func.func @transform_7(%arg0: i32) -> (i32, i32) {
    %c0_i32 = arith.constant 0 : i32
    %c0_i32_0 = arith.constant 0 : i32
    %c0_i32_1 = arith.constant 0 : i32
    return %c0_i32, %c0_i32_0 : i32, i32
  }
  func.func @transform_8(%arg0: i32) -> (i32, i32) {
    %c0_i32 = arith.constant 0 : i32
    %c0_i32_0 = arith.constant 0 : i32
    %c0_i32_1 = arith.constant 0 : i32
    return %c0_i32, %c0_i32_0 : i32, i32
  }
  func.func @transform_9(%arg0: i32) -> (i32, i32) {
    %c0_i32 = arith.constant 0 : i32
    %c0_i32_0 = arith.constant 0 : i32
    %c0_i32_1 = arith.constant 0 : i32
    return %c0_i32, %c0_i32_0 : i32, i32
  }
  func.func @transform_10(%arg0: i32) -> (i32, i32, i32) {
    %c0_i32 = arith.constant 0 : i32
    %c0_i32_0 = arith.constant 0 : i32
    %c0_i32_1 = arith.constant 0 : i32
    return %arg0, %c0_i32, %c0_i32_0 : i32, i32, i32
  }
}

</mosaic_0001>

<llo_original>
// kernel: audio_transformer_enc_dec.9
$region0: #{audio_transformer_enc_dec.9}
  #allocation0 [shape = 'u32[]', space=smem, size = 0x4, offset = 0x4, fixed_abs, tag = 'smem constant byte address 0x4 - core index']
  #allocation1 [shape = 'u32[72,128]{1,0:T(1,128)}', space=vmem, size = 0x9000, scoped, tag = 'internal scratch']
  %s0 = inlined_call_operand.vmem [shape: f32[16,128], index: 0, kind: input, shape index: {}]
  %s1 = inlined_call_operand.vmem [shape: f32[1,128], index: 1, kind: input, shape index: {}]
  %s2 = inlined_call_operand.vmem [shape: f32[1,128], index: 2, kind: input, shape index: {}]
  %s3 = inlined_call_operand.vmem [shape: f32[16,128], index: 3, kind: output, shape index: {}]
  %s4 = sld [smem:[#allocation0]]
  $region22: #{audio_transformer_enc_dec.9} parent=0
    _
  %s6 = ssub.s32 1, %s4
  %s7 = scalar_select 0, %s6, %s4
  // Predicated region
  $region2: #{audio_transformer_enc_dec.9} parent=0 // pred_check
    _
  $region3: #{audio_transformer_enc_dec.9} parent=0 // pred_check_branch
    %9 = sbr.rel (0) target = $region5
  $region4: #{audio_transformer_enc_dec.9} parent=0 // pred_region
    _
  $region5: #{audio_transformer_enc_dec.9} parent=0 // pred_fallthru
    _
  // Predicated region
  $region6: #{audio_transformer_enc_dec.9} parent=0 // pred_check
    _
  $region7: #{audio_transformer_enc_dec.9} parent=0 // pred_check_branch
    %11 = sbr.rel (0) target = $region9
  $region8: #{audio_transformer_enc_dec.9} parent=0 // pred_region
    _
  $region9: #{audio_transformer_enc_dec.9} parent=0 // pred_fallthru
    _
  // Predicated region
  $region10: #{audio_transformer_enc_dec.9} parent=0 // pred_check
    _
  $region11: #{audio_transformer_enc_dec.9} parent=0 // pred_check_branch
    %13 = sbr.rel (0) target = $region13
  $region12: #{audio_transformer_enc_dec.9} parent=0 // pred_region
    _
  $region13: #{audio_transformer_enc_dec.9} parent=0 // pred_fallthru
    _
  %v14 = vld [vmem:[%s0] sm:$0xff]
  %v15 = vld [vmem:[%s0 + $0x8] sm:$0xff]
  %v16 = vld [vmem:[%s1] sm:$0x1]
  %v17 = vld [vmem:[%s2] sm:$0x1]
  %18 = vadd.xlane.f32.xlu0 %v14
  %v19 = vpop.xlane.xlu0 %18
  %20 = vadd.xlane.f32.xlu0 %v15
  %v21 = vpop.xlane.xlu0 %20
  %v22 = vrcp.pop 128.0
  %v23 = vmul.f32 128.0, %v22
  %v24 = vsub.f32 1.0, %v23
  %v25 = vmul.f32 %v22, %v24
  %v26 = vadd.f32 %v22, %v25
  %vm27 = vweird.f32 %v22
  %v28 = vsel %vm27, %v22, %v26
  %v29 = vmul.f32 %v19, %v28
  %v30 = vmul.f32 %v21, %v28
  %v31 = vsub.f32 %v14, %v29
  %v32 = vsub.f32 %v15, %v30
  %v33 = vmul.f32 %v31, %v31
  %v34 = vmul.f32 %v32, %v32
  %35 = vadd.xlane.f32.xlu0 %v33
  %v36 = vpop.xlane.xlu0 %35
  %37 = vadd.xlane.f32.xlu0 %v34
  %v38 = vpop.xlane.xlu0 %37
  %v39 = vmul.f32 %v36, %v28
  %v40 = vmul.f32 %v38, %v28
  %v41 = vadd.f32 %v39, 1e-05
  %v42 = vadd.f32 %v40, 1e-05
  %v43 = vrsqrt.pop %v41
  %v44 = vmul.f32 %v43, %v41
  %v45 = vmul.f32 %v44, %v43
  %v46 = vmul.f32 0.5, %v45
  %v47 = vsub.f32 1.5, %v46
  %v48 = vmul.f32 %v43, %v47
  %vm49 = vweird.f32 %v41
  %vm50 = vweird.f32 %v43
  %vm51 = vmor %vm49, %vm50
  %v52 = vsel %vm51, %v43, %v48
  %v53 = vrsqrt.pop %v42
  %v54 = vmul.f32 %v53, %v42
  %v55 = vmul.f32 %v54, %v53
  %v56 = vmul.f32 0.5, %v55
  %v57 = vsub.f32 1.5, %v56
  %v58 = vmul.f32 %v53, %v57
  %vm59 = vweird.f32 %v42
  %vm60 = vweird.f32 %v53
  %vm61 = vmor %vm59, %vm60
  %v62 = vsel %vm61, %v53, %v58
  %v63 = vmul.f32 %v31, %v52
  %v64 = vmul.f32 %v32, %v62
  %v66 = vperm.slane %v16, 0
  %v68 = vmul.f32 %v63, %v66
  %v69 = vmul.f32 %v64, %v66
  %v71 = vperm.slane %v17, 0
  %v73 = vadd.f32 %v68, %v71
  %v74 = vadd.f32 %v69, %v71
  %75 = vst [vmem:[%s3] sm:$0xff] %v73
  %76 = vst [vmem:[%s3 + $0x8] sm:$0xff] %v74
  // Predicated region
  $region14: #{audio_transformer_enc_dec.9} parent=0 // pred_check
    _
  $region15: #{audio_transformer_enc_dec.9} parent=0 // pred_check_branch
    %78 = sbr.rel (0) target = $region17
  $region16: #{audio_transformer_enc_dec.9} parent=0 // pred_region
    _
  $region17: #{audio_transformer_enc_dec.9} parent=0 // pred_fallthru
    _
  // Predicated region
  $region18: #{audio_transformer_enc_dec.9} parent=0 // pred_check
    _
  $region19: #{audio_transformer_enc_dec.9} parent=0 // pred_check_branch
    %80 = sbr.rel (0) target = $region21
  $region20: #{audio_transformer_enc_dec.9} parent=0 // pred_region
    _
  $region21: #{audio_transformer_enc_dec.9} parent=0 // pred_fallthru
    _

// kernel: audio_transformer_enc_dec.8
$region0: #{audio_transformer_enc_dec.8}
  #allocation0 [shape = 'u32[]', space=smem, size = 0x4, offset = 0x4, fixed_abs, tag = 'smem constant byte address 0x4 - core index']
  #allocation1 [shape = 'u32[72,128]{1,0:T(1,128)}', space=vmem, size = 0x9000, scoped, tag = 'internal scratch']
  %s0 = inlined_call_operand.vmem [shape: f32[16,128], index: 0, kind: input, shape index: {}]
  %s1 = inlined_call_operand.hbm [shape: bf16[128,256], index: 1, kind: input, shape index: {}]
  %s2 = inlined_call_operand.vmem [shape: f32[1,256], index: 2, kind: input, shape index: {}]
  %s3 = inlined_call_operand.hbm [shape: bf16[256,128], index: 3, kind: input, shape index: {}]
  %s4 = inlined_call_operand.vmem [shape: f32[1,128], index: 4, kind: input, shape index: {}]
  %s5 = inlined_call_operand.vmem [shape: f32[1,128], index: 5, kind: input, shape index: {}]
  %s6 = inlined_call_operand.vmem [shape: f32[1,128], index: 6, kind: input, shape index: {}]
  %s7 = inlined_call_operand.vmem [shape: f32[16,128], index: 7, kind: output, shape index: {}]
  %s8 = sld [smem:[#allocation0]]
  $region46: #{audio_transformer_enc_dec.8} parent=0
    _
  %s10 = ssub.s32 1, %s8
  %s11 = scalar_select 0, %s10, %s8
  $region1: #{audio_transformer_enc_dec.8} parent=0
    #allocation2 [shape = 'u8[65536]{0}', space=vmem, size = 0x10000, scoped, tag = 'input window, operand 1, single buffered']
    #allocation3 [shape = 's32[1]{0}', space=sflag, size = 0x4, scoped, tag = 'scoped memory for audio_transformer_enc_dec.8']
    #allocation4 [shape = 'u8[65536]{0}', space=vmem, size = 0x10000, scoped, tag = 'input window, operand 3, single buffered']
    #allocation5 [shape = 's32[1]{0}', space=sflag, size = 0x4, scoped, tag = 'scoped memory for audio_transformer_enc_dec.8']
    %12 = vsyncpa [#allocation3], 0
    %13 = vsyncpa [#allocation5], 0
    // Predicated region
    $region2: #{audio_transformer_enc_dec.8} parent=1 // pred_check
      _
    $region3: #{audio_transformer_enc_dec.8} parent=1 // pred_check_branch
      %15 = sbr.rel (0) target = $region5
    $region4: #{audio_transformer_enc_dec.8} parent=1 // pred_region
      _
    $region5: #{audio_transformer_enc_dec.8} parent=1 // pred_fallthru
      _
    // Predicated region
    $region6: #{audio_transformer_enc_dec.8} parent=1 // pred_check
      _
    $region7: #{audio_transformer_enc_dec.8} parent=1 // pred_check_branch
      %17 = sbr.rel (0) target = $region9
    $region8: #{audio_transformer_enc_dec.8} parent=1 // pred_region
      %19 = vsyncadd [#allocation3], 0
      %s20 = sshll.u32 %s1, 4
      %s21 = int_to_ptr.hbm [resolvable:$true] %s20
      %s22 = sshll.u32 [#allocation2], 4
      %s23 = int_to_ptr.vmem [resolvable:$true] %s22
      %28 = dma.hbm_to_vmem [thread:$0]  %s21, 2048, %s23, [#allocation3], 128, 128, 8
    $region9: #{audio_transformer_enc_dec.8} parent=1 // pred_fallthru
      _
    // Predicated region
    $region10: #{audio_transformer_enc_dec.8} parent=1 // pred_check
      _
    $region11: #{audio_transformer_enc_dec.8} parent=1 // pred_check_branch
      %30 = sbr.rel (0) target = $region13
    $region12: #{audio_transformer_enc_dec.8} parent=1 // pred_region
      _
    $region13: #{audio_transformer_enc_dec.8} parent=1 // pred_fallthru
      _
    // Predicated region
    $region14: #{audio_transformer_enc_dec.8} parent=1 // pred_check
      _
    $region15: #{audio_transformer_enc_dec.8} parent=1 // pred_check_branch
      %32 = sbr.rel (0) target = $region17
    $region16: #{audio_transformer_enc_dec.8} parent=1 // pred_region
      %34 = vsyncadd [#allocation5], 0
      %s35 = sshll.u32 %s3, 4
      %s36 = int_to_ptr.hbm [resolvable:$true] %s35
      %s37 = sshll.u32 [#allocation4], 4
      %s38 = int_to_ptr.vmem [resolvable:$true] %s37
      %43 = dma.hbm_to_vmem [thread:$0]  %s36, 2048, %s38, [#allocation5], 64, 64, 4
    $region17: #{audio_transformer_enc_dec.8} parent=1 // pred_fallthru
      _
    // Predicated region
    $region18: #{audio_transformer_enc_dec.8} parent=1 // pred_check
      _
    $region19: #{audio_transformer_enc_dec.8} parent=1 // pred_check_branch
      %45 = sbr.rel (0) target = $region21
    $region20: #{audio_transformer_enc_dec.8} parent=1 // pred_region
      _
    $region21: #{audio_transformer_enc_dec.8} parent=1 // pred_fallthru
      _
    // Predicated region
    $region22: #{audio_transformer_enc_dec.8} parent=1 // pred_check
      _
    $region23: #{audio_transformer_enc_dec.8} parent=1 // pred_check_branch
      %47 = sbr.rel (0) target = $region25
    $region24: #{audio_transformer_enc_dec.8} parent=1 // pred_region
      _
    $region25: #{audio_transformer_enc_dec.8} parent=1 // pred_fallthru
      _
    // Predicated region
    $region26: #{audio_transformer_enc_dec.8} parent=1 // pred_check
      _
    $region27: #{audio_transformer_enc_dec.8} parent=1 // pred_check_branch
      %49 = sbr.rel (0) target = $region29
    $region28: #{audio_transformer_enc_dec.8} parent=1 // pred_region
      _
    $region29: #{audio_transformer_enc_dec.8} parent=1 // pred_fallthru
      _
    // Predicated region
    $region30: #{audio_transformer_enc_dec.8} parent=1 // pred_check
      _
    $region31: #{audio_transformer_enc_dec.8} parent=1 // pred_check_branch
      %51 = sbr.rel (0) target = $region33
    $region32: #{audio_transformer_enc_dec.8} parent=1 // pred_region
      %53 = dma.done [#allocation3], 2048
    $region33: #{audio_transformer_enc_dec.8} parent=1 // pred_fallthru
      _
    // Predicated region
    $region34: #{audio_transformer_enc_dec.8} parent=1 // pred_check
      _
    $region35: #{audio_transformer_enc_dec.8} parent=1 // pred_check_branch
      %55 = sbr.rel (0) target = $region37
    $region36: #{audio_transformer_enc_dec.8} parent=1 // pred_region
      %57 = dma.done [#allocation5], 2048
    $region37: #{audio_transformer_enc_dec.8} parent=1 // pred_fallthru
      _
    %v58 = vld [vmem:[%s0] sm:$0xff]
    %v59 = vld [vmem:[%s0 + $0x8] sm:$0xff]
    %v60 = vpack.c.bf16 %v59, %v58
    %v61 = vld [vmem:[#allocation2] sm:$0xff]
    %v62 = vld [vmem:[#allocation2 + $0x8] sm:$0xff]
    %v63 = vld [vmem:[#allocation2 + $0x10] sm:$0xff]
    %v64 = vld [vmem:[#allocation2 + $0x18] sm:$0xff]
    %v65 = vld [vmem:[#allocation2 + $0x20] sm:$0xff]
    %v66 = vld [vmem:[#allocation2 + $0x28] sm:$0xff]
    %v67 = vld [vmem:[#allocation2 + $0x30] sm:$0xff]
    %v68 = vld [vmem:[#allocation2 + $0x38] sm:$0xff]
    %v69 = vld [vmem:[#allocation2 + $0x40] sm:$0xff]
    %v70 = vld [vmem:[#allocation2 + $0x48] sm:$0xff]
    %v71 = vld [vmem:[#allocation2 + $0x50] sm:$0xff]
    %v72 = vld [vmem:[#allocation2 + $0x58] sm:$0xff]
    %v73 = vld [vmem:[#allocation2 + $0x60] sm:$0xff]
    %v74 = vld [vmem:[#allocation2 + $0x68] sm:$0xff]
    %v75 = vld [vmem:[#allocation2 + $0x70] sm:$0xff]
    %v76 = vld [vmem:[#allocation2 + $0x78] sm:$0xff]
    %v77 = vld [vmem:[%s2] sm:$0x3]
    %v79 = vperm.slane %v77, 0
    %v80 = vperm.slane %v77, 1
    %v99 = vunpack.c.l.b16 %v61
    %v100 = vunpack.c.h.b16 %v61
    %v101 = vunpack.c.l.b16 %v62
    %v102 = vunpack.c.h.b16 %v62
    %v103 = vunpack.c.l.b16 %v63
    %v104 = vunpack.c.h.b16 %v63
    %v105 = vunpack.c.l.b16 %v64
    %v106 = vunpack.c.h.b16 %v64
    %v107 = vunpack.c.l.b16 %v65
    %v108 = vunpack.c.h.b16 %v65
    %v109 = vunpack.c.l.b16 %v66
    %v110 = vunpack.c.h.b16 %v66
    %v111 = vunpack.c.l.b16 %v67
    %v112 = vunpack.c.h.b16 %v67
    %v113 = vunpack.c.l.b16 %v68
    %v114 = vunpack.c.h.b16 %v68
    %v115 = vunpack.c.l.b16 %v69
    %v116 = vunpack.c.h.b16 %v69
    %v117 = vunpack.c.l.b16 %v70
    %v118 = vunpack.c.h.b16 %v70
    %v119 = vunpack.c.l.b16 %v71
    %v120 = vunpack.c.h.b16 %v71
    %v121 = vunpack.c.l.b16 %v72
    %v122 = vunpack.c.h.b16 %v72
    %v123 = vunpack.c.l.b16 %v73
    %v124 = vunpack.c.h.b16 %v73
    %v125 = vunpack.c.l.b16 %v74
    %v126 = vunpack.c.h.b16 %v74
    %v127 = vunpack.c.l.b16 %v75
    %v128 = vunpack.c.h.b16 %v75
    %v129 = vunpack.c.l.b16 %v76
    %v130 = vunpack.c.h.b16 %v76
    %v131 = vpack.c.b16 %v101, %v99
    %v132 = vpack.c.b16 %v102, %v100
    %v133 = vpack.c.b16 %v105, %v103
    %v134 = vpack.c.b16 %v106, %v104
    %v135 = vpack.c.b16 %v109, %v107
    %v136 = vpack.c.b16 %v110, %v108
    %v137 = vpack.c.b16 %v113, %v111
    %v138 = vpack.c.b16 %v114, %v112
    %v139 = vpack.c.b16 %v117, %v115
    %v140 = vpack.c.b16 %v118, %v116
    %v141 = vpack.c.b16 %v121, %v119
    %v142 = vpack.c.b16 %v122, %v120
    %v143 = vpack.c.b16 %v125, %v123
    %v144 = vpack.c.b16 %v126, %v124
    %v145 = vpack.c.b16 %v129, %v127
    %v146 = vpack.c.b16 %v130, %v128
    %163 = vmatpush.bf16.msra.mxu0 %v145
    %164 = vmatpush.bf16.msra.mxu0 %v143
    %165 = vmatpush.bf16.msra.mxu0 %v141
    %166 = vmatpush.bf16.msra.mxu0 %v139
    %167 = vmatpush.bf16.msra.mxu0 %v137
    %168 = vmatpush.bf16.msra.mxu0 %v135
    %169 = vmatpush.bf16.msra.mxu0 %v133
    %170 = vmatpush.bf16.msra.mxu0 %v131
    %171 = vmatmul.bf16.gmra.mxu0 %v60
    %v172 = vpop.f32.mrf.mxu0
    %v173 = vadd.f32 %v79, %v172
    %v174 = vpop.f32.mrf.mxu0
    %v175 = vadd.f32 %v79, %v174
    %176 = vdwg.mxu0
    %177 = vmatpush.bf16.msra.mxu0 %v146
    %178 = vmatpush.bf16.msra.mxu0 %v144
    %179 = vmatpush.bf16.msra.mxu0 %v142
    %180 = vmatpush.bf16.msra.mxu0 %v140
    %181 = vmatpush.bf16.msra.mxu0 %v138
    %182 = vmatpush.bf16.msra.mxu0 %v136
    %183 = vmatpush.bf16.msra.mxu0 %v134
    %184 = vmatpush.bf16.msra.mxu0 %v132
    %185 = vmatmul.bf16.gmra.mxu0 %v60
    %v186 = vpop.f32.mrf.mxu0
    %v187 = vadd.f32 %v80, %v186
    %v188 = vpop.f32.mrf.mxu0
    %v189 = vadd.f32 %v80, %v188
    %190 = vdwg.mxu0
    %v191 = vmul.f32 %v173, 0.5
    %v192 = vmul.f32 %v187, 0.5
    %v193 = vmul.f32 %v175, 0.5
    %v194 = vmul.f32 %v189, 0.5
    %v195 = vmul.f32 %v173, 0.70710677
    %v196 = vmul.f32 %v187, 0.70710677
    %v197 = vmul.f32 %v175, 0.70710677
    %v198 = vmul.f32 %v189, 0.70710677
    %v199 = vand.u32 2147483647, %v195
    %v200 = vand.u32 2147483647, %v196
    %v201 = vand.u32 2147483647, %v197
    %v202 = vand.u32 2147483647, %v198
    %v203 = vmul.f32 %v199, 0.3275911
    %v204 = vmul.f32 %v200, 0.3275911
    %v205 = vmul.f32 %v201, 0.3275911
    %v206 = vmul.f32 %v202, 0.3275911
    %v207 = vadd.f32 %v203, 1.0
    %v208 = vadd.f32 %v204, 1.0
    %v209 = vadd.f32 %v205, 1.0
    %v210 = vadd.f32 %v206, 1.0
    %v211 = vrcp.pop %v207
    %v212 = vrcp.pop %v208
    %v213 = vrcp.pop %v209
    %v214 = vrcp.pop %v210
    %v215 = vmul.f32 %v211, 1.0614054
    %v216 = vmul.f32 %v212, 1.0614054
    %v217 = vmul.f32 %v213, 1.0614054
    %v218 = vmul.f32 %v214, 1.0614054
    %v219 = vadd.f32 %v215, -1.4531521
    %v220 = vadd.f32 %v216, -1.4531521
    %v221 = vadd.f32 %v217, -1.4531521
    %v222 = vadd.f32 %v218, -1.4531521
    %v223 = vmul.f32 %v219, %v211
    %v224 = vmul.f32 %v220, %v212
    %v225 = vmul.f32 %v221, %v213
    %v226 = vmul.f32 %v222, %v214
    %v227 = vadd.f32 %v223, 1.4214138
    %v228 = vadd.f32 %v224, 1.4214138
    %v229 = vadd.f32 %v225, 1.4214138
    %v230 = vadd.f32 %v226, 1.4214138
    %v231 = vmul.f32 %v227, %v211
    %v232 = vmul.f32 %v228, %v212
    %v233 = vmul.f32 %v229, %v213
    %v234 = vmul.f32 %v230, %v214
    %v235 = vadd.f32 %v231, -0.28449672
    %v236 = vadd.f32 %v232, -0.28449672
    %v237 = vadd.f32 %v233, -0.28449672
    %v238 = vadd.f32 %v234, -0.28449672
    %v239 = vmul.f32 %v235, %v211
    %v240 = vmul.f32 %v236, %v212
    %v241 = vmul.f32 %v237, %v213
    %v242 = vmul.f32 %v238, %v214
    %v243 = vadd.f32 %v239, 0.2548296
    %v244 = vadd.f32 %v240, 0.2548296
    %v245 = vadd.f32 %v241, 0.2548296
    %v246 = vadd.f32 %v242, 0.2548296
    %v247 = vmul.f32 %v243, %v211
    %v248 = vmul.f32 %v244, %v212
    %v249 = vmul.f32 %v245, %v213
    %v250 = vmul.f32 %v246, %v214
    %v251 = vsub.f32 0.0, %v199
    %v252 = vsub.f32 0.0, %v200
    %v253 = vsub.f32 0.0, %v201
    %v254 = vsub.f32 0.0, %v202
    %v255 = vmul.f32 %v251, %v199
    %v256 = vmul.f32 %v252, %v200
    %v257 = vmul.f32 %v253, %v201
    %v258 = vmul.f32 %v254, %v202
    %v259 = vmul.f32 %v255, 1.442695
    %v260 = vpow.pop %v259
    %v261 = vmul.f32 %v256, 1.442695
    %v262 = vpow.pop %v261
    %v263 = vmul.f32 %v257, 1.442695
    %v264 = vpow.pop %v263
    %v265 = vmul.f32 %v258, 1.442695
    %v266 = vpow.pop %v265
    %v267 = vmul.f32 %v247, %v260
    %v268 = vmul.f32 %v248, %v262
    %v269 = vmul.f32 %v249, %v264
    %v270 = vmul.f32 %v250, %v266
    %v271 = vsub.f32 1.0, %v267
    %v272 = vsub.f32 1.0, %v268
    %v273 = vsub.f32 1.0, %v269
    %v274 = vsub.f32 1.0, %v270
    %vm275 = vcmp.lt.f32.partialorder %v195, 0.0
    %vm276 = vcmp.lt.f32.partialorder %v196, 0.0
    %vm277 = vcmp.lt.f32.partialorder %v197, 0.0
    %vm278 = vcmp.lt.f32.partialorder %v198, 0.0
    %v279 = vsub.f32 0.0, %v271
    %v280 = vsub.f32 0.0, %v272
    %v281 = vsub.f32 0.0, %v273
    %v282 = vsub.f32 0.0, %v274
    %v283 = vsel %vm275, %v279, %v271
    %v284 = vsel %vm276, %v280, %v272
    %v285 = vsel %vm277, %v281, %v273
    %v286 = vsel %vm278, %v282, %v274
    %v287 = vadd.f32 %v283, 1.0
    %v288 = vadd.f32 %v284, 1.0
    %v289 = vadd.f32 %v285, 1.0
    %v290 = vadd.f32 %v286, 1.0
    %v291 = vmul.f32 %v191, %v287
    %v292 = vmul.f32 %v192, %v288
    %v293 = vmul.f32 %v193, %v289
    %v294 = vmul.f32 %v194, %v290
    %v295 = vpack.c.bf16 %v293, %v291
    %v296 = vpack.c.bf16 %v294, %v292
    %v297 = vld [vmem:[#allocation4] sm:$0xf]
    %v298 = vld [vmem:[#allocation4 + $0x4] sm:$0xf]
    %v299 = vld [vmem:[#allocation4 + $0x8] sm:$0xf]
    %v300 = vld [vmem:[#allocation4 + $0xc] sm:$0xf]
    %v301 = vld [vmem:[#allocation4 + $0x10] sm:$0xf]
    %v302 = vld [vmem:[#allocation4 + $0x14] sm:$0xf]
    %v303 = vld [vmem:[#allocation4 + $0x18] sm:$0xf]
    %v304 = vld [vmem:[#allocation4 + $0x1c] sm:$0xf]
    %v305 = vld [vmem:[#allocation4 + $0x20] sm:$0xf]
    %v306 = vld [vmem:[#allocation4 + $0x24] sm:$0xf]
    %v307 = vld [vmem:[#allocation4 + $0x28] sm:$0xf]
    %v308 = vld [vmem:[#allocation4 + $0x2c] sm:$0xf]
    %v309 = vld [vmem:[#allocation4 + $0x30] sm:$0xf]
    %v310 = vld [vmem:[#allocation4 + $0x34] sm:$0xf]
    %v311 = vld [vmem:[#allocation4 + $0x38] sm:$0xf]
    %v312 = vld [vmem:[#allocation4 + $0x3c] sm:$0xf]
    %v313 = vld [vmem:[#allocation4 + $0x40] sm:$0xf]
    %v314 = vld [vmem:[#allocation4 + $0x44] sm:$0xf]
    %v315 = vld [vmem:[#allocation4 + $0x48] sm:$0xf]
    %v316 = vld [vmem:[#allocation4 + $0x4c] sm:$0xf]
    %v317 = vld [vmem:[#allocation4 + $0x50] sm:$0xf]
    %v318 = vld [vmem:[#allocation4 + $0x54] sm:$0xf]
    %v319 = vld [vmem:[#allocation4 + $0x58] sm:$0xf]
    %v320 = vld [vmem:[#allocation4 + $0x5c] sm:$0xf]
    %v321 = vld [vmem:[#allocation4 + $0x60] sm:$0xf]
    %v322 = vld [vmem:[#allocation4 + $0x64] sm:$0xf]
    %v323 = vld [vmem:[#allocation4 + $0x68] sm:$0xf]
    %v324 = vld [vmem:[#allocation4 + $0x6c] sm:$0xf]
    %v325 = vld [vmem:[#allocation4 + $0x70] sm:$0xf]
    %v326 = vld [vmem:[#allocation4 + $0x74] sm:$0xf]
    %v327 = vld [vmem:[#allocation4 + $0x78] sm:$0xf]
    %v328 = vld [vmem:[#allocation4 + $0x7c] sm:$0xf]
    %v329 = vld [vmem:[%s4] sm:$0x1]
    %v331 = vperm.slane %v329, 0
    %v365 = vunpack.c.l.b16 %v297
    %v366 = vunpack.c.l.b16 %v298
    %v367 = vunpack.c.l.b16 %v299
    %v368 = vunpack.c.l.b16 %v300
    %v369 = vunpack.c.l.b16 %v301
    %v370 = vunpack.c.l.b16 %v302
    %v371 = vunpack.c.l.b16 %v303
    %v372 = vunpack.c.l.b16 %v304
    %v373 = vunpack.c.l.b16 %v305
    %v374 = vunpack.c.l.b16 %v306
    %v375 = vunpack.c.l.b16 %v307
    %v376 = vunpack.c.l.b16 %v308
    %v377 = vunpack.c.l.b16 %v309
    %v378 = vunpack.c.l.b16 %v310
    %v379 = vunpack.c.l.b16 %v311
    %v380 = vunpack.c.l.b16 %v312
    %v381 = vunpack.c.l.b16 %v313
    %v382 = vunpack.c.l.b16 %v314
    %v383 = vunpack.c.l.b16 %v315
    %v384 = vunpack.c.l.b16 %v316
    %v385 = vunpack.c.l.b16 %v317
    %v386 = vunpack.c.l.b16 %v318
    %v387 = vunpack.c.l.b16 %v319
    %v388 = vunpack.c.l.b16 %v320
    %v389 = vunpack.c.l.b16 %v321
    %v390 = vunpack.c.l.b16 %v322
    %v391 = vunpack.c.l.b16 %v323
    %v392 = vunpack.c.l.b16 %v324
    %v393 = vunpack.c.l.b16 %v325
    %v394 = vunpack.c.l.b16 %v326
    %v395 = vunpack.c.l.b16 %v327
    %v396 = vunpack.c.l.b16 %v328
    %v397 = vpack.c.b16 %v366, %v365
    %v398 = vpack.c.b16 %v368, %v367
    %v399 = vpack.c.b16 %v370, %v369
    %v400 = vpack.c.b16 %v372, %v371
    %v401 = vpack.c.b16 %v374, %v373
    %v402 = vpack.c.b16 %v376, %v375
    %v403 = vpack.c.b16 %v378, %v377
    %v404 = vpack.c.b16 %v380, %v379
    %v405 = vpack.c.b16 %v382, %v381
    %v406 = vpack.c.b16 %v384, %v383
    %v407 = vpack.c.b16 %v386, %v385
    %v408 = vpack.c.b16 %v388, %v387
    %v409 = vpack.c.b16 %v390, %v389
    %v410 = vpack.c.b16 %v392, %v391
    %v411 = vpack.c.b16 %v394, %v393
    %v412 = vpack.c.b16 %v396, %v395
    %429 = vmatpush.bf16.msra.mxu0 %v404
    %430 = vmatpush.bf16.msra.mxu0 %v403
    %431 = vmatpush.bf16.msra.mxu0 %v402
    %432 = vmatpush.bf16.msra.mxu0 %v401
    %433 = vmatpush.bf16.msra.mxu0 %v400
    %434 = vmatpush.bf16.msra.mxu0 %v399
    %435 = vmatpush.bf16.msra.mxu0 %v398
    %436 = vmatpush.bf16.msra.mxu0 %v397
    %437 = vmatmul.bf16.gmra.mxu0 %v295
    %v438 = vpop.f32.mrf.mxu0
    %v439 = vadd.f32 %v331, %v438
    %v440 = vpop.f32.mrf.mxu0
    %v441 = vadd.f32 %v331, %v440
    %442 = vdwg.mxu0
    %443 = vmatpush.bf16.msra.mxu0 %v412
    %444 = vmatpush.bf16.msra.mxu0 %v411
    %445 = vmatpush.bf16.msra.mxu0 %v410
    %446 = vmatpush.bf16.msra.mxu0 %v409
    %447 = vmatpush.bf16.msra.mxu0 %v408
    %448 = vmatpush.bf16.msra.mxu0 %v407
    %449 = vmatpush.bf16.msra.mxu0 %v406
    %450 = vmatpush.bf16.msra.mxu0 %v405
    %451 = vmatmul.bf16.gmra.mxu0 %v296
    %v452 = vpop.f32.mrf.mxu0
    %v453 = vadd.f32 %v439, %v452
    %v454 = vpop.f32.mrf.mxu0
    %v455 = vadd.f32 %v441, %v454
    %456 = vdwg.mxu0
    %v457 = vadd.f32 %v453, %v58
    %v458 = vadd.f32 %v455, %v59
    %v459 = vld [vmem:[%s5] sm:$0x1]
    %v460 = vld [vmem:[%s6] sm:$0x1]
    %461 = vadd.xlane.f32.xlu0 %v457
    %v462 = vpop.xlane.xlu0 %461
    %463 = vadd.xlane.f32.xlu0 %v458
    %v464 = vpop.xlane.xlu0 %463
    %v465 = vrcp.pop 128.0
    %v466 = vmul.f32 128.0, %v465
    %v467 = vsub.f32 1.0, %v466
    %v468 = vmul.f32 %v465, %v467
    %v469 = vadd.f32 %v465, %v468
    %vm470 = vweird.f32 %v465
    %v471 = vsel %vm470, %v465, %v469
    %v472 = vmul.f32 %v462, %v471
    %v473 = vmul.f32 %v464, %v471
    %v474 = vsub.f32 %v457, %v472
    %v475 = vsub.f32 %v458, %v473
    %v476 = vmul.f32 %v474, %v474
    %v477 = vmul.f32 %v475, %v475
    %478 = vadd.xlane.f32.xlu0 %v476
    %v479 = vpop.xlane.xlu0 %478
    %480 = vadd.xlane.f32.xlu0 %v477
    %v481 = vpop.xlane.xlu0 %480
    %v482 = vmul.f32 %v479, %v471
    %v483 = vmul.f32 %v481, %v471
    %v484 = vadd.f32 %v482, 1e-05
    %v485 = vadd.f32 %v483, 1e-05
    %v486 = vrsqrt.pop %v484
    %v487 = vmul.f32 %v486, %v484
    %v488 = vmul.f32 %v487, %v486
    %v489 = vmul.f32 0.5, %v488
    %v490 = vsub.f32 1.5, %v489
    %v491 = vmul.f32 %v486, %v490
    %vm492 = vweird.f32 %v484
    %vm493 = vweird.f32 %v486
    %vm494 = vmor %vm492, %vm493
    %v495 = vsel %vm494, %v486, %v491
    %v496 = vrsqrt.pop %v485
    %v497 = vmul.f32 %v496, %v485
    %v498 = vmul.f32 %v497, %v496
    %v499 = vmul.f32 0.5, %v498
    %v500 = vsub.f32 1.5, %v499
    %v501 = vmul.f32 %v496, %v500
    %vm502 = vweird.f32 %v485
    %vm503 = vweird.f32 %v496
    %vm504 = vmor %vm502, %vm503
    %v505 = vsel %vm504, %v496, %v501
    %v506 = vmul.f32 %v474, %v495
    %v507 = vmul.f32 %v475, %v505
    %v509 = vperm.slane %v459, 0
    %v511 = vmul.f32 %v506, %v509
    %v512 = vmul.f32 %v507, %v509
    %v514 = vperm.slane %v460, 0
    %v516 = vadd.f32 %v511, %v514
    %v517 = vadd.f32 %v512, %v514
    %518 = vst [vmem:[%s7] sm:$0xff] %v516
    %519 = vst [vmem:[%s7 + $0x8] sm:$0xff] %v517
    // Predicated region
    $region38: #{audio_transformer_enc_dec.8} parent=1 // pred_check
      _
    $region39: #{audio_transformer_enc_dec.8} parent=1 // pred_check_branch
      %521 = sbr.rel (0) target = $region41
    $region40: #{audio_transformer_enc_dec.8} parent=1 // pred_region
      _
    $region41: #{audio_transformer_enc_dec.8} parent=1 // pred_fallthru
      _
    // Predicated region
    $region42: #{audio_transformer_enc_dec.8} parent=1 // pred_check
      _
    $region43: #{audio_transformer_enc_dec.8} parent=1 // pred_check_branch
      %523 = sbr.rel (0) target = $region45
    $region44: #{audio_transformer_enc_dec.8} parent=1 // pred_region
      _
    $region45: #{audio_transformer_enc_dec.8} parent=1 // pred_fallthru
      _
    %524 = vsyncpa [#allocation3], 1
    %525 = vsyncpa [#allocation5], 1

// kernel: audio_transformer_enc_dec.7
$region0: #{audio_transformer_enc_dec.7}
  #allocation0 [shape = 'u32[]', space=smem, size = 0x4, offset = 0x4, fixed_abs, tag = 'smem constant byte address 0x4 - core index']
  #allocation1 [shape = 'u32[72,128]{1,0:T(1,128)}', space=vmem, size = 0x9000, scoped, tag = 'internal scratch']
  %s0 = inlined_call_operand.vmem [shape: f32[2,8,128], index: 0, kind: input, shape index: {}]
  %s1 = inlined_call_operand.hbm [shape: bf16[128,384], index: 1, kind: input, shape index: {}]
  %s2 = inlined_call_operand.vmem [shape: f32[1,384], index: 2, kind: input, shape index: {}]
  %s3 = inlined_call_operand.hbm [shape: bf16[128,128], index: 3, kind: input, shape index: {}]
  %s4 = inlined_call_operand.vmem [shape: f32[1,128], index: 4, kind: input, shape index: {}]
  %s5 = inlined_call_operand.vmem [shape: f32[1,128], index: 5, kind: input, shape index: {}]
  %s6 = inlined_call_operand.vmem [shape: f32[1,128], index: 6, kind: input, shape index: {}]
  %s7 = inlined_call_operand.vmem [shape: f32[2,8,128], index: 7, kind: output, shape index: {}]
  %s8 = sld [smem:[#allocation0]]
  $region69: #{audio_transformer_enc_dec.7} parent=0
    _
  %s10 = ssub.s32 1, %s8
  %s11 = scalar_select 0, %s10, %s8
  $region1: #{audio_transformer_enc_dec.7} parent=0
    #allocation2 [shape = 'u8[98304]{0}', space=vmem, size = 0x18000, scoped, tag = 'input window, operand 1, single buffered']
    #allocation3 [shape = 's32[2]{0}', space=sflag, size = 0x8, scoped, tag = 'scoped memory for audio_transformer_enc_dec.7']
    #allocation4 [shape = 'u8[32768]{0}', space=vmem, size = 0x8000, scoped, tag = 'input window, operand 3, single buffered']
    #allocation5 [shape = 's32[1]{0}', space=sflag, size = 0x4, scoped, tag = 'scoped memory for audio_transformer_enc_dec.7']
    %12 = vsyncpa [#allocation3], 0
    %13 = vsyncpa [#allocation5], 0
    loop: start=0, step=1, limit=4
    $region2: #{audio_transformer_enc_dec.7} parent=1 // loop_pre_header
      _
    $region3: #{audio_transformer_enc_dec.7} parent=1 // loop_header
      %s15 = sphi 0, %s19
      %p16 = scmp.ge.s32.totalorder %s15, 4
      %s25 = sphi 0, %s27
      %s28 = sphi 0, %s25
      %s29 = sphi 0, %s28
      %s45 = sphi 0, %s29
      %s49 = sphi 0, %s49
      %s51 = sphi 0, %s49
      %s52 = sphi 0, %s51
      %s66 = sphi 0, %s52
      %s70 = sphi 0, %s70
      %s72 = sphi 0, %s70
      %s73 = sphi 0, %s72
      %s87 = sphi 0, %s73
      %s91 = sphi 0, %s91
      %s93 = sphi 0, %s91
      %s94 = sphi 0, %s93
      %s108 = sphi 0, %s94
      %s112 = sphi 0, %s112
      %s114 = sphi 0, %s112
      %s115 = sphi 0, %s114
      %s129 = sphi 0, %s115
      %s133 = sphi 0, %s133
      %s135 = sphi 0, %s133
      %s136 = sphi 0, %s135
      %s150 = sphi 0, %s136
      %s154 = sphi 0, %s154
      %s156 = sphi 0, %s154
      %s157 = sphi 0, %s156
      %s171 = sphi 0, %s157
      %s177 = sphi 0, %s179
      %s180 = sphi 0, %s177
      %s181 = sphi 0, %s180
      %s197 = sphi 0, %s181
    $region4: #{audio_transformer_enc_dec.7} parent=1 // loop_header_branch
      %18 = sbr.rel (%p16) target = $region8
    $region5: #{audio_transformer_enc_dec.7} parent=1 // loop_body
      %s20 = ssub.s32 %s15, 1
      %s21 = ssub.s32 %s15, 2
      %s22 = sadd.s32 %s15, 1
      %s23 = ssub.s32 %s15, %s22
      %p24 = scmp.eq.s32.totalorder %s23, 0
      %s26 = sadd.s32 %s25, 1
      %s27 = scalar_select %p24, %s25, %s26
      %p30 = pneg %p24
      %p31 = scmp.eq.s32.totalorder %s15, 1
      %p32 = por %p30, %p31
      %p33 = scmp.ne.s32.totalorder %s25, %s28
      %p34 = scmp.eq.s32.totalorder %s15, 0
      %p35 = por %p33, %p34
      %p36 = scmp.ne.s32.totalorder %s25, %s28
      %p37 = scmp.eq.s32.totalorder %s20, 1
      %p38 = por %p36, %p37
      %p39 = scmp.ne.s32.totalorder %s28, %s29
      %p40 = scmp.eq.s32.totalorder %s20, 0
      %p41 = por %p39, %p40
      %p42 = scmp.ne.s32.totalorder %s28, %s29
      %p43 = scmp.eq.s32.totalorder %s21, 1
      %p44 = por %p42, %p43
      %p46 = scmp.ne.s32.totalorder %s29, %s45
      %p47 = scmp.eq.s32.totalorder %s21, 0
      %p48 = por %p46, %p47
      %s50 = sadd.s32 %s49, 1
      %p53 = scmp.eq.s32.totalorder %s15, 1
      %p54 = scmp.ne.s32.totalorder %s49, %s51
      %p55 = scmp.eq.s32.totalorder %s15, 0
      %p56 = por %p54, %p55
      %p57 = scmp.ne.s32.totalorder %s49, %s51
      %p58 = scmp.eq.s32.totalorder %s20, 1
      %p59 = por %p57, %p58
      %p60 = scmp.ne.s32.totalorder %s51, %s52
      %p61 = scmp.eq.s32.totalorder %s20, 0
      %p62 = por %p60, %p61
      %p63 = scmp.ne.s32.totalorder %s51, %s52
      %p64 = scmp.eq.s32.totalorder %s21, 1
      %p65 = por %p63, %p64
      %p67 = scmp.ne.s32.totalorder %s52, %s66
      %p68 = scmp.eq.s32.totalorder %s21, 0
      %p69 = por %p67, %p68
      %s71 = sadd.s32 %s70, 1
      %p74 = scmp.eq.s32.totalorder %s15, 1
      %p75 = scmp.ne.s32.totalorder %s70, %s72
      %p76 = scmp.eq.s32.totalorder %s15, 0
      %p77 = por %p75, %p76
      %p78 = scmp.ne.s32.totalorder %s70, %s72
      %p79 = scmp.eq.s32.totalorder %s20, 1
      %p80 = por %p78, %p79
      %p81 = scmp.ne.s32.totalorder %s72, %s73
      %p82 = scmp.eq.s32.totalorder %s20, 0
      %p83 = por %p81, %p82
      %p84 = scmp.ne.s32.totalorder %s72, %s73
      %p85 = scmp.eq.s32.totalorder %s21, 1
      %p86 = por %p84, %p85
      %p88 = scmp.ne.s32.totalorder %s73, %s87
      %p89 = scmp.eq.s32.totalorder %s21, 0
      %p90 = por %p88, %p89
      %s92 = sadd.s32 %s91, 1
      %p95 = scmp.eq.s32.totalorder %s15, 1
      %p96 = scmp.ne.s32.totalorder %s91, %s93
      %p97 = scmp.eq.s32.totalorder %s15, 0
      %p98 = por %p96, %p97
      %p99 = scmp.ne.s32.totalorder %s91, %s93
      %p100 = scmp.eq.s32.totalorder %s20, 1
      %p101 = por %p99, %p100
      %p102 = scmp.ne.s32.totalorder %s93, %s94
      %p103 = scmp.eq.s32.totalorder %s20, 0
      %p104 = por %p102, %p103
      %p105 = scmp.ne.s32.totalorder %s93, %s94
      %p106 = scmp.eq.s32.totalorder %s21, 1
      %p107 = por %p105, %p106
      %p109 = scmp.ne.s32.totalorder %s94, %s108
      %p110 = scmp.eq.s32.totalorder %s21, 0
      %p111 = por %p109, %p110
      %s113 = sadd.s32 %s112, 1
      %p116 = scmp.eq.s32.totalorder %s15, 1
      %p117 = scmp.ne.s32.totalorder %s112, %s114
      %p118 = scmp.eq.s32.totalorder %s15, 0
      %p119 = por %p117, %p118
      %p120 = scmp.ne.s32.totalorder %s112, %s114
      %p121 = scmp.eq.s32.totalorder %s20, 1
      %p122 = por %p120, %p121
      %p123 = scmp.ne.s32.totalorder %s114, %s115
      %p124 = scmp.eq.s32.totalorder %s20, 0
      %p125 = por %p123, %p124
      %p126 = scmp.ne.s32.totalorder %s114, %s115
      %p127 = scmp.eq.s32.totalorder %s21, 1
      %p128 = por %p126, %p127
      %p130 = scmp.ne.s32.totalorder %s115, %s129
      %p131 = scmp.eq.s32.totalorder %s21, 0
      %p132 = por %p130, %p131
      %s134 = sadd.s32 %s133, 1
      %p137 = scmp.eq.s32.totalorder %s15, 1
      %p138 = scmp.ne.s32.totalorder %s133, %s135
      %p139 = scmp.eq.s32.totalorder %s15, 0
      %p140 = por %p138, %p139
      %p141 = scmp.ne.s32.totalorder %s133, %s135
      %p142 = scmp.eq.s32.totalorder %s20, 1
      %p143 = por %p141, %p142
      %p144 = scmp.ne.s32.totalorder %s135, %s136
      %p145 = scmp.eq.s32.totalorder %s20, 0
      %p146 = por %p144, %p145
      %p147 = scmp.ne.s32.totalorder %s135, %s136
      %p148 = scmp.eq.s32.totalorder %s21, 1
      %p149 = por %p147, %p148
      %p151 = scmp.ne.s32.totalorder %s136, %s150
      %p152 = scmp.eq.s32.totalorder %s21, 0
      %p153 = por %p151, %p152
      %s155 = sadd.s32 %s154, 1
      %p158 = scmp.eq.s32.totalorder %s15, 1
      %p159 = scmp.ne.s32.totalorder %s154, %s156
      %p160 = scmp.eq.s32.totalorder %s15, 0
      %p161 = por %p159, %p160
      %p162 = scmp.ne.s32.totalorder %s154, %s156
      %p163 = scmp.eq.s32.totalorder %s20, 1
      %p164 = por %p162, %p163
      %p165 = scmp.ne.s32.totalorder %s156, %s157
      %p166 = scmp.eq.s32.totalorder %s20, 0
      %p167 = por %p165, %p166
      %p168 = scmp.ne.s32.totalorder %s156, %s157
      %p169 = scmp.eq.s32.totalorder %s21, 1
      %p170 = por %p168, %p169
      %p172 = scmp.ne.s32.totalorder %s157, %s171
      %p173 = scmp.eq.s32.totalorder %s21, 0
      %p174 = por %p172, %p173
      %s175 = ssub.s32 %s15, %s22
      %p176 = scmp.eq.s32.totalorder %s175, 0
      %s178 = sadd.s32 %s177, 1
      %s179 = scalar_select %p176, %s177, %s178
      %p182 = pneg %p176
      %p183 = scmp.eq.s32.totalorder %s15, 1
      %p184 = por %p182, %p183
      %p185 = scmp.ne.s32.totalorder %s177, %s180
      %p186 = scmp.eq.s32.totalorder %s15, 0
      %p187 = por %p185, %p186
      %p188 = scmp.ne.s32.totalorder %s177, %s180
      %p189 = scmp.eq.s32.totalorder %s20, 1
      %p190 = por %p188, %p189
      %p191 = scmp.ne.s32.totalorder %s180, %s181
      %p192 = scmp.eq.s32.totalorder %s20, 0
      %p193 = por %p191, %p192
      %p194 = scmp.ne.s32.totalorder %s180, %s181
      %p195 = scmp.eq.s32.totalorder %s21, 1
      %p196 = por %p194, %p195
      %p198 = scmp.ne.s32.totalorder %s181, %s197
      %p199 = scmp.eq.s32.totalorder %s21, 0
      %p200 = por %p198, %p199
      %p201 = scmp.le.s32.totalorder 1, %s15
      %p202 = scmp.lt.s32.totalorder %s15, 3
      %p203 = pnand %p201, %p202
      %p204 = pneg %p203
      // Predicated region
      $region9: #{audio_transformer_enc_dec.7} parent=5 // pred_check
        _
      $region10: #{audio_transformer_enc_dec.7} parent=5 // pred_check_branch
        %206 = sbr.rel (%p203) target = $region12
      $region11: #{audio_transformer_enc_dec.7} parent=5 // pred_region
        %s207 = ssub.s32 %s15, 1
        // Predicated region
        $region13: #{audio_transformer_enc_dec.7} parent=11 // pred_check
          %p208 = pneg %p62
        $region14: #{audio_transformer_enc_dec.7} parent=11 // pred_check_branch
          %210 = sbr.rel (%p208) target = $region16
        $region15: #{audio_transformer_enc_dec.7} parent=11 // pred_region
          %212 = vsyncadd [#allocation3], 0
          %s213 = sshll.u32 %s1, 4
          %s214 = int_to_ptr.hbm [resolvable:$true] %s213
          %s215 = sshll.u32 [#allocation2], 4
          %s216 = int_to_ptr.vmem [resolvable:$true] %s215
          %221 = dma.hbm_to_vmem [thread:$0]  %s214, 3072, %s216, [#allocation3], 192, 192, 12
        $region16: #{audio_transformer_enc_dec.7} parent=11 // pred_fallthru
          _
        // Predicated region
        $region17: #{audio_transformer_enc_dec.7} parent=11 // pred_check
          %p222 = pneg %p83
        $region18: #{audio_transformer_enc_dec.7} parent=11 // pred_check_branch
          %224 = sbr.rel (%p222) target = $region20
        $region19: #{audio_transformer_enc_dec.7} parent=11 // pred_region
          _
        $region20: #{audio_transformer_enc_dec.7} parent=11 // pred_fallthru
          _
        // Predicated region
        $region21: #{audio_transformer_enc_dec.7} parent=11 // pred_check
          %p225 = pneg %p104
        $region22: #{audio_transformer_enc_dec.7} parent=11 // pred_check_branch
          %227 = sbr.rel (%p225) target = $region24
        $region23: #{audio_transformer_enc_dec.7} parent=11 // pred_region
          %229 = vsyncadd [#allocation5], 0
          %s230 = sshll.u32 %s3, 4
          %s231 = int_to_ptr.hbm [resolvable:$true] %s230
          %s232 = sshll.u32 [#allocation4], 4
          %s233 = int_to_ptr.vmem [resolvable:$true] %s232
          %238 = dma.hbm_to_vmem [thread:$0]  %s231, 1024, %s233, [#allocation5], 64, 64, 4
        $region24: #{audio_transformer_enc_dec.7} parent=11 // pred_fallthru
          _
        // Predicated region
        $region25: #{audio_transformer_enc_dec.7} parent=11 // pred_check
          %p239 = pneg %p125
        $region26: #{audio_transformer_enc_dec.7} parent=11 // pred_check_branch
          %241 = sbr.rel (%p239) target = $region28
        $region27: #{audio_transformer_enc_dec.7} parent=11 // pred_region
          _
        $region28: #{audio_transformer_enc_dec.7} parent=11 // pred_fallthru
          _
        // Predicated region
        $region29: #{audio_transformer_enc_dec.7} parent=11 // pred_check
          %p242 = pneg %p146
        $region30: #{audio_transformer_enc_dec.7} parent=11 // pred_check_branch
          %244 = sbr.rel (%p242) target = $region32
        $region31: #{audio_transformer_enc_dec.7} parent=11 // pred_region
          _
        $region32: #{audio_transformer_enc_dec.7} parent=11 // pred_fallthru
          _
        // Predicated region
        $region33: #{audio_transformer_enc_dec.7} parent=11 // pred_check
          %p245 = pneg %p167
        $region34: #{audio_transformer_enc_dec.7} parent=11 // pred_check_branch
          %247 = sbr.rel (%p245) target = $region36
        $region35: #{audio_transformer_enc_dec.7} parent=11 // pred_region
          _
        $region36: #{audio_transformer_enc_dec.7} parent=11 // pred_fallthru
          _
      $region12: #{audio_transformer_enc_dec.7} parent=5 // pred_fallthru
        _
      %p248 = scmp.lt.s32.totalorder %s15, 2
      // Predicated region
      $region37: #{audio_transformer_enc_dec.7} parent=5 // pred_check
        %p249 = pneg %p248
      $region38: #{audio_transformer_enc_dec.7} parent=5 // pred_check_branch
        %251 = sbr.rel (%p249) target = $region40
      $region39: #{audio_transformer_enc_dec.7} parent=5 // pred_region
        // Predicated region
        $region41: #{audio_transformer_enc_dec.7} parent=39 // pred_check
          %p252 = pneg %p35
        $region42: #{audio_transformer_enc_dec.7} parent=39 // pred_check_branch
          %254 = sbr.rel (%p252) target = $region44
        $region43: #{audio_transformer_enc_dec.7} parent=39 // pred_region
          %p255 = scmp.lt.s32.totalorder %s15, 1
          %s256 = scalar_select %p255, %s15, 1
          %s257 = smul.addr %s256, 8
          %s258 = scalar_lea.vmem %s0, %s257
        $region44: #{audio_transformer_enc_dec.7} parent=39 // pred_fallthru
          _
      $region40: #{audio_transformer_enc_dec.7} parent=5 // pred_fallthru
        _
      %p259 = scmp.le.s32.totalorder 1, %s15
      %p260 = scmp.lt.s32.totalorder %s15, 3
      %p261 = pnand %p259, %p260
      %p262 = pneg %p261
      // Predicated region
      $region45: #{audio_transformer_enc_dec.7} parent=5 // pred_check
        _
      $region46: #{audio_transformer_enc_dec.7} parent=5 // pred_check_branch
        %264 = sbr.rel (%p261) target = $region48
      $region47: #{audio_transformer_enc_dec.7} parent=5 // pred_region
        %s265 = ssub.s32 %s15, 1
        // Predicated region
        $region49: #{audio_transformer_enc_dec.7} parent=47 // pred_check
          %p266 = pneg %p62
        $region50: #{audio_transformer_enc_dec.7} parent=47 // pred_check_branch
          %268 = sbr.rel (%p266) target = $region52
        $region51: #{audio_transformer_enc_dec.7} parent=47 // pred_region
          %270 = dma.done [#allocation3], 3072
        $region52: #{audio_transformer_enc_dec.7} parent=47 // pred_fallthru
          _
        // Predicated region
        $region53: #{audio_transformer_enc_dec.7} parent=47 // pred_check
          %p271 = pneg %p104
        $region54: #{audio_transformer_enc_dec.7} parent=47 // pred_check_branch
          %273 = sbr.rel (%p271) target = $region56
        $region55: #{audio_transformer_enc_dec.7} parent=47 // pred_region
          %275 = dma.done [#allocation5], 1024
        $region56: #{audio_transformer_enc_dec.7} parent=47 // pred_fallthru
          _
        %p276 = scmp.lt.s32.totalorder %s20, 1
        %s277 = scalar_select %p276, %s20, 1
        %s278 = smul.addr %s277, 8
        %s279 = scalar_lea.vmem %s0, %s278
        %p280 = pneg %p41
        %p281 = pneg %p38
        %p282 = pneg %p62
        %p283 = pneg %p59
        %p284 = pneg %p83
        %p285 = pneg %p80
        %p286 = pneg %p104
        %p287 = pneg %p101
        %p288 = pneg %p125
        %p289 = pneg %p122
        %p290 = pneg %p146
        %p291 = pneg %p143
        %p292 = pneg %p167
        %p293 = pneg %p164
        %p294 = pneg %p193
        %p295 = pneg %p190
        %p296 = scmp.lt.s32.totalorder %s20, 1
        %s297 = scalar_select %p296, %s20, 1
        %s298 = smul.addr %s297, 8
        %s299 = scalar_lea.vmem %s7, %s298
        %p300 = scmp.lt.s32.totalorder %s20, 1
        %s301 = scalar_select %p300, %s20, 1
        %s302 = smul.addr %s301, 8
        %s303 = scalar_lea.vmem %s0, %s302
        %p304 = scmp.lt.s32.totalorder %s20, 1
        %s305 = scalar_select %p304, %s20, 1
        %s306 = smul.addr %s305, 8
        %s307 = scalar_lea.vmem %s7, %s306
        %v309 = vld [vmem:[%s303] sm:$0xff]
        %v310 = vpack.c.bf16 %v309, %v309
        %v311 = vld [vmem:[#allocation2] sm:$0xff]
        %v312 = vld [vmem:[#allocation2 + $0x8] sm:$0xf]
        %v313 = vld [vmem:[#allocation2 + $0xc] sm:$0xff]
        %v314 = vld [vmem:[#allocation2 + $0x14] sm:$0xf]
        %v315 = vld [vmem:[#allocation2 + $0x18] sm:$0xff]
        %v316 = vld [vmem:[#allocation2 + $0x20] sm:$0xf]
        %v317 = vld [vmem:[#allocation2 + $0x24] sm:$0xff]
        %v318 = vld [vmem:[#allocation2 + $0x2c] sm:$0xf]
        %v319 = vld [vmem:[#allocation2 + $0x30] sm:$0xff]
        %v320 = vld [vmem:[#allocation2 + $0x38] sm:$0xf]
        %v321 = vld [vmem:[#allocation2 + $0x3c] sm:$0xff]
        %v322 = vld [vmem:[#allocation2 + $0x44] sm:$0xf]
        %v323 = vld [vmem:[#allocation2 + $0x48] sm:$0xff]
        %v324 = vld [vmem:[#allocation2 + $0x50] sm:$0xf]
        %v325 = vld [vmem:[#allocation2 + $0x54] sm:$0xff]
        %v326 = vld [vmem:[#allocation2 + $0x5c] sm:$0xf]
        %v327 = vld [vmem:[#allocation2 + $0x60] sm:$0xff]
        %v328 = vld [vmem:[#allocation2 + $0x68] sm:$0xf]
        %v329 = vld [vmem:[#allocation2 + $0x6c] sm:$0xff]
        %v330 = vld [vmem:[#allocation2 + $0x74] sm:$0xf]
        %v331 = vld [vmem:[#allocation2 + $0x78] sm:$0xff]
        %v332 = vld [vmem:[#allocation2 + $0x80] sm:$0xf]
        %v333 = vld [vmem:[#allocation2 + $0x84] sm:$0xff]
        %v334 = vld [vmem:[#allocation2 + $0x8c] sm:$0xf]
        %v335 = vld [vmem:[#allocation2 + $0x90] sm:$0xff]
        %v336 = vld [vmem:[#allocation2 + $0x98] sm:$0xf]
        %v337 = vld [vmem:[#allocation2 + $0x9c] sm:$0xff]
        %v338 = vld [vmem:[#allocation2 + $0xa4] sm:$0xf]
        %v339 = vld [vmem:[#allocation2 + $0xa8] sm:$0xff]
        %v340 = vld [vmem:[#allocation2 + $0xb0] sm:$0xf]
        %v341 = vld [vmem:[#allocation2 + $0xb4] sm:$0xff]
        %v342 = vld [vmem:[#allocation2 + $0xbc] sm:$0xf]
        %v343 = vld [vmem:[%s2] sm:$0x7]
        %v345 = vperm.slane %v343, 0
        %v346 = vperm.slane %v343, 1
        %v347 = vperm.slane %v343, 2
        %v383 = vunpack.c.l.b16 %v311
        %v384 = vunpack.c.h.b16 %v311
        %v385 = vunpack.c.l.b16 %v312
        %v386 = vunpack.c.l.b16 %v313
        %v387 = vunpack.c.h.b16 %v313
        %v388 = vunpack.c.l.b16 %v314
        %v389 = vunpack.c.l.b16 %v315
        %v390 = vunpack.c.h.b16 %v315
        %v391 = vunpack.c.l.b16 %v316
        %v392 = vunpack.c.l.b16 %v317
        %v393 = vunpack.c.h.b16 %v317
        %v394 = vunpack.c.l.b16 %v318
        %v395 = vunpack.c.l.b16 %v319
        %v396 = vunpack.c.h.b16 %v319
        %v397 = vunpack.c.l.b16 %v320
        %v398 = vunpack.c.l.b16 %v321
        %v399 = vunpack.c.h.b16 %v321
        %v400 = vunpack.c.l.b16 %v322
        %v401 = vunpack.c.l.b16 %v323
        %v402 = vunpack.c.h.b16 %v323
        %v403 = vunpack.c.l.b16 %v324
        %v404 = vunpack.c.l.b16 %v325
        %v405 = vunpack.c.h.b16 %v325
        %v406 = vunpack.c.l.b16 %v326
        %v407 = vunpack.c.l.b16 %v327
        %v408 = vunpack.c.h.b16 %v327
        %v409 = vunpack.c.l.b16 %v328
        %v410 = vunpack.c.l.b16 %v329
        %v411 = vunpack.c.h.b16 %v329
        %v412 = vunpack.c.l.b16 %v330
        %v413 = vunpack.c.l.b16 %v331
        %v414 = vunpack.c.h.b16 %v331
        %v415 = vunpack.c.l.b16 %v332
        %v416 = vunpack.c.l.b16 %v333
        %v417 = vunpack.c.h.b16 %v333
        %v418 = vunpack.c.l.b16 %v334
        %v419 = vunpack.c.l.b16 %v335
        %v420 = vunpack.c.h.b16 %v335
        %v421 = vunpack.c.l.b16 %v336
        %v422 = vunpack.c.l.b16 %v337
        %v423 = vunpack.c.h.b16 %v337
        %v424 = vunpack.c.l.b16 %v338
        %v425 = vunpack.c.l.b16 %v339
        %v426 = vunpack.c.h.b16 %v339
        %v427 = vunpack.c.l.b16 %v340
        %v428 = vunpack.c.l.b16 %v341
        %v429 = vunpack.c.h.b16 %v341
        %v430 = vunpack.c.l.b16 %v342
        %v431 = vpack.c.b16 %v386, %v383
        %v432 = vpack.c.b16 %v387, %v384
        %v433 = vpack.c.b16 %v388, %v385
        %v434 = vpack.c.b16 %v392, %v389
        %v435 = vpack.c.b16 %v393, %v390
        %v436 = vpack.c.b16 %v394, %v391
        %v437 = vpack.c.b16 %v398, %v395
        %v438 = vpack.c.b16 %v399, %v396
        %v439 = vpack.c.b16 %v400, %v397
        %v440 = vpack.c.b16 %v404, %v401
        %v441 = vpack.c.b16 %v405, %v402
        %v442 = vpack.c.b16 %v406, %v403
        %v443 = vpack.c.b16 %v410, %v407
        %v444 = vpack.c.b16 %v411, %v408
        %v445 = vpack.c.b16 %v412, %v409
        %v446 = vpack.c.b16 %v416, %v413
        %v447 = vpack.c.b16 %v417, %v414
        %v448 = vpack.c.b16 %v418, %v415
        %v449 = vpack.c.b16 %v422, %v419
        %v450 = vpack.c.b16 %v423, %v420
        %v451 = vpack.c.b16 %v424, %v421
        %v452 = vpack.c.b16 %v428, %v425
        %v453 = vpack.c.b16 %v429, %v426
        %v454 = vpack.c.b16 %v430, %v427
        %479 = vmatpush.bf16.msra.mxu0 %v452
        %480 = vmatpush.bf16.msra.mxu0 %v449
        %481 = vmatpush.bf16.msra.mxu0 %v446
        %482 = vmatpush.bf16.msra.mxu0 %v443
        %483 = vmatpush.bf16.msra.mxu0 %v440
        %484 = vmatpush.bf16.msra.mxu0 %v437
        %485 = vmatpush.bf16.msra.mxu0 %v434
        %486 = vmatpush.bf16.msra.mxu0 %v431
        %487 = vmatmul.bf16.gmra.mxu0 %v310
        %v488 = vpop.f32.mrf.mxu0
        %v489 = vadd.f32 %v345, %v488
        %v490 = vpop.f32.mrf.mxu0
        %491 = vdwg.mxu0
        %492 = vmatpush.bf16.msra.mxu0 %v453
        %493 = vmatpush.bf16.msra.mxu0 %v450
        %494 = vmatpush.bf16.msra.mxu0 %v447
        %495 = vmatpush.bf16.msra.mxu0 %v444
        %496 = vmatpush.bf16.msra.mxu0 %v441
        %497 = vmatpush.bf16.msra.mxu0 %v438
        %498 = vmatpush.bf16.msra.mxu0 %v435
        %499 = vmatpush.bf16.msra.mxu0 %v432
        %500 = vmatmul.bf16.gmra.mxu0 %v310
        %v501 = vpop.f32.mrf.mxu0
        %v502 = vadd.f32 %v346, %v501
        %v503 = vpop.f32.mrf.mxu0
        %504 = vdwg.mxu0
        %505 = vmatpush.bf16.msra.mxu0 %v454
        %506 = vmatpush.bf16.msra.mxu0 %v451
        %507 = vmatpush.bf16.msra.mxu0 %v448
        %508 = vmatpush.bf16.msra.mxu0 %v445
        %509 = vmatpush.bf16.msra.mxu0 %v442
        %510 = vmatpush.bf16.msra.mxu0 %v439
        %511 = vmatpush.bf16.msra.mxu0 %v436
        %512 = vmatpush.bf16.msra.mxu0 %v433
        %513 = vmatmul.bf16.gmra.mxu0 %v310
        %v514 = vpop.f32.mrf.mxu0
        %v515 = vadd.f32 %v347, %v514
        %v516 = vpop.f32.mrf.mxu0
        %517 = vdwg.mxu0
        %519 = vrot.lane.b32.xlu0 %v489, 96
        %v520 = vpop.permute.xlu0 %519
        %522 = vrot.lane.b32.xlu0 %v489, 64
        %v523 = vpop.permute.xlu0 %522
        %525 = vrot.lane.b32.xlu0 %v489, 32
        %v526 = vpop.permute.xlu0 %525
        %v528 = vrot.slane %v523, 4
        %vm529 = vcmask 1047556
        %v530 = vsel %vm529, %v528, %v489
        %v531 = vrot.slane %v489, 4
        %v532 = vsel %vm529, %v523, %v531
        %v534 = vunpack.c.l.s4 1983009808
        %v535 = vunpack.c.0.s8 %v534
        %v536 = vperm.slane %v530, %v535
        %v538 = vunpack.c.l.s4 1983009808
        %v539 = vunpack.c.0.s8 %v538
        %v540 = vperm.slane %v532, %v539
        %v541 = vrot.slane %v526, 4
        %v542 = vsel %vm529, %v541, %v520
        %v543 = vrot.slane %v520, 4
        %v544 = vsel %vm529, %v526, %v543
        %v546 = vunpack.c.l.s4 1983009808
        %v547 = vunpack.c.0.s8 %v546
        %v548 = vperm.slane %v542, %v547
        %v550 = vunpack.c.l.s4 1983009808
        %v551 = vunpack.c.0.s8 %v550
        %v552 = vperm.slane %v544, %v551
        %v553 = vrot.slane %v548, 4
        %v554 = vsel %vm529, %v553, %v536
        %v555 = vrot.slane %v536, 4
        %v556 = vsel %vm529, %v548, %v555
        %v558 = vunpack.c.l.s4 1934713408
        %v559 = vunpack.c.0.s8 %v558
        %v560 = vperm.slane %v554, %v559
        %v562 = vunpack.c.l.s4 1934713408
        %v563 = vunpack.c.0.s8 %v562
        %v564 = vperm.slane %v556, %v563
        %v565 = vrot.slane %v552, 4
        %v566 = vsel %vm529, %v565, %v540
        %v567 = vrot.slane %v540, 4
        %v568 = vsel %vm529, %v552, %v567
        %v570 = vunpack.c.l.s4 1934713408
        %v571 = vunpack.c.0.s8 %v570
        %v572 = vperm.slane %v566, %v571
        %v574 = vunpack.c.l.s4 1934713408
        %v575 = vunpack.c.0.s8 %v574
        %v576 = vperm.slane %v568, %v575
        %v577 = vrot.slane %v560, 4
        %v578 = vsel %vm529, 0.0, %v577
        %v579 = vrot.slane %v564, 4
        %v580 = vsel %vm529, 0.0, %v579
        %v581 = vrot.slane %v572, 4
        %v582 = vsel %vm529, 0.0, %v581
        %v583 = vrot.slane %v576, 4
        %v584 = vsel %vm529, 0.0, %v583
        %586 = vrot.lane.b32.xlu0 %v502, 96
        %v587 = vpop.permute.xlu0 %586
        %589 = vrot.lane.b32.xlu0 %v502, 64
        %v590 = vpop.permute.xlu0 %589
        %592 = vrot.lane.b32.xlu0 %v502, 32
        %v593 = vpop.permute.xlu0 %592
        %v595 = vrot.slane %v590, 4
        %v596 = vsel %vm529, %v595, %v502
        %v597 = vrot.slane %v502, 4
        %v598 = vsel %vm529, %v590, %v597
        %v600 = vunpack.c.l.s4 1983009808
        %v601 = vunpack.c.0.s8 %v600
        %v602 = vperm.slane %v596, %v601
        %v604 = vunpack.c.l.s4 1983009808
        %v605 = vunpack.c.0.s8 %v604
        %v606 = vperm.slane %v598, %v605
        %v607 = vrot.slane %v593, 4
        %v608 = vsel %vm529, %v607, %v587
        %v609 = vrot.slane %v587, 4
        %v610 = vsel %vm529, %v593, %v609
        %v612 = vunpack.c.l.s4 1983009808
        %v613 = vunpack.c.0.s8 %v612
        %v614 = vperm.slane %v608, %v613
        %v616 = vunpack.c.l.s4 1983009808
        %v617 = vunpack.c.0.s8 %v616
        %v618 = vperm.slane %v610, %v617
        %v619 = vrot.slane %v614, 4
        %v620 = vsel %vm529, %v619, %v602
        %v621 = vrot.slane %v602, 4
        %v622 = vsel %vm529, %v614, %v621
        %v624 = vunpack.c.l.s4 1934713408
        %v625 = vunpack.c.0.s8 %v624
        %v626 = vperm.slane %v620, %v625
        %v628 = vunpack.c.l.s4 1934713408
        %v629 = vunpack.c.0.s8 %v628
        %v630 = vperm.slane %v622, %v629
        %v631 = vrot.slane %v618, 4
        %v632 = vsel %vm529, %v631, %v606
        %v633 = vrot.slane %v606, 4
        %v634 = vsel %vm529, %v618, %v633
        %v636 = vunpack.c.l.s4 1934713408
        %v637 = vunpack.c.0.s8 %v636
        %v638 = vperm.slane %v632, %v637
        %v640 = vunpack.c.l.s4 1934713408
        %v641 = vunpack.c.0.s8 %v640
        %v642 = vperm.slane %v634, %v641
        %v643 = vrot.slane %v626, 4
        %v644 = vsel %vm529, 0.0, %v643
        %v645 = vrot.slane %v630, 4
        %v646 = vsel %vm529, 0.0, %v645
        %v647 = vrot.slane %v638, 4
        %v648 = vsel %vm529, 0.0, %v647
        %v649 = vrot.slane %v642, 4
        %v650 = vsel %vm529, 0.0, %v649
        %652 = vrot.lane.b32.xlu0 %v515, 96
        %v653 = vpop.permute.xlu0 %652
        %655 = vrot.lane.b32.xlu0 %v515, 64
        %v656 = vpop.permute.xlu0 %655
        %658 = vrot.lane.b32.xlu0 %v515, 32
        %v659 = vpop.permute.xlu0 %658
        %v661 = vrot.slane %v656, 4
        %v662 = vsel %vm529, %v661, %v515
        %v663 = vrot.slane %v515, 4
        %v664 = vsel %vm529, %v656, %v663
        %v666 = vunpack.c.l.s4 1983009808
        %v667 = vunpack.c.0.s8 %v666
        %v668 = vperm.slane %v662, %v667
        %v670 = vunpack.c.l.s4 1983009808
        %v671 = vunpack.c.0.s8 %v670
        %v672 = vperm.slane %v664, %v671
        %v673 = vrot.slane %v659, 4
        %v674 = vsel %vm529, %v673, %v653
        %v675 = vrot.slane %v653, 4
        %v676 = vsel %vm529, %v659, %v675
        %v678 = vunpack.c.l.s4 1983009808
        %v679 = vunpack.c.0.s8 %v678
        %v680 = vperm.slane %v674, %v679
        %v682 = vunpack.c.l.s4 1983009808
        %v683 = vunpack.c.0.s8 %v682
        %v684 = vperm.slane %v676, %v683
        %v685 = vrot.slane %v680, 4
        %v686 = vsel %vm529, %v685, %v668
        %v687 = vrot.slane %v668, 4
        %v688 = vsel %vm529, %v680, %v687
        %v690 = vunpack.c.l.s4 1934713408
        %v691 = vunpack.c.0.s8 %v690
        %v692 = vperm.slane %v686, %v691
        %v694 = vunpack.c.l.s4 1934713408
        %v695 = vunpack.c.0.s8 %v694
        %v696 = vperm.slane %v688, %v695
        %v697 = vrot.slane %v684, 4
        %v698 = vsel %vm529, %v697, %v672
        %v699 = vrot.slane %v672, 4
        %v700 = vsel %vm529, %v684, %v699
        %v702 = vunpack.c.l.s4 1934713408
        %v703 = vunpack.c.0.s8 %v702
        %v704 = vperm.slane %v698, %v703
        %v706 = vunpack.c.l.s4 1934713408
        %v707 = vunpack.c.0.s8 %v706
        %v708 = vperm.slane %v700, %v707
        %v709 = vrot.slane %v692, 4
        %v710 = vsel %vm529, 0.0, %v709
        %v711 = vrot.slane %v696, 4
        %v712 = vsel %vm529, 0.0, %v711
        %v713 = vrot.slane %v704, 4
        %v714 = vsel %vm529, 0.0, %v713
        %v715 = vrot.slane %v708, 4
        %v716 = vsel %vm529, 0.0, %v715
        %v717 = vpack.c.bf16 %v560, %v560
        %v718 = vpack.c.bf16 %v578, %v578
        %v719 = vpack.c.bf16 %v564, %v564
        %v720 = vpack.c.bf16 %v580, %v580
        %v721 = vpack.c.bf16 %v572, %v572
        %v722 = vpack.c.bf16 %v582, %v582
        %v723 = vpack.c.bf16 %v576, %v576
        %v724 = vpack.c.bf16 %v584, %v584
        %v725 = vpack.c.bf16 %v626, %v626
        %v726 = vpack.c.bf16 %v644, %v644
        %v727 = vpack.c.bf16 %v630, %v630
        %v728 = vpack.c.bf16 %v646, %v646
        %v729 = vpack.c.bf16 %v638, %v638
        %v730 = vpack.c.bf16 %v648, %v648
        %v731 = vpack.c.bf16 %v642, %v642
        %v732 = vpack.c.bf16 %v650, %v650
        %v733 = vrot.slane %v721, 4
        %vm734 = vcmask 1047556
        %v735 = vsel %vm734, %v733, %v717
        %v737 = vunpack.c.l.s4 1983009808
        %v738 = vunpack.c.0.s8 %v737
        %v739 = vperm.slane %v735, %v738
        %v740 = vrot.slane %v723, 4
        %v741 = vsel %vm734, %v740, %v719
        %v743 = vunpack.c.l.s4 1983009808
        %v744 = vunpack.c.0.s8 %v743
        %v745 = vperm.slane %v741, %v744
        %v746 = vrot.slane %v745, 4
        %v747 = vsel %vm734, %v746, %v739
        %v749 = vunpack.c.l.s4 1934713408
        %v750 = vunpack.c.0.s8 %v749
        %v751 = vperm.slane %v747, %v750
        %v752 = vrot.slane %v751, 4
        %v753 = vsel %vm734, 0, %v752
        %v754 = vrot.slane %v722, 4
        %v755 = vsel %vm734, %v754, %v718
        %v757 = vunpack.c.l.s4 1983009808
        %v758 = vunpack.c.0.s8 %v757
        %v759 = vperm.slane %v755, %v758
        %v760 = vrot.slane %v724, 4
        %v761 = vsel %vm734, %v760, %v720
        %v763 = vunpack.c.l.s4 1983009808
        %v764 = vunpack.c.0.s8 %v763
        %v765 = vperm.slane %v761, %v764
        %v766 = vrot.slane %v765, 4
        %v767 = vsel %vm734, %v766, %v759
        %v769 = vunpack.c.l.s4 1934713408
        %v770 = vunpack.c.0.s8 %v769
        %v771 = vperm.slane %v767, %v770
        %v772 = vrot.slane %v771, 4
        %v773 = vsel %vm734, 0, %v772
        %v776 = vpack.i.b16 %v771, %v751
        %v777 = vshrl.u32 %v751, 16
        %v778 = vshrl.u32 %v771, 16
        %v779 = vpack.i.b16 %v778, %v777
        %v782 = vpack.i.b16 %v773, %v753
        %v783 = vshrl.u32 %v753, 16
        %v784 = vshrl.u32 %v773, 16
        %v785 = vpack.i.b16 %v784, %v783
        %786 = vxpose.xlu0.c.b16.start [1/8] %v725, 128
        %787 = vxpose.xlu0.c.b16.cont [2/8] 0, 128
        %788 = vxpose.xlu0.c.b16.cont [3/8] 0, 128
        %789 = vxpose.xlu0.c.b16.cont [4/8] 0, 128
        %790 = vxpose.xlu0.c.b16.cont [5/8] 0, 128
        %791 = vxpose.xlu0.c.b16.cont [6/8] 0, 128
        %792 = vxpose.xlu0.c.b16.cont [7/8] 0, 128
        %793 = vxpose.xlu0.c.b16.end [8/8] 0, 128
        %v794 = vpop.trf.xlu0
        %v795 = vpop.trf.xlu0
        %v796 = vpop.trf.xlu0
        %v797 = vpop.trf.xlu0
        %v798 = vpop.trf.xlu0
        %v799 = vpop.trf.xlu0
        %v800 = vpop.trf.xlu0
        %v801 = vpop.trf.xlu0
        %802 = vxpose.xlu0.c.b16.start [1/8] %v726, 128
        %803 = vxpose.xlu0.c.b16.cont [2/8] 0, 128
        %804 = vxpose.xlu0.c.b16.cont [3/8] 0, 128
        %805 = vxpose.xlu0.c.b16.cont [4/8] 0, 128
        %806 = vxpose.xlu0.c.b16.cont [5/8] 0, 128
        %807 = vxpose.xlu0.c.b16.cont [6/8] 0, 128
        %808 = vxpose.xlu0.c.b16.cont [7/8] 0, 128
        %809 = vxpose.xlu0.c.b16.end [8/8] 0, 128
        %v810 = vpop.trf.xlu0
        %v811 = vpop.trf.xlu0
        %v812 = vpop.trf.xlu0
        %v813 = vpop.trf.xlu0
        %v814 = vpop.trf.xlu0
        %v815 = vpop.trf.xlu0
        %v816 = vpop.trf.xlu0
        %v817 = vpop.trf.xlu0
        %818 = vxpose.xlu0.c.b16.start [1/8] %v727, 128
        %819 = vxpose.xlu0.c.b16.cont [2/8] 0, 128
        %820 = vxpose.xlu0.c.b16.cont [3/8] 0, 128
        %821 = vxpose.xlu0.c.b16.cont [4/8] 0, 128
        %822 = vxpose.xlu0.c.b16.cont [5/8] 0, 128
        %823 = vxpose.xlu0.c.b16.cont [6/8] 0, 128
        %824 = vxpose.xlu0.c.b16.cont [7/8] 0, 128
        %825 = vxpose.xlu0.c.b16.end [8/8] 0, 128
        %v826 = vpop.trf.xlu0
        %v827 = vpop.trf.xlu0
        %v828 = vpop.trf.xlu0
        %v829 = vpop.trf.xlu0
        %v830 = vpop.trf.xlu0
        %v831 = vpop.trf.xlu0
        %v832 = vpop.trf.xlu0
        %v833 = vpop.trf.xlu0
        %834 = vxpose.xlu0.c.b16.start [1/8] %v728, 128
        %835 = vxpose.xlu0.c.b16.cont [2/8] 0, 128
        %836 = vxpose.xlu0.c.b16.cont [3/8] 0, 128
        %837 = vxpose.xlu0.c.b16.cont [4/8] 0, 128
        %838 = vxpose.xlu0.c.b16.cont [5/8] 0, 128
        %839 = vxpose.xlu0.c.b16.cont [6/8] 0, 128
        %840 = vxpose.xlu0.c.b16.cont [7/8] 0, 128
        %841 = vxpose.xlu0.c.b16.end [8/8] 0, 128
        %v842 = vpop.trf.xlu0
        %v843 = vpop.trf.xlu0
        %v844 = vpop.trf.xlu0
        %v845 = vpop.trf.xlu0
        %v846 = vpop.trf.xlu0
        %v847 = vpop.trf.xlu0
        %v848 = vpop.trf.xlu0
        %v849 = vpop.trf.xlu0
        %850 = vxpose.xlu0.c.b16.start [1/8] %v729, 128
        %851 = vxpose.xlu0.c.b16.cont [2/8] 0, 128
        %852 = vxpose.xlu0.c.b16.cont [3/8] 0, 128
        %853 = vxpose.xlu0.c.b16.cont [4/8] 0, 128
        %854 = vxpose.xlu0.c.b16.cont [5/8] 0, 128
        %855 = vxpose.xlu0.c.b16.cont [6/8] 0, 128
        %856 = vxpose.xlu0.c.b16.cont [7/8] 0, 128
        %857 = vxpose.xlu0.c.b16.end [8/8] 0, 128
        %v858 = vpop.trf.xlu0
        %v859 = vpop.trf.xlu0
        %v860 = vpop.trf.xlu0
        %v861 = vpop.trf.xlu0
        %v862 = vpop.trf.xlu0
        %v863 = vpop.trf.xlu0
        %v864 = vpop.trf.xlu0
        %v865 = vpop.trf.xlu0
        %866 = vxpose.xlu0.c.b16.start [1/8] %v730, 128
        %867 = vxpose.xlu0.c.b16.cont [2/8] 0, 128
        %868 = vxpose.xlu0.c.b16.cont [3/8] 0, 128
        %869 = vxpose.xlu0.c.b16.cont [4/8] 0, 128
        %870 = vxpose.xlu0.c.b16.cont [5/8] 0, 128
        %871 = vxpose.xlu0.c.b16.cont [6/8] 0, 128
        %872 = vxpose.xlu0.c.b16.cont [7/8] 0, 128
        %873 = vxpose.xlu0.c.b16.end [8/8] 0, 128
        %v874 = vpop.trf.xlu0
        %v875 = vpop.trf.xlu0
        %v876 = vpop.trf.xlu0
        %v877 = vpop.trf.xlu0
        %v878 = vpop.trf.xlu0
        %v879 = vpop.trf.xlu0
        %v880 = vpop.trf.xlu0
        %v881 = vpop.trf.xlu0
        %882 = vxpose.xlu0.c.b16.start [1/8] %v731, 128
        %883 = vxpose.xlu0.c.b16.cont [2/8] 0, 128
        %884 = vxpose.xlu0.c.b16.cont [3/8] 0, 128
        %885 = vxpose.xlu0.c.b16.cont [4/8] 0, 128
        %886 = vxpose.xlu0.c.b16.cont [5/8] 0, 128
        %887 = vxpose.xlu0.c.b16.cont [6/8] 0, 128
        %888 = vxpose.xlu0.c.b16.cont [7/8] 0, 128
        %889 = vxpose.xlu0.c.b16.end [8/8] 0, 128
        %v890 = vpop.trf.xlu0
        %v891 = vpop.trf.xlu0
        %v892 = vpop.trf.xlu0
        %v893 = vpop.trf.xlu0
        %v894 = vpop.trf.xlu0
        %v895 = vpop.trf.xlu0
        %v896 = vpop.trf.xlu0
        %v897 = vpop.trf.xlu0
        %898 = vxpose.xlu0.c.b16.start [1/8] %v732, 128
        %899 = vxpose.xlu0.c.b16.cont [2/8] 0, 128
        %900 = vxpose.xlu0.c.b16.cont [3/8] 0, 128
        %901 = vxpose.xlu0.c.b16.cont [4/8] 0, 128
        %902 = vxpose.xlu0.c.b16.cont [5/8] 0, 128
        %903 = vxpose.xlu0.c.b16.cont [6/8] 0, 128
        %904 = vxpose.xlu0.c.b16.cont [7/8] 0, 128
        %905 = vxpose.xlu0.c.b16.end [8/8] 0, 128
        %v906 = vpop.trf.xlu0
        %v907 = vpop.trf.xlu0
        %v908 = vpop.trf.xlu0
        %v909 = vpop.trf.xlu0
        %v910 = vpop.trf.xlu0
        %v911 = vpop.trf.xlu0
        %v912 = vpop.trf.xlu0
        %v913 = vpop.trf.xlu0
        %v916 = vpack.i.b16 %v810, %v794
        %v918 = vshrl.u32 %v794, 16
        %v919 = vshrl.u32 %v810, 16
        %v920 = vpack.i.b16 %v919, %v918
        %v924 = vpack.i.b16 %v842, %v826
        %v926 = vshrl.u32 %v826, 16
        %v927 = vshrl.u32 %v842, 16
        %v928 = vpack.i.b16 %v927, %v926
        %v932 = vpack.i.b16 %v874, %v858
        %v934 = vshrl.u32 %v858, 16
        %v935 = vshrl.u32 %v874, 16
        %v936 = vpack.i.b16 %v935, %v934
        %v940 = vpack.i.b16 %v906, %v890
        %v942 = vshrl.u32 %v890, 16
        %v943 = vshrl.u32 %v906, 16
        %v944 = vpack.i.b16 %v943, %v942
        %v948 = vpack.i.b16 %v811, %v795
        %v950 = vshrl.u32 %v795, 16
        %v951 = vshrl.u32 %v811, 16
        %v952 = vpack.i.b16 %v951, %v950
        %v956 = vpack.i.b16 %v843, %v827
        %v958 = vshrl.u32 %v827, 16
        %v959 = vshrl.u32 %v843, 16
        %v960 = vpack.i.b16 %v959, %v958
        %v964 = vpack.i.b16 %v875, %v859
        %v966 = vshrl.u32 %v859, 16
        %v967 = vshrl.u32 %v875, 16
        %v968 = vpack.i.b16 %v967, %v966
        %v972 = vpack.i.b16 %v907, %v891
        %v974 = vshrl.u32 %v891, 16
        %v975 = vshrl.u32 %v907, 16
        %v976 = vpack.i.b16 %v975, %v974
        %v978 = vrot.slane %v932, 4
        %v979 = vsel %vm734, %v978, %v916
        %v980 = vrot.slane %v916, 4
        %v981 = vsel %vm734, %v932, %v980
        %v983 = vunpack.c.l.s4 1983009808
        %v984 = vunpack.c.0.s8 %v983
        %v985 = vperm.slane %v979, %v984
        %v987 = vunpack.c.l.s4 1983009808
        %v988 = vunpack.c.0.s8 %v987
        %v989 = vperm.slane %v981, %v988
        %v990 = vrot.slane %v940, 4
        %v991 = vsel %vm734, %v990, %v924
        %v992 = vrot.slane %v924, 4
        %v993 = vsel %vm734, %v940, %v992
        %v995 = vunpack.c.l.s4 1983009808
        %v996 = vunpack.c.0.s8 %v995
        %v997 = vperm.slane %v991, %v996
        %v999 = vunpack.c.l.s4 1983009808
        %v1000 = vunpack.c.0.s8 %v999
        %v1001 = vperm.slane %v993, %v1000
        %v1002 = vrot.slane %v997, 4
        %v1003 = vsel %vm734, %v1002, %v985
        %v1004 = vrot.slane %v985, 4
        %v1005 = vsel %vm734, %v997, %v1004
        %v1007 = vunpack.c.l.s4 1934713408
        %v1008 = vunpack.c.0.s8 %v1007
        %v1009 = vperm.slane %v1003, %v1008
        %v1011 = vunpack.c.l.s4 1934713408
        %v1012 = vunpack.c.0.s8 %v1011
        %v1013 = vperm.slane %v1005, %v1012
        %v1014 = vrot.slane %v1001, 4
        %v1015 = vsel %vm734, %v1014, %v989
        %v1016 = vrot.slane %v989, 4
        %v1017 = vsel %vm734, %v1001, %v1016
        %v1019 = vunpack.c.l.s4 1934713408
        %v1020 = vunpack.c.0.s8 %v1019
        %v1021 = vperm.slane %v1015, %v1020
        %v1023 = vunpack.c.l.s4 1934713408
        %v1024 = vunpack.c.0.s8 %v1023
        %v1025 = vperm.slane %v1017, %v1024
        %v1026 = vrot.slane %v1009, 4
        %v1027 = vsel %vm734, 0, %v1026
        %v1028 = vrot.slane %v1013, 4
        %v1029 = vsel %vm734, 0, %v1028
        %v1030 = vrot.slane %v1021, 4
        %v1031 = vsel %vm734, 0, %v1030
        %v1032 = vrot.slane %v1025, 4
        %v1033 = vsel %vm734, 0, %v1032
        %v1034 = vrot.slane %v936, 4
        %v1035 = vsel %vm734, %v1034, %v920
        %v1036 = vrot.slane %v920, 4
        %v1037 = vsel %vm734, %v936, %v1036
        %v1039 = vunpack.c.l.s4 1983009808
        %v1040 = vunpack.c.0.s8 %v1039
        %v1041 = vperm.slane %v1035, %v1040
        %v1043 = vunpack.c.l.s4 1983009808
        %v1044 = vunpack.c.0.s8 %v1043
        %v1045 = vperm.slane %v1037, %v1044
        %v1046 = vrot.slane %v944, 4
        %v1047 = vsel %vm734, %v1046, %v928
        %v1048 = vrot.slane %v928, 4
        %v1049 = vsel %vm734, %v944, %v1048
        %v1051 = vunpack.c.l.s4 1983009808
        %v1052 = vunpack.c.0.s8 %v1051
        %v1053 = vperm.slane %v1047, %v1052
        %v1055 = vunpack.c.l.s4 1983009808
        %v1056 = vunpack.c.0.s8 %v1055
        %v1057 = vperm.slane %v1049, %v1056
        %v1058 = vrot.slane %v1053, 4
        %v1059 = vsel %vm734, %v1058, %v1041
        %v1060 = vrot.slane %v1041, 4
        %v1061 = vsel %vm734, %v1053, %v1060
        %v1063 = vunpack.c.l.s4 1934713408
        %v1064 = vunpack.c.0.s8 %v1063
        %v1065 = vperm.slane %v1059, %v1064
        %v1067 = vunpack.c.l.s4 1934713408
        %v1068 = vunpack.c.0.s8 %v1067
        %v1069 = vperm.slane %v1061, %v1068
        %v1070 = vrot.slane %v1057, 4
        %v1071 = vsel %vm734, %v1070, %v1045
        %v1072 = vrot.slane %v1045, 4
        %v1073 = vsel %vm734, %v1057, %v1072
        %v1075 = vunpack.c.l.s4 1934713408
        %v1076 = vunpack.c.0.s8 %v1075
        %v1077 = vperm.slane %v1071, %v1076
        %v1079 = vunpack.c.l.s4 1934713408
        %v1080 = vunpack.c.0.s8 %v1079
        %v1081 = vperm.slane %v1073, %v1080
        %v1082 = vrot.slane %v1065, 4
        %v1083 = vsel %vm734, 0, %v1082
        %v1084 = vrot.slane %v1069, 4
        %v1085 = vsel %vm734, 0, %v1084
        %v1086 = vrot.slane %v1077, 4
        %v1087 = vsel %vm734, 0, %v1086
        %v1088 = vrot.slane %v1081, 4
        %v1089 = vsel %vm734, 0, %v1088
        %v1090 = vrot.slane %v964, 4
        %v1091 = vsel %vm734, %v1090, %v948
        %v1092 = vrot.slane %v948, 4
        %v1093 = vsel %vm734, %v964, %v1092
        %v1095 = vunpack.c.l.s4 1983009808
        %v1096 = vunpack.c.0.s8 %v1095
        %v1097 = vperm.slane %v1091, %v1096
        %v1099 = vunpack.c.l.s4 1983009808
        %v1100 = vunpack.c.0.s8 %v1099
        %v1101 = vperm.slane %v1093, %v1100
        %v1102 = vrot.slane %v972, 4
        %v1103 = vsel %vm734, %v1102, %v956
        %v1104 = vrot.slane %v956, 4
        %v1105 = vsel %vm734, %v972, %v1104
        %v1107 = vunpack.c.l.s4 1983009808
        %v1108 = vunpack.c.0.s8 %v1107
        %v1109 = vperm.slane %v1103, %v1108
        %v1111 = vunpack.c.l.s4 1983009808
        %v1112 = vunpack.c.0.s8 %v1111
        %v1113 = vperm.slane %v1105, %v1112
        %v1114 = vrot.slane %v1109, 4
        %v1115 = vsel %vm734, %v1114, %v1097
        %v1116 = vrot.slane %v1097, 4
        %v1117 = vsel %vm734, %v1109, %v1116
        %v1119 = vunpack.c.l.s4 1934713408
        %v1120 = vunpack.c.0.s8 %v1119
        %v1121 = vperm.slane %v1115, %v1120
        %v1123 = vunpack.c.l.s4 1934713408
        %v1124 = vunpack.c.0.s8 %v1123
        %v1125 = vperm.slane %v1117, %v1124
        %v1126 = vrot.slane %v1113, 4
        %v1127 = vsel %vm734, %v1126, %v1101
        %v1128 = vrot.slane %v1101, 4
        %v1129 = vsel %vm734, %v1113, %v1128
        %v1131 = vunpack.c.l.s4 1934713408
        %v1132 = vunpack.c.0.s8 %v1131
        %v1133 = vperm.slane %v1127, %v1132
        %v1135 = vunpack.c.l.s4 1934713408
        %v1136 = vunpack.c.0.s8 %v1135
        %v1137 = vperm.slane %v1129, %v1136
        %v1138 = vrot.slane %v1121, 4
        %v1139 = vsel %vm734, 0, %v1138
        %v1140 = vrot.slane %v1125, 4
        %v1141 = vsel %vm734, 0, %v1140
        %v1142 = vrot.slane %v1133, 4
        %v1143 = vsel %vm734, 0, %v1142
        %v1144 = vrot.slane %v1137, 4
        %v1145 = vsel %vm734, 0, %v1144
        %v1146 = vrot.slane %v968, 4
        %v1147 = vsel %vm734, %v1146, %v952
        %v1148 = vrot.slane %v952, 4
        %v1149 = vsel %vm734, %v968, %v1148
        %v1151 = vunpack.c.l.s4 1983009808
        %v1152 = vunpack.c.0.s8 %v1151
        %v1153 = vperm.slane %v1147, %v1152
        %v1155 = vunpack.c.l.s4 1983009808
        %v1156 = vunpack.c.0.s8 %v1155
        %v1157 = vperm.slane %v1149, %v1156
        %v1158 = vrot.slane %v976, 4
        %v1159 = vsel %vm734, %v1158, %v960
        %v1160 = vrot.slane %v960, 4
        %v1161 = vsel %vm734, %v976, %v1160
        %v1163 = vunpack.c.l.s4 1983009808
        %v1164 = vunpack.c.0.s8 %v1163
        %v1165 = vperm.slane %v1159, %v1164
        %v1167 = vunpack.c.l.s4 1983009808
        %v1168 = vunpack.c.0.s8 %v1167
        %v1169 = vperm.slane %v1161, %v1168
        %v1170 = vrot.slane %v1165, 4
        %v1171 = vsel %vm734, %v1170, %v1153
        %v1172 = vrot.slane %v1153, 4
        %v1173 = vsel %vm734, %v1165, %v1172
        %v1175 = vunpack.c.l.s4 1934713408
        %v1176 = vunpack.c.0.s8 %v1175
        %v1177 = vperm.slane %v1171, %v1176
        %v1179 = vunpack.c.l.s4 1934713408
        %v1180 = vunpack.c.0.s8 %v1179
        %v1181 = vperm.slane %v1173, %v1180
        %v1182 = vrot.slane %v1169, 4
        %v1183 = vsel %vm734, %v1182, %v1157
        %v1184 = vrot.slane %v1157, 4
        %v1185 = vsel %vm734, %v1169, %v1184
        %v1187 = vunpack.c.l.s4 1934713408
        %v1188 = vunpack.c.0.s8 %v1187
        %v1189 = vperm.slane %v1183, %v1188
        %v1191 = vunpack.c.l.s4 1934713408
        %v1192 = vunpack.c.0.s8 %v1191
        %v1193 = vperm.slane %v1185, %v1192
        %v1194 = vrot.slane %v1177, 4
        %v1195 = vsel %vm734, 0, %v1194
        %v1196 = vrot.slane %v1181, 4
        %v1197 = vsel %vm734, 0, %v1196
        %v1198 = vrot.slane %v1189, 4
        %v1199 = vsel %vm734, 0, %v1198
        %v1200 = vrot.slane %v1193, 4
        %v1201 = vsel %vm734, 0, %v1200
        %1202 = vxpose.xlu0.c.b16.start [1/8] %v1009, 128
        %1203 = vxpose.xlu0.c.b16.cont [2/8] 0, 128
        %1204 = vxpose.xlu0.c.b16.cont [3/8] 0, 128
        %1205 = vxpose.xlu0.c.b16.cont [4/8] 0, 128
        %1206 = vxpose.xlu0.c.b16.cont [5/8] 0, 128
        %1207 = vxpose.xlu0.c.b16.cont [6/8] 0, 128
        %1208 = vxpose.xlu0.c.b16.cont [7/8] 0, 128
        %1209 = vxpose.xlu0.c.b16.end [8/8] 0, 128
        %v1210 = vpop.trf.xlu0
        %v1211 = vpop.trf.xlu0
        %v1212 = vpop.trf.xlu0
        %v1213 = vpop.trf.xlu0
        %v1214 = vpop.trf.xlu0
        %v1215 = vpop.trf.xlu0
        %v1216 = vpop.trf.xlu0
        %v1217 = vpop.trf.xlu0
        %1218 = vxpose.xlu0.c.b16.start [1/8] %v1065, 128
        %1219 = vxpose.xlu0.c.b16.cont [2/8] 0, 128
        %1220 = vxpose.xlu0.c.b16.cont [3/8] 0, 128
        %1221 = vxpose.xlu0.c.b16.cont [4/8] 0, 128
        %1222 = vxpose.xlu0.c.b16.cont [5/8] 0, 128
        %1223 = vxpose.xlu0.c.b16.cont [6/8] 0, 128
        %1224 = vxpose.xlu0.c.b16.cont [7/8] 0, 128
        %1225 = vxpose.xlu0.c.b16.end [8/8] 0, 128
        %v1226 = vpop.trf.xlu0
        %v1227 = vpop.trf.xlu0
        %v1228 = vpop.trf.xlu0
        %v1229 = vpop.trf.xlu0
        %v1230 = vpop.trf.xlu0
        %v1231 = vpop.trf.xlu0
        %v1232 = vpop.trf.xlu0
        %v1233 = vpop.trf.xlu0
        %1234 = vxpose.xlu0.c.b16.start [1/8] %v1027, 128
        %1235 = vxpose.xlu0.c.b16.cont [2/8] 0, 128
        %1236 = vxpose.xlu0.c.b16.cont [3/8] 0, 128
        %1237 = vxpose.xlu0.c.b16.cont [4/8] 0, 128
        %1238 = vxpose.xlu0.c.b16.cont [5/8] 0, 128
        %1239 = vxpose.xlu0.c.b16.cont [6/8] 0, 128
        %1240 = vxpose.xlu0.c.b16.cont [7/8] 0, 128
        %1241 = vxpose.xlu0.c.b16.end [8/8] 0, 128
        %v1242 = vpop.trf.xlu0
        %v1243 = vpop.trf.xlu0
        %v1244 = vpop.trf.xlu0
        %v1245 = vpop.trf.xlu0
        %v1246 = vpop.trf.xlu0
        %v1247 = vpop.trf.xlu0
        %v1248 = vpop.trf.xlu0
        %v1249 = vpop.trf.xlu0
        %1250 = vxpose.xlu0.c.b16.start [1/8] %v1083, 128
        %1251 = vxpose.xlu0.c.b16.cont [2/8] 0, 128
        %1252 = vxpose.xlu0.c.b16.cont [3/8] 0, 128
        %1253 = vxpose.xlu0.c.b16.cont [4/8] 0, 128
        %1254 = vxpose.xlu0.c.b16.cont [5/8] 0, 128
        %1255 = vxpose.xlu0.c.b16.cont [6/8] 0, 128
        %1256 = vxpose.xlu0.c.b16.cont [7/8] 0, 128
        %1257 = vxpose.xlu0.c.b16.end [8/8] 0, 128
        %v1258 = vpop.trf.xlu0
        %v1259 = vpop.trf.xlu0
        %v1260 = vpop.trf.xlu0
        %v1261 = vpop.trf.xlu0
        %v1262 = vpop.trf.xlu0
        %v1263 = vpop.trf.xlu0
        %v1264 = vpop.trf.xlu0
        %v1265 = vpop.trf.xlu0
        %1266 = vxpose.xlu0.c.b16.start [1/8] %v1013, 128
        %1267 = vxpose.xlu0.c.b16.cont [2/8] 0, 128
        %1268 = vxpose.xlu0.c.b16.cont [3/8] 0, 128
        %1269 = vxpose.xlu0.c.b16.cont [4/8] 0, 128
        %1270 = vxpose.xlu0.c.b16.cont [5/8] 0, 128
        %1271 = vxpose.xlu0.c.b16.cont [6/8] 0, 128
        %1272 = vxpose.xlu0.c.b16.cont [7/8] 0, 128
        %1273 = vxpose.xlu0.c.b16.end [8/8] 0, 128
        %v1274 = vpop.trf.xlu0
        %v1275 = vpop.trf.xlu0
        %v1276 = vpop.trf.xlu0
        %v1277 = vpop.trf.xlu0
        %v1278 = vpop.trf.xlu0
        %v1279 = vpop.trf.xlu0
        %v1280 = vpop.trf.xlu0
        %v1281 = vpop.trf.xlu0
        %1282 = vxpose.xlu0.c.b16.start [1/8] %v1069, 128
        %1283 = vxpose.xlu0.c.b16.cont [2/8] 0, 128
        %1284 = vxpose.xlu0.c.b16.cont [3/8] 0, 128
        %1285 = vxpose.xlu0.c.b16.cont [4/8] 0, 128
        %1286 = vxpose.xlu0.c.b16.cont [5/8] 0, 128
        %1287 = vxpose.xlu0.c.b16.cont [6/8] 0, 128
        %1288 = vxpose.xlu0.c.b16.cont [7/8] 0, 128
        %1289 = vxpose.xlu0.c.b16.end [8/8] 0, 128
        %v1290 = vpop.trf.xlu0
        %v1291 = vpop.trf.xlu0
        %v1292 = vpop.trf.xlu0
        %v1293 = vpop.trf.xlu0
        %v1294 = vpop.trf.xlu0
        %v1295 = vpop.trf.xlu0
        %v1296 = vpop.trf.xlu0
        %v1297 = vpop.trf.xlu0
        %1298 = vxpose.xlu0.c.b16.start [1/8] %v1029, 128
        %1299 = vxpose.xlu0.c.b16.cont [2/8] 0, 128
        %1300 = vxpose.xlu0.c.b16.cont [3/8] 0, 128
        %1301 = vxpose.xlu0.c.b16.cont [4/8] 0, 128
        %1302 = vxpose.xlu0.c.b16.cont [5/8] 0, 128
        %1303 = vxpose.xlu0.c.b16.cont [6/8] 0, 128
        %1304 = vxpose.xlu0.c.b16.cont [7/8] 0, 128
        %1305 = vxpose.xlu0.c.b16.end [8/8] 0, 128
        %v1306 = vpop.trf.xlu0
        %v1307 = vpop.trf.xlu0
        %v1308 = vpop.trf.xlu0
        %v1309 = vpop.trf.xlu0
        %v1310 = vpop.trf.xlu0
        %v1311 = vpop.trf.xlu0
        %v1312 = vpop.trf.xlu0
        %v1313 = vpop.trf.xlu0
        %1314 = vxpose.xlu0.c.b16.start [1/8] %v1085, 128
        %1315 = vxpose.xlu0.c.b16.cont [2/8] 0, 128
        %1316 = vxpose.xlu0.c.b16.cont [3/8] 0, 128
        %1317 = vxpose.xlu0.c.b16.cont [4/8] 0, 128
        %1318 = vxpose.xlu0.c.b16.cont [5/8] 0, 128
        %1319 = vxpose.xlu0.c.b16.cont [6/8] 0, 128
        %1320 = vxpose.xlu0.c.b16.cont [7/8] 0, 128
        %1321 = vxpose.xlu0.c.b16.end [8/8] 0, 128
        %v1322 = vpop.trf.xlu0
        %v1323 = vpop.trf.xlu0
        %v1324 = vpop.trf.xlu0
        %v1325 = vpop.trf.xlu0
        %v1326 = vpop.trf.xlu0
        %v1327 = vpop.trf.xlu0
        %v1328 = vpop.trf.xlu0
        %v1329 = vpop.trf.xlu0
        %1330 = vxpose.xlu0.c.b16.start [1/8] %v1021, 128
        %1331 = vxpose.xlu0.c.b16.cont [2/8] 0, 128
        %1332 = vxpose.xlu0.c.b16.cont [3/8] 0, 128
        %1333 = vxpose.xlu0.c.b16.cont [4/8] 0, 128
        %1334 = vxpose.xlu0.c.b16.cont [5/8] 0, 128
        %1335 = vxpose.xlu0.c.b16.cont [6/8] 0, 128
        %1336 = vxpose.xlu0.c.b16.cont [7/8] 0, 128
        %1337 = vxpose.xlu0.c.b16.end [8/8] 0, 128
        %v1338 = vpop.trf.xlu0
        %v1339 = vpop.trf.xlu0
        %v1340 = vpop.trf.xlu0
        %v1341 = vpop.trf.xlu0
        %v1342 = vpop.trf.xlu0
        %v1343 = vpop.trf.xlu0
        %v1344 = vpop.trf.xlu0
        %v1345 = vpop.trf.xlu0
        %1346 = vxpose.xlu0.c.b16.start [1/8] %v1077, 128
        %1347 = vxpose.xlu0.c.b16.cont [2/8] 0, 128
        %1348 = vxpose.xlu0.c.b16.cont [3/8] 0, 128
        %1349 = vxpose.xlu0.c.b16.cont [4/8] 0, 128
        %1350 = vxpose.xlu0.c.b16.cont [5/8] 0, 128
        %1351 = vxpose.xlu0.c.b16.cont [6/8] 0, 128
        %1352 = vxpose.xlu0.c.b16.cont [7/8] 0, 128
        %1353 = vxpose.xlu0.c.b16.end [8/8] 0, 128
        %v1354 = vpop.trf.xlu0
        %v1355 = vpop.trf.xlu0
        %v1356 = vpop.trf.xlu0
        %v1357 = vpop.trf.xlu0
        %v1358 = vpop.trf.xlu0
        %v1359 = vpop.trf.xlu0
        %v1360 = vpop.trf.xlu0
        %v1361 = vpop.trf.xlu0
        %1362 = vxpose.xlu0.c.b16.start [1/8] %v1031, 128
        %1363 = vxpose.xlu0.c.b16.cont [2/8] 0, 128
        %1364 = vxpose.xlu0.c.b16.cont [3/8] 0, 128
        %1365 = vxpose.xlu0.c.b16.cont [4/8] 0, 128
        %1366 = vxpose.xlu0.c.b16.cont [5/8] 0, 128
        %1367 = vxpose.xlu0.c.b16.cont [6/8] 0, 128
        %1368 = vxpose.xlu0.c.b16.cont [7/8] 0, 128
        %1369 = vxpose.xlu0.c.b16.end [8/8] 0, 128
        %v1370 = vpop.trf.xlu0
        %v1371 = vpop.trf.xlu0
        %v1372 = vpop.trf.xlu0
        %v1373 = vpop.trf.xlu0
        %v1374 = vpop.trf.xlu0
        %v1375 = vpop.trf.xlu0
        %v1376 = vpop.trf.xlu0
        %v1377 = vpop.trf.xlu0
        %1378 = vxpose.xlu0.c.b16.start [1/8] %v1087, 128
        %1379 = vxpose.xlu0.c.b16.cont [2/8] 0, 128
        %1380 = vxpose.xlu0.c.b16.cont [3/8] 0, 128
        %1381 = vxpose.xlu0.c.b16.cont [4/8] 0, 128
        %1382 = vxpose.xlu0.c.b16.cont [5/8] 0, 128
        %1383 = vxpose.xlu0.c.b16.cont [6/8] 0, 128
        %1384 = vxpose.xlu0.c.b16.cont [7/8] 0, 128
        %1385 = vxpose.xlu0.c.b16.end [8/8] 0, 128
        %v1386 = vpop.trf.xlu0
        %v1387 = vpop.trf.xlu0
        %v1388 = vpop.trf.xlu0
        %v1389 = vpop.trf.xlu0
        %v1390 = vpop.trf.xlu0
        %v1391 = vpop.trf.xlu0
        %v1392 = vpop.trf.xlu0
        %v1393 = vpop.trf.xlu0
        %1394 = vxpose.xlu0.c.b16.start [1/8] %v1025, 128
        %1395 = vxpose.xlu0.c.b16.cont [2/8] 0, 128
        %1396 = vxpose.xlu0.c.b16.cont [3/8] 0, 128
        %1397 = vxpose.xlu0.c.b16.cont [4/8] 0, 128
        %1398 = vxpose.xlu0.c.b16.cont [5/8] 0, 128
        %1399 = vxpose.xlu0.c.b16.cont [6/8] 0, 128
        %1400 = vxpose.xlu0.c.b16.cont [7/8] 0, 128
        %1401 = vxpose.xlu0.c.b16.end [8/8] 0, 128
        %v1402 = vpop.trf.xlu0
        %v1403 = vpop.trf.xlu0
        %v1404 = vpop.trf.xlu0
        %v1405 = vpop.trf.xlu0
        %v1406 = vpop.trf.xlu0
        %v1407 = vpop.trf.xlu0
        %v1408 = vpop.trf.xlu0
        %v1409 = vpop.trf.xlu0
        %1410 = vxpose.xlu0.c.b16.start [1/8] %v1081, 128
        %1411 = vxpose.xlu0.c.b16.cont [2/8] 0, 128
        %1412 = vxpose.xlu0.c.b16.cont [3/8] 0, 128
        %1413 = vxpose.xlu0.c.b16.cont [4/8] 0, 128
        %1414 = vxpose.xlu0.c.b16.cont [5/8] 0, 128
        %1415 = vxpose.xlu0.c.b16.cont [6/8] 0, 128
        %1416 = vxpose.xlu0.c.b16.cont [7/8] 0, 128
        %1417 = vxpose.xlu0.c.b16.end [8/8] 0, 128
        %v1418 = vpop.trf.xlu0
        %v1419 = vpop.trf.xlu0
        %v1420 = vpop.trf.xlu0
        %v1421 = vpop.trf.xlu0
        %v1422 = vpop.trf.xlu0
        %v1423 = vpop.trf.xlu0
        %v1424 = vpop.trf.xlu0
        %v1425 = vpop.trf.xlu0
        %1426 = vxpose.xlu0.c.b16.start [1/8] %v1033, 128
        %1427 = vxpose.xlu0.c.b16.cont [2/8] 0, 128
        %1428 = vxpose.xlu0.c.b16.cont [3/8] 0, 128
        %1429 = vxpose.xlu0.c.b16.cont [4/8] 0, 128
        %1430 = vxpose.xlu0.c.b16.cont [5/8] 0, 128
        %1431 = vxpose.xlu0.c.b16.cont [6/8] 0, 128
        %1432 = vxpose.xlu0.c.b16.cont [7/8] 0, 128
        %1433 = vxpose.xlu0.c.b16.end [8/8] 0, 128
        %v1434 = vpop.trf.xlu0
        %v1435 = vpop.trf.xlu0
        %v1436 = vpop.trf.xlu0
        %v1437 = vpop.trf.xlu0
        %v1438 = vpop.trf.xlu0
        %v1439 = vpop.trf.xlu0
        %v1440 = vpop.trf.xlu0
        %v1441 = vpop.trf.xlu0
        %1442 = vxpose.xlu0.c.b16.start [1/8] %v1089, 128
        %1443 = vxpose.xlu0.c.b16.cont [2/8] 0, 128
        %1444 = vxpose.xlu0.c.b16.cont [3/8] 0, 128
        %1445 = vxpose.xlu0.c.b16.cont [4/8] 0, 128
        %1446 = vxpose.xlu0.c.b16.cont [5/8] 0, 128
        %1447 = vxpose.xlu0.c.b16.cont [6/8] 0, 128
        %1448 = vxpose.xlu0.c.b16.cont [7/8] 0, 128
        %1449 = vxpose.xlu0.c.b16.end [8/8] 0, 128
        %v1450 = vpop.trf.xlu0
        %v1451 = vpop.trf.xlu0
        %v1452 = vpop.trf.xlu0
        %v1453 = vpop.trf.xlu0
        %v1454 = vpop.trf.xlu0
        %v1455 = vpop.trf.xlu0
        %v1456 = vpop.trf.xlu0
        %v1457 = vpop.trf.xlu0
        %1458 = vxpose.xlu0.c.b16.start [1/8] %v1121, 128
        %1459 = vxpose.xlu0.c.b16.cont [2/8] 0, 128
        %1460 = vxpose.xlu0.c.b16.cont [3/8] 0, 128
        %1461 = vxpose.xlu0.c.b16.cont [4/8] 0, 128
        %1462 = vxpose.xlu0.c.b16.cont [5/8] 0, 128
        %1463 = vxpose.xlu0.c.b16.cont [6/8] 0, 128
        %1464 = vxpose.xlu0.c.b16.cont [7/8] 0, 128
        %1465 = vxpose.xlu0.c.b16.end [8/8] 0, 128
        %v1466 = vpop.trf.xlu0
        %v1467 = vpop.trf.xlu0
        %v1468 = vpop.trf.xlu0
        %v1469 = vpop.trf.xlu0
        %v1470 = vpop.trf.xlu0
        %v1471 = vpop.trf.xlu0
        %v1472 = vpop.trf.xlu0
        %v1473 = vpop.trf.xlu0
        %1474 = vxpose.xlu0.c.b16.start [1/8] %v1177, 128
        %1475 = vxpose.xlu0.c.b16.cont [2/8] 0, 128
        %1476 = vxpose.xlu0.c.b16.cont [3/8] 0, 128
        %1477 = vxpose.xlu0.c.b16.cont [4/8] 0, 128
        %1478 = vxpose.xlu0.c.b16.cont [5/8] 0, 128
        %1479 = vxpose.xlu0.c.b16.cont [6/8] 0, 128
        %1480 = vxpose.xlu0.c.b16.cont [7/8] 0, 128
        %1481 = vxpose.xlu0.c.b16.end [8/8] 0, 128
        %v1482 = vpop.trf.xlu0
        %v1483 = vpop.trf.xlu0
        %v1484 = vpop.trf.xlu0
        %v1485 = vpop.trf.xlu0
        %v1486 = vpop.trf.xlu0
        %v1487 = vpop.trf.xlu0
        %v1488 = vpop.trf.xlu0
        %v1489 = vpop.trf.xlu0
        %1490 = vxpose.xlu0.c.b16.start [1/8] %v1139, 128
        %1491 = vxpose.xlu0.c.b16.cont [2/8] 0, 128
        %1492 = vxpose.xlu0.c.b16.cont [3/8] 0, 128
        %1493 = vxpose.xlu0.c.b16.cont [4/8] 0, 128
        %1494 = vxpose.xlu0.c.b16.cont [5/8] 0, 128
        %1495 = vxpose.xlu0.c.b16.cont [6/8] 0, 128
        %1496 = vxpose.xlu0.c.b16.cont [7/8] 0, 128
        %1497 = vxpose.xlu0.c.b16.end [8/8] 0, 128
        %v1498 = vpop.trf.xlu0
        %v1499 = vpop.trf.xlu0
        %v1500 = vpop.trf.xlu0
        %v1501 = vpop.trf.xlu0
        %v1502 = vpop.trf.xlu0
        %v1503 = vpop.trf.xlu0
        %v1504 = vpop.trf.xlu0
        %v1505 = vpop.trf.xlu0
        %1506 = vxpose.xlu0.c.b16.start [1/8] %v1195, 128
        %1507 = vxpose.xlu0.c.b16.cont [2/8] 0, 128
        %1508 = vxpose.xlu0.c.b16.cont [3/8] 0, 128
        %1509 = vxpose.xlu0.c.b16.cont [4/8] 0, 128
        %1510 = vxpose.xlu0.c.b16.cont [5/8] 0, 128
        %1511 = vxpose.xlu0.c.b16.cont [6/8] 0, 128
        %1512 = vxpose.xlu0.c.b16.cont [7/8] 0, 128
        %1513 = vxpose.xlu0.c.b16.end [8/8] 0, 128
        %v1514 = vpop.trf.xlu0
        %v1515 = vpop.trf.xlu0
        %v1516 = vpop.trf.xlu0
        %v1517 = vpop.trf.xlu0
        %v1518 = vpop.trf.xlu0
        %v1519 = vpop.trf.xlu0
        %v1520 = vpop.trf.xlu0
        %v1521 = vpop.trf.xlu0
        %1522 = vxpose.xlu0.c.b16.start [1/8] %v1125, 128
        %1523 = vxpose.xlu0.c.b16.cont [2/8] 0, 128
        %1524 = vxpose.xlu0.c.b16.cont [3/8] 0, 128
        %1525 = vxpose.xlu0.c.b16.cont [4/8] 0, 128
        %1526 = vxpose.xlu0.c.b16.cont [5/8] 0, 128
        %1527 = vxpose.xlu0.c.b16.cont [6/8] 0, 128
        %1528 = vxpose.xlu0.c.b16.cont [7/8] 0, 128
        %1529 = vxpose.xlu0.c.b16.end [8/8] 0, 128
        %v1530 = vpop.trf.xlu0
        %v1531 = vpop.trf.xlu0
        %v1532 = vpop.trf.xlu0
        %v1533 = vpop.trf.xlu0
        %v1534 = vpop.trf.xlu0
        %v1535 = vpop.trf.xlu0
        %v1536 = vpop.trf.xlu0
        %v1537 = vpop.trf.xlu0
        %1538 = vxpose.xlu0.c.b16.start [1/8] %v1181, 128
        %1539 = vxpose.xlu0.c.b16.cont [2/8] 0, 128
        %1540 = vxpose.xlu0.c.b16.cont [3/8] 0, 128
        %1541 = vxpose.xlu0.c.b16.cont [4/8] 0, 128
        %1542 = vxpose.xlu0.c.b16.cont [5/8] 0, 128
        %1543 = vxpose.xlu0.c.b16.cont [6/8] 0, 128
        %1544 = vxpose.xlu0.c.b16.cont [7/8] 0, 128
        %1545 = vxpose.xlu0.c.b16.end [8/8] 0, 128
        %v1546 = vpop.trf.xlu0
        %v1547 = vpop.trf.xlu0
        %v1548 = vpop.trf.xlu0
        %v1549 = vpop.trf.xlu0
        %v1550 = vpop.trf.xlu0
        %v1551 = vpop.trf.xlu0
        %v1552 = vpop.trf.xlu0
        %v1553 = vpop.trf.xlu0
        %1554 = vxpose.xlu0.c.b16.start [1/8] %v1141, 128
        %1555 = vxpose.xlu0.c.b16.cont [2/8] 0, 128
        %1556 = vxpose.xlu0.c.b16.cont [3/8] 0, 128
        %1557 = vxpose.xlu0.c.b16.cont [4/8] 0, 128
        %1558 = vxpose.xlu0.c.b16.cont [5/8] 0, 128
        %1559 = vxpose.xlu0.c.b16.cont [6/8] 0, 128
        %1560 = vxpose.xlu0.c.b16.cont [7/8] 0, 128
        %1561 = vxpose.xlu0.c.b16.end [8/8] 0, 128
        %v1562 = vpop.trf.xlu0
        %v1563 = vpop.trf.xlu0
        %v1564 = vpop.trf.xlu0
        %v1565 = vpop.trf.xlu0
        %v1566 = vpop.trf.xlu0
        %v1567 = vpop.trf.xlu0
        %v1568 = vpop.trf.xlu0
        %v1569 = vpop.trf.xlu0
        %1570 = vxpose.xlu0.c.b16.start [1/8] %v1197, 128
        %1571 = vxpose.xlu0.c.b16.cont [2/8] 0, 128
        %1572 = vxpose.xlu0.c.b16.cont [3/8] 0, 128
        %1573 = vxpose.xlu0.c.b16.cont [4/8] 0, 128
        %1574 = vxpose.xlu0.c.b16.cont [5/8] 0, 128
        %1575 = vxpose.xlu0.c.b16.cont [6/8] 0, 128
        %1576 = vxpose.xlu0.c.b16.cont [7/8] 0, 128
        %1577 = vxpose.xlu0.c.b16.end [8/8] 0, 128
        %v1578 = vpop.trf.xlu0
        %v1579 = vpop.trf.xlu0
        %v1580 = vpop.trf.xlu0
        %v1581 = vpop.trf.xlu0
        %v1582 = vpop.trf.xlu0
        %v1583 = vpop.trf.xlu0
        %v1584 = vpop.trf.xlu0
        %v1585 = vpop.trf.xlu0
        %1586 = vxpose.xlu0.c.b16.start [1/8] %v1133, 128
        %1587 = vxpose.xlu0.c.b16.cont [2/8] 0, 128
        %1588 = vxpose.xlu0.c.b16.cont [3/8] 0, 128
        %1589 = vxpose.xlu0.c.b16.cont [4/8] 0, 128
        %1590 = vxpose.xlu0.c.b16.cont [5/8] 0, 128
        %1591 = vxpose.xlu0.c.b16.cont [6/8] 0, 128
        %1592 = vxpose.xlu0.c.b16.cont [7/8] 0, 128
        %1593 = vxpose.xlu0.c.b16.end [8/8] 0, 128
        %v1594 = vpop.trf.xlu0
        %v1595 = vpop.trf.xlu0
        %v1596 = vpop.trf.xlu0
        %v1597 = vpop.trf.xlu0
        %v1598 = vpop.trf.xlu0
        %v1599 = vpop.trf.xlu0
        %v1600 = vpop.trf.xlu0
        %v1601 = vpop.trf.xlu0
        %1602 = vxpose.xlu0.c.b16.start [1/8] %v1189, 128
        %1603 = vxpose.xlu0.c.b16.cont [2/8] 0, 128
        %1604 = vxpose.xlu0.c.b16.cont [3/8] 0, 128
        %1605 = vxpose.xlu0.c.b16.cont [4/8] 0, 128
        %1606 = vxpose.xlu0.c.b16.cont [5/8] 0, 128
        %1607 = vxpose.xlu0.c.b16.cont [6/8] 0, 128
        %1608 = vxpose.xlu0.c.b16.cont [7/8] 0, 128
        %1609 = vxpose.xlu0.c.b16.end [8/8] 0, 128
        %v1610 = vpop.trf.xlu0
        %v1611 = vpop.trf.xlu0
        %v1612 = vpop.trf.xlu0
        %v1613 = vpop.trf.xlu0
        %v1614 = vpop.trf.xlu0
        %v1615 = vpop.trf.xlu0
        %v1616 = vpop.trf.xlu0
        %v1617 = vpop.trf.xlu0
        %1618 = vxpose.xlu0.c.b16.start [1/8] %v1143, 128
        %1619 = vxpose.xlu0.c.b16.cont [2/8] 0, 128
        %1620 = vxpose.xlu0.c.b16.cont [3/8] 0, 128
        %1621 = vxpose.xlu0.c.b16.cont [4/8] 0, 128
        %1622 = vxpose.xlu0.c.b16.cont [5/8] 0, 128
        %1623 = vxpose.xlu0.c.b16.cont [6/8] 0, 128
        %1624 = vxpose.xlu0.c.b16.cont [7/8] 0, 128
        %1625 = vxpose.xlu0.c.b16.end [8/8] 0, 128
        %v1626 = vpop.trf.xlu0
        %v1627 = vpop.trf.xlu0
        %v1628 = vpop.trf.xlu0
        %v1629 = vpop.trf.xlu0
        %v1630 = vpop.trf.xlu0
        %v1631 = vpop.trf.xlu0
        %v1632 = vpop.trf.xlu0
        %v1633 = vpop.trf.xlu0
        %1634 = vxpose.xlu0.c.b16.start [1/8] %v1199, 128
        %1635 = vxpose.xlu0.c.b16.cont [2/8] 0, 128
        %1636 = vxpose.xlu0.c.b16.cont [3/8] 0, 128
        %1637 = vxpose.xlu0.c.b16.cont [4/8] 0, 128
        %1638 = vxpose.xlu0.c.b16.cont [5/8] 0, 128
        %1639 = vxpose.xlu0.c.b16.cont [6/8] 0, 128
        %1640 = vxpose.xlu0.c.b16.cont [7/8] 0, 128
        %1641 = vxpose.xlu0.c.b16.end [8/8] 0, 128
        %v1642 = vpop.trf.xlu0
        %v1643 = vpop.trf.xlu0
        %v1644 = vpop.trf.xlu0
        %v1645 = vpop.trf.xlu0
        %v1646 = vpop.trf.xlu0
        %v1647 = vpop.trf.xlu0
        %v1648 = vpop.trf.xlu0
        %v1649 = vpop.trf.xlu0
        %1650 = vxpose.xlu0.c.b16.start [1/8] %v1137, 128
        %1651 = vxpose.xlu0.c.b16.cont [2/8] 0, 128
        %1652 = vxpose.xlu0.c.b16.cont [3/8] 0, 128
        %1653 = vxpose.xlu0.c.b16.cont [4/8] 0, 128
        %1654 = vxpose.xlu0.c.b16.cont [5/8] 0, 128
        %1655 = vxpose.xlu0.c.b16.cont [6/8] 0, 128
        %1656 = vxpose.xlu0.c.b16.cont [7/8] 0, 128
        %1657 = vxpose.xlu0.c.b16.end [8/8] 0, 128
        %v1658 = vpop.trf.xlu0
        %v1659 = vpop.trf.xlu0
        %v1660 = vpop.trf.xlu0
        %v1661 = vpop.trf.xlu0
        %v1662 = vpop.trf.xlu0
        %v1663 = vpop.trf.xlu0
        %v1664 = vpop.trf.xlu0
        %v1665 = vpop.trf.xlu0
        %1666 = vxpose.xlu0.c.b16.start [1/8] %v1193, 128
        %1667 = vxpose.xlu0.c.b16.cont [2/8] 0, 128
        %1668 = vxpose.xlu0.c.b16.cont [3/8] 0, 128
        %1669 = vxpose.xlu0.c.b16.cont [4/8] 0, 128
        %1670 = vxpose.xlu0.c.b16.cont [5/8] 0, 128
        %1671 = vxpose.xlu0.c.b16.cont [6/8] 0, 128
        %1672 = vxpose.xlu0.c.b16.cont [7/8] 0, 128
        %1673 = vxpose.xlu0.c.b16.end [8/8] 0, 128
        %v1674 = vpop.trf.xlu0
        %v1675 = vpop.trf.xlu0
        %v1676 = vpop.trf.xlu0
        %v1677 = vpop.trf.xlu0
        %v1678 = vpop.trf.xlu0
        %v1679 = vpop.trf.xlu0
        %v1680 = vpop.trf.xlu0
        %v1681 = vpop.trf.xlu0
        %1682 = vxpose.xlu0.c.b16.start [1/8] %v1145, 128
        %1683 = vxpose.xlu0.c.b16.cont [2/8] 0, 128
        %1684 = vxpose.xlu0.c.b16.cont [3/8] 0, 128
        %1685 = vxpose.xlu0.c.b16.cont [4/8] 0, 128
        %1686 = vxpose.xlu0.c.b16.cont [5/8] 0, 128
        %1687 = vxpose.xlu0.c.b16.cont [6/8] 0, 128
        %1688 = vxpose.xlu0.c.b16.cont [7/8] 0, 128
        %1689 = vxpose.xlu0.c.b16.end [8/8] 0, 128
        %v1690 = vpop.trf.xlu0
        %v1691 = vpop.trf.xlu0
        %v1692 = vpop.trf.xlu0
        %v1693 = vpop.trf.xlu0
        %v1694 = vpop.trf.xlu0
        %v1695 = vpop.trf.xlu0
        %v1696 = vpop.trf.xlu0
        %v1697 = vpop.trf.xlu0
        %1698 = vxpose.xlu0.c.b16.start [1/8] %v1201, 128
        %1699 = vxpose.xlu0.c.b16.cont [2/8] 0, 128
        %1700 = vxpose.xlu0.c.b16.cont [3/8] 0, 128
        %1701 = vxpose.xlu0.c.b16.cont [4/8] 0, 128
        %1702 = vxpose.xlu0.c.b16.cont [5/8] 0, 128
        %1703 = vxpose.xlu0.c.b16.cont [6/8] 0, 128
        %1704 = vxpose.xlu0.c.b16.cont [7/8] 0, 128
        %1705 = vxpose.xlu0.c.b16.end [8/8] 0, 128
        %v1706 = vpop.trf.xlu0
        %v1707 = vpop.trf.xlu0
        %v1708 = vpop.trf.xlu0
        %v1709 = vpop.trf.xlu0
        %v1710 = vpop.trf.xlu0
        %v1711 = vpop.trf.xlu0
        %v1712 = vpop.trf.xlu0
        %v1713 = vpop.trf.xlu0
        %v1714 = vrot.slane %v1274, 4
        %v1715 = vsel %vm734, %v1714, %v1210
        %v1717 = vunpack.c.l.s4 1983009808
        %v1718 = vunpack.c.0.s8 %v1717
        %v1719 = vperm.slane %v1715, %v1718
        %v1720 = vrot.slane %v1306, 4
        %v1721 = vsel %vm734, %v1720, %v1242
        %v1723 = vunpack.c.l.s4 1983009808
        %v1724 = vunpack.c.0.s8 %v1723
        %v1725 = vperm.slane %v1721, %v1724
        %v1726 = vrot.slane %v1402, 4
        %v1727 = vsel %vm734, %v1726, %v1338
        %v1729 = vunpack.c.l.s4 1983009808
        %v1730 = vunpack.c.0.s8 %v1729
        %v1731 = vperm.slane %v1727, %v1730
        %v1732 = vrot.slane %v1434, 4
        %v1733 = vsel %vm734, %v1732, %v1370
        %v1735 = vunpack.c.l.s4 1983009808
        %v1736 = vunpack.c.0.s8 %v1735
        %v1737 = vperm.slane %v1733, %v1736
        %v1738 = vrot.slane %v1725, 4
        %v1739 = vsel %vm734, %v1738, %v1719
        %v1741 = vunpack.c.l.s4 1934713408
        %v1742 = vunpack.c.0.s8 %v1741
        %v1743 = vperm.slane %v1739, %v1742
        %v1744 = vrot.slane %v1737, 4
        %v1745 = vsel %vm734, %v1744, %v1731
        %v1747 = vunpack.c.l.s4 1934713408
        %v1748 = vunpack.c.0.s8 %v1747
        %v1749 = vperm.slane %v1745, %v1748
        %v1750 = vrot.slane %v1749, 4
        %v1751 = vsel %vm734, %v1750, %v1743
        %v1752 = vrot.slane %v1743, 4
        %v1753 = vsel %vm734, %v1749, %v1752
        %v1754 = vrot.slane %v1290, 4
        %v1755 = vsel %vm734, %v1754, %v1226
        %v1757 = vunpack.c.l.s4 1983009808
        %v1758 = vunpack.c.0.s8 %v1757
        %v1759 = vperm.slane %v1755, %v1758
        %v1760 = vrot.slane %v1322, 4
        %v1761 = vsel %vm734, %v1760, %v1258
        %v1763 = vunpack.c.l.s4 1983009808
        %v1764 = vunpack.c.0.s8 %v1763
        %v1765 = vperm.slane %v1761, %v1764
        %v1766 = vrot.slane %v1418, 4
        %v1767 = vsel %vm734, %v1766, %v1354
        %v1769 = vunpack.c.l.s4 1983009808
        %v1770 = vunpack.c.0.s8 %v1769
        %v1771 = vperm.slane %v1767, %v1770
        %v1772 = vrot.slane %v1450, 4
        %v1773 = vsel %vm734, %v1772, %v1386
        %v1775 = vunpack.c.l.s4 1983009808
        %v1776 = vunpack.c.0.s8 %v1775
        %v1777 = vperm.slane %v1773, %v1776
        %v1778 = vrot.slane %v1765, 4
        %v1779 = vsel %vm734, %v1778, %v1759
        %v1781 = vunpack.c.l.s4 1934713408
        %v1782 = vunpack.c.0.s8 %v1781
        %v1783 = vperm.slane %v1779, %v1782
        %v1784 = vrot.slane %v1777, 4
        %v1785 = vsel %vm734, %v1784, %v1771
        %v1787 = vunpack.c.l.s4 1934713408
        %v1788 = vunpack.c.0.s8 %v1787
        %v1789 = vperm.slane %v1785, %v1788
        %v1790 = vrot.slane %v1789, 4
        %v1791 = vsel %vm734, %v1790, %v1783
        %v1792 = vrot.slane %v1783, 4
        %v1793 = vsel %vm734, %v1789, %v1792
        %v1794 = vrot.slane %v1530, 4
        %v1795 = vsel %vm734, %v1794, %v1466
        %v1797 = vunpack.c.l.s4 1983009808
        %v1798 = vunpack.c.0.s8 %v1797
        %v1799 = vperm.slane %v1795, %v1798
        %v1800 = vrot.slane %v1562, 4
        %v1801 = vsel %vm734, %v1800, %v1498
        %v1803 = vunpack.c.l.s4 1983009808
        %v1804 = vunpack.c.0.s8 %v1803
        %v1805 = vperm.slane %v1801, %v1804
        %v1806 = vrot.slane %v1658, 4
        %v1807 = vsel %vm734, %v1806, %v1594
        %v1809 = vunpack.c.l.s4 1983009808
        %v1810 = vunpack.c.0.s8 %v1809
        %v1811 = vperm.slane %v1807, %v1810
        %v1812 = vrot.slane %v1690, 4
        %v1813 = vsel %vm734, %v1812, %v1626
        %v1815 = vunpack.c.l.s4 1983009808
        %v1816 = vunpack.c.0.s8 %v1815
        %v1817 = vperm.slane %v1813, %v1816
        %v1818 = vrot.slane %v1805, 4
        %v1819 = vsel %vm734, %v1818, %v1799
        %v1821 = vunpack.c.l.s4 1934713408
        %v1822 = vunpack.c.0.s8 %v1821
        %v1823 = vperm.slane %v1819, %v1822
        %v1824 = vrot.slane %v1817, 4
        %v1825 = vsel %vm734, %v1824, %v1811
        %v1827 = vunpack.c.l.s4 1934713408
        %v1828 = vunpack.c.0.s8 %v1827
        %v1829 = vperm.slane %v1825, %v1828
        %v1830 = vrot.slane %v1829, 4
        %v1831 = vsel %vm734, %v1830, %v1823
        %v1832 = vrot.slane %v1823, 4
        %v1833 = vsel %vm734, %v1829, %v1832
        %v1834 = vrot.slane %v1546, 4
        %v1835 = vsel %vm734, %v1834, %v1482
        %v1837 = vunpack.c.l.s4 1983009808
        %v1838 = vunpack.c.0.s8 %v1837
        %v1839 = vperm.slane %v1835, %v1838
        %v1840 = vrot.slane %v1578, 4
        %v1841 = vsel %vm734, %v1840, %v1514
        %v1843 = vunpack.c.l.s4 1983009808
        %v1844 = vunpack.c.0.s8 %v1843
        %v1845 = vperm.slane %v1841, %v1844
        %v1846 = vrot.slane %v1674, 4
        %v1847 = vsel %vm734, %v1846, %v1610
        %v1849 = vunpack.c.l.s4 1983009808
        %v1850 = vunpack.c.0.s8 %v1849
        %v1851 = vperm.slane %v1847, %v1850
        %v1852 = vrot.slane %v1706, 4
        %v1853 = vsel %vm734, %v1852, %v1642
        %v1855 = vunpack.c.l.s4 1983009808
        %v1856 = vunpack.c.0.s8 %v1855
        %v1857 = vperm.slane %v1853, %v1856
        %v1858 = vrot.slane %v1845, 4
        %v1859 = vsel %vm734, %v1858, %v1839
        %v1861 = vunpack.c.l.s4 1934713408
        %v1862 = vunpack.c.0.s8 %v1861
        %v1863 = vperm.slane %v1859, %v1862
        %v1864 = vrot.slane %v1857, 4
        %v1865 = vsel %vm734, %v1864, %v1851
        %v1867 = vunpack.c.l.s4 1934713408
        %v1868 = vunpack.c.0.s8 %v1867
        %v1869 = vperm.slane %v1865, %v1868
        %v1870 = vrot.slane %v1869, 4
        %v1871 = vsel %vm734, %v1870, %v1863
        %v1872 = vrot.slane %v1863, 4
        %v1873 = vsel %vm734, %v1869, %v1872
        %v1876 = vpack.i.b16 %v1791, %v1751
        %v1878 = vshrl.u32 %v1751, 16
        %v1879 = vshrl.u32 %v1791, 16
        %v1880 = vpack.i.b16 %v1879, %v1878
        %v1884 = vpack.i.b16 %v1793, %v1753
        %v1886 = vshrl.u32 %v1753, 16
        %v1887 = vshrl.u32 %v1793, 16
        %v1888 = vpack.i.b16 %v1887, %v1886
        %v1892 = vpack.i.b16 %v1871, %v1831
        %v1894 = vshrl.u32 %v1831, 16
        %v1895 = vshrl.u32 %v1871, 16
        %v1896 = vpack.i.b16 %v1895, %v1894
        %v1900 = vpack.i.b16 %v1873, %v1833
        %v1902 = vshrl.u32 %v1833, 16
        %v1903 = vshrl.u32 %v1873, 16
        %v1904 = vpack.i.b16 %v1903, %v1902
        %vm1906 = vcmask 261120
        %v1908 = vsel %vm1906, %v776, 0
        %1910 = vmatpush.bf16.msra.mxu0 0
        %1911 = vmatpush.bf16.msra.mxu0 0
        %1912 = vmatpush.bf16.msra.mxu0 0
        %1913 = vmatpush.bf16.msra.mxu0 0
        %1914 = vmatpush.bf16.msra.mxu0 0
        %1915 = vmatpush.bf16.msra.mxu0 0
        %1916 = vmatpush.bf16.msra.mxu0 %v1892
        %1917 = vmatpush.bf16.msra.mxu0 %v1876
        %1918 = vmatmul.bf16.gmra.mxu0 %v1908
        %v1919 = vpop.f32.mrf.mxu0
        %v1920 = vadd.f32 0.0, %v1919
        %v1921 = vpop.f32.mrf.mxu0
        %1922 = vdwg.mxu0
        %v1924 = vsel %vm1906, %v779, 0
        %1926 = vmatpush.bf16.msra.mxu0 0
        %1927 = vmatpush.bf16.msra.mxu0 0
        %1928 = vmatpush.bf16.msra.mxu0 0
        %1929 = vmatpush.bf16.msra.mxu0 0
        %1930 = vmatpush.bf16.msra.mxu0 0
        %1931 = vmatpush.bf16.msra.mxu0 0
        %1932 = vmatpush.bf16.msra.mxu0 %v1896
        %1933 = vmatpush.bf16.msra.mxu0 %v1880
        %1934 = vmatmul.bf16.gmra.mxu0 %v1924
        %v1935 = vpop.f32.mrf.mxu0
        %v1936 = vadd.f32 0.0, %v1935
        %v1937 = vpop.f32.mrf.mxu0
        %1938 = vdwg.mxu0
        %v1940 = vsel %vm1906, %v782, 0
        %1942 = vmatpush.bf16.msra.mxu0 0
        %1943 = vmatpush.bf16.msra.mxu0 0
        %1944 = vmatpush.bf16.msra.mxu0 0
        %1945 = vmatpush.bf16.msra.mxu0 0
        %1946 = vmatpush.bf16.msra.mxu0 0
        %1947 = vmatpush.bf16.msra.mxu0 0
        %1948 = vmatpush.bf16.msra.mxu0 %v1900
        %1949 = vmatpush.bf16.msra.mxu0 %v1884
        %1950 = vmatmul.bf16.gmra.mxu0 %v1940
        %v1951 = vpop.f32.mrf.mxu0
        %v1952 = vadd.f32 0.0, %v1951
        %v1953 = vpop.f32.mrf.mxu0
        %1954 = vdwg.mxu0
        %v1956 = vsel %vm1906, %v785, 0
        %1958 = vmatpush.bf16.msra.mxu0 0
        %1959 = vmatpush.bf16.msra.mxu0 0
        %1960 = vmatpush.bf16.msra.mxu0 0
        %1961 = vmatpush.bf16.msra.mxu0 0
        %1962 = vmatpush.bf16.msra.mxu0 0
        %1963 = vmatpush.bf16.msra.mxu0 0
        %1964 = vmatpush.bf16.msra.mxu0 %v1904
        %1965 = vmatpush.bf16.msra.mxu0 %v1888
        %1966 = vmatmul.bf16.gmra.mxu0 %v1956
        %v1967 = vpop.f32.mrf.mxu0
        %v1968 = vadd.f32 0.0, %v1967
        %v1969 = vpop.f32.mrf.mxu0
        %1970 = vdwg.mxu0
        %vm1971 = vcmask 64512
        %v1972 = vsel %vm1971, %v1920, -inf
        %1973 = vmax.xlane.f32.xlu0 %v1972
        %v1974 = vpop.xlane.xlu0 %1973
        %v1975 = vsel %vm1971, %v1936, -inf
        %1976 = vmax.xlane.f32.xlu0 %v1975
        %v1977 = vpop.xlane.xlu0 %1976
        %v1978 = vsel %vm1971, %v1952, -inf
        %1979 = vmax.xlane.f32.xlu0 %v1978
        %v1980 = vpop.xlane.xlu0 %1979
        %v1981 = vsel %vm1971, %v1968, -inf
        %1982 = vmax.xlane.f32.xlu0 %v1981
        %v1983 = vpop.xlane.xlu0 %1982
        %v1984 = vsub.f32 %v1920, %v1974
        %v1985 = vsub.f32 %v1936, %v1977
        %v1986 = vsub.f32 %v1952, %v1980
        %v1987 = vsub.f32 %v1968, %v1983
        %v1988 = vmul.f32 %v1984, 1.442695
        %v1989 = vpow.pop %v1988
        %v1990 = vmul.f32 %v1985, 1.442695
        %v1991 = vpow.pop %v1990
        %v1992 = vmul.f32 %v1986, 1.442695
        %v1993 = vpow.pop %v1992
        %v1994 = vmul.f32 %v1987, 1.442695
        %v1995 = vpow.pop %v1994
        %v1996 = vsel %vm1971, %v1989, 0.0
        %1997 = vadd.xlane.f32.xlu0 %v1996
        %v1998 = vpop.xlane.xlu0 %1997
        %v1999 = vsel %vm1971, %v1991, 0.0
        %2000 = vadd.xlane.f32.xlu0 %v1999
        %v2001 = vpop.xlane.xlu0 %2000
        %v2002 = vsel %vm1971, %v1993, 0.0
        %2003 = vadd.xlane.f32.xlu0 %v2002
        %v2004 = vpop.xlane.xlu0 %2003
        %v2005 = vsel %vm1971, %v1995, 0.0
        %2006 = vadd.xlane.f32.xlu0 %v2005
        %v2007 = vpop.xlane.xlu0 %2006
        %v2008 = vrcp.pop %v1998
        %v2009 = vrcp.pop %v2001
        %v2010 = vrcp.pop %v2004
        %v2011 = vrcp.pop %v2007
        %v2012 = vmul.f32 %v1989, %v2008
        %v2013 = vmul.f32 %v1991, %v2009
        %v2014 = vmul.f32 %v1993, %v2010
        %v2015 = vmul.f32 %v1995, %v2011
        %v2016 = vpack.c.bf16 %v2012, %v2012
        %v2017 = vpack.c.bf16 %v2013, %v2013
        %v2018 = vpack.c.bf16 %v2014, %v2014
        %v2019 = vpack.c.bf16 %v2015, %v2015
        %v2020 = vpack.c.bf16 %v692, %v692
        %v2021 = vpack.c.bf16 %v710, %v710
        %v2022 = vpack.c.bf16 %v696, %v696
        %v2023 = vpack.c.bf16 %v712, %v712
        %v2024 = vpack.c.bf16 %v704, %v704
        %v2025 = vpack.c.bf16 %v714, %v714
        %v2026 = vpack.c.bf16 %v708, %v708
        %v2027 = vpack.c.bf16 %v716, %v716
        %2028 = vxpose.xlu0.c.b16.start [1/8] %v2020, 128
        %2029 = vxpose.xlu0.c.b16.cont [2/8] 0, 128
        %2030 = vxpose.xlu0.c.b16.cont [3/8] 0, 128
        %2031 = vxpose.xlu0.c.b16.cont [4/8] 0, 128
        %2032 = vxpose.xlu0.c.b16.cont [5/8] 0, 128
        %2033 = vxpose.xlu0.c.b16.cont [6/8] 0, 128
        %2034 = vxpose.xlu0.c.b16.cont [7/8] 0, 128
        %2035 = vxpose.xlu0.c.b16.end [8/8] 0, 128
        %v2036 = vpop.trf.xlu0
        %v2037 = vpop.trf.xlu0
        %v2038 = vpop.trf.xlu0
        %v2039 = vpop.trf.xlu0
        %v2040 = vpop.trf.xlu0
        %v2041 = vpop.trf.xlu0
        %v2042 = vpop.trf.xlu0
        %v2043 = vpop.trf.xlu0
        %2044 = vxpose.xlu0.c.b16.start [1/8] %v2021, 128
        %2045 = vxpose.xlu0.c.b16.cont [2/8] 0, 128
        %2046 = vxpose.xlu0.c.b16.cont [3/8] 0, 128
        %2047 = vxpose.xlu0.c.b16.cont [4/8] 0, 128
        %2048 = vxpose.xlu0.c.b16.cont [5/8] 0, 128
        %2049 = vxpose.xlu0.c.b16.cont [6/8] 0, 128
        %2050 = vxpose.xlu0.c.b16.cont [7/8] 0, 128
        %2051 = vxpose.xlu0.c.b16.end [8/8] 0, 128
        %v2052 = vpop.trf.xlu0
        %v2053 = vpop.trf.xlu0
        %v2054 = vpop.trf.xlu0
        %v2055 = vpop.trf.xlu0
        %v2056 = vpop.trf.xlu0
        %v2057 = vpop.trf.xlu0
        %v2058 = vpop.trf.xlu0
        %v2059 = vpop.trf.xlu0
        %2060 = vxpose.xlu0.c.b16.start [1/8] %v2022, 128
        %2061 = vxpose.xlu0.c.b16.cont [2/8] 0, 128
        %2062 = vxpose.xlu0.c.b16.cont [3/8] 0, 128
        %2063 = vxpose.xlu0.c.b16.cont [4/8] 0, 128
        %2064 = vxpose.xlu0.c.b16.cont [5/8] 0, 128
        %2065 = vxpose.xlu0.c.b16.cont [6/8] 0, 128
        %2066 = vxpose.xlu0.c.b16.cont [7/8] 0, 128
        %2067 = vxpose.xlu0.c.b16.end [8/8] 0, 128
        %v2068 = vpop.trf.xlu0
        %v2069 = vpop.trf.xlu0
        %v2070 = vpop.trf.xlu0
        %v2071 = vpop.trf.xlu0
        %v2072 = vpop.trf.xlu0
        %v2073 = vpop.trf.xlu0
        %v2074 = vpop.trf.xlu0
        %v2075 = vpop.trf.xlu0
        %2076 = vxpose.xlu0.c.b16.start [1/8] %v2023, 128
        %2077 = vxpose.xlu0.c.b16.cont [2/8] 0, 128
        %2078 = vxpose.xlu0.c.b16.cont [3/8] 0, 128
        %2079 = vxpose.xlu0.c.b16.cont [4/8] 0, 128
        %2080 = vxpose.xlu0.c.b16.cont [5/8] 0, 128
        %2081 = vxpose.xlu0.c.b16.cont [6/8] 0, 128
        %2082 = vxpose.xlu0.c.b16.cont [7/8] 0, 128
        %2083 = vxpose.xlu0.c.b16.end [8/8] 0, 128
        %v2084 = vpop.trf.xlu0
        %v2085 = vpop.trf.xlu0
        %v2086 = vpop.trf.xlu0
        %v2087 = vpop.trf.xlu0
        %v2088 = vpop.trf.xlu0
        %v2089 = vpop.trf.xlu0
        %v2090 = vpop.trf.xlu0
        %v2091 = vpop.trf.xlu0
        %2092 = vxpose.xlu0.c.b16.start [1/8] %v2024, 128
        %2093 = vxpose.xlu0.c.b16.cont [2/8] 0, 128
        %2094 = vxpose.xlu0.c.b16.cont [3/8] 0, 128
        %2095 = vxpose.xlu0.c.b16.cont [4/8] 0, 128
        %2096 = vxpose.xlu0.c.b16.cont [5/8] 0, 128
        %2097 = vxpose.xlu0.c.b16.cont [6/8] 0, 128
        %2098 = vxpose.xlu0.c.b16.cont [7/8] 0, 128
        %2099 = vxpose.xlu0.c.b16.end [8/8] 0, 128
        %v2100 = vpop.trf.xlu0
        %v2101 = vpop.trf.xlu0
        %v2102 = vpop.trf.xlu0
        %v2103 = vpop.trf.xlu0
        %v2104 = vpop.trf.xlu0
        %v2105 = vpop.trf.xlu0
        %v2106 = vpop.trf.xlu0
        %v2107 = vpop.trf.xlu0
        %2108 = vxpose.xlu0.c.b16.start [1/8] %v2025, 128
        %2109 = vxpose.xlu0.c.b16.cont [2/8] 0, 128
        %2110 = vxpose.xlu0.c.b16.cont [3/8] 0, 128
        %2111 = vxpose.xlu0.c.b16.cont [4/8] 0, 128
        %2112 = vxpose.xlu0.c.b16.cont [5/8] 0, 128
        %2113 = vxpose.xlu0.c.b16.cont [6/8] 0, 128
        %2114 = vxpose.xlu0.c.b16.cont [7/8] 0, 128
        %2115 = vxpose.xlu0.c.b16.end [8/8] 0, 128
        %v2116 = vpop.trf.xlu0
        %v2117 = vpop.trf.xlu0
        %v2118 = vpop.trf.xlu0
        %v2119 = vpop.trf.xlu0
        %v2120 = vpop.trf.xlu0
        %v2121 = vpop.trf.xlu0
        %v2122 = vpop.trf.xlu0
        %v2123 = vpop.trf.xlu0
        %2124 = vxpose.xlu0.c.b16.start [1/8] %v2026, 128
        %2125 = vxpose.xlu0.c.b16.cont [2/8] 0, 128
        %2126 = vxpose.xlu0.c.b16.cont [3/8] 0, 128
        %2127 = vxpose.xlu0.c.b16.cont [4/8] 0, 128
        %2128 = vxpose.xlu0.c.b16.cont [5/8] 0, 128
        %2129 = vxpose.xlu0.c.b16.cont [6/8] 0, 128
        %2130 = vxpose.xlu0.c.b16.cont [7/8] 0, 128
        %2131 = vxpose.xlu0.c.b16.end [8/8] 0, 128
        %v2132 = vpop.trf.xlu0
        %v2133 = vpop.trf.xlu0
        %v2134 = vpop.trf.xlu0
        %v2135 = vpop.trf.xlu0
        %v2136 = vpop.trf.xlu0
        %v2137 = vpop.trf.xlu0
        %v2138 = vpop.trf.xlu0
        %v2139 = vpop.trf.xlu0
        %2140 = vxpose.xlu0.c.b16.start [1/8] %v2027, 128
        %2141 = vxpose.xlu0.c.b16.cont [2/8] 0, 128
        %2142 = vxpose.xlu0.c.b16.cont [3/8] 0, 128
        %2143 = vxpose.xlu0.c.b16.cont [4/8] 0, 128
        %2144 = vxpose.xlu0.c.b16.cont [5/8] 0, 128
        %2145 = vxpose.xlu0.c.b16.cont [6/8] 0, 128
        %2146 = vxpose.xlu0.c.b16.cont [7/8] 0, 128
        %2147 = vxpose.xlu0.c.b16.end [8/8] 0, 128
        %v2148 = vpop.trf.xlu0
        %v2149 = vpop.trf.xlu0
        %v2150 = vpop.trf.xlu0
        %v2151 = vpop.trf.xlu0
        %v2152 = vpop.trf.xlu0
        %v2153 = vpop.trf.xlu0
        %v2154 = vpop.trf.xlu0
        %v2155 = vpop.trf.xlu0
        %v2158 = vpack.i.b16 %v2052, %v2036
        %v2160 = vshrl.u32 %v2036, 16
        %v2161 = vshrl.u32 %v2052, 16
        %v2162 = vpack.i.b16 %v2161, %v2160
        %v2166 = vpack.i.b16 %v2084, %v2068
        %v2168 = vshrl.u32 %v2068, 16
        %v2169 = vshrl.u32 %v2084, 16
        %v2170 = vpack.i.b16 %v2169, %v2168
        %v2174 = vpack.i.b16 %v2116, %v2100
        %v2176 = vshrl.u32 %v2100, 16
        %v2177 = vshrl.u32 %v2116, 16
        %v2178 = vpack.i.b16 %v2177, %v2176
        %v2182 = vpack.i.b16 %v2148, %v2132
        %v2184 = vshrl.u32 %v2132, 16
        %v2185 = vshrl.u32 %v2148, 16
        %v2186 = vpack.i.b16 %v2185, %v2184
        %v2190 = vpack.i.b16 %v2053, %v2037
        %v2192 = vshrl.u32 %v2037, 16
        %v2193 = vshrl.u32 %v2053, 16
        %v2194 = vpack.i.b16 %v2193, %v2192
        %v2198 = vpack.i.b16 %v2085, %v2069
        %v2200 = vshrl.u32 %v2069, 16
        %v2201 = vshrl.u32 %v2085, 16
        %v2202 = vpack.i.b16 %v2201, %v2200
        %v2206 = vpack.i.b16 %v2117, %v2101
        %v2208 = vshrl.u32 %v2101, 16
        %v2209 = vshrl.u32 %v2117, 16
        %v2210 = vpack.i.b16 %v2209, %v2208
        %v2214 = vpack.i.b16 %v2149, %v2133
        %v2216 = vshrl.u32 %v2133, 16
        %v2217 = vshrl.u32 %v2149, 16
        %v2218 = vpack.i.b16 %v2217, %v2216
        %v2220 = vrot.slane %v2174, 4
        %v2221 = vsel %vm734, %v2220, %v2158
        %v2222 = vrot.slane %v2158, 4
        %v2223 = vsel %vm734, %v2174, %v2222
        %v2225 = vunpack.c.l.s4 1983009808
        %v2226 = vunpack.c.0.s8 %v2225
        %v2227 = vperm.slane %v2221, %v2226
        %v2229 = vunpack.c.l.s4 1983009808
        %v2230 = vunpack.c.0.s8 %v2229
        %v2231 = vperm.slane %v2223, %v2230
        %v2232 = vrot.slane %v2182, 4
        %v2233 = vsel %vm734, %v2232, %v2166
        %v2234 = vrot.slane %v2166, 4
        %v2235 = vsel %vm734, %v2182, %v2234
        %v2237 = vunpack.c.l.s4 1983009808
        %v2238 = vunpack.c.0.s8 %v2237
        %v2239 = vperm.slane %v2233, %v2238
        %v2241 = vunpack.c.l.s4 1983009808
        %v2242 = vunpack.c.0.s8 %v2241
        %v2243 = vperm.slane %v2235, %v2242
        %v2244 = vrot.slane %v2239, 4
        %v2245 = vsel %vm734, %v2244, %v2227
        %v2246 = vrot.slane %v2227, 4
        %v2247 = vsel %vm734, %v2239, %v2246
        %v2249 = vunpack.c.l.s4 1934713408
        %v2250 = vunpack.c.0.s8 %v2249
        %v2251 = vperm.slane %v2245, %v2250
        %v2253 = vunpack.c.l.s4 1934713408
        %v2254 = vunpack.c.0.s8 %v2253
        %v2255 = vperm.slane %v2247, %v2254
        %v2256 = vrot.slane %v2243, 4
        %v2257 = vsel %vm734, %v2256, %v2231
        %v2258 = vrot.slane %v2231, 4
        %v2259 = vsel %vm734, %v2243, %v2258
        %v2261 = vunpack.c.l.s4 1934713408
        %v2262 = vunpack.c.0.s8 %v2261
        %v2263 = vperm.slane %v2257, %v2262
        %v2265 = vunpack.c.l.s4 1934713408
        %v2266 = vunpack.c.0.s8 %v2265
        %v2267 = vperm.slane %v2259, %v2266
        %v2268 = vrot.slane %v2251, 4
        %v2269 = vsel %vm734, 0, %v2268
        %v2270 = vrot.slane %v2255, 4
        %v2271 = vsel %vm734, 0, %v2270
        %v2272 = vrot.slane %v2263, 4
        %v2273 = vsel %vm734, 0, %v2272
        %v2274 = vrot.slane %v2267, 4
        %v2275 = vsel %vm734, 0, %v2274
        %v2276 = vrot.slane %v2178, 4
        %v2277 = vsel %vm734, %v2276, %v2162
        %v2278 = vrot.slane %v2162, 4
        %v2279 = vsel %vm734, %v2178, %v2278
        %v2281 = vunpack.c.l.s4 1983009808
        %v2282 = vunpack.c.0.s8 %v2281
        %v2283 = vperm.slane %v2277, %v2282
        %v2285 = vunpack.c.l.s4 1983009808
        %v2286 = vunpack.c.0.s8 %v2285
        %v2287 = vperm.slane %v2279, %v2286
        %v2288 = vrot.slane %v2186, 4
        %v2289 = vsel %vm734, %v2288, %v2170
        %v2290 = vrot.slane %v2170, 4
        %v2291 = vsel %vm734, %v2186, %v2290
        %v2293 = vunpack.c.l.s4 1983009808
        %v2294 = vunpack.c.0.s8 %v2293
        %v2295 = vperm.slane %v2289, %v2294
        %v2297 = vunpack.c.l.s4 1983009808
        %v2298 = vunpack.c.0.s8 %v2297
        %v2299 = vperm.slane %v2291, %v2298
        %v2300 = vrot.slane %v2295, 4
        %v2301 = vsel %vm734, %v2300, %v2283
        %v2302 = vrot.slane %v2283, 4
        %v2303 = vsel %vm734, %v2295, %v2302
        %v2305 = vunpack.c.l.s4 1934713408
        %v2306 = vunpack.c.0.s8 %v2305
        %v2307 = vperm.slane %v2301, %v2306
        %v2309 = vunpack.c.l.s4 1934713408
        %v2310 = vunpack.c.0.s8 %v2309
        %v2311 = vperm.slane %v2303, %v2310
        %v2312 = vrot.slane %v2299, 4
        %v2313 = vsel %vm734, %v2312, %v2287
        %v2314 = vrot.slane %v2287, 4
        %v2315 = vsel %vm734, %v2299, %v2314
        %v2317 = vunpack.c.l.s4 1934713408
        %v2318 = vunpack.c.0.s8 %v2317
        %v2319 = vperm.slane %v2313, %v2318
        %v2321 = vunpack.c.l.s4 1934713408
        %v2322 = vunpack.c.0.s8 %v2321
        %v2323 = vperm.slane %v2315, %v2322
        %v2324 = vrot.slane %v2307, 4
        %v2325 = vsel %vm734, 0, %v2324
        %v2326 = vrot.slane %v2311, 4
        %v2327 = vsel %vm734, 0, %v2326
        %v2328 = vrot.slane %v2319, 4
        %v2329 = vsel %vm734, 0, %v2328
        %v2330 = vrot.slane %v2323, 4
        %v2331 = vsel %vm734, 0, %v2330
        %v2332 = vrot.slane %v2206, 4
        %v2333 = vsel %vm734, %v2332, %v2190
        %v2334 = vrot.slane %v2190, 4
        %v2335 = vsel %vm734, %v2206, %v2334
        %v2337 = vunpack.c.l.s4 1983009808
        %v2338 = vunpack.c.0.s8 %v2337
        %v2339 = vperm.slane %v2333, %v2338
        %v2341 = vunpack.c.l.s4 1983009808
        %v2342 = vunpack.c.0.s8 %v2341
        %v2343 = vperm.slane %v2335, %v2342
        %v2344 = vrot.slane %v2214, 4
        %v2345 = vsel %vm734, %v2344, %v2198
        %v2346 = vrot.slane %v2198, 4
        %v2347 = vsel %vm734, %v2214, %v2346
        %v2349 = vunpack.c.l.s4 1983009808
        %v2350 = vunpack.c.0.s8 %v2349
        %v2351 = vperm.slane %v2345, %v2350
        %v2353 = vunpack.c.l.s4 1983009808
        %v2354 = vunpack.c.0.s8 %v2353
        %v2355 = vperm.slane %v2347, %v2354
        %v2356 = vrot.slane %v2351, 4
        %v2357 = vsel %vm734, %v2356, %v2339
        %v2358 = vrot.slane %v2339, 4
        %v2359 = vsel %vm734, %v2351, %v2358
        %v2361 = vunpack.c.l.s4 1934713408
        %v2362 = vunpack.c.0.s8 %v2361
        %v2363 = vperm.slane %v2357, %v2362
        %v2365 = vunpack.c.l.s4 1934713408
        %v2366 = vunpack.c.0.s8 %v2365
        %v2367 = vperm.slane %v2359, %v2366
        %v2368 = vrot.slane %v2355, 4
        %v2369 = vsel %vm734, %v2368, %v2343
        %v2370 = vrot.slane %v2343, 4
        %v2371 = vsel %vm734, %v2355, %v2370
        %v2373 = vunpack.c.l.s4 1934713408
        %v2374 = vunpack.c.0.s8 %v2373
        %v2375 = vperm.slane %v2369, %v2374
        %v2377 = vunpack.c.l.s4 1934713408
        %v2378 = vunpack.c.0.s8 %v2377
        %v2379 = vperm.slane %v2371, %v2378
        %v2380 = vrot.slane %v2363, 4
        %v2381 = vsel %vm734, 0, %v2380
        %v2382 = vrot.slane %v2367, 4
        %v2383 = vsel %vm734, 0, %v2382
        %v2384 = vrot.slane %v2375, 4
        %v2385 = vsel %vm734, 0, %v2384
        %v2386 = vrot.slane %v2379, 4
        %v2387 = vsel %vm734, 0, %v2386
        %v2388 = vrot.slane %v2210, 4
        %v2389 = vsel %vm734, %v2388, %v2194
        %v2390 = vrot.slane %v2194, 4
        %v2391 = vsel %vm734, %v2210, %v2390
        %v2393 = vunpack.c.l.s4 1983009808
        %v2394 = vunpack.c.0.s8 %v2393
        %v2395 = vperm.slane %v2389, %v2394
        %v2397 = vunpack.c.l.s4 1983009808
        %v2398 = vunpack.c.0.s8 %v2397
        %v2399 = vperm.slane %v2391, %v2398
        %v2400 = vrot.slane %v2218, 4
        %v2401 = vsel %vm734, %v2400, %v2202
        %v2402 = vrot.slane %v2202, 4
        %v2403 = vsel %vm734, %v2218, %v2402
        %v2405 = vunpack.c.l.s4 1983009808
        %v2406 = vunpack.c.0.s8 %v2405
        %v2407 = vperm.slane %v2401, %v2406
        %v2409 = vunpack.c.l.s4 1983009808
        %v2410 = vunpack.c.0.s8 %v2409
        %v2411 = vperm.slane %v2403, %v2410
        %v2412 = vrot.slane %v2407, 4
        %v2413 = vsel %vm734, %v2412, %v2395
        %v2414 = vrot.slane %v2395, 4
        %v2415 = vsel %vm734, %v2407, %v2414
        %v2417 = vunpack.c.l.s4 1934713408
        %v2418 = vunpack.c.0.s8 %v2417
        %v2419 = vperm.slane %v2413, %v2418
        %v2421 = vunpack.c.l.s4 1934713408
        %v2422 = vunpack.c.0.s8 %v2421
        %v2423 = vperm.slane %v2415, %v2422
        %v2424 = vrot.slane %v2411, 4
        %v2425 = vsel %vm734, %v2424, %v2399
        %v2426 = vrot.slane %v2399, 4
        %v2427 = vsel %vm734, %v2411, %v2426
        %v2429 = vunpack.c.l.s4 1934713408
        %v2430 = vunpack.c.0.s8 %v2429
        %v2431 = vperm.slane %v2425, %v2430
        %v2433 = vunpack.c.l.s4 1934713408
        %v2434 = vunpack.c.0.s8 %v2433
        %v2435 = vperm.slane %v2427, %v2434
        %v2436 = vrot.slane %v2419, 4
        %v2437 = vsel %vm734, 0, %v2436
        %v2438 = vrot.slane %v2423, 4
        %v2439 = vsel %vm734, 0, %v2438
        %v2440 = vrot.slane %v2431, 4
        %v2441 = vsel %vm734, 0, %v2440
        %v2442 = vrot.slane %v2435, 4
        %v2443 = vsel %vm734, 0, %v2442
        %2444 = vxpose.xlu0.c.b16.start [1/8] %v2251, 128
        %2445 = vxpose.xlu0.c.b16.cont [2/8] 0, 128
        %2446 = vxpose.xlu0.c.b16.cont [3/8] 0, 128
        %2447 = vxpose.xlu0.c.b16.cont [4/8] 0, 128
        %2448 = vxpose.xlu0.c.b16.cont [5/8] 0, 128
        %2449 = vxpose.xlu0.c.b16.cont [6/8] 0, 128
        %2450 = vxpose.xlu0.c.b16.cont [7/8] 0, 128
        %2451 = vxpose.xlu0.c.b16.end [8/8] 0, 128
        %v2452 = vpop.trf.xlu0
        %v2453 = vpop.trf.xlu0
        %v2454 = vpop.trf.xlu0
        %v2455 = vpop.trf.xlu0
        %v2456 = vpop.trf.xlu0
        %v2457 = vpop.trf.xlu0
        %v2458 = vpop.trf.xlu0
        %v2459 = vpop.trf.xlu0
        %2460 = vxpose.xlu0.c.b16.start [1/8] %v2307, 128
        %2461 = vxpose.xlu0.c.b16.cont [2/8] 0, 128
        %2462 = vxpose.xlu0.c.b16.cont [3/8] 0, 128
        %2463 = vxpose.xlu0.c.b16.cont [4/8] 0, 128
        %2464 = vxpose.xlu0.c.b16.cont [5/8] 0, 128
        %2465 = vxpose.xlu0.c.b16.cont [6/8] 0, 128
        %2466 = vxpose.xlu0.c.b16.cont [7/8] 0, 128
        %2467 = vxpose.xlu0.c.b16.end [8/8] 0, 128
        %v2468 = vpop.trf.xlu0
        %v2469 = vpop.trf.xlu0
        %v2470 = vpop.trf.xlu0
        %v2471 = vpop.trf.xlu0
        %v2472 = vpop.trf.xlu0
        %v2473 = vpop.trf.xlu0
        %v2474 = vpop.trf.xlu0
        %v2475 = vpop.trf.xlu0
        %2476 = vxpose.xlu0.c.b16.start [1/8] %v2269, 128
        %2477 = vxpose.xlu0.c.b16.cont [2/8] 0, 128
        %2478 = vxpose.xlu0.c.b16.cont [3/8] 0, 128
        %2479 = vxpose.xlu0.c.b16.cont [4/8] 0, 128
        %2480 = vxpose.xlu0.c.b16.cont [5/8] 0, 128
        %2481 = vxpose.xlu0.c.b16.cont [6/8] 0, 128
        %2482 = vxpose.xlu0.c.b16.cont [7/8] 0, 128
        %2483 = vxpose.xlu0.c.b16.end [8/8] 0, 128
        %v2484 = vpop.trf.xlu0
        %v2485 = vpop.trf.xlu0
        %v2486 = vpop.trf.xlu0
        %v2487 = vpop.trf.xlu0
        %v2488 = vpop.trf.xlu0
        %v2489 = vpop.trf.xlu0
        %v2490 = vpop.trf.xlu0
        %v2491 = vpop.trf.xlu0
        %2492 = vxpose.xlu0.c.b16.start [1/8] %v2325, 128
        %2493 = vxpose.xlu0.c.b16.cont [2/8] 0, 128
        %2494 = vxpose.xlu0.c.b16.cont [3/8] 0, 128
        %2495 = vxpose.xlu0.c.b16.cont [4/8] 0, 128
        %2496 = vxpose.xlu0.c.b16.cont [5/8] 0, 128
        %2497 = vxpose.xlu0.c.b16.cont [6/8] 0, 128
        %2498 = vxpose.xlu0.c.b16.cont [7/8] 0, 128
        %2499 = vxpose.xlu0.c.b16.end [8/8] 0, 128
        %v2500 = vpop.trf.xlu0
        %v2501 = vpop.trf.xlu0
        %v2502 = vpop.trf.xlu0
        %v2503 = vpop.trf.xlu0
        %v2504 = vpop.trf.xlu0
        %v2505 = vpop.trf.xlu0
        %v2506 = vpop.trf.xlu0
        %v2507 = vpop.trf.xlu0
        %2508 = vxpose.xlu0.c.b16.start [1/8] %v2255, 128
        %2509 = vxpose.xlu0.c.b16.cont [2/8] 0, 128
        %2510 = vxpose.xlu0.c.b16.cont [3/8] 0, 128
        %2511 = vxpose.xlu0.c.b16.cont [4/8] 0, 128
        %2512 = vxpose.xlu0.c.b16.cont [5/8] 0, 128
        %2513 = vxpose.xlu0.c.b16.cont [6/8] 0, 128
        %2514 = vxpose.xlu0.c.b16.cont [7/8] 0, 128
        %2515 = vxpose.xlu0.c.b16.end [8/8] 0, 128
        %v2516 = vpop.trf.xlu0
        %v2517 = vpop.trf.xlu0
        %v2518 = vpop.trf.xlu0
        %v2519 = vpop.trf.xlu0
        %v2520 = vpop.trf.xlu0
        %v2521 = vpop.trf.xlu0
        %v2522 = vpop.trf.xlu0
        %v2523 = vpop.trf.xlu0
        %2524 = vxpose.xlu0.c.b16.start [1/8] %v2311, 128
        %2525 = vxpose.xlu0.c.b16.cont [2/8] 0, 128
        %2526 = vxpose.xlu0.c.b16.cont [3/8] 0, 128
        %2527 = vxpose.xlu0.c.b16.cont [4/8] 0, 128
        %2528 = vxpose.xlu0.c.b16.cont [5/8] 0, 128
        %2529 = vxpose.xlu0.c.b16.cont [6/8] 0, 128
        %2530 = vxpose.xlu0.c.b16.cont [7/8] 0, 128
        %2531 = vxpose.xlu0.c.b16.end [8/8] 0, 128
        %v2532 = vpop.trf.xlu0
        %v2533 = vpop.trf.xlu0
        %v2534 = vpop.trf.xlu0
        %v2535 = vpop.trf.xlu0
        %v2536 = vpop.trf.xlu0
        %v2537 = vpop.trf.xlu0
        %v2538 = vpop.trf.xlu0
        %v2539 = vpop.trf.xlu0
        %2540 = vxpose.xlu0.c.b16.start [1/8] %v2271, 128
        %2541 = vxpose.xlu0.c.b16.cont [2/8] 0, 128
        %2542 = vxpose.xlu0.c.b16.cont [3/8] 0, 128
        %2543 = vxpose.xlu0.c.b16.cont [4/8] 0, 128
        %2544 = vxpose.xlu0.c.b16.cont [5/8] 0, 128
        %2545 = vxpose.xlu0.c.b16.cont [6/8] 0, 128
        %2546 = vxpose.xlu0.c.b16.cont [7/8] 0, 128
        %2547 = vxpose.xlu0.c.b16.end [8/8] 0, 128
        %v2548 = vpop.trf.xlu0
        %v2549 = vpop.trf.xlu0
        %v2550 = vpop.trf.xlu0
        %v2551 = vpop.trf.xlu0
        %v2552 = vpop.trf.xlu0
        %v2553 = vpop.trf.xlu0
        %v2554 = vpop.trf.xlu0
        %v2555 = vpop.trf.xlu0
        %2556 = vxpose.xlu0.c.b16.start [1/8] %v2327, 128
        %2557 = vxpose.xlu0.c.b16.cont [2/8] 0, 128
        %2558 = vxpose.xlu0.c.b16.cont [3/8] 0, 128
        %2559 = vxpose.xlu0.c.b16.cont [4/8] 0, 128
        %2560 = vxpose.xlu0.c.b16.cont [5/8] 0, 128
        %2561 = vxpose.xlu0.c.b16.cont [6/8] 0, 128
        %2562 = vxpose.xlu0.c.b16.cont [7/8] 0, 128
        %2563 = vxpose.xlu0.c.b16.end [8/8] 0, 128
        %v2564 = vpop.trf.xlu0
        %v2565 = vpop.trf.xlu0
        %v2566 = vpop.trf.xlu0
        %v2567 = vpop.trf.xlu0
        %v2568 = vpop.trf.xlu0
        %v2569 = vpop.trf.xlu0
        %v2570 = vpop.trf.xlu0
        %v2571 = vpop.trf.xlu0
        %2572 = vxpose.xlu0.c.b16.start [1/8] %v2263, 128
        %2573 = vxpose.xlu0.c.b16.cont [2/8] 0, 128
        %2574 = vxpose.xlu0.c.b16.cont [3/8] 0, 128
        %2575 = vxpose.xlu0.c.b16.cont [4/8] 0, 128
        %2576 = vxpose.xlu0.c.b16.cont [5/8] 0, 128
        %2577 = vxpose.xlu0.c.b16.cont [6/8] 0, 128
        %2578 = vxpose.xlu0.c.b16.cont [7/8] 0, 128
        %2579 = vxpose.xlu0.c.b16.end [8/8] 0, 128
        %v2580 = vpop.trf.xlu0
        %v2581 = vpop.trf.xlu0
        %v2582 = vpop.trf.xlu0
        %v2583 = vpop.trf.xlu0
        %v2584 = vpop.trf.xlu0
        %v2585 = vpop.trf.xlu0
        %v2586 = vpop.trf.xlu0
        %v2587 = vpop.trf.xlu0
        %2588 = vxpose.xlu0.c.b16.start [1/8] %v2319, 128
        %2589 = vxpose.xlu0.c.b16.cont [2/8] 0, 128
        %2590 = vxpose.xlu0.c.b16.cont [3/8] 0, 128
        %2591 = vxpose.xlu0.c.b16.cont [4/8] 0, 128
        %2592 = vxpose.xlu0.c.b16.cont [5/8] 0, 128
        %2593 = vxpose.xlu0.c.b16.cont [6/8] 0, 128
        %2594 = vxpose.xlu0.c.b16.cont [7/8] 0, 128
        %2595 = vxpose.xlu0.c.b16.end [8/8] 0, 128
        %v2596 = vpop.trf.xlu0
        %v2597 = vpop.trf.xlu0
        %v2598 = vpop.trf.xlu0
        %v2599 = vpop.trf.xlu0
        %v2600 = vpop.trf.xlu0
        %v2601 = vpop.trf.xlu0
        %v2602 = vpop.trf.xlu0
        %v2603 = vpop.trf.xlu0
        %2604 = vxpose.xlu0.c.b16.start [1/8] %v2273, 128
        %2605 = vxpose.xlu0.c.b16.cont [2/8] 0, 128
        %2606 = vxpose.xlu0.c.b16.cont [3/8] 0, 128
        %2607 = vxpose.xlu0.c.b16.cont [4/8] 0, 128
        %2608 = vxpose.xlu0.c.b16.cont [5/8] 0, 128
        %2609 = vxpose.xlu0.c.b16.cont [6/8] 0, 128
        %2610 = vxpose.xlu0.c.b16.cont [7/8] 0, 128
        %2611 = vxpose.xlu0.c.b16.end [8/8] 0, 128
        %v2612 = vpop.trf.xlu0
        %v2613 = vpop.trf.xlu0
        %v2614 = vpop.trf.xlu0
        %v2615 = vpop.trf.xlu0
        %v2616 = vpop.trf.xlu0
        %v2617 = vpop.trf.xlu0
        %v2618 = vpop.trf.xlu0
        %v2619 = vpop.trf.xlu0
        %2620 = vxpose.xlu0.c.b16.start [1/8] %v2329, 128
        %2621 = vxpose.xlu0.c.b16.cont [2/8] 0, 128
        %2622 = vxpose.xlu0.c.b16.cont [3/8] 0, 128
        %2623 = vxpose.xlu0.c.b16.cont [4/8] 0, 128
        %2624 = vxpose.xlu0.c.b16.cont [5/8] 0, 128
        %2625 = vxpose.xlu0.c.b16.cont [6/8] 0, 128
        %2626 = vxpose.xlu0.c.b16.cont [7/8] 0, 128
        %2627 = vxpose.xlu0.c.b16.end [8/8] 0, 128
        %v2628 = vpop.trf.xlu0
        %v2629 = vpop.trf.xlu0
        %v2630 = vpop.trf.xlu0
        %v2631 = vpop.trf.xlu0
        %v2632 = vpop.trf.xlu0
        %v2633 = vpop.trf.xlu0
        %v2634 = vpop.trf.xlu0
        %v2635 = vpop.trf.xlu0
        %2636 = vxpose.xlu0.c.b16.start [1/8] %v2267, 128
        %2637 = vxpose.xlu0.c.b16.cont [2/8] 0, 128
        %2638 = vxpose.xlu0.c.b16.cont [3/8] 0, 128
        %2639 = vxpose.xlu0.c.b16.cont [4/8] 0, 128
        %2640 = vxpose.xlu0.c.b16.cont [5/8] 0, 128
        %2641 = vxpose.xlu0.c.b16.cont [6/8] 0, 128
        %2642 = vxpose.xlu0.c.b16.cont [7/8] 0, 128
        %2643 = vxpose.xlu0.c.b16.end [8/8] 0, 128
        %v2644 = vpop.trf.xlu0
        %v2645 = vpop.trf.xlu0
        %v2646 = vpop.trf.xlu0
        %v2647 = vpop.trf.xlu0
        %v2648 = vpop.trf.xlu0
        %v2649 = vpop.trf.xlu0
        %v2650 = vpop.trf.xlu0
        %v2651 = vpop.trf.xlu0
        %2652 = vxpose.xlu0.c.b16.start [1/8] %v2323, 128
        %2653 = vxpose.xlu0.c.b16.cont [2/8] 0, 128
        %2654 = vxpose.xlu0.c.b16.cont [3/8] 0, 128
        %2655 = vxpose.xlu0.c.b16.cont [4/8] 0, 128
        %2656 = vxpose.xlu0.c.b16.cont [5/8] 0, 128
        %2657 = vxpose.xlu0.c.b16.cont [6/8] 0, 128
        %2658 = vxpose.xlu0.c.b16.cont [7/8] 0, 128
        %2659 = vxpose.xlu0.c.b16.end [8/8] 0, 128
        %v2660 = vpop.trf.xlu0
        %v2661 = vpop.trf.xlu0
        %v2662 = vpop.trf.xlu0
        %v2663 = vpop.trf.xlu0
        %v2664 = vpop.trf.xlu0
        %v2665 = vpop.trf.xlu0
        %v2666 = vpop.trf.xlu0
        %v2667 = vpop.trf.xlu0
        %2668 = vxpose.xlu0.c.b16.start [1/8] %v2275, 128
        %2669 = vxpose.xlu0.c.b16.cont [2/8] 0, 128
        %2670 = vxpose.xlu0.c.b16.cont [3/8] 0, 128
        %2671 = vxpose.xlu0.c.b16.cont [4/8] 0, 128
        %2672 = vxpose.xlu0.c.b16.cont [5/8] 0, 128
        %2673 = vxpose.xlu0.c.b16.cont [6/8] 0, 128
        %2674 = vxpose.xlu0.c.b16.cont [7/8] 0, 128
        %2675 = vxpose.xlu0.c.b16.end [8/8] 0, 128
        %v2676 = vpop.trf.xlu0
        %v2677 = vpop.trf.xlu0
        %v2678 = vpop.trf.xlu0
        %v2679 = vpop.trf.xlu0
        %v2680 = vpop.trf.xlu0
        %v2681 = vpop.trf.xlu0
        %v2682 = vpop.trf.xlu0
        %v2683 = vpop.trf.xlu0
        %2684 = vxpose.xlu0.c.b16.start [1/8] %v2331, 128
        %2685 = vxpose.xlu0.c.b16.cont [2/8] 0, 128
        %2686 = vxpose.xlu0.c.b16.cont [3/8] 0, 128
        %2687 = vxpose.xlu0.c.b16.cont [4/8] 0, 128
        %2688 = vxpose.xlu0.c.b16.cont [5/8] 0, 128
        %2689 = vxpose.xlu0.c.b16.cont [6/8] 0, 128
        %2690 = vxpose.xlu0.c.b16.cont [7/8] 0, 128
        %2691 = vxpose.xlu0.c.b16.end [8/8] 0, 128
        %v2692 = vpop.trf.xlu0
        %v2693 = vpop.trf.xlu0
        %v2694 = vpop.trf.xlu0
        %v2695 = vpop.trf.xlu0
        %v2696 = vpop.trf.xlu0
        %v2697 = vpop.trf.xlu0
        %v2698 = vpop.trf.xlu0
        %v2699 = vpop.trf.xlu0
        %2700 = vxpose.xlu0.c.b16.start [1/8] %v2363, 128
        %2701 = vxpose.xlu0.c.b16.cont [2/8] 0, 128
        %2702 = vxpose.xlu0.c.b16.cont [3/8] 0, 128
        %2703 = vxpose.xlu0.c.b16.cont [4/8] 0, 128
        %2704 = vxpose.xlu0.c.b16.cont [5/8] 0, 128
        %2705 = vxpose.xlu0.c.b16.cont [6/8] 0, 128
        %2706 = vxpose.xlu0.c.b16.cont [7/8] 0, 128
        %2707 = vxpose.xlu0.c.b16.end [8/8] 0, 128
        %v2708 = vpop.trf.xlu0
        %v2709 = vpop.trf.xlu0
        %v2710 = vpop.trf.xlu0
        %v2711 = vpop.trf.xlu0
        %v2712 = vpop.trf.xlu0
        %v2713 = vpop.trf.xlu0
        %v2714 = vpop.trf.xlu0
        %v2715 = vpop.trf.xlu0
        %2716 = vxpose.xlu0.c.b16.start [1/8] %v2419, 128
        %2717 = vxpose.xlu0.c.b16.cont [2/8] 0, 128
        %2718 = vxpose.xlu0.c.b16.cont [3/8] 0, 128
        %2719 = vxpose.xlu0.c.b16.cont [4/8] 0, 128
        %2720 = vxpose.xlu0.c.b16.cont [5/8] 0, 128
        %2721 = vxpose.xlu0.c.b16.cont [6/8] 0, 128
        %2722 = vxpose.xlu0.c.b16.cont [7/8] 0, 128
        %2723 = vxpose.xlu0.c.b16.end [8/8] 0, 128
        %v2724 = vpop.trf.xlu0
        %v2725 = vpop.trf.xlu0
        %v2726 = vpop.trf.xlu0
        %v2727 = vpop.trf.xlu0
        %v2728 = vpop.trf.xlu0
        %v2729 = vpop.trf.xlu0
        %v2730 = vpop.trf.xlu0
        %v2731 = vpop.trf.xlu0
        %2732 = vxpose.xlu0.c.b16.start [1/8] %v2381, 128
        %2733 = vxpose.xlu0.c.b16.cont [2/8] 0, 128
        %2734 = vxpose.xlu0.c.b16.cont [3/8] 0, 128
        %2735 = vxpose.xlu0.c.b16.cont [4/8] 0, 128
        %2736 = vxpose.xlu0.c.b16.cont [5/8] 0, 128
        %2737 = vxpose.xlu0.c.b16.cont [6/8] 0, 128
        %2738 = vxpose.xlu0.c.b16.cont [7/8] 0, 128
        %2739 = vxpose.xlu0.c.b16.end [8/8] 0, 128
        %v2740 = vpop.trf.xlu0
        %v2741 = vpop.trf.xlu0
        %v2742 = vpop.trf.xlu0
        %v2743 = vpop.trf.xlu0
        %v2744 = vpop.trf.xlu0
        %v2745 = vpop.trf.xlu0
        %v2746 = vpop.trf.xlu0
        %v2747 = vpop.trf.xlu0
        %2748 = vxpose.xlu0.c.b16.start [1/8] %v2437, 128
        %2749 = vxpose.xlu0.c.b16.cont [2/8] 0, 128
        %2750 = vxpose.xlu0.c.b16.cont [3/8] 0, 128
        %2751 = vxpose.xlu0.c.b16.cont [4/8] 0, 128
        %2752 = vxpose.xlu0.c.b16.cont [5/8] 0, 128
        %2753 = vxpose.xlu0.c.b16.cont [6/8] 0, 128
        %2754 = vxpose.xlu0.c.b16.cont [7/8] 0, 128
        %2755 = vxpose.xlu0.c.b16.end [8/8] 0, 128
        %v2756 = vpop.trf.xlu0
        %v2757 = vpop.trf.xlu0
        %v2758 = vpop.trf.xlu0
        %v2759 = vpop.trf.xlu0
        %v2760 = vpop.trf.xlu0
        %v2761 = vpop.trf.xlu0
        %v2762 = vpop.trf.xlu0
        %v2763 = vpop.trf.xlu0
        %2764 = vxpose.xlu0.c.b16.start [1/8] %v2367, 128
        %2765 = vxpose.xlu0.c.b16.cont [2/8] 0, 128
        %2766 = vxpose.xlu0.c.b16.cont [3/8] 0, 128
        %2767 = vxpose.xlu0.c.b16.cont [4/8] 0, 128
        %2768 = vxpose.xlu0.c.b16.cont [5/8] 0, 128
        %2769 = vxpose.xlu0.c.b16.cont [6/8] 0, 128
        %2770 = vxpose.xlu0.c.b16.cont [7/8] 0, 128
        %2771 = vxpose.xlu0.c.b16.end [8/8] 0, 128
        %v2772 = vpop.trf.xlu0
        %v2773 = vpop.trf.xlu0
        %v2774 = vpop.trf.xlu0
        %v2775 = vpop.trf.xlu0
        %v2776 = vpop.trf.xlu0
        %v2777 = vpop.trf.xlu0
        %v2778 = vpop.trf.xlu0
        %v2779 = vpop.trf.xlu0
        %2780 = vxpose.xlu0.c.b16.start [1/8] %v2423, 128
        %2781 = vxpose.xlu0.c.b16.cont [2/8] 0, 128
        %2782 = vxpose.xlu0.c.b16.cont [3/8] 0, 128
        %2783 = vxpose.xlu0.c.b16.cont [4/8] 0, 128
        %2784 = vxpose.xlu0.c.b16.cont [5/8] 0, 128
        %2785 = vxpose.xlu0.c.b16.cont [6/8] 0, 128
        %2786 = vxpose.xlu0.c.b16.cont [7/8] 0, 128
        %2787 = vxpose.xlu0.c.b16.end [8/8] 0, 128
        %v2788 = vpop.trf.xlu0
        %v2789 = vpop.trf.xlu0
        %v2790 = vpop.trf.xlu0
        %v2791 = vpop.trf.xlu0
        %v2792 = vpop.trf.xlu0
        %v2793 = vpop.trf.xlu0
        %v2794 = vpop.trf.xlu0
        %v2795 = vpop.trf.xlu0
        %2796 = vxpose.xlu0.c.b16.start [1/8] %v2383, 128
        %2797 = vxpose.xlu0.c.b16.cont [2/8] 0, 128
        %2798 = vxpose.xlu0.c.b16.cont [3/8] 0, 128
        %2799 = vxpose.xlu0.c.b16.cont [4/8] 0, 128
        %2800 = vxpose.xlu0.c.b16.cont [5/8] 0, 128
        %2801 = vxpose.xlu0.c.b16.cont [6/8] 0, 128
        %2802 = vxpose.xlu0.c.b16.cont [7/8] 0, 128
        %2803 = vxpose.xlu0.c.b16.end [8/8] 0, 128
        %v2804 = vpop.trf.xlu0
        %v2805 = vpop.trf.xlu0
        %v2806 = vpop.trf.xlu0
        %v2807 = vpop.trf.xlu0
        %v2808 = vpop.trf.xlu0
        %v2809 = vpop.trf.xlu0
        %v2810 = vpop.trf.xlu0
        %v2811 = vpop.trf.xlu0
        %2812 = vxpose.xlu0.c.b16.start [1/8] %v2439, 128
        %2813 = vxpose.xlu0.c.b16.cont [2/8] 0, 128
        %2814 = vxpose.xlu0.c.b16.cont [3/8] 0, 128
        %2815 = vxpose.xlu0.c.b16.cont [4/8] 0, 128
        %2816 = vxpose.xlu0.c.b16.cont [5/8] 0, 128
        %2817 = vxpose.xlu0.c.b16.cont [6/8] 0, 128
        %2818 = vxpose.xlu0.c.b16.cont [7/8] 0, 128
        %2819 = vxpose.xlu0.c.b16.end [8/8] 0, 128
        %v2820 = vpop.trf.xlu0
        %v2821 = vpop.trf.xlu0
        %v2822 = vpop.trf.xlu0
        %v2823 = vpop.trf.xlu0
        %v2824 = vpop.trf.xlu0
        %v2825 = vpop.trf.xlu0
        %v2826 = vpop.trf.xlu0
        %v2827 = vpop.trf.xlu0
        %2828 = vxpose.xlu0.c.b16.start [1/8] %v2375, 128
        %2829 = vxpose.xlu0.c.b16.cont [2/8] 0, 128
        %2830 = vxpose.xlu0.c.b16.cont [3/8] 0, 128
        %2831 = vxpose.xlu0.c.b16.cont [4/8] 0, 128
        %2832 = vxpose.xlu0.c.b16.cont [5/8] 0, 128
        %2833 = vxpose.xlu0.c.b16.cont [6/8] 0, 128
        %2834 = vxpose.xlu0.c.b16.cont [7/8] 0, 128
        %2835 = vxpose.xlu0.c.b16.end [8/8] 0, 128
        %v2836 = vpop.trf.xlu0
        %v2837 = vpop.trf.xlu0
        %v2838 = vpop.trf.xlu0
        %v2839 = vpop.trf.xlu0
        %v2840 = vpop.trf.xlu0
        %v2841 = vpop.trf.xlu0
        %v2842 = vpop.trf.xlu0
        %v2843 = vpop.trf.xlu0
        %2844 = vxpose.xlu0.c.b16.start [1/8] %v2431, 128
        %2845 = vxpose.xlu0.c.b16.cont [2/8] 0, 128
        %2846 = vxpose.xlu0.c.b16.cont [3/8] 0, 128
        %2847 = vxpose.xlu0.c.b16.cont [4/8] 0, 128
        %2848 = vxpose.xlu0.c.b16.cont [5/8] 0, 128
        %2849 = vxpose.xlu0.c.b16.cont [6/8] 0, 128
        %2850 = vxpose.xlu0.c.b16.cont [7/8] 0, 128
        %2851 = vxpose.xlu0.c.b16.end [8/8] 0, 128
        %v2852 = vpop.trf.xlu0
        %v2853 = vpop.trf.xlu0
        %v2854 = vpop.trf.xlu0
        %v2855 = vpop.trf.xlu0
        %v2856 = vpop.trf.xlu0
        %v2857 = vpop.trf.xlu0
        %v2858 = vpop.trf.xlu0
        %v2859 = vpop.trf.xlu0
        %2860 = vxpose.xlu0.c.b16.start [1/8] %v2385, 128
        %2861 = vxpose.xlu0.c.b16.cont [2/8] 0, 128
        %2862 = vxpose.xlu0.c.b16.cont [3/8] 0, 128
        %2863 = vxpose.xlu0.c.b16.cont [4/8] 0, 128
        %2864 = vxpose.xlu0.c.b16.cont [5/8] 0, 128
        %2865 = vxpose.xlu0.c.b16.cont [6/8] 0, 128
        %2866 = vxpose.xlu0.c.b16.cont [7/8] 0, 128
        %2867 = vxpose.xlu0.c.b16.end [8/8] 0, 128
        %v2868 = vpop.trf.xlu0
        %v2869 = vpop.trf.xlu0
        %v2870 = vpop.trf.xlu0
        %v2871 = vpop.trf.xlu0
        %v2872 = vpop.trf.xlu0
        %v2873 = vpop.trf.xlu0
        %v2874 = vpop.trf.xlu0
        %v2875 = vpop.trf.xlu0
        %2876 = vxpose.xlu0.c.b16.start [1/8] %v2441, 128
        %2877 = vxpose.xlu0.c.b16.cont [2/8] 0, 128
        %2878 = vxpose.xlu0.c.b16.cont [3/8] 0, 128
        %2879 = vxpose.xlu0.c.b16.cont [4/8] 0, 128
        %2880 = vxpose.xlu0.c.b16.cont [5/8] 0, 128
        %2881 = vxpose.xlu0.c.b16.cont [6/8] 0, 128
        %2882 = vxpose.xlu0.c.b16.cont [7/8] 0, 128
        %2883 = vxpose.xlu0.c.b16.end [8/8] 0, 128
        %v2884 = vpop.trf.xlu0
        %v2885 = vpop.trf.xlu0
        %v2886 = vpop.trf.xlu0
        %v2887 = vpop.trf.xlu0
        %v2888 = vpop.trf.xlu0
        %v2889 = vpop.trf.xlu0
        %v2890 = vpop.trf.xlu0
        %v2891 = vpop.trf.xlu0
        %2892 = vxpose.xlu0.c.b16.start [1/8] %v2379, 128
        %2893 = vxpose.xlu0.c.b16.cont [2/8] 0, 128
        %2894 = vxpose.xlu0.c.b16.cont [3/8] 0, 128
        %2895 = vxpose.xlu0.c.b16.cont [4/8] 0, 128
        %2896 = vxpose.xlu0.c.b16.cont [5/8] 0, 128
        %2897 = vxpose.xlu0.c.b16.cont [6/8] 0, 128
        %2898 = vxpose.xlu0.c.b16.cont [7/8] 0, 128
        %2899 = vxpose.xlu0.c.b16.end [8/8] 0, 128
        %v2900 = vpop.trf.xlu0
        %v2901 = vpop.trf.xlu0
        %v2902 = vpop.trf.xlu0
        %v2903 = vpop.trf.xlu0
        %v2904 = vpop.trf.xlu0
        %v2905 = vpop.trf.xlu0
        %v2906 = vpop.trf.xlu0
        %v2907 = vpop.trf.xlu0
        %2908 = vxpose.xlu0.c.b16.start [1/8] %v2435, 128
        %2909 = vxpose.xlu0.c.b16.cont [2/8] 0, 128
        %2910 = vxpose.xlu0.c.b16.cont [3/8] 0, 128
        %2911 = vxpose.xlu0.c.b16.cont [4/8] 0, 128
        %2912 = vxpose.xlu0.c.b16.cont [5/8] 0, 128
        %2913 = vxpose.xlu0.c.b16.cont [6/8] 0, 128
        %2914 = vxpose.xlu0.c.b16.cont [7/8] 0, 128
        %2915 = vxpose.xlu0.c.b16.end [8/8] 0, 128
        %v2916 = vpop.trf.xlu0
        %v2917 = vpop.trf.xlu0
        %v2918 = vpop.trf.xlu0
        %v2919 = vpop.trf.xlu0
        %v2920 = vpop.trf.xlu0
        %v2921 = vpop.trf.xlu0
        %v2922 = vpop.trf.xlu0
        %v2923 = vpop.trf.xlu0
        %2924 = vxpose.xlu0.c.b16.start [1/8] %v2387, 128
        %2925 = vxpose.xlu0.c.b16.cont [2/8] 0, 128
        %2926 = vxpose.xlu0.c.b16.cont [3/8] 0, 128
        %2927 = vxpose.xlu0.c.b16.cont [4/8] 0, 128
        %2928 = vxpose.xlu0.c.b16.cont [5/8] 0, 128
        %2929 = vxpose.xlu0.c.b16.cont [6/8] 0, 128
        %2930 = vxpose.xlu0.c.b16.cont [7/8] 0, 128
        %2931 = vxpose.xlu0.c.b16.end [8/8] 0, 128
        %v2932 = vpop.trf.xlu0
        %v2933 = vpop.trf.xlu0
        %v2934 = vpop.trf.xlu0
        %v2935 = vpop.trf.xlu0
        %v2936 = vpop.trf.xlu0
        %v2937 = vpop.trf.xlu0
        %v2938 = vpop.trf.xlu0
        %v2939 = vpop.trf.xlu0
        %2940 = vxpose.xlu0.c.b16.start [1/8] %v2443, 128
        %2941 = vxpose.xlu0.c.b16.cont [2/8] 0, 128
        %2942 = vxpose.xlu0.c.b16.cont [3/8] 0, 128
        %2943 = vxpose.xlu0.c.b16.cont [4/8] 0, 128
        %2944 = vxpose.xlu0.c.b16.cont [5/8] 0, 128
        %2945 = vxpose.xlu0.c.b16.cont [6/8] 0, 128
        %2946 = vxpose.xlu0.c.b16.cont [7/8] 0, 128
        %2947 = vxpose.xlu0.c.b16.end [8/8] 0, 128
        %v2948 = vpop.trf.xlu0
        %v2949 = vpop.trf.xlu0
        %v2950 = vpop.trf.xlu0
        %v2951 = vpop.trf.xlu0
        %v2952 = vpop.trf.xlu0
        %v2953 = vpop.trf.xlu0
        %v2954 = vpop.trf.xlu0
        %v2955 = vpop.trf.xlu0
        %v2956 = vrot.slane %v2516, 4
        %v2957 = vsel %vm734, %v2956, %v2452
        %v2959 = vunpack.c.l.s4 1983009808
        %v2960 = vunpack.c.0.s8 %v2959
        %v2961 = vperm.slane %v2957, %v2960
        %v2962 = vrot.slane %v2548, 4
        %v2963 = vsel %vm734, %v2962, %v2484
        %v2965 = vunpack.c.l.s4 1983009808
        %v2966 = vunpack.c.0.s8 %v2965
        %v2967 = vperm.slane %v2963, %v2966
        %v2968 = vrot.slane %v2644, 4
        %v2969 = vsel %vm734, %v2968, %v2580
        %v2971 = vunpack.c.l.s4 1983009808
        %v2972 = vunpack.c.0.s8 %v2971
        %v2973 = vperm.slane %v2969, %v2972
        %v2974 = vrot.slane %v2676, 4
        %v2975 = vsel %vm734, %v2974, %v2612
        %v2977 = vunpack.c.l.s4 1983009808
        %v2978 = vunpack.c.0.s8 %v2977
        %v2979 = vperm.slane %v2975, %v2978
        %v2980 = vrot.slane %v2967, 4
        %v2981 = vsel %vm734, %v2980, %v2961
        %v2983 = vunpack.c.l.s4 1934713408
        %v2984 = vunpack.c.0.s8 %v2983
        %v2985 = vperm.slane %v2981, %v2984
        %v2986 = vrot.slane %v2979, 4
        %v2987 = vsel %vm734, %v2986, %v2973
        %v2989 = vunpack.c.l.s4 1934713408
        %v2990 = vunpack.c.0.s8 %v2989
        %v2991 = vperm.slane %v2987, %v2990
        %v2992 = vrot.slane %v2991, 4
        %v2993 = vsel %vm734, %v2992, %v2985
        %v2994 = vrot.slane %v2985, 4
        %v2995 = vsel %vm734, %v2991, %v2994
        %v2996 = vrot.slane %v2532, 4
        %v2997 = vsel %vm734, %v2996, %v2468
        %v2999 = vunpack.c.l.s4 1983009808
        %v3000 = vunpack.c.0.s8 %v2999
        %v3001 = vperm.slane %v2997, %v3000
        %v3002 = vrot.slane %v2564, 4
        %v3003 = vsel %vm734, %v3002, %v2500
        %v3005 = vunpack.c.l.s4 1983009808
        %v3006 = vunpack.c.0.s8 %v3005
        %v3007 = vperm.slane %v3003, %v3006
        %v3008 = vrot.slane %v2660, 4
        %v3009 = vsel %vm734, %v3008, %v2596
        %v3011 = vunpack.c.l.s4 1983009808
        %v3012 = vunpack.c.0.s8 %v3011
        %v3013 = vperm.slane %v3009, %v3012
        %v3014 = vrot.slane %v2692, 4
        %v3015 = vsel %vm734, %v3014, %v2628
        %v3017 = vunpack.c.l.s4 1983009808
        %v3018 = vunpack.c.0.s8 %v3017
        %v3019 = vperm.slane %v3015, %v3018
        %v3020 = vrot.slane %v3007, 4
        %v3021 = vsel %vm734, %v3020, %v3001
        %v3023 = vunpack.c.l.s4 1934713408
        %v3024 = vunpack.c.0.s8 %v3023
        %v3025 = vperm.slane %v3021, %v3024
        %v3026 = vrot.slane %v3019, 4
        %v3027 = vsel %vm734, %v3026, %v3013
        %v3029 = vunpack.c.l.s4 1934713408
        %v3030 = vunpack.c.0.s8 %v3029
        %v3031 = vperm.slane %v3027, %v3030
        %v3032 = vrot.slane %v3031, 4
        %v3033 = vsel %vm734, %v3032, %v3025
        %v3034 = vrot.slane %v3025, 4
        %v3035 = vsel %vm734, %v3031, %v3034
        %v3036 = vrot.slane %v2772, 4
        %v3037 = vsel %vm734, %v3036, %v2708
        %v3039 = vunpack.c.l.s4 1983009808
        %v3040 = vunpack.c.0.s8 %v3039
        %v3041 = vperm.slane %v3037, %v3040
        %v3042 = vrot.slane %v2804, 4
        %v3043 = vsel %vm734, %v3042, %v2740
        %v3045 = vunpack.c.l.s4 1983009808
        %v3046 = vunpack.c.0.s8 %v3045
        %v3047 = vperm.slane %v3043, %v3046
        %v3048 = vrot.slane %v2900, 4
        %v3049 = vsel %vm734, %v3048, %v2836
        %v3051 = vunpack.c.l.s4 1983009808
        %v3052 = vunpack.c.0.s8 %v3051
        %v3053 = vperm.slane %v3049, %v3052
        %v3054 = vrot.slane %v2932, 4
        %v3055 = vsel %vm734, %v3054, %v2868
        %v3057 = vunpack.c.l.s4 1983009808
        %v3058 = vunpack.c.0.s8 %v3057
        %v3059 = vperm.slane %v3055, %v3058
        %v3060 = vrot.slane %v3047, 4
        %v3061 = vsel %vm734, %v3060, %v3041
        %v3063 = vunpack.c.l.s4 1934713408
        %v3064 = vunpack.c.0.s8 %v3063
        %v3065 = vperm.slane %v3061, %v3064
        %v3066 = vrot.slane %v3059, 4
        %v3067 = vsel %vm734, %v3066, %v3053
        %v3069 = vunpack.c.l.s4 1934713408
        %v3070 = vunpack.c.0.s8 %v3069
        %v3071 = vperm.slane %v3067, %v3070
        %v3072 = vrot.slane %v3071, 4
        %v3073 = vsel %vm734, %v3072, %v3065
        %v3074 = vrot.slane %v3065, 4
        %v3075 = vsel %vm734, %v3071, %v3074
        %v3076 = vrot.slane %v2788, 4
        %v3077 = vsel %vm734, %v3076, %v2724
        %v3079 = vunpack.c.l.s4 1983009808
        %v3080 = vunpack.c.0.s8 %v3079
        %v3081 = vperm.slane %v3077, %v3080
        %v3082 = vrot.slane %v2820, 4
        %v3083 = vsel %vm734, %v3082, %v2756
        %v3085 = vunpack.c.l.s4 1983009808
        %v3086 = vunpack.c.0.s8 %v3085
        %v3087 = vperm.slane %v3083, %v3086
        %v3088 = vrot.slane %v2916, 4
        %v3089 = vsel %vm734, %v3088, %v2852
        %v3091 = vunpack.c.l.s4 1983009808
        %v3092 = vunpack.c.0.s8 %v3091
        %v3093 = vperm.slane %v3089, %v3092
        %v3094 = vrot.slane %v2948, 4
        %v3095 = vsel %vm734, %v3094, %v2884
        %v3097 = vunpack.c.l.s4 1983009808
        %v3098 = vunpack.c.0.s8 %v3097
        %v3099 = vperm.slane %v3095, %v3098
        %v3100 = vrot.slane %v3087, 4
        %v3101 = vsel %vm734, %v3100, %v3081
        %v3103 = vunpack.c.l.s4 1934713408
        %v3104 = vunpack.c.0.s8 %v3103
        %v3105 = vperm.slane %v3101, %v3104
        %v3106 = vrot.slane %v3099, 4
        %v3107 = vsel %vm734, %v3106, %v3093
        %v3109 = vunpack.c.l.s4 1934713408
        %v3110 = vunpack.c.0.s8 %v3109
        %v3111 = vperm.slane %v3107, %v3110
        %v3112 = vrot.slane %v3111, 4
        %v3113 = vsel %vm734, %v3112, %v3105
        %v3114 = vrot.slane %v3105, 4
        %v3115 = vsel %vm734, %v3111, %v3114
        %v3118 = vpack.i.b16 %v3033, %v2993
        %v3119 = vshrl.u32 %v2993, 16
        %v3120 = vshrl.u32 %v3033, 16
        %v3121 = vpack.i.b16 %v3120, %v3119
        %v3124 = vpack.i.b16 %v3035, %v2995
        %v3125 = vshrl.u32 %v2995, 16
        %v3126 = vshrl.u32 %v3035, 16
        %v3127 = vpack.i.b16 %v3126, %v3125
        %v3130 = vpack.i.b16 %v3113, %v3073
        %v3131 = vshrl.u32 %v3073, 16
        %v3132 = vshrl.u32 %v3113, 16
        %v3133 = vpack.i.b16 %v3132, %v3131
        %v3136 = vpack.i.b16 %v3115, %v3075
        %v3137 = vshrl.u32 %v3075, 16
        %v3138 = vshrl.u32 %v3115, 16
        %v3139 = vpack.i.b16 %v3138, %v3137
        %v3141 = vsel %vm1971, %v3118, 0
        %v3144 = vsel %vm1971, %v3130, 0
        %v3147 = vsel %vm1971, %v2016, 0
        %3149 = vmatpush.bf16.xpose.msra.mxu0 0
        %3150 = vmatpush.bf16.xpose.msra.mxu0 0
        %3151 = vmatpush.bf16.xpose.msra.mxu0 0
        %3152 = vmatpush.bf16.xpose.msra.mxu0 0
        %3153 = vmatpush.bf16.xpose.msra.mxu0 0
        %3154 = vmatpush.bf16.xpose.msra.mxu0 0
        %3155 = vmatpush.bf16.xpose.msra.mxu0 0
        %3156 = vmatpush.bf16.xpose.msra.mxu0 %v3147
        %3157 = vmatmul.bf16.gmra.mxu0 %v3141
        %v3158 = vpop.f32.mrf.mxu0
        %v3159 = vadd.f32 0.0, %v3158
        %v3160 = vpop.f32.mrf.mxu0
        %v3161 = vadd.f32 0.0, %v3160
        %3162 = vmatmul.bf16.gmra.mxu0 %v3144
        %v3163 = vpop.f32.mrf.mxu0
        %v3164 = vadd.f32 0.0, %v3163
        %v3165 = vpop.f32.mrf.mxu0
        %v3166 = vadd.f32 0.0, %v3165
        %3167 = vdwg.mxu0
        %v3169 = vsel %vm1971, %v3121, 0
        %v3172 = vsel %vm1971, %v3133, 0
        %v3175 = vsel %vm1971, %v2017, 0
        %3177 = vmatpush.bf16.xpose.msra.mxu0 0
        %3178 = vmatpush.bf16.xpose.msra.mxu0 0
        %3179 = vmatpush.bf16.xpose.msra.mxu0 0
        %3180 = vmatpush.bf16.xpose.msra.mxu0 0
        %3181 = vmatpush.bf16.xpose.msra.mxu0 0
        %3182 = vmatpush.bf16.xpose.msra.mxu0 0
        %3183 = vmatpush.bf16.xpose.msra.mxu0 0
        %3184 = vmatpush.bf16.xpose.msra.mxu0 %v3175
        %3185 = vmatmul.bf16.gmra.mxu0 %v3169
        %v3186 = vpop.f32.mrf.mxu0
        %v3187 = vadd.f32 0.0, %v3186
        %v3188 = vpop.f32.mrf.mxu0
        %v3189 = vadd.f32 0.0, %v3188
        %3190 = vmatmul.bf16.gmra.mxu0 %v3172
        %v3191 = vpop.f32.mrf.mxu0
        %v3192 = vadd.f32 0.0, %v3191
        %v3193 = vpop.f32.mrf.mxu0
        %v3194 = vadd.f32 0.0, %v3193
        %3195 = vdwg.mxu0
        %v3197 = vsel %vm1971, %v3124, 0
        %v3200 = vsel %vm1971, %v3136, 0
        %v3203 = vsel %vm1971, %v2018, 0
        %3205 = vmatpush.bf16.xpose.msra.mxu0 0
        %3206 = vmatpush.bf16.xpose.msra.mxu0 0
        %3207 = vmatpush.bf16.xpose.msra.mxu0 0
        %3208 = vmatpush.bf16.xpose.msra.mxu0 0
        %3209 = vmatpush.bf16.xpose.msra.mxu0 0
        %3210 = vmatpush.bf16.xpose.msra.mxu0 0
        %3211 = vmatpush.bf16.xpose.msra.mxu0 0
        %3212 = vmatpush.bf16.xpose.msra.mxu0 %v3203
        %3213 = vmatmul.bf16.gmra.mxu0 %v3197
        %v3214 = vpop.f32.mrf.mxu0
        %v3215 = vadd.f32 0.0, %v3214
        %v3216 = vpop.f32.mrf.mxu0
        %v3217 = vadd.f32 0.0, %v3216
        %3218 = vmatmul.bf16.gmra.mxu0 %v3200
        %v3219 = vpop.f32.mrf.mxu0
        %v3220 = vadd.f32 0.0, %v3219
        %v3221 = vpop.f32.mrf.mxu0
        %v3222 = vadd.f32 0.0, %v3221
        %3223 = vdwg.mxu0
        %v3225 = vsel %vm1971, %v3127, 0
        %v3228 = vsel %vm1971, %v3139, 0
        %v3231 = vsel %vm1971, %v2019, 0
        %3233 = vmatpush.bf16.xpose.msra.mxu0 0
        %3234 = vmatpush.bf16.xpose.msra.mxu0 0
        %3235 = vmatpush.bf16.xpose.msra.mxu0 0
        %3236 = vmatpush.bf16.xpose.msra.mxu0 0
        %3237 = vmatpush.bf16.xpose.msra.mxu0 0
        %3238 = vmatpush.bf16.xpose.msra.mxu0 0
        %3239 = vmatpush.bf16.xpose.msra.mxu0 0
        %3240 = vmatpush.bf16.xpose.msra.mxu0 %v3231
        %3241 = vmatmul.bf16.gmra.mxu0 %v3225
        %v3242 = vpop.f32.mrf.mxu0
        %v3243 = vadd.f32 0.0, %v3242
        %v3244 = vpop.f32.mrf.mxu0
        %v3245 = vadd.f32 0.0, %v3244
        %3246 = vmatmul.bf16.gmra.mxu0 %v3228
        %v3247 = vpop.f32.mrf.mxu0
        %v3248 = vadd.f32 0.0, %v3247
        %v3249 = vpop.f32.mrf.mxu0
        %v3250 = vadd.f32 0.0, %v3249
        %3251 = vdwg.mxu0
        %3252 = vxpose.xlu0.b32.start [1/16] %v3159, 128
        %3253 = vxpose.xlu0.b32.cont [2/16] %v3161, 128
        %3254 = vxpose.xlu0.b32.cont [3/16] %v3164, 128
        %3255 = vxpose.xlu0.b32.cont [4/16] %v3166, 128
        %3256 = vxpose.xlu0.b32.cont [5/16] 0.0, 128
        %3257 = vxpose.xlu0.b32.cont [6/16] 0.0, 128
        %3258 = vxpose.xlu0.b32.cont [7/16] 0.0, 128
        %3259 = vxpose.xlu0.b32.cont [8/16] 0.0, 128
        %3260 = vxpose.xlu0.b32.cont [9/16] 0.0, 128
        %3261 = vxpose.xlu0.b32.cont [10/16] 0.0, 128
        %3262 = vxpose.xlu0.b32.cont [11/16] 0.0, 128
        %3263 = vxpose.xlu0.b32.cont [12/16] 0.0, 128
        %3264 = vxpose.xlu0.b32.cont [13/16] 0.0, 128
        %3265 = vxpose.xlu0.b32.cont [14/16] 0.0, 128
        %3266 = vxpose.xlu0.b32.cont [15/16] 0.0, 128
        %3267 = vxpose.xlu0.b32.end [16/16] 0.0, 128
        %v3268 = vpop.trf.xlu0
        %v3269 = vpop.trf.xlu0
        %v3270 = vpop.trf.xlu0
        %v3271 = vpop.trf.xlu0
        %v3272 = vpop.trf.xlu0
        %v3273 = vpop.trf.xlu0
        %v3274 = vpop.trf.xlu0
        %v3275 = vpop.trf.xlu0
        %v3276 = vpop.trf.xlu0
        %v3277 = vpop.trf.xlu0
        %v3278 = vpop.trf.xlu0
        %v3279 = vpop.trf.xlu0
        %v3280 = vpop.trf.xlu0
        %v3281 = vpop.trf.xlu0
        %v3282 = vpop.trf.xlu0
        %v3283 = vpop.trf.xlu0
        %3284 = vxpose.xlu0.b32.start [1/16] %v3187, 128
        %3285 = vxpose.xlu0.b32.cont [2/16] %v3189, 128
        %3286 = vxpose.xlu0.b32.cont [3/16] %v3192, 128
        %3287 = vxpose.xlu0.b32.cont [4/16] %v3194, 128
        %3288 = vxpose.xlu0.b32.cont [5/16] 0.0, 128
        %3289 = vxpose.xlu0.b32.cont [6/16] 0.0, 128
        %3290 = vxpose.xlu0.b32.cont [7/16] 0.0, 128
        %3291 = vxpose.xlu0.b32.cont [8/16] 0.0, 128
        %3292 = vxpose.xlu0.b32.cont [9/16] 0.0, 128
        %3293 = vxpose.xlu0.b32.cont [10/16] 0.0, 128
        %3294 = vxpose.xlu0.b32.cont [11/16] 0.0, 128
        %3295 = vxpose.xlu0.b32.cont [12/16] 0.0, 128
        %3296 = vxpose.xlu0.b32.cont [13/16] 0.0, 128
        %3297 = vxpose.xlu0.b32.cont [14/16] 0.0, 128
        %3298 = vxpose.xlu0.b32.cont [15/16] 0.0, 128
        %3299 = vxpose.xlu0.b32.end [16/16] 0.0, 128
        %v3300 = vpop.trf.xlu0
        %v3301 = vpop.trf.xlu0
        %v3302 = vpop.trf.xlu0
        %v3303 = vpop.trf.xlu0
        %v3304 = vpop.trf.xlu0
        %v3305 = vpop.trf.xlu0
        %v3306 = vpop.trf.xlu0
        %v3307 = vpop.trf.xlu0
        %v3308 = vpop.trf.xlu0
        %v3309 = vpop.trf.xlu0
        %v3310 = vpop.trf.xlu0
        %v3311 = vpop.trf.xlu0
        %v3312 = vpop.trf.xlu0
        %v3313 = vpop.trf.xlu0
        %v3314 = vpop.trf.xlu0
        %v3315 = vpop.trf.xlu0
        %3316 = vxpose.xlu0.b32.start [1/16] %v3215, 128
        %3317 = vxpose.xlu0.b32.cont [2/16] %v3217, 128
        %3318 = vxpose.xlu0.b32.cont [3/16] %v3220, 128
        %3319 = vxpose.xlu0.b32.cont [4/16] %v3222, 128
        %3320 = vxpose.xlu0.b32.cont [5/16] 0.0, 128
        %3321 = vxpose.xlu0.b32.cont [6/16] 0.0, 128
        %3322 = vxpose.xlu0.b32.cont [7/16] 0.0, 128
        %3323 = vxpose.xlu0.b32.cont [8/16] 0.0, 128
        %3324 = vxpose.xlu0.b32.cont [9/16] 0.0, 128
        %3325 = vxpose.xlu0.b32.cont [10/16] 0.0, 128
        %3326 = vxpose.xlu0.b32.cont [11/16] 0.0, 128
        %3327 = vxpose.xlu0.b32.cont [12/16] 0.0, 128
        %3328 = vxpose.xlu0.b32.cont [13/16] 0.0, 128
        %3329 = vxpose.xlu0.b32.cont [14/16] 0.0, 128
        %3330 = vxpose.xlu0.b32.cont [15/16] 0.0, 128
        %3331 = vxpose.xlu0.b32.end [16/16] 0.0, 128
        %v3332 = vpop.trf.xlu0
        %v3333 = vpop.trf.xlu0
        %v3334 = vpop.trf.xlu0
        %v3335 = vpop.trf.xlu0
        %v3336 = vpop.trf.xlu0
        %v3337 = vpop.trf.xlu0
        %v3338 = vpop.trf.xlu0
        %v3339 = vpop.trf.xlu0
        %v3340 = vpop.trf.xlu0
        %v3341 = vpop.trf.xlu0
        %v3342 = vpop.trf.xlu0
        %v3343 = vpop.trf.xlu0
        %v3344 = vpop.trf.xlu0
        %v3345 = vpop.trf.xlu0
        %v3346 = vpop.trf.xlu0
        %v3347 = vpop.trf.xlu0
        %3348 = vxpose.xlu0.b32.start [1/16] %v3243, 128
        %3349 = vxpose.xlu0.b32.cont [2/16] %v3245, 128
        %3350 = vxpose.xlu0.b32.cont [3/16] %v3248, 128
        %3351 = vxpose.xlu0.b32.cont [4/16] %v3250, 128
        %3352 = vxpose.xlu0.b32.cont [5/16] 0.0, 128
        %3353 = vxpose.xlu0.b32.cont [6/16] 0.0, 128
        %3354 = vxpose.xlu0.b32.cont [7/16] 0.0, 128
        %3355 = vxpose.xlu0.b32.cont [8/16] 0.0, 128
        %3356 = vxpose.xlu0.b32.cont [9/16] 0.0, 128
        %3357 = vxpose.xlu0.b32.cont [10/16] 0.0, 128
        %3358 = vxpose.xlu0.b32.cont [11/16] 0.0, 128
        %3359 = vxpose.xlu0.b32.cont [12/16] 0.0, 128
        %3360 = vxpose.xlu0.b32.cont [13/16] 0.0, 128
        %3361 = vxpose.xlu0.b32.cont [14/16] 0.0, 128
        %3362 = vxpose.xlu0.b32.cont [15/16] 0.0, 128
        %3363 = vxpose.xlu0.b32.end [16/16] 0.0, 128
        %v3364 = vpop.trf.xlu0
        %v3365 = vpop.trf.xlu0
        %v3366 = vpop.trf.xlu0
        %v3367 = vpop.trf.xlu0
        %v3368 = vpop.trf.xlu0
        %v3369 = vpop.trf.xlu0
        %v3370 = vpop.trf.xlu0
        %v3371 = vpop.trf.xlu0
        %v3372 = vpop.trf.xlu0
        %v3373 = vpop.trf.xlu0
        %v3374 = vpop.trf.xlu0
        %v3375 = vpop.trf.xlu0
        %v3376 = vpop.trf.xlu0
        %v3377 = vpop.trf.xlu0
        %v3378 = vpop.trf.xlu0
        %v3379 = vpop.trf.xlu0
        %v3380 = vrot.slane %v3332, 4
        %v3381 = vsel %vm529, %v3380, %v3268
        %v3382 = vrot.slane %v3268, 4
        %v3383 = vsel %vm529, %v3332, %v3382
        %v3385 = vunpack.c.l.s4 1983009808
        %v3386 = vunpack.c.0.s8 %v3385
        %v3387 = vperm.slane %v3381, %v3386
        %v3389 = vunpack.c.l.s4 1983009808
        %v3390 = vunpack.c.0.s8 %v3389
        %v3391 = vperm.slane %v3383, %v3390
        %v3392 = vrot.slane %v3364, 4
        %v3393 = vsel %vm529, %v3392, %v3300
        %v3394 = vrot.slane %v3300, 4
        %v3395 = vsel %vm529, %v3364, %v3394
        %v3397 = vunpack.c.l.s4 1983009808
        %v3398 = vunpack.c.0.s8 %v3397
        %v3399 = vperm.slane %v3393, %v3398
        %v3401 = vunpack.c.l.s4 1983009808
        %v3402 = vunpack.c.0.s8 %v3401
        %v3403 = vperm.slane %v3395, %v3402
        %v3404 = vrot.slane %v3399, 4
        %v3405 = vsel %vm529, %v3404, %v3387
        %v3406 = vrot.slane %v3387, 4
        %v3407 = vsel %vm529, %v3399, %v3406
        %v3409 = vunpack.c.l.s4 1934713408
        %v3410 = vunpack.c.0.s8 %v3409
        %v3411 = vperm.slane %v3405, %v3410
        %v3413 = vunpack.c.l.s4 1934713408
        %v3414 = vunpack.c.0.s8 %v3413
        %v3415 = vperm.slane %v3407, %v3414
        %v3416 = vrot.slane %v3403, 4
        %v3417 = vsel %vm529, %v3416, %v3391
        %v3418 = vrot.slane %v3391, 4
        %v3419 = vsel %vm529, %v3403, %v3418
        %v3421 = vunpack.c.l.s4 1934713408
        %v3422 = vunpack.c.0.s8 %v3421
        %v3423 = vperm.slane %v3417, %v3422
        %v3425 = vunpack.c.l.s4 1934713408
        %v3426 = vunpack.c.0.s8 %v3425
        %v3427 = vperm.slane %v3419, %v3426
        %v3428 = vrot.slane %v3411, 4
        %v3429 = vsel %vm529, 0.0, %v3428
        %v3430 = vrot.slane %v3415, 4
        %v3431 = vsel %vm529, 0.0, %v3430
        %v3432 = vrot.slane %v3423, 4
        %v3433 = vsel %vm529, 0.0, %v3432
        %v3434 = vrot.slane %v3427, 4
        %v3435 = vsel %vm529, 0.0, %v3434
        %v3436 = vsel %vm529, %v3430, %v3411
        %v3438 = vunpack.c.l.s4 1983009808
        %v3439 = vunpack.c.0.s8 %v3438
        %v3440 = vperm.slane %v3436, %v3439
        %v3441 = vrot.slane %v3431, 4
        %v3442 = vsel %vm529, %v3441, %v3429
        %v3444 = vunpack.c.l.s4 1983009808
        %v3445 = vunpack.c.0.s8 %v3444
        %v3446 = vperm.slane %v3442, %v3445
        %v3447 = vsel %vm529, %v3434, %v3423
        %v3449 = vunpack.c.l.s4 1983009808
        %v3450 = vunpack.c.0.s8 %v3449
        %v3451 = vperm.slane %v3447, %v3450
        %v3452 = vrot.slane %v3435, 4
        %v3453 = vsel %vm529, %v3452, %v3433
        %v3455 = vunpack.c.l.s4 1983009808
        %v3456 = vunpack.c.0.s8 %v3455
        %v3457 = vperm.slane %v3453, %v3456
        %v3458 = vrot.slane %v3446, 4
        %v3459 = vsel %vm529, %v3458, %v3440
        %v3460 = vrot.slane %v3440, 4
        %v3461 = vsel %vm529, %v3446, %v3460
        %v3463 = vunpack.c.l.s4 1934713408
        %v3464 = vunpack.c.0.s8 %v3463
        %v3465 = vperm.slane %v3459, %v3464
        %v3467 = vunpack.c.l.s4 1934713408
        %v3468 = vunpack.c.0.s8 %v3467
        %v3469 = vperm.slane %v3461, %v3468
        %v3470 = vrot.slane %v3457, 4
        %v3471 = vsel %vm529, %v3470, %v3451
        %v3472 = vrot.slane %v3451, 4
        %v3473 = vsel %vm529, %v3457, %v3472
        %v3475 = vunpack.c.l.s4 1934713408
        %v3476 = vunpack.c.0.s8 %v3475
        %v3477 = vperm.slane %v3471, %v3476
        %v3479 = vunpack.c.l.s4 1934713408
        %v3480 = vunpack.c.0.s8 %v3479
        %v3481 = vperm.slane %v3473, %v3480
        %v3482 = vrot.slane %v3477, 4
        %v3483 = vsel %vm529, %v3482, %v3465
        %v3484 = vrot.slane %v3465, 4
        %v3485 = vsel %vm529, %v3477, %v3484
        %v3486 = vrot.slane %v3481, 4
        %v3487 = vsel %vm529, %v3486, %v3469
        %v3488 = vrot.slane %v3469, 4
        %v3489 = vsel %vm529, %v3481, %v3488
        %3491 = vrot.lane.b32.xlu0 %v3485, 32
        %v3492 = vpop.permute.xlu0 %3491
        %3495 = vrot.lane.b32.xlu0 %v3487, 64
        %v3496 = vpop.permute.xlu0 %3495
        %3499 = vrot.lane.b32.xlu0 %v3489, 96
        %v3500 = vpop.permute.xlu0 %3499
        %v3502 = vsel %vm1906, %v3483, %v3492
        %vm3503 = vcmask 523264
        %v3504 = vsel %vm3503, %v3502, %v3496
        %vm3505 = vcmask 785408
        %v3506 = vsel %vm3505, %v3504, %v3500
        %v3507 = vpack.c.bf16 %v3506, %v3506
        %v3508 = vld [vmem:[#allocation4] sm:$0xf]
        %v3509 = vld [vmem:[#allocation4 + $0x4] sm:$0xf]
        %v3510 = vld [vmem:[#allocation4 + $0x8] sm:$0xf]
        %v3511 = vld [vmem:[#allocation4 + $0xc] sm:$0xf]
        %v3512 = vld [vmem:[#allocation4 + $0x10] sm:$0xf]
        %v3513 = vld [vmem:[#allocation4 + $0x14] sm:$0xf]
        %v3514 = vld [vmem:[#allocation4 + $0x18] sm:$0xf]
        %v3515 = vld [vmem:[#allocation4 + $0x1c] sm:$0xf]
        %v3516 = vld [vmem:[#allocation4 + $0x20] sm:$0xf]
        %v3517 = vld [vmem:[#allocation4 + $0x24] sm:$0xf]
        %v3518 = vld [vmem:[#allocation4 + $0x28] sm:$0xf]
        %v3519 = vld [vmem:[#allocation4 + $0x2c] sm:$0xf]
        %v3520 = vld [vmem:[#allocation4 + $0x30] sm:$0xf]
        %v3521 = vld [vmem:[#allocation4 + $0x34] sm:$0xf]
        %v3522 = vld [vmem:[#allocation4 + $0x38] sm:$0xf]
        %v3523 = vld [vmem:[#allocation4 + $0x3c] sm:$0xf]
        %v3524 = vld [vmem:[%s4] sm:$0x1]
        %v3526 = vperm.slane %v3524, 0
        %v3544 = vunpack.c.l.b16 %v3508
        %v3545 = vunpack.c.l.b16 %v3509
        %v3546 = vunpack.c.l.b16 %v3510
        %v3547 = vunpack.c.l.b16 %v3511
        %v3548 = vunpack.c.l.b16 %v3512
        %v3549 = vunpack.c.l.b16 %v3513
        %v3550 = vunpack.c.l.b16 %v3514
        %v3551 = vunpack.c.l.b16 %v3515
        %v3552 = vunpack.c.l.b16 %v3516
        %v3553 = vunpack.c.l.b16 %v3517
        %v3554 = vunpack.c.l.b16 %v3518
        %v3555 = vunpack.c.l.b16 %v3519
        %v3556 = vunpack.c.l.b16 %v3520
        %v3557 = vunpack.c.l.b16 %v3521
        %v3558 = vunpack.c.l.b16 %v3522
        %v3559 = vunpack.c.l.b16 %v3523
        %v3560 = vpack.c.b16 %v3545, %v3544
        %v3561 = vpack.c.b16 %v3547, %v3546
        %v3562 = vpack.c.b16 %v3549, %v3548
        %v3563 = vpack.c.b16 %v3551, %v3550
        %v3564 = vpack.c.b16 %v3553, %v3552
        %v3565 = vpack.c.b16 %v3555, %v3554
        %v3566 = vpack.c.b16 %v3557, %v3556
        %v3567 = vpack.c.b16 %v3559, %v3558
        %3576 = vmatpush.bf16.msra.mxu0 %v3567
        %3577 = vmatpush.bf16.msra.mxu0 %v3566
        %3578 = vmatpush.bf16.msra.mxu0 %v3565
        %3579 = vmatpush.bf16.msra.mxu0 %v3564
        %3580 = vmatpush.bf16.msra.mxu0 %v3563
        %3581 = vmatpush.bf16.msra.mxu0 %v3562
        %3582 = vmatpush.bf16.msra.mxu0 %v3561
        %3583 = vmatpush.bf16.msra.mxu0 %v3560
        %3584 = vmatmul.bf16.gmra.mxu0 %v3507
        %v3585 = vpop.f32.mrf.mxu0
        %v3586 = vadd.f32 %v3526, %v3585
        %v3587 = vpop.f32.mrf.mxu0
        %3588 = vdwg.mxu0
        %v3589 = vadd.f32 %v3586, %v309
        %v3590 = vld [vmem:[%s5] sm:$0x1]
        %v3591 = vld [vmem:[%s6] sm:$0x1]
        %3592 = vadd.xlane.f32.xlu0 %v3589
        %v3593 = vpop.xlane.xlu0 %3592
        %v3594 = vrcp.pop 128.0
        %v3595 = vmul.f32 128.0, %v3594
        %v3596 = vsub.f32 1.0, %v3595
        %v3597 = vmul.f32 %v3594, %v3596
        %v3598 = vadd.f32 %v3594, %v3597
        %vm3599 = vweird.f32 %v3594
        %v3600 = vsel %vm3599, %v3594, %v3598
        %v3601 = vmul.f32 %v3593, %v3600
        %v3602 = vsub.f32 %v3589, %v3601
        %v3603 = vmul.f32 %v3602, %v3602
        %3604 = vadd.xlane.f32.xlu0 %v3603
        %v3605 = vpop.xlane.xlu0 %3604
        %v3606 = vmul.f32 %v3605, %v3600
        %v3607 = vadd.f32 %v3606, 1e-05
        %v3608 = vrsqrt.pop %v3607
        %v3609 = vmul.f32 %v3608, %v3607
        %v3610 = vmul.f32 %v3609, %v3608
        %v3611 = vmul.f32 0.5, %v3610
        %v3612 = vsub.f32 1.5, %v3611
        %v3613 = vmul.f32 %v3608, %v3612
        %vm3614 = vweird.f32 %v3607
        %vm3615 = vweird.f32 %v3608
        %vm3616 = vmor %vm3614, %vm3615
        %v3617 = vsel %vm3616, %v3608, %v3613
        %v3618 = vmul.f32 %v3602, %v3617
        %v3620 = vperm.slane %v3590, 0
        %v3622 = vmul.f32 %v3618, %v3620
        %v3624 = vperm.slane %v3591, 0
        %v3626 = vadd.f32 %v3622, %v3624
        %3627 = vst [vmem:[%s307] sm:$0xff] %v3626
        %p3628 = scmp.lt.s32.totalorder %s20, 1
        %s3629 = scalar_select %p3628, %s20, 1
        %s3630 = smul.addr %s3629, 8
        %s3631 = scalar_lea.vmem %s7, %s3630
        // Predicated region
        $region57: #{audio_transformer_enc_dec.7} parent=47 // pred_check
          %p3632 = pneg %p190
        $region58: #{audio_transformer_enc_dec.7} parent=47 // pred_check_branch
          %3634 = sbr.rel (%p3632) target = $region60
        $region59: #{audio_transformer_enc_dec.7} parent=47 // pred_region
          _
        $region60: #{audio_transformer_enc_dec.7} parent=47 // pred_fallthru
          _
      $region48: #{audio_transformer_enc_dec.7} parent=5 // pred_fallthru
        _
      %p3635 = scmp.le.s32.totalorder 2, %s15
      // Predicated region
      $region61: #{audio_transformer_enc_dec.7} parent=5 // pred_check
        %p3636 = pneg %p3635
      $region62: #{audio_transformer_enc_dec.7} parent=5 // pred_check_branch
        %3638 = sbr.rel (%p3636) target = $region64
      $region63: #{audio_transformer_enc_dec.7} parent=5 // pred_region
        %s3639 = ssub.s32 %s15, 2
        // Predicated region
        $region65: #{audio_transformer_enc_dec.7} parent=63 // pred_check
          %p3640 = pneg %p196
        $region66: #{audio_transformer_enc_dec.7} parent=63 // pred_check_branch
          %3642 = sbr.rel (%p3640) target = $region68
        $region67: #{audio_transformer_enc_dec.7} parent=63 // pred_region
          %p3643 = scmp.lt.s32.totalorder %s21, 1
          %s3644 = scalar_select %p3643, %s21, 1
          %s3645 = smul.addr %s3644, 8
          %s3646 = scalar_lea.vmem %s7, %s3645
        $region68: #{audio_transformer_enc_dec.7} parent=63 // pred_fallthru
          _
      $region64: #{audio_transformer_enc_dec.7} parent=5 // pred_fallthru
        _
    $region6: #{audio_transformer_enc_dec.7} parent=1 // loop_footer
      %s19 = sadd.s32 1, %s15
    $region7: #{audio_transformer_enc_dec.7} parent=1 // loop_footer_branch
      %14 = sbr.rel target = $region3
    $region8: #{audio_transformer_enc_dec.7} parent=1 // loop_exit
      _
    %3647 = vsyncpa [#allocation3], 1
    %s3648 = scalar_lea.sflag [#allocation3], 1
    %3649 = vsyncpa %s3648, 1
    %3650 = vsyncpa [#allocation5], 1

// kernel: audio_transformer_enc_dec.11
$region0: #{audio_transformer_enc_dec.11}
  #allocation0 [shape = 'u32[]', space=smem, size = 0x4, offset = 0x4, fixed_abs, tag = 'smem constant byte address 0x4 - core index']
  #allocation1 [shape = 'u32[72,128]{1,0:T(1,128)}', space=vmem, size = 0x9000, scoped, tag = 'internal scratch']
  %s0 = inlined_call_operand.vmem [shape: f32[2,8,128], index: 0, kind: input, shape index: {}]
  %s1 = inlined_call_operand.vmem [shape: f32[2,8,128], index: 1, kind: input, shape index: {}]
  %s2 = inlined_call_operand.hbm [shape: bf16[128,128], index: 2, kind: input, shape index: {}]
  %s3 = inlined_call_operand.vmem [shape: f32[1,128], index: 3, kind: input, shape index: {}]
  %s4 = inlined_call_operand.hbm [shape: bf16[128,256], index: 4, kind: input, shape index: {}]
  %s5 = inlined_call_operand.vmem [shape: f32[1,256], index: 5, kind: input, shape index: {}]
  %s6 = inlined_call_operand.hbm [shape: bf16[128,128], index: 6, kind: input, shape index: {}]
  %s7 = inlined_call_operand.vmem [shape: f32[1,128], index: 7, kind: input, shape index: {}]
  %s8 = inlined_call_operand.vmem [shape: f32[1,128], index: 8, kind: input, shape index: {}]
  %s9 = inlined_call_operand.vmem [shape: f32[1,128], index: 9, kind: input, shape index: {}]
  %s10 = inlined_call_operand.vmem [shape: f32[2,8,128], index: 10, kind: output, shape index: {}]
  %s11 = sld [smem:[#allocation0]]
  $region85: #{audio_transformer_enc_dec.11} parent=0
    _
  %s13 = ssub.s32 1, %s11
  %s14 = scalar_select 0, %s13, %s11
  $region1: #{audio_transformer_enc_dec.11} parent=0
    #allocation2 [shape = 'u8[32768]{0}', space=vmem, size = 0x8000, scoped, tag = 'input window, operand 2, single buffered']
    #allocation3 [shape = 's32[2]{0}', space=sflag, size = 0x8, scoped, tag = 'scoped memory for audio_transformer_enc_dec.11']
    #allocation4 [shape = 'u8[65536]{0}', space=vmem, size = 0x10000, scoped, tag = 'input window, operand 4, single buffered']
    #allocation5 [shape = 's32[1]{0}', space=sflag, size = 0x4, scoped, tag = 'scoped memory for audio_transformer_enc_dec.11']
    #allocation6 [shape = 'u8[32768]{0}', space=vmem, size = 0x8000, scoped, tag = 'input window, operand 6, single buffered']
    %15 = vsyncpa [#allocation3], 0
    %16 = vsyncpa [#allocation5], 0
    loop: start=0, step=1, limit=4
    $region2: #{audio_transformer_enc_dec.11} parent=1 // loop_pre_header
      _
    $region3: #{audio_transformer_enc_dec.11} parent=1 // loop_header
      %s18 = sphi 0, %s22
      %p19 = scmp.ge.s32.totalorder %s18, 4
      %s28 = sphi 0, %s30
      %s31 = sphi 0, %s28
      %s32 = sphi 0, %s31
      %s48 = sphi 0, %s32
      %s54 = sphi 0, %s56
      %s57 = sphi 0, %s54
      %s58 = sphi 0, %s57
      %s74 = sphi 0, %s58
      %s78 = sphi 0, %s78
      %s80 = sphi 0, %s78
      %s81 = sphi 0, %s80
      %s95 = sphi 0, %s81
      %s99 = sphi 0, %s99
      %s101 = sphi 0, %s99
      %s102 = sphi 0, %s101
      %s116 = sphi 0, %s102
      %s120 = sphi 0, %s120
      %s122 = sphi 0, %s120
      %s123 = sphi 0, %s122
      %s137 = sphi 0, %s123
      %s141 = sphi 0, %s141
      %s143 = sphi 0, %s141
      %s144 = sphi 0, %s143
      %s158 = sphi 0, %s144
      %s162 = sphi 0, %s162
      %s164 = sphi 0, %s162
      %s165 = sphi 0, %s164
      %s179 = sphi 0, %s165
      %s183 = sphi 0, %s183
      %s185 = sphi 0, %s183
      %s186 = sphi 0, %s185
      %s200 = sphi 0, %s186
      %s204 = sphi 0, %s204
      %s206 = sphi 0, %s204
      %s207 = sphi 0, %s206
      %s221 = sphi 0, %s207
      %s225 = sphi 0, %s225
      %s227 = sphi 0, %s225
      %s228 = sphi 0, %s227
      %s242 = sphi 0, %s228
      %s248 = sphi 0, %s250
      %s251 = sphi 0, %s248
      %s252 = sphi 0, %s251
      %s268 = sphi 0, %s252
    $region4: #{audio_transformer_enc_dec.11} parent=1 // loop_header_branch
      %21 = sbr.rel (%p19) target = $region8
    $region5: #{audio_transformer_enc_dec.11} parent=1 // loop_body
      %s23 = ssub.s32 %s18, 1
      %s24 = ssub.s32 %s18, 2
      %s25 = sadd.s32 %s18, 1
      %s26 = ssub.s32 %s18, %s25
      %p27 = scmp.eq.s32.totalorder %s26, 0
      %s29 = sadd.s32 %s28, 1
      %s30 = scalar_select %p27, %s28, %s29
      %p33 = pneg %p27
      %p34 = scmp.eq.s32.totalorder %s18, 1
      %p35 = por %p33, %p34
      %p36 = scmp.ne.s32.totalorder %s28, %s31
      %p37 = scmp.eq.s32.totalorder %s18, 0
      %p38 = por %p36, %p37
      %p39 = scmp.ne.s32.totalorder %s28, %s31
      %p40 = scmp.eq.s32.totalorder %s23, 1
      %p41 = por %p39, %p40
      %p42 = scmp.ne.s32.totalorder %s31, %s32
      %p43 = scmp.eq.s32.totalorder %s23, 0
      %p44 = por %p42, %p43
      %p45 = scmp.ne.s32.totalorder %s31, %s32
      %p46 = scmp.eq.s32.totalorder %s24, 1
      %p47 = por %p45, %p46
      %p49 = scmp.ne.s32.totalorder %s32, %s48
      %p50 = scmp.eq.s32.totalorder %s24, 0
      %p51 = por %p49, %p50
      %s52 = ssub.s32 %s18, %s25
      %p53 = scmp.eq.s32.totalorder %s52, 0
      %s55 = sadd.s32 %s54, 1
      %s56 = scalar_select %p53, %s54, %s55
      %p59 = pneg %p53
      %p60 = scmp.eq.s32.totalorder %s18, 1
      %p61 = por %p59, %p60
      %p62 = scmp.ne.s32.totalorder %s54, %s57
      %p63 = scmp.eq.s32.totalorder %s18, 0
      %p64 = por %p62, %p63
      %p65 = scmp.ne.s32.totalorder %s54, %s57
      %p66 = scmp.eq.s32.totalorder %s23, 1
      %p67 = por %p65, %p66
      %p68 = scmp.ne.s32.totalorder %s57, %s58
      %p69 = scmp.eq.s32.totalorder %s23, 0
      %p70 = por %p68, %p69
      %p71 = scmp.ne.s32.totalorder %s57, %s58
      %p72 = scmp.eq.s32.totalorder %s24, 1
      %p73 = por %p71, %p72
      %p75 = scmp.ne.s32.totalorder %s58, %s74
      %p76 = scmp.eq.s32.totalorder %s24, 0
      %p77 = por %p75, %p76
      %s79 = sadd.s32 %s78, 1
      %p82 = scmp.eq.s32.totalorder %s18, 1
      %p83 = scmp.ne.s32.totalorder %s78, %s80
      %p84 = scmp.eq.s32.totalorder %s18, 0
      %p85 = por %p83, %p84
      %p86 = scmp.ne.s32.totalorder %s78, %s80
      %p87 = scmp.eq.s32.totalorder %s23, 1
      %p88 = por %p86, %p87
      %p89 = scmp.ne.s32.totalorder %s80, %s81
      %p90 = scmp.eq.s32.totalorder %s23, 0
      %p91 = por %p89, %p90
      %p92 = scmp.ne.s32.totalorder %s80, %s81
      %p93 = scmp.eq.s32.totalorder %s24, 1
      %p94 = por %p92, %p93
      %p96 = scmp.ne.s32.totalorder %s81, %s95
      %p97 = scmp.eq.s32.totalorder %s24, 0
      %p98 = por %p96, %p97
      %s100 = sadd.s32 %s99, 1
      %p103 = scmp.eq.s32.totalorder %s18, 1
      %p104 = scmp.ne.s32.totalorder %s99, %s101
      %p105 = scmp.eq.s32.totalorder %s18, 0
      %p106 = por %p104, %p105
      %p107 = scmp.ne.s32.totalorder %s99, %s101
      %p108 = scmp.eq.s32.totalorder %s23, 1
      %p109 = por %p107, %p108
      %p110 = scmp.ne.s32.totalorder %s101, %s102
      %p111 = scmp.eq.s32.totalorder %s23, 0
      %p112 = por %p110, %p111
      %p113 = scmp.ne.s32.totalorder %s101, %s102
      %p114 = scmp.eq.s32.totalorder %s24, 1
      %p115 = por %p113, %p114
      %p117 = scmp.ne.s32.totalorder %s102, %s116
      %p118 = scmp.eq.s32.totalorder %s24, 0
      %p119 = por %p117, %p118
      %s121 = sadd.s32 %s120, 1
      %p124 = scmp.eq.s32.totalorder %s18, 1
      %p125 = scmp.ne.s32.totalorder %s120, %s122
      %p126 = scmp.eq.s32.totalorder %s18, 0
      %p127 = por %p125, %p126
      %p128 = scmp.ne.s32.totalorder %s120, %s122
      %p129 = scmp.eq.s32.totalorder %s23, 1
      %p130 = por %p128, %p129
      %p131 = scmp.ne.s32.totalorder %s122, %s123
      %p132 = scmp.eq.s32.totalorder %s23, 0
      %p133 = por %p131, %p132
      %p134 = scmp.ne.s32.totalorder %s122, %s123
      %p135 = scmp.eq.s32.totalorder %s24, 1
      %p136 = por %p134, %p135
      %p138 = scmp.ne.s32.totalorder %s123, %s137
      %p139 = scmp.eq.s32.totalorder %s24, 0
      %p140 = por %p138, %p139
      %s142 = sadd.s32 %s141, 1
      %p145 = scmp.eq.s32.totalorder %s18, 1
      %p146 = scmp.ne.s32.totalorder %s141, %s143
      %p147 = scmp.eq.s32.totalorder %s18, 0
      %p148 = por %p146, %p147
      %p149 = scmp.ne.s32.totalorder %s141, %s143
      %p150 = scmp.eq.s32.totalorder %s23, 1
      %p151 = por %p149, %p150
      %p152 = scmp.ne.s32.totalorder %s143, %s144
      %p153 = scmp.eq.s32.totalorder %s23, 0
      %p154 = por %p152, %p153
      %p155 = scmp.ne.s32.totalorder %s143, %s144
      %p156 = scmp.eq.s32.totalorder %s24, 1
      %p157 = por %p155, %p156
      %p159 = scmp.ne.s32.totalorder %s144, %s158
      %p160 = scmp.eq.s32.totalorder %s24, 0
      %p161 = por %p159, %p160
      %s163 = sadd.s32 %s162, 1
      %p166 = scmp.eq.s32.totalorder %s18, 1
      %p167 = scmp.ne.s32.totalorder %s162, %s164
      %p168 = scmp.eq.s32.totalorder %s18, 0
      %p169 = por %p167, %p168
      %p170 = scmp.ne.s32.totalorder %s162, %s164
      %p171 = scmp.eq.s32.totalorder %s23, 1
      %p172 = por %p170, %p171
      %p173 = scmp.ne.s32.totalorder %s164, %s165
      %p174 = scmp.eq.s32.totalorder %s23, 0
      %p175 = por %p173, %p174
      %p176 = scmp.ne.s32.totalorder %s164, %s165
      %p177 = scmp.eq.s32.totalorder %s24, 1
      %p178 = por %p176, %p177
      %p180 = scmp.ne.s32.totalorder %s165, %s179
      %p181 = scmp.eq.s32.totalorder %s24, 0
      %p182 = por %p180, %p181
      %s184 = sadd.s32 %s183, 1
      %p187 = scmp.eq.s32.totalorder %s18, 1
      %p188 = scmp.ne.s32.totalorder %s183, %s185
      %p189 = scmp.eq.s32.totalorder %s18, 0
      %p190 = por %p188, %p189
      %p191 = scmp.ne.s32.totalorder %s183, %s185
      %p192 = scmp.eq.s32.totalorder %s23, 1
      %p193 = por %p191, %p192
      %p194 = scmp.ne.s32.totalorder %s185, %s186
      %p195 = scmp.eq.s32.totalorder %s23, 0
      %p196 = por %p194, %p195
      %p197 = scmp.ne.s32.totalorder %s185, %s186
      %p198 = scmp.eq.s32.totalorder %s24, 1
      %p199 = por %p197, %p198
      %p201 = scmp.ne.s32.totalorder %s186, %s200
      %p202 = scmp.eq.s32.totalorder %s24, 0
      %p203 = por %p201, %p202
      %s205 = sadd.s32 %s204, 1
      %p208 = scmp.eq.s32.totalorder %s18, 1
      %p209 = scmp.ne.s32.totalorder %s204, %s206
      %p210 = scmp.eq.s32.totalorder %s18, 0
      %p211 = por %p209, %p210
      %p212 = scmp.ne.s32.totalorder %s204, %s206
      %p213 = scmp.eq.s32.totalorder %s23, 1
      %p214 = por %p212, %p213
      %p215 = scmp.ne.s32.totalorder %s206, %s207
      %p216 = scmp.eq.s32.totalorder %s23, 0
      %p217 = por %p215, %p216
      %p218 = scmp.ne.s32.totalorder %s206, %s207
      %p219 = scmp.eq.s32.totalorder %s24, 1
      %p220 = por %p218, %p219
      %p222 = scmp.ne.s32.totalorder %s207, %s221
      %p223 = scmp.eq.s32.totalorder %s24, 0
      %p224 = por %p222, %p223
      %s226 = sadd.s32 %s225, 1
      %p229 = scmp.eq.s32.totalorder %s18, 1
      %p230 = scmp.ne.s32.totalorder %s225, %s227
      %p231 = scmp.eq.s32.totalorder %s18, 0
      %p232 = por %p230, %p231
      %p233 = scmp.ne.s32.totalorder %s225, %s227
      %p234 = scmp.eq.s32.totalorder %s23, 1
      %p235 = por %p233, %p234
      %p236 = scmp.ne.s32.totalorder %s227, %s228
      %p237 = scmp.eq.s32.totalorder %s23, 0
      %p238 = por %p236, %p237
      %p239 = scmp.ne.s32.totalorder %s227, %s228
      %p240 = scmp.eq.s32.totalorder %s24, 1
      %p241 = por %p239, %p240
      %p243 = scmp.ne.s32.totalorder %s228, %s242
      %p244 = scmp.eq.s32.totalorder %s24, 0
      %p245 = por %p243, %p244
      %s246 = ssub.s32 %s18, %s25
      %p247 = scmp.eq.s32.totalorder %s246, 0
      %s249 = sadd.s32 %s248, 1
      %s250 = scalar_select %p247, %s248, %s249
      %p253 = pneg %p247
      %p254 = scmp.eq.s32.totalorder %s18, 1
      %p255 = por %p253, %p254
      %p256 = scmp.ne.s32.totalorder %s248, %s251
      %p257 = scmp.eq.s32.totalorder %s18, 0
      %p258 = por %p256, %p257
      %p259 = scmp.ne.s32.totalorder %s248, %s251
      %p260 = scmp.eq.s32.totalorder %s23, 1
      %p261 = por %p259, %p260
      %p262 = scmp.ne.s32.totalorder %s251, %s252
      %p263 = scmp.eq.s32.totalorder %s23, 0
      %p264 = por %p262, %p263
      %p265 = scmp.ne.s32.totalorder %s251, %s252
      %p266 = scmp.eq.s32.totalorder %s24, 1
      %p267 = por %p265, %p266
      %p269 = scmp.ne.s32.totalorder %s252, %s268
      %p270 = scmp.eq.s32.totalorder %s24, 0
      %p271 = por %p269, %p270
      %p272 = scmp.le.s32.totalorder 1, %s18
      %p273 = scmp.lt.s32.totalorder %s18, 3
      %p274 = pnand %p272, %p273
      %p275 = pneg %p274
      // Predicated region
      $region9: #{audio_transformer_enc_dec.11} parent=5 // pred_check
        _
      $region10: #{audio_transformer_enc_dec.11} parent=5 // pred_check_branch
        %277 = sbr.rel (%p274) target = $region12
      $region11: #{audio_transformer_enc_dec.11} parent=5 // pred_region
        %s278 = ssub.s32 %s18, 1
        // Predicated region
        $region13: #{audio_transformer_enc_dec.11} parent=11 // pred_check
          %p279 = pneg %p91
        $region14: #{audio_transformer_enc_dec.11} parent=11 // pred_check_branch
          %281 = sbr.rel (%p279) target = $region16
        $region15: #{audio_transformer_enc_dec.11} parent=11 // pred_region
          %283 = vsyncadd [#allocation3], 0
          %s284 = sshll.u32 %s2, 4
          %s285 = int_to_ptr.hbm [resolvable:$true] %s284
          %s286 = sshll.u32 [#allocation2], 4
          %s287 = int_to_ptr.vmem [resolvable:$true] %s286
          %292 = dma.hbm_to_vmem [thread:$0]  %s285, 1024, %s287, [#allocation3], 64, 64, 4
        $region16: #{audio_transformer_enc_dec.11} parent=11 // pred_fallthru
          _
        // Predicated region
        $region17: #{audio_transformer_enc_dec.11} parent=11 // pred_check
          %p293 = pneg %p112
        $region18: #{audio_transformer_enc_dec.11} parent=11 // pred_check_branch
          %295 = sbr.rel (%p293) target = $region20
        $region19: #{audio_transformer_enc_dec.11} parent=11 // pred_region
          _
        $region20: #{audio_transformer_enc_dec.11} parent=11 // pred_fallthru
          _
        // Predicated region
        $region21: #{audio_transformer_enc_dec.11} parent=11 // pred_check
          %p296 = pneg %p133
        $region22: #{audio_transformer_enc_dec.11} parent=11 // pred_check_branch
          %298 = sbr.rel (%p296) target = $region24
        $region23: #{audio_transformer_enc_dec.11} parent=11 // pred_region
          %300 = vsyncadd [#allocation5], 0
          %s301 = sshll.u32 %s4, 4
          %s302 = int_to_ptr.hbm [resolvable:$true] %s301
          %s303 = sshll.u32 [#allocation4], 4
          %s304 = int_to_ptr.vmem [resolvable:$true] %s303
          %309 = dma.hbm_to_vmem [thread:$0]  %s302, 2048, %s304, [#allocation5], 128, 128, 8
        $region24: #{audio_transformer_enc_dec.11} parent=11 // pred_fallthru
          _
        // Predicated region
        $region25: #{audio_transformer_enc_dec.11} parent=11 // pred_check
          %p310 = pneg %p154
        $region26: #{audio_transformer_enc_dec.11} parent=11 // pred_check_branch
          %312 = sbr.rel (%p310) target = $region28
        $region27: #{audio_transformer_enc_dec.11} parent=11 // pred_region
          _
        $region28: #{audio_transformer_enc_dec.11} parent=11 // pred_fallthru
          _
        // Predicated region
        $region29: #{audio_transformer_enc_dec.11} parent=11 // pred_check
          %p313 = pneg %p175
        $region30: #{audio_transformer_enc_dec.11} parent=11 // pred_check_branch
          %315 = sbr.rel (%p313) target = $region32
        $region31: #{audio_transformer_enc_dec.11} parent=11 // pred_region
          %317 = vsyncadd [#allocation5], 0
          %s318 = sshll.u32 %s6, 4
          %s319 = int_to_ptr.hbm [resolvable:$true] %s318
          %s320 = sshll.u32 [#allocation6], 4
          %s321 = int_to_ptr.vmem [resolvable:$true] %s320
          %326 = dma.hbm_to_vmem [thread:$0]  %s319, 1024, %s321, [#allocation5], 64, 64, 4
        $region32: #{audio_transformer_enc_dec.11} parent=11 // pred_fallthru
          _
        // Predicated region
        $region33: #{audio_transformer_enc_dec.11} parent=11 // pred_check
          %p327 = pneg %p196
        $region34: #{audio_transformer_enc_dec.11} parent=11 // pred_check_branch
          %329 = sbr.rel (%p327) target = $region36
        $region35: #{audio_transformer_enc_dec.11} parent=11 // pred_region
          _
        $region36: #{audio_transformer_enc_dec.11} parent=11 // pred_fallthru
          _
        // Predicated region
        $region37: #{audio_transformer_enc_dec.11} parent=11 // pred_check
          %p330 = pneg %p217
        $region38: #{audio_transformer_enc_dec.11} parent=11 // pred_check_branch
          %332 = sbr.rel (%p330) target = $region40
        $region39: #{audio_transformer_enc_dec.11} parent=11 // pred_region
          _
        $region40: #{audio_transformer_enc_dec.11} parent=11 // pred_fallthru
          _
        // Predicated region
        $region41: #{audio_transformer_enc_dec.11} parent=11 // pred_check
          %p333 = pneg %p238
        $region42: #{audio_transformer_enc_dec.11} parent=11 // pred_check_branch
          %335 = sbr.rel (%p333) target = $region44
        $region43: #{audio_transformer_enc_dec.11} parent=11 // pred_region
          _
        $region44: #{audio_transformer_enc_dec.11} parent=11 // pred_fallthru
          _
      $region12: #{audio_transformer_enc_dec.11} parent=5 // pred_fallthru
        _
      %p336 = scmp.lt.s32.totalorder %s18, 2
      // Predicated region
      $region45: #{audio_transformer_enc_dec.11} parent=5 // pred_check
        %p337 = pneg %p336
      $region46: #{audio_transformer_enc_dec.11} parent=5 // pred_check_branch
        %339 = sbr.rel (%p337) target = $region48
      $region47: #{audio_transformer_enc_dec.11} parent=5 // pred_region
        // Predicated region
        $region49: #{audio_transformer_enc_dec.11} parent=47 // pred_check
          %p340 = pneg %p38
        $region50: #{audio_transformer_enc_dec.11} parent=47 // pred_check_branch
          %342 = sbr.rel (%p340) target = $region52
        $region51: #{audio_transformer_enc_dec.11} parent=47 // pred_region
          %p343 = scmp.lt.s32.totalorder %s18, 1
          %s344 = scalar_select %p343, %s18, 1
          %s345 = smul.addr %s344, 8
          %s346 = scalar_lea.vmem %s0, %s345
        $region52: #{audio_transformer_enc_dec.11} parent=47 // pred_fallthru
          _
        // Predicated region
        $region53: #{audio_transformer_enc_dec.11} parent=47 // pred_check
          %p347 = pneg %p64
        $region54: #{audio_transformer_enc_dec.11} parent=47 // pred_check_branch
          %349 = sbr.rel (%p347) target = $region56
        $region55: #{audio_transformer_enc_dec.11} parent=47 // pred_region
          %p350 = scmp.lt.s32.totalorder %s18, 1
          %s351 = scalar_select %p350, %s18, 1
          %s352 = smul.addr %s351, 8
          %s353 = scalar_lea.vmem %s1, %s352
        $region56: #{audio_transformer_enc_dec.11} parent=47 // pred_fallthru
          _
      $region48: #{audio_transformer_enc_dec.11} parent=5 // pred_fallthru
        _
      %p354 = scmp.le.s32.totalorder 1, %s18
      %p355 = scmp.lt.s32.totalorder %s18, 3
      %p356 = pnand %p354, %p355
      %p357 = pneg %p356
      // Predicated region
      $region57: #{audio_transformer_enc_dec.11} parent=5 // pred_check
        _
      $region58: #{audio_transformer_enc_dec.11} parent=5 // pred_check_branch
        %359 = sbr.rel (%p356) target = $region60
      $region59: #{audio_transformer_enc_dec.11} parent=5 // pred_region
        %s360 = ssub.s32 %s18, 1
        // Predicated region
        $region61: #{audio_transformer_enc_dec.11} parent=59 // pred_check
          %p361 = pneg %p91
        $region62: #{audio_transformer_enc_dec.11} parent=59 // pred_check_branch
          %363 = sbr.rel (%p361) target = $region64
        $region63: #{audio_transformer_enc_dec.11} parent=59 // pred_region
          %365 = dma.done [#allocation3], 1024
        $region64: #{audio_transformer_enc_dec.11} parent=59 // pred_fallthru
          _
        // Predicated region
        $region65: #{audio_transformer_enc_dec.11} parent=59 // pred_check
          %p366 = pneg %p133
        $region66: #{audio_transformer_enc_dec.11} parent=59 // pred_check_branch
          %368 = sbr.rel (%p366) target = $region68
        $region67: #{audio_transformer_enc_dec.11} parent=59 // pred_region
          %370 = dma.done [#allocation5], 2048
        $region68: #{audio_transformer_enc_dec.11} parent=59 // pred_fallthru
          _
        // Predicated region
        $region69: #{audio_transformer_enc_dec.11} parent=59 // pred_check
          %p371 = pneg %p175
        $region70: #{audio_transformer_enc_dec.11} parent=59 // pred_check_branch
          %373 = sbr.rel (%p371) target = $region72
        $region71: #{audio_transformer_enc_dec.11} parent=59 // pred_region
          %375 = dma.done [#allocation5], 1024
        $region72: #{audio_transformer_enc_dec.11} parent=59 // pred_fallthru
          _
        %p376 = scmp.lt.s32.totalorder %s23, 1
        %s377 = scalar_select %p376, %s23, 1
        %s378 = smul.addr %s377, 8
        %s379 = scalar_lea.vmem %s0, %s378
        %p380 = pneg %p44
        %p381 = pneg %p41
        %p382 = scmp.lt.s32.totalorder %s23, 1
        %s383 = scalar_select %p382, %s23, 1
        %s384 = smul.addr %s383, 8
        %s385 = scalar_lea.vmem %s1, %s384
        %p386 = pneg %p70
        %p387 = pneg %p67
        %p388 = pneg %p91
        %p389 = pneg %p88
        %p390 = pneg %p112
        %p391 = pneg %p109
        %p392 = pneg %p133
        %p393 = pneg %p130
        %p394 = pneg %p154
        %p395 = pneg %p151
        %p396 = pneg %p175
        %p397 = pneg %p172
        %p398 = pneg %p196
        %p399 = pneg %p193
        %p400 = pneg %p217
        %p401 = pneg %p214
        %p402 = pneg %p238
        %p403 = pneg %p235
        %p404 = pneg %p264
        %p405 = pneg %p261
        %p406 = scmp.lt.s32.totalorder %s23, 1
        %s407 = scalar_select %p406, %s23, 1
        %s408 = smul.addr %s407, 8
        %s409 = scalar_lea.vmem %s10, %s408
        %p410 = scmp.lt.s32.totalorder %s23, 1
        %s411 = scalar_select %p410, %s23, 1
        %s412 = smul.addr %s411, 8
        %s413 = scalar_lea.vmem %s0, %s412
        %p414 = scmp.lt.s32.totalorder %s23, 1
        %s415 = scalar_select %p414, %s23, 1
        %s416 = smul.addr %s415, 8
        %s417 = scalar_lea.vmem %s1, %s416
        %p418 = scmp.lt.s32.totalorder %s23, 1
        %s419 = scalar_select %p418, %s23, 1
        %s420 = smul.addr %s419, 8
        %s421 = scalar_lea.vmem %s10, %s420
        %v423 = vld [vmem:[%s413] sm:$0xff]
        %v424 = vld [vmem:[%s417] sm:$0xff]
        %v425 = vpack.c.bf16 %v423, %v423
        %v426 = vld [vmem:[#allocation2] sm:$0xf]
        %v427 = vld [vmem:[#allocation2 + $0x4] sm:$0xf]
        %v428 = vld [vmem:[#allocation2 + $0x8] sm:$0xf]
        %v429 = vld [vmem:[#allocation2 + $0xc] sm:$0xf]
        %v430 = vld [vmem:[#allocation2 + $0x10] sm:$0xf]
        %v431 = vld [vmem:[#allocation2 + $0x14] sm:$0xf]
        %v432 = vld [vmem:[#allocation2 + $0x18] sm:$0xf]
        %v433 = vld [vmem:[#allocation2 + $0x1c] sm:$0xf]
        %v434 = vld [vmem:[#allocation2 + $0x20] sm:$0xf]
        %v435 = vld [vmem:[#allocation2 + $0x24] sm:$0xf]
        %v436 = vld [vmem:[#allocation2 + $0x28] sm:$0xf]
        %v437 = vld [vmem:[#allocation2 + $0x2c] sm:$0xf]
        %v438 = vld [vmem:[#allocation2 + $0x30] sm:$0xf]
        %v439 = vld [vmem:[#allocation2 + $0x34] sm:$0xf]
        %v440 = vld [vmem:[#allocation2 + $0x38] sm:$0xf]
        %v441 = vld [vmem:[#allocation2 + $0x3c] sm:$0xf]
        %v442 = vld [vmem:[%s3] sm:$0x1]
        %v444 = vperm.slane %v442, 0
        %v462 = vunpack.c.l.b16 %v426
        %v463 = vunpack.c.l.b16 %v427
        %v464 = vunpack.c.l.b16 %v428
        %v465 = vunpack.c.l.b16 %v429
        %v466 = vunpack.c.l.b16 %v430
        %v467 = vunpack.c.l.b16 %v431
        %v468 = vunpack.c.l.b16 %v432
        %v469 = vunpack.c.l.b16 %v433
        %v470 = vunpack.c.l.b16 %v434
        %v471 = vunpack.c.l.b16 %v435
        %v472 = vunpack.c.l.b16 %v436
        %v473 = vunpack.c.l.b16 %v437
        %v474 = vunpack.c.l.b16 %v438
        %v475 = vunpack.c.l.b16 %v439
        %v476 = vunpack.c.l.b16 %v440
        %v477 = vunpack.c.l.b16 %v441
        %v478 = vpack.c.b16 %v463, %v462
        %v479 = vpack.c.b16 %v465, %v464
        %v480 = vpack.c.b16 %v467, %v466
        %v481 = vpack.c.b16 %v469, %v468
        %v482 = vpack.c.b16 %v471, %v470
        %v483 = vpack.c.b16 %v473, %v472
        %v484 = vpack.c.b16 %v475, %v474
        %v485 = vpack.c.b16 %v477, %v476
        %494 = vmatpush.bf16.msra.mxu0 %v485
        %495 = vmatpush.bf16.msra.mxu0 %v484
        %496 = vmatpush.bf16.msra.mxu0 %v483
        %497 = vmatpush.bf16.msra.mxu0 %v482
        %498 = vmatpush.bf16.msra.mxu0 %v481
        %499 = vmatpush.bf16.msra.mxu0 %v480
        %500 = vmatpush.bf16.msra.mxu0 %v479
        %501 = vmatpush.bf16.msra.mxu0 %v478
        %502 = vmatmul.bf16.gmra.mxu0 %v425
        %v503 = vpop.f32.mrf.mxu0
        %v504 = vadd.f32 %v444, %v503
        %v505 = vpop.f32.mrf.mxu0
        %506 = vdwg.mxu0
        %v507 = vpack.c.bf16 %v424, %v424
        %v508 = vld [vmem:[#allocation4] sm:$0xff]
        %v509 = vld [vmem:[#allocation4 + $0x8] sm:$0xff]
        %v510 = vld [vmem:[#allocation4 + $0x10] sm:$0xff]
        %v511 = vld [vmem:[#allocation4 + $0x18] sm:$0xff]
        %v512 = vld [vmem:[#allocation4 + $0x20] sm:$0xff]
        %v513 = vld [vmem:[#allocation4 + $0x28] sm:$0xff]
        %v514 = vld [vmem:[#allocation4 + $0x30] sm:$0xff]
        %v515 = vld [vmem:[#allocation4 + $0x38] sm:$0xff]
        %v516 = vld [vmem:[#allocation4 + $0x40] sm:$0xff]
        %v517 = vld [vmem:[#allocation4 + $0x48] sm:$0xff]
        %v518 = vld [vmem:[#allocation4 + $0x50] sm:$0xff]
        %v519 = vld [vmem:[#allocation4 + $0x58] sm:$0xff]
        %v520 = vld [vmem:[#allocation4 + $0x60] sm:$0xff]
        %v521 = vld [vmem:[#allocation4 + $0x68] sm:$0xff]
        %v522 = vld [vmem:[#allocation4 + $0x70] sm:$0xff]
        %v523 = vld [vmem:[#allocation4 + $0x78] sm:$0xff]
        %v524 = vld [vmem:[%s5] sm:$0x3]
        %v526 = vperm.slane %v524, 0
        %v527 = vperm.slane %v524, 1
        %v546 = vunpack.c.l.b16 %v508
        %v547 = vunpack.c.h.b16 %v508
        %v548 = vunpack.c.l.b16 %v509
        %v549 = vunpack.c.h.b16 %v509
        %v550 = vunpack.c.l.b16 %v510
        %v551 = vunpack.c.h.b16 %v510
        %v552 = vunpack.c.l.b16 %v511
        %v553 = vunpack.c.h.b16 %v511
        %v554 = vunpack.c.l.b16 %v512
        %v555 = vunpack.c.h.b16 %v512
        %v556 = vunpack.c.l.b16 %v513
        %v557 = vunpack.c.h.b16 %v513
        %v558 = vunpack.c.l.b16 %v514
        %v559 = vunpack.c.h.b16 %v514
        %v560 = vunpack.c.l.b16 %v515
        %v561 = vunpack.c.h.b16 %v515
        %v562 = vunpack.c.l.b16 %v516
        %v563 = vunpack.c.h.b16 %v516
        %v564 = vunpack.c.l.b16 %v517
        %v565 = vunpack.c.h.b16 %v517
        %v566 = vunpack.c.l.b16 %v518
        %v567 = vunpack.c.h.b16 %v518
        %v568 = vunpack.c.l.b16 %v519
        %v569 = vunpack.c.h.b16 %v519
        %v570 = vunpack.c.l.b16 %v520
        %v571 = vunpack.c.h.b16 %v520
        %v572 = vunpack.c.l.b16 %v521
        %v573 = vunpack.c.h.b16 %v521
        %v574 = vunpack.c.l.b16 %v522
        %v575 = vunpack.c.h.b16 %v522
        %v576 = vunpack.c.l.b16 %v523
        %v577 = vunpack.c.h.b16 %v523
        %v578 = vpack.c.b16 %v548, %v546
        %v579 = vpack.c.b16 %v549, %v547
        %v580 = vpack.c.b16 %v552, %v550
        %v581 = vpack.c.b16 %v553, %v551
        %v582 = vpack.c.b16 %v556, %v554
        %v583 = vpack.c.b16 %v557, %v555
        %v584 = vpack.c.b16 %v560, %v558
        %v585 = vpack.c.b16 %v561, %v559
        %v586 = vpack.c.b16 %v564, %v562
        %v587 = vpack.c.b16 %v565, %v563
        %v588 = vpack.c.b16 %v568, %v566
        %v589 = vpack.c.b16 %v569, %v567
        %v590 = vpack.c.b16 %v572, %v570
        %v591 = vpack.c.b16 %v573, %v571
        %v592 = vpack.c.b16 %v576, %v574
        %v593 = vpack.c.b16 %v577, %v575
        %610 = vmatpush.bf16.msra.mxu0 %v592
        %611 = vmatpush.bf16.msra.mxu0 %v590
        %612 = vmatpush.bf16.msra.mxu0 %v588
        %613 = vmatpush.bf16.msra.mxu0 %v586
        %614 = vmatpush.bf16.msra.mxu0 %v584
        %615 = vmatpush.bf16.msra.mxu0 %v582
        %616 = vmatpush.bf16.msra.mxu0 %v580
        %617 = vmatpush.bf16.msra.mxu0 %v578
        %618 = vmatmul.bf16.gmra.mxu0 %v507
        %v619 = vpop.f32.mrf.mxu0
        %v620 = vadd.f32 %v526, %v619
        %v621 = vpop.f32.mrf.mxu0
        %622 = vdwg.mxu0
        %623 = vmatpush.bf16.msra.mxu0 %v593
        %624 = vmatpush.bf16.msra.mxu0 %v591
        %625 = vmatpush.bf16.msra.mxu0 %v589
        %626 = vmatpush.bf16.msra.mxu0 %v587
        %627 = vmatpush.bf16.msra.mxu0 %v585
        %628 = vmatpush.bf16.msra.mxu0 %v583
        %629 = vmatpush.bf16.msra.mxu0 %v581
        %630 = vmatpush.bf16.msra.mxu0 %v579
        %631 = vmatmul.bf16.gmra.mxu0 %v507
        %v632 = vpop.f32.mrf.mxu0
        %v633 = vadd.f32 %v527, %v632
        %v634 = vpop.f32.mrf.mxu0
        %635 = vdwg.mxu0
        %637 = vrot.lane.b32.xlu0 %v504, 96
        %v638 = vpop.permute.xlu0 %637
        %640 = vrot.lane.b32.xlu0 %v504, 64
        %v641 = vpop.permute.xlu0 %640
        %643 = vrot.lane.b32.xlu0 %v504, 32
        %v644 = vpop.permute.xlu0 %643
        %v646 = vrot.slane %v641, 4
        %vm647 = vcmask 1047556
        %v648 = vsel %vm647, %v646, %v504
        %v649 = vrot.slane %v504, 4
        %v650 = vsel %vm647, %v641, %v649
        %v652 = vunpack.c.l.s4 1983009808
        %v653 = vunpack.c.0.s8 %v652
        %v654 = vperm.slane %v648, %v653
        %v656 = vunpack.c.l.s4 1983009808
        %v657 = vunpack.c.0.s8 %v656
        %v658 = vperm.slane %v650, %v657
        %v659 = vrot.slane %v644, 4
        %v660 = vsel %vm647, %v659, %v638
        %v661 = vrot.slane %v638, 4
        %v662 = vsel %vm647, %v644, %v661
        %v664 = vunpack.c.l.s4 1983009808
        %v665 = vunpack.c.0.s8 %v664
        %v666 = vperm.slane %v660, %v665
        %v668 = vunpack.c.l.s4 1983009808
        %v669 = vunpack.c.0.s8 %v668
        %v670 = vperm.slane %v662, %v669
        %v671 = vrot.slane %v666, 4
        %v672 = vsel %vm647, %v671, %v654
        %v673 = vrot.slane %v654, 4
        %v674 = vsel %vm647, %v666, %v673
        %v676 = vunpack.c.l.s4 1934713408
        %v677 = vunpack.c.0.s8 %v676
        %v678 = vperm.slane %v672, %v677
        %v680 = vunpack.c.l.s4 1934713408
        %v681 = vunpack.c.0.s8 %v680
        %v682 = vperm.slane %v674, %v681
        %v683 = vrot.slane %v670, 4
        %v684 = vsel %vm647, %v683, %v658
        %v685 = vrot.slane %v658, 4
        %v686 = vsel %vm647, %v670, %v685
        %v688 = vunpack.c.l.s4 1934713408
        %v689 = vunpack.c.0.s8 %v688
        %v690 = vperm.slane %v684, %v689
        %v692 = vunpack.c.l.s4 1934713408
        %v693 = vunpack.c.0.s8 %v692
        %v694 = vperm.slane %v686, %v693
        %v695 = vrot.slane %v678, 4
        %v696 = vsel %vm647, 0.0, %v695
        %v697 = vrot.slane %v682, 4
        %v698 = vsel %vm647, 0.0, %v697
        %v699 = vrot.slane %v690, 4
        %v700 = vsel %vm647, 0.0, %v699
        %v701 = vrot.slane %v694, 4
        %v702 = vsel %vm647, 0.0, %v701
        %704 = vrot.lane.b32.xlu0 %v620, 96
        %v705 = vpop.permute.xlu0 %704
        %707 = vrot.lane.b32.xlu0 %v620, 64
        %v708 = vpop.permute.xlu0 %707
        %710 = vrot.lane.b32.xlu0 %v620, 32
        %v711 = vpop.permute.xlu0 %710
        %v713 = vrot.slane %v708, 4
        %v714 = vsel %vm647, %v713, %v620
        %v715 = vrot.slane %v620, 4
        %v716 = vsel %vm647, %v708, %v715
        %v718 = vunpack.c.l.s4 1983009808
        %v719 = vunpack.c.0.s8 %v718
        %v720 = vperm.slane %v714, %v719
        %v722 = vunpack.c.l.s4 1983009808
        %v723 = vunpack.c.0.s8 %v722
        %v724 = vperm.slane %v716, %v723
        %v725 = vrot.slane %v711, 4
        %v726 = vsel %vm647, %v725, %v705
        %v727 = vrot.slane %v705, 4
        %v728 = vsel %vm647, %v711, %v727
        %v730 = vunpack.c.l.s4 1983009808
        %v731 = vunpack.c.0.s8 %v730
        %v732 = vperm.slane %v726, %v731
        %v734 = vunpack.c.l.s4 1983009808
        %v735 = vunpack.c.0.s8 %v734
        %v736 = vperm.slane %v728, %v735
        %v737 = vrot.slane %v732, 4
        %v738 = vsel %vm647, %v737, %v720
        %v739 = vrot.slane %v720, 4
        %v740 = vsel %vm647, %v732, %v739
        %v742 = vunpack.c.l.s4 1934713408
        %v743 = vunpack.c.0.s8 %v742
        %v744 = vperm.slane %v738, %v743
        %v746 = vunpack.c.l.s4 1934713408
        %v747 = vunpack.c.0.s8 %v746
        %v748 = vperm.slane %v740, %v747
        %v749 = vrot.slane %v736, 4
        %v750 = vsel %vm647, %v749, %v724
        %v751 = vrot.slane %v724, 4
        %v752 = vsel %vm647, %v736, %v751
        %v754 = vunpack.c.l.s4 1934713408
        %v755 = vunpack.c.0.s8 %v754
        %v756 = vperm.slane %v750, %v755
        %v758 = vunpack.c.l.s4 1934713408
        %v759 = vunpack.c.0.s8 %v758
        %v760 = vperm.slane %v752, %v759
        %v761 = vrot.slane %v744, 4
        %v762 = vsel %vm647, 0.0, %v761
        %v763 = vrot.slane %v748, 4
        %v764 = vsel %vm647, 0.0, %v763
        %v765 = vrot.slane %v756, 4
        %v766 = vsel %vm647, 0.0, %v765
        %v767 = vrot.slane %v760, 4
        %v768 = vsel %vm647, 0.0, %v767
        %770 = vrot.lane.b32.xlu0 %v633, 96
        %v771 = vpop.permute.xlu0 %770
        %773 = vrot.lane.b32.xlu0 %v633, 64
        %v774 = vpop.permute.xlu0 %773
        %776 = vrot.lane.b32.xlu0 %v633, 32
        %v777 = vpop.permute.xlu0 %776
        %v779 = vrot.slane %v774, 4
        %v780 = vsel %vm647, %v779, %v633
        %v781 = vrot.slane %v633, 4
        %v782 = vsel %vm647, %v774, %v781
        %v784 = vunpack.c.l.s4 1983009808
        %v785 = vunpack.c.0.s8 %v784
        %v786 = vperm.slane %v780, %v785
        %v788 = vunpack.c.l.s4 1983009808
        %v789 = vunpack.c.0.s8 %v788
        %v790 = vperm.slane %v782, %v789
        %v791 = vrot.slane %v777, 4
        %v792 = vsel %vm647, %v791, %v771
        %v793 = vrot.slane %v771, 4
        %v794 = vsel %vm647, %v777, %v793
        %v796 = vunpack.c.l.s4 1983009808
        %v797 = vunpack.c.0.s8 %v796
        %v798 = vperm.slane %v792, %v797
        %v800 = vunpack.c.l.s4 1983009808
        %v801 = vunpack.c.0.s8 %v800
        %v802 = vperm.slane %v794, %v801
        %v803 = vrot.slane %v798, 4
        %v804 = vsel %vm647, %v803, %v786
        %v805 = vrot.slane %v786, 4
        %v806 = vsel %vm647, %v798, %v805
        %v808 = vunpack.c.l.s4 1934713408
        %v809 = vunpack.c.0.s8 %v808
        %v810 = vperm.slane %v804, %v809
        %v812 = vunpack.c.l.s4 1934713408
        %v813 = vunpack.c.0.s8 %v812
        %v814 = vperm.slane %v806, %v813
        %v815 = vrot.slane %v802, 4
        %v816 = vsel %vm647, %v815, %v790
        %v817 = vrot.slane %v790, 4
        %v818 = vsel %vm647, %v802, %v817
        %v820 = vunpack.c.l.s4 1934713408
        %v821 = vunpack.c.0.s8 %v820
        %v822 = vperm.slane %v816, %v821
        %v824 = vunpack.c.l.s4 1934713408
        %v825 = vunpack.c.0.s8 %v824
        %v826 = vperm.slane %v818, %v825
        %v827 = vrot.slane %v810, 4
        %v828 = vsel %vm647, 0.0, %v827
        %v829 = vrot.slane %v814, 4
        %v830 = vsel %vm647, 0.0, %v829
        %v831 = vrot.slane %v822, 4
        %v832 = vsel %vm647, 0.0, %v831
        %v833 = vrot.slane %v826, 4
        %v834 = vsel %vm647, 0.0, %v833
        %v835 = vpack.c.bf16 %v678, %v678
        %v836 = vpack.c.bf16 %v696, %v696
        %v837 = vpack.c.bf16 %v682, %v682
        %v838 = vpack.c.bf16 %v698, %v698
        %v839 = vpack.c.bf16 %v690, %v690
        %v840 = vpack.c.bf16 %v700, %v700
        %v841 = vpack.c.bf16 %v694, %v694
        %v842 = vpack.c.bf16 %v702, %v702
        %v843 = vpack.c.bf16 %v744, %v744
        %v844 = vpack.c.bf16 %v762, %v762
        %v845 = vpack.c.bf16 %v748, %v748
        %v846 = vpack.c.bf16 %v764, %v764
        %v847 = vpack.c.bf16 %v756, %v756
        %v848 = vpack.c.bf16 %v766, %v766
        %v849 = vpack.c.bf16 %v760, %v760
        %v850 = vpack.c.bf16 %v768, %v768
        %v851 = vrot.slane %v839, 4
        %vm852 = vcmask 1047556
        %v853 = vsel %vm852, %v851, %v835
        %v855 = vunpack.c.l.s4 1983009808
        %v856 = vunpack.c.0.s8 %v855
        %v857 = vperm.slane %v853, %v856
        %v858 = vrot.slane %v841, 4
        %v859 = vsel %vm852, %v858, %v837
        %v861 = vunpack.c.l.s4 1983009808
        %v862 = vunpack.c.0.s8 %v861
        %v863 = vperm.slane %v859, %v862
        %v864 = vrot.slane %v863, 4
        %v865 = vsel %vm852, %v864, %v857
        %v867 = vunpack.c.l.s4 1934713408
        %v868 = vunpack.c.0.s8 %v867
        %v869 = vperm.slane %v865, %v868
        %v870 = vrot.slane %v869, 4
        %v871 = vsel %vm852, 0, %v870
        %v872 = vrot.slane %v840, 4
        %v873 = vsel %vm852, %v872, %v836
        %v875 = vunpack.c.l.s4 1983009808
        %v876 = vunpack.c.0.s8 %v875
        %v877 = vperm.slane %v873, %v876
        %v878 = vrot.slane %v842, 4
        %v879 = vsel %vm852, %v878, %v838
        %v881 = vunpack.c.l.s4 1983009808
        %v882 = vunpack.c.0.s8 %v881
        %v883 = vperm.slane %v879, %v882
        %v884 = vrot.slane %v883, 4
        %v885 = vsel %vm852, %v884, %v877
        %v887 = vunpack.c.l.s4 1934713408
        %v888 = vunpack.c.0.s8 %v887
        %v889 = vperm.slane %v885, %v888
        %v890 = vrot.slane %v889, 4
        %v891 = vsel %vm852, 0, %v890
        %v894 = vpack.i.b16 %v889, %v869
        %v895 = vshrl.u32 %v869, 16
        %v896 = vshrl.u32 %v889, 16
        %v897 = vpack.i.b16 %v896, %v895
        %v900 = vpack.i.b16 %v891, %v871
        %v901 = vshrl.u32 %v871, 16
        %v902 = vshrl.u32 %v891, 16
        %v903 = vpack.i.b16 %v902, %v901
        %904 = vxpose.xlu0.c.b16.start [1/8] %v843, 128
        %905 = vxpose.xlu0.c.b16.cont [2/8] 0, 128
        %906 = vxpose.xlu0.c.b16.cont [3/8] 0, 128
        %907 = vxpose.xlu0.c.b16.cont [4/8] 0, 128
        %908 = vxpose.xlu0.c.b16.cont [5/8] 0, 128
        %909 = vxpose.xlu0.c.b16.cont [6/8] 0, 128
        %910 = vxpose.xlu0.c.b16.cont [7/8] 0, 128
        %911 = vxpose.xlu0.c.b16.end [8/8] 0, 128
        %v912 = vpop.trf.xlu0
        %v913 = vpop.trf.xlu0
        %v914 = vpop.trf.xlu0
        %v915 = vpop.trf.xlu0
        %v916 = vpop.trf.xlu0
        %v917 = vpop.trf.xlu0
        %v918 = vpop.trf.xlu0
        %v919 = vpop.trf.xlu0
        %920 = vxpose.xlu0.c.b16.start [1/8] %v844, 128
        %921 = vxpose.xlu0.c.b16.cont [2/8] 0, 128
        %922 = vxpose.xlu0.c.b16.cont [3/8] 0, 128
        %923 = vxpose.xlu0.c.b16.cont [4/8] 0, 128
        %924 = vxpose.xlu0.c.b16.cont [5/8] 0, 128
        %925 = vxpose.xlu0.c.b16.cont [6/8] 0, 128
        %926 = vxpose.xlu0.c.b16.cont [7/8] 0, 128
        %927 = vxpose.xlu0.c.b16.end [8/8] 0, 128
        %v928 = vpop.trf.xlu0
        %v929 = vpop.trf.xlu0
        %v930 = vpop.trf.xlu0
        %v931 = vpop.trf.xlu0
        %v932 = vpop.trf.xlu0
        %v933 = vpop.trf.xlu0
        %v934 = vpop.trf.xlu0
        %v935 = vpop.trf.xlu0
        %936 = vxpose.xlu0.c.b16.start [1/8] %v845, 128
        %937 = vxpose.xlu0.c.b16.cont [2/8] 0, 128
        %938 = vxpose.xlu0.c.b16.cont [3/8] 0, 128
        %939 = vxpose.xlu0.c.b16.cont [4/8] 0, 128
        %940 = vxpose.xlu0.c.b16.cont [5/8] 0, 128
        %941 = vxpose.xlu0.c.b16.cont [6/8] 0, 128
        %942 = vxpose.xlu0.c.b16.cont [7/8] 0, 128
        %943 = vxpose.xlu0.c.b16.end [8/8] 0, 128
        %v944 = vpop.trf.xlu0
        %v945 = vpop.trf.xlu0
        %v946 = vpop.trf.xlu0
        %v947 = vpop.trf.xlu0
        %v948 = vpop.trf.xlu0
        %v949 = vpop.trf.xlu0
        %v950 = vpop.trf.xlu0
        %v951 = vpop.trf.xlu0
        %952 = vxpose.xlu0.c.b16.start [1/8] %v846, 128
        %953 = vxpose.xlu0.c.b16.cont [2/8] 0, 128
        %954 = vxpose.xlu0.c.b16.cont [3/8] 0, 128
        %955 = vxpose.xlu0.c.b16.cont [4/8] 0, 128
        %956 = vxpose.xlu0.c.b16.cont [5/8] 0, 128
        %957 = vxpose.xlu0.c.b16.cont [6/8] 0, 128
        %958 = vxpose.xlu0.c.b16.cont [7/8] 0, 128
        %959 = vxpose.xlu0.c.b16.end [8/8] 0, 128
        %v960 = vpop.trf.xlu0
        %v961 = vpop.trf.xlu0
        %v962 = vpop.trf.xlu0
        %v963 = vpop.trf.xlu0
        %v964 = vpop.trf.xlu0
        %v965 = vpop.trf.xlu0
        %v966 = vpop.trf.xlu0
        %v967 = vpop.trf.xlu0
        %968 = vxpose.xlu0.c.b16.start [1/8] %v847, 128
        %969 = vxpose.xlu0.c.b16.cont [2/8] 0, 128
        %970 = vxpose.xlu0.c.b16.cont [3/8] 0, 128
        %971 = vxpose.xlu0.c.b16.cont [4/8] 0, 128
        %972 = vxpose.xlu0.c.b16.cont [5/8] 0, 128
        %973 = vxpose.xlu0.c.b16.cont [6/8] 0, 128
        %974 = vxpose.xlu0.c.b16.cont [7/8] 0, 128
        %975 = vxpose.xlu0.c.b16.end [8/8] 0, 128
        %v976 = vpop.trf.xlu0
        %v977 = vpop.trf.xlu0
        %v978 = vpop.trf.xlu0
        %v979 = vpop.trf.xlu0
        %v980 = vpop.trf.xlu0
        %v981 = vpop.trf.xlu0
        %v982 = vpop.trf.xlu0
        %v983 = vpop.trf.xlu0
        %984 = vxpose.xlu0.c.b16.start [1/8] %v848, 128
        %985 = vxpose.xlu0.c.b16.cont [2/8] 0, 128
        %986 = vxpose.xlu0.c.b16.cont [3/8] 0, 128
        %987 = vxpose.xlu0.c.b16.cont [4/8] 0, 128
        %988 = vxpose.xlu0.c.b16.cont [5/8] 0, 128
        %989 = vxpose.xlu0.c.b16.cont [6/8] 0, 128
        %990 = vxpose.xlu0.c.b16.cont [7/8] 0, 128
        %991 = vxpose.xlu0.c.b16.end [8/8] 0, 128
        %v992 = vpop.trf.xlu0
        %v993 = vpop.trf.xlu0
        %v994 = vpop.trf.xlu0
        %v995 = vpop.trf.xlu0
        %v996 = vpop.trf.xlu0
        %v997 = vpop.trf.xlu0
        %v998 = vpop.trf.xlu0
        %v999 = vpop.trf.xlu0
        %1000 = vxpose.xlu0.c.b16.start [1/8] %v849, 128
        %1001 = vxpose.xlu0.c.b16.cont [2/8] 0, 128
        %1002 = vxpose.xlu0.c.b16.cont [3/8] 0, 128
        %1003 = vxpose.xlu0.c.b16.cont [4/8] 0, 128
        %1004 = vxpose.xlu0.c.b16.cont [5/8] 0, 128
        %1005 = vxpose.xlu0.c.b16.cont [6/8] 0, 128
        %1006 = vxpose.xlu0.c.b16.cont [7/8] 0, 128
        %1007 = vxpose.xlu0.c.b16.end [8/8] 0, 128
        %v1008 = vpop.trf.xlu0
        %v1009 = vpop.trf.xlu0
        %v1010 = vpop.trf.xlu0
        %v1011 = vpop.trf.xlu0
        %v1012 = vpop.trf.xlu0
        %v1013 = vpop.trf.xlu0
        %v1014 = vpop.trf.xlu0
        %v1015 = vpop.trf.xlu0
        %1016 = vxpose.xlu0.c.b16.start [1/8] %v850, 128
        %1017 = vxpose.xlu0.c.b16.cont [2/8] 0, 128
        %1018 = vxpose.xlu0.c.b16.cont [3/8] 0, 128
        %1019 = vxpose.xlu0.c.b16.cont [4/8] 0, 128
        %1020 = vxpose.xlu0.c.b16.cont [5/8] 0, 128
        %1021 = vxpose.xlu0.c.b16.cont [6/8] 0, 128
        %1022 = vxpose.xlu0.c.b16.cont [7/8] 0, 128
        %1023 = vxpose.xlu0.c.b16.end [8/8] 0, 128
        %v1024 = vpop.trf.xlu0
        %v1025 = vpop.trf.xlu0
        %v1026 = vpop.trf.xlu0
        %v1027 = vpop.trf.xlu0
        %v1028 = vpop.trf.xlu0
        %v1029 = vpop.trf.xlu0
        %v1030 = vpop.trf.xlu0
        %v1031 = vpop.trf.xlu0
        %v1034 = vpack.i.b16 %v928, %v912
        %v1036 = vshrl.u32 %v912, 16
        %v1037 = vshrl.u32 %v928, 16
        %v1038 = vpack.i.b16 %v1037, %v1036
        %v1042 = vpack.i.b16 %v960, %v944
        %v1044 = vshrl.u32 %v944, 16
        %v1045 = vshrl.u32 %v960, 16
        %v1046 = vpack.i.b16 %v1045, %v1044
        %v1050 = vpack.i.b16 %v992, %v976
        %v1052 = vshrl.u32 %v976, 16
        %v1053 = vshrl.u32 %v992, 16
        %v1054 = vpack.i.b16 %v1053, %v1052
        %v1058 = vpack.i.b16 %v1024, %v1008
        %v1060 = vshrl.u32 %v1008, 16
        %v1061 = vshrl.u32 %v1024, 16
        %v1062 = vpack.i.b16 %v1061, %v1060
        %v1066 = vpack.i.b16 %v929, %v913
        %v1068 = vshrl.u32 %v913, 16
        %v1069 = vshrl.u32 %v929, 16
        %v1070 = vpack.i.b16 %v1069, %v1068
        %v1074 = vpack.i.b16 %v961, %v945
        %v1076 = vshrl.u32 %v945, 16
        %v1077 = vshrl.u32 %v961, 16
        %v1078 = vpack.i.b16 %v1077, %v1076
        %v1082 = vpack.i.b16 %v993, %v977
        %v1084 = vshrl.u32 %v977, 16
        %v1085 = vshrl.u32 %v993, 16
        %v1086 = vpack.i.b16 %v1085, %v1084
        %v1090 = vpack.i.b16 %v1025, %v1009
        %v1092 = vshrl.u32 %v1009, 16
        %v1093 = vshrl.u32 %v1025, 16
        %v1094 = vpack.i.b16 %v1093, %v1092
        %v1096 = vrot.slane %v1050, 4
        %v1097 = vsel %vm852, %v1096, %v1034
        %v1098 = vrot.slane %v1034, 4
        %v1099 = vsel %vm852, %v1050, %v1098
        %v1101 = vunpack.c.l.s4 1983009808
        %v1102 = vunpack.c.0.s8 %v1101
        %v1103 = vperm.slane %v1097, %v1102
        %v1105 = vunpack.c.l.s4 1983009808
        %v1106 = vunpack.c.0.s8 %v1105
        %v1107 = vperm.slane %v1099, %v1106
        %v1108 = vrot.slane %v1058, 4
        %v1109 = vsel %vm852, %v1108, %v1042
        %v1110 = vrot.slane %v1042, 4
        %v1111 = vsel %vm852, %v1058, %v1110
        %v1113 = vunpack.c.l.s4 1983009808
        %v1114 = vunpack.c.0.s8 %v1113
        %v1115 = vperm.slane %v1109, %v1114
        %v1117 = vunpack.c.l.s4 1983009808
        %v1118 = vunpack.c.0.s8 %v1117
        %v1119 = vperm.slane %v1111, %v1118
        %v1120 = vrot.slane %v1115, 4
        %v1121 = vsel %vm852, %v1120, %v1103
        %v1122 = vrot.slane %v1103, 4
        %v1123 = vsel %vm852, %v1115, %v1122
        %v1125 = vunpack.c.l.s4 1934713408
        %v1126 = vunpack.c.0.s8 %v1125
        %v1127 = vperm.slane %v1121, %v1126
        %v1129 = vunpack.c.l.s4 1934713408
        %v1130 = vunpack.c.0.s8 %v1129
        %v1131 = vperm.slane %v1123, %v1130
        %v1132 = vrot.slane %v1119, 4
        %v1133 = vsel %vm852, %v1132, %v1107
        %v1134 = vrot.slane %v1107, 4
        %v1135 = vsel %vm852, %v1119, %v1134
        %v1137 = vunpack.c.l.s4 1934713408
        %v1138 = vunpack.c.0.s8 %v1137
        %v1139 = vperm.slane %v1133, %v1138
        %v1141 = vunpack.c.l.s4 1934713408
        %v1142 = vunpack.c.0.s8 %v1141
        %v1143 = vperm.slane %v1135, %v1142
        %v1144 = vrot.slane %v1127, 4
        %v1145 = vsel %vm852, 0, %v1144
        %v1146 = vrot.slane %v1131, 4
        %v1147 = vsel %vm852, 0, %v1146
        %v1148 = vrot.slane %v1139, 4
        %v1149 = vsel %vm852, 0, %v1148
        %v1150 = vrot.slane %v1143, 4
        %v1151 = vsel %vm852, 0, %v1150
        %v1152 = vrot.slane %v1054, 4
        %v1153 = vsel %vm852, %v1152, %v1038
        %v1154 = vrot.slane %v1038, 4
        %v1155 = vsel %vm852, %v1054, %v1154
        %v1157 = vunpack.c.l.s4 1983009808
        %v1158 = vunpack.c.0.s8 %v1157
        %v1159 = vperm.slane %v1153, %v1158
        %v1161 = vunpack.c.l.s4 1983009808
        %v1162 = vunpack.c.0.s8 %v1161
        %v1163 = vperm.slane %v1155, %v1162
        %v1164 = vrot.slane %v1062, 4
        %v1165 = vsel %vm852, %v1164, %v1046
        %v1166 = vrot.slane %v1046, 4
        %v1167 = vsel %vm852, %v1062, %v1166
        %v1169 = vunpack.c.l.s4 1983009808
        %v1170 = vunpack.c.0.s8 %v1169
        %v1171 = vperm.slane %v1165, %v1170
        %v1173 = vunpack.c.l.s4 1983009808
        %v1174 = vunpack.c.0.s8 %v1173
        %v1175 = vperm.slane %v1167, %v1174
        %v1176 = vrot.slane %v1171, 4
        %v1177 = vsel %vm852, %v1176, %v1159
        %v1178 = vrot.slane %v1159, 4
        %v1179 = vsel %vm852, %v1171, %v1178
        %v1181 = vunpack.c.l.s4 1934713408
        %v1182 = vunpack.c.0.s8 %v1181
        %v1183 = vperm.slane %v1177, %v1182
        %v1185 = vunpack.c.l.s4 1934713408
        %v1186 = vunpack.c.0.s8 %v1185
        %v1187 = vperm.slane %v1179, %v1186
        %v1188 = vrot.slane %v1175, 4
        %v1189 = vsel %vm852, %v1188, %v1163
        %v1190 = vrot.slane %v1163, 4
        %v1191 = vsel %vm852, %v1175, %v1190
        %v1193 = vunpack.c.l.s4 1934713408
        %v1194 = vunpack.c.0.s8 %v1193
        %v1195 = vperm.slane %v1189, %v1194
        %v1197 = vunpack.c.l.s4 1934713408
        %v1198 = vunpack.c.0.s8 %v1197
        %v1199 = vperm.slane %v1191, %v1198
        %v1200 = vrot.slane %v1183, 4
        %v1201 = vsel %vm852, 0, %v1200
        %v1202 = vrot.slane %v1187, 4
        %v1203 = vsel %vm852, 0, %v1202
        %v1204 = vrot.slane %v1195, 4
        %v1205 = vsel %vm852, 0, %v1204
        %v1206 = vrot.slane %v1199, 4
        %v1207 = vsel %vm852, 0, %v1206
        %v1208 = vrot.slane %v1082, 4
        %v1209 = vsel %vm852, %v1208, %v1066
        %v1210 = vrot.slane %v1066, 4
        %v1211 = vsel %vm852, %v1082, %v1210
        %v1213 = vunpack.c.l.s4 1983009808
        %v1214 = vunpack.c.0.s8 %v1213
        %v1215 = vperm.slane %v1209, %v1214
        %v1217 = vunpack.c.l.s4 1983009808
        %v1218 = vunpack.c.0.s8 %v1217
        %v1219 = vperm.slane %v1211, %v1218
        %v1220 = vrot.slane %v1090, 4
        %v1221 = vsel %vm852, %v1220, %v1074
        %v1222 = vrot.slane %v1074, 4
        %v1223 = vsel %vm852, %v1090, %v1222
        %v1225 = vunpack.c.l.s4 1983009808
        %v1226 = vunpack.c.0.s8 %v1225
        %v1227 = vperm.slane %v1221, %v1226
        %v1229 = vunpack.c.l.s4 1983009808
        %v1230 = vunpack.c.0.s8 %v1229
        %v1231 = vperm.slane %v1223, %v1230
        %v1232 = vrot.slane %v1227, 4
        %v1233 = vsel %vm852, %v1232, %v1215
        %v1234 = vrot.slane %v1215, 4
        %v1235 = vsel %vm852, %v1227, %v1234
        %v1237 = vunpack.c.l.s4 1934713408
        %v1238 = vunpack.c.0.s8 %v1237
        %v1239 = vperm.slane %v1233, %v1238
        %v1241 = vunpack.c.l.s4 1934713408
        %v1242 = vunpack.c.0.s8 %v1241
        %v1243 = vperm.slane %v1235, %v1242
        %v1244 = vrot.slane %v1231, 4
        %v1245 = vsel %vm852, %v1244, %v1219
        %v1246 = vrot.slane %v1219, 4
        %v1247 = vsel %vm852, %v1231, %v1246
        %v1249 = vunpack.c.l.s4 1934713408
        %v1250 = vunpack.c.0.s8 %v1249
        %v1251 = vperm.slane %v1245, %v1250
        %v1253 = vunpack.c.l.s4 1934713408
        %v1254 = vunpack.c.0.s8 %v1253
        %v1255 = vperm.slane %v1247, %v1254
        %v1256 = vrot.slane %v1239, 4
        %v1257 = vsel %vm852, 0, %v1256
        %v1258 = vrot.slane %v1243, 4
        %v1259 = vsel %vm852, 0, %v1258
        %v1260 = vrot.slane %v1251, 4
        %v1261 = vsel %vm852, 0, %v1260
        %v1262 = vrot.slane %v1255, 4
        %v1263 = vsel %vm852, 0, %v1262
        %v1264 = vrot.slane %v1086, 4
        %v1265 = vsel %vm852, %v1264, %v1070
        %v1266 = vrot.slane %v1070, 4
        %v1267 = vsel %vm852, %v1086, %v1266
        %v1269 = vunpack.c.l.s4 1983009808
        %v1270 = vunpack.c.0.s8 %v1269
        %v1271 = vperm.slane %v1265, %v1270
        %v1273 = vunpack.c.l.s4 1983009808
        %v1274 = vunpack.c.0.s8 %v1273
        %v1275 = vperm.slane %v1267, %v1274
        %v1276 = vrot.slane %v1094, 4
        %v1277 = vsel %vm852, %v1276, %v1078
        %v1278 = vrot.slane %v1078, 4
        %v1279 = vsel %vm852, %v1094, %v1278
        %v1281 = vunpack.c.l.s4 1983009808
        %v1282 = vunpack.c.0.s8 %v1281
        %v1283 = vperm.slane %v1277, %v1282
        %v1285 = vunpack.c.l.s4 1983009808
        %v1286 = vunpack.c.0.s8 %v1285
        %v1287 = vperm.slane %v1279, %v1286
        %v1288 = vrot.slane %v1283, 4
        %v1289 = vsel %vm852, %v1288, %v1271
        %v1290 = vrot.slane %v1271, 4
        %v1291 = vsel %vm852, %v1283, %v1290
        %v1293 = vunpack.c.l.s4 1934713408
        %v1294 = vunpack.c.0.s8 %v1293
        %v1295 = vperm.slane %v1289, %v1294
        %v1297 = vunpack.c.l.s4 1934713408
        %v1298 = vunpack.c.0.s8 %v1297
        %v1299 = vperm.slane %v1291, %v1298
        %v1300 = vrot.slane %v1287, 4
        %v1301 = vsel %vm852, %v1300, %v1275
        %v1302 = vrot.slane %v1275, 4
        %v1303 = vsel %vm852, %v1287, %v1302
        %v1305 = vunpack.c.l.s4 1934713408
        %v1306 = vunpack.c.0.s8 %v1305
        %v1307 = vperm.slane %v1301, %v1306
        %v1309 = vunpack.c.l.s4 1934713408
        %v1310 = vunpack.c.0.s8 %v1309
        %v1311 = vperm.slane %v1303, %v1310
        %v1312 = vrot.slane %v1295, 4
        %v1313 = vsel %vm852, 0, %v1312
        %v1314 = vrot.slane %v1299, 4
        %v1315 = vsel %vm852, 0, %v1314
        %v1316 = vrot.slane %v1307, 4
        %v1317 = vsel %vm852, 0, %v1316
        %v1318 = vrot.slane %v1311, 4
        %v1319 = vsel %vm852, 0, %v1318
        %1320 = vxpose.xlu0.c.b16.start [1/8] %v1127, 128
        %1321 = vxpose.xlu0.c.b16.cont [2/8] 0, 128
        %1322 = vxpose.xlu0.c.b16.cont [3/8] 0, 128
        %1323 = vxpose.xlu0.c.b16.cont [4/8] 0, 128
        %1324 = vxpose.xlu0.c.b16.cont [5/8] 0, 128
        %1325 = vxpose.xlu0.c.b16.cont [6/8] 0, 128
        %1326 = vxpose.xlu0.c.b16.cont [7/8] 0, 128
        %1327 = vxpose.xlu0.c.b16.end [8/8] 0, 128
        %v1328 = vpop.trf.xlu0
        %v1329 = vpop.trf.xlu0
        %v1330 = vpop.trf.xlu0
        %v1331 = vpop.trf.xlu0
        %v1332 = vpop.trf.xlu0
        %v1333 = vpop.trf.xlu0
        %v1334 = vpop.trf.xlu0
        %v1335 = vpop.trf.xlu0
        %1336 = vxpose.xlu0.c.b16.start [1/8] %v1183, 128
        %1337 = vxpose.xlu0.c.b16.cont [2/8] 0, 128
        %1338 = vxpose.xlu0.c.b16.cont [3/8] 0, 128
        %1339 = vxpose.xlu0.c.b16.cont [4/8] 0, 128
        %1340 = vxpose.xlu0.c.b16.cont [5/8] 0, 128
        %1341 = vxpose.xlu0.c.b16.cont [6/8] 0, 128
        %1342 = vxpose.xlu0.c.b16.cont [7/8] 0, 128
        %1343 = vxpose.xlu0.c.b16.end [8/8] 0, 128
        %v1344 = vpop.trf.xlu0
        %v1345 = vpop.trf.xlu0
        %v1346 = vpop.trf.xlu0
        %v1347 = vpop.trf.xlu0
        %v1348 = vpop.trf.xlu0
        %v1349 = vpop.trf.xlu0
        %v1350 = vpop.trf.xlu0
        %v1351 = vpop.trf.xlu0
        %1352 = vxpose.xlu0.c.b16.start [1/8] %v1145, 128
        %1353 = vxpose.xlu0.c.b16.cont [2/8] 0, 128
        %1354 = vxpose.xlu0.c.b16.cont [3/8] 0, 128
        %1355 = vxpose.xlu0.c.b16.cont [4/8] 0, 128
        %1356 = vxpose.xlu0.c.b16.cont [5/8] 0, 128
        %1357 = vxpose.xlu0.c.b16.cont [6/8] 0, 128
        %1358 = vxpose.xlu0.c.b16.cont [7/8] 0, 128
        %1359 = vxpose.xlu0.c.b16.end [8/8] 0, 128
        %v1360 = vpop.trf.xlu0
        %v1361 = vpop.trf.xlu0
        %v1362 = vpop.trf.xlu0
        %v1363 = vpop.trf.xlu0
        %v1364 = vpop.trf.xlu0
        %v1365 = vpop.trf.xlu0
        %v1366 = vpop.trf.xlu0
        %v1367 = vpop.trf.xlu0
        %1368 = vxpose.xlu0.c.b16.start [1/8] %v1201, 128
        %1369 = vxpose.xlu0.c.b16.cont [2/8] 0, 128
        %1370 = vxpose.xlu0.c.b16.cont [3/8] 0, 128
        %1371 = vxpose.xlu0.c.b16.cont [4/8] 0, 128
        %1372 = vxpose.xlu0.c.b16.cont [5/8] 0, 128
        %1373 = vxpose.xlu0.c.b16.cont [6/8] 0, 128
        %1374 = vxpose.xlu0.c.b16.cont [7/8] 0, 128
        %1375 = vxpose.xlu0.c.b16.end [8/8] 0, 128
        %v1376 = vpop.trf.xlu0
        %v1377 = vpop.trf.xlu0
        %v1378 = vpop.trf.xlu0
        %v1379 = vpop.trf.xlu0
        %v1380 = vpop.trf.xlu0
        %v1381 = vpop.trf.xlu0
        %v1382 = vpop.trf.xlu0
        %v1383 = vpop.trf.xlu0
        %1384 = vxpose.xlu0.c.b16.start [1/8] %v1131, 128
        %1385 = vxpose.xlu0.c.b16.cont [2/8] 0, 128
        %1386 = vxpose.xlu0.c.b16.cont [3/8] 0, 128
        %1387 = vxpose.xlu0.c.b16.cont [4/8] 0, 128
        %1388 = vxpose.xlu0.c.b16.cont [5/8] 0, 128
        %1389 = vxpose.xlu0.c.b16.cont [6/8] 0, 128
        %1390 = vxpose.xlu0.c.b16.cont [7/8] 0, 128
        %1391 = vxpose.xlu0.c.b16.end [8/8] 0, 128
        %v1392 = vpop.trf.xlu0
        %v1393 = vpop.trf.xlu0
        %v1394 = vpop.trf.xlu0
        %v1395 = vpop.trf.xlu0
        %v1396 = vpop.trf.xlu0
        %v1397 = vpop.trf.xlu0
        %v1398 = vpop.trf.xlu0
        %v1399 = vpop.trf.xlu0
        %1400 = vxpose.xlu0.c.b16.start [1/8] %v1187, 128
        %1401 = vxpose.xlu0.c.b16.cont [2/8] 0, 128
        %1402 = vxpose.xlu0.c.b16.cont [3/8] 0, 128
        %1403 = vxpose.xlu0.c.b16.cont [4/8] 0, 128
        %1404 = vxpose.xlu0.c.b16.cont [5/8] 0, 128
        %1405 = vxpose.xlu0.c.b16.cont [6/8] 0, 128
        %1406 = vxpose.xlu0.c.b16.cont [7/8] 0, 128
        %1407 = vxpose.xlu0.c.b16.end [8/8] 0, 128
        %v1408 = vpop.trf.xlu0
        %v1409 = vpop.trf.xlu0
        %v1410 = vpop.trf.xlu0
        %v1411 = vpop.trf.xlu0
        %v1412 = vpop.trf.xlu0
        %v1413 = vpop.trf.xlu0
        %v1414 = vpop.trf.xlu0
        %v1415 = vpop.trf.xlu0
        %1416 = vxpose.xlu0.c.b16.start [1/8] %v1147, 128
        %1417 = vxpose.xlu0.c.b16.cont [2/8] 0, 128
        %1418 = vxpose.xlu0.c.b16.cont [3/8] 0, 128
        %1419 = vxpose.xlu0.c.b16.cont [4/8] 0, 128
        %1420 = vxpose.xlu0.c.b16.cont [5/8] 0, 128
        %1421 = vxpose.xlu0.c.b16.cont [6/8] 0, 128
        %1422 = vxpose.xlu0.c.b16.cont [7/8] 0, 128
        %1423 = vxpose.xlu0.c.b16.end [8/8] 0, 128
        %v1424 = vpop.trf.xlu0
        %v1425 = vpop.trf.xlu0
        %v1426 = vpop.trf.xlu0
        %v1427 = vpop.trf.xlu0
        %v1428 = vpop.trf.xlu0
        %v1429 = vpop.trf.xlu0
        %v1430 = vpop.trf.xlu0
        %v1431 = vpop.trf.xlu0
        %1432 = vxpose.xlu0.c.b16.start [1/8] %v1203, 128
        %1433 = vxpose.xlu0.c.b16.cont [2/8] 0, 128
        %1434 = vxpose.xlu0.c.b16.cont [3/8] 0, 128
        %1435 = vxpose.xlu0.c.b16.cont [4/8] 0, 128
        %1436 = vxpose.xlu0.c.b16.cont [5/8] 0, 128
        %1437 = vxpose.xlu0.c.b16.cont [6/8] 0, 128
        %1438 = vxpose.xlu0.c.b16.cont [7/8] 0, 128
        %1439 = vxpose.xlu0.c.b16.end [8/8] 0, 128
        %v1440 = vpop.trf.xlu0
        %v1441 = vpop.trf.xlu0
        %v1442 = vpop.trf.xlu0
        %v1443 = vpop.trf.xlu0
        %v1444 = vpop.trf.xlu0
        %v1445 = vpop.trf.xlu0
        %v1446 = vpop.trf.xlu0
        %v1447 = vpop.trf.xlu0
        %1448 = vxpose.xlu0.c.b16.start [1/8] %v1139, 128
        %1449 = vxpose.xlu0.c.b16.cont [2/8] 0, 128
        %1450 = vxpose.xlu0.c.b16.cont [3/8] 0, 128
        %1451 = vxpose.xlu0.c.b16.cont [4/8] 0, 128
        %1452 = vxpose.xlu0.c.b16.cont [5/8] 0, 128
        %1453 = vxpose.xlu0.c.b16.cont [6/8] 0, 128
        %1454 = vxpose.xlu0.c.b16.cont [7/8] 0, 128
        %1455 = vxpose.xlu0.c.b16.end [8/8] 0, 128
        %v1456 = vpop.trf.xlu0
        %v1457 = vpop.trf.xlu0
        %v1458 = vpop.trf.xlu0
        %v1459 = vpop.trf.xlu0
        %v1460 = vpop.trf.xlu0
        %v1461 = vpop.trf.xlu0
        %v1462 = vpop.trf.xlu0
        %v1463 = vpop.trf.xlu0
        %1464 = vxpose.xlu0.c.b16.start [1/8] %v1195, 128
        %1465 = vxpose.xlu0.c.b16.cont [2/8] 0, 128
        %1466 = vxpose.xlu0.c.b16.cont [3/8] 0, 128
        %1467 = vxpose.xlu0.c.b16.cont [4/8] 0, 128
        %1468 = vxpose.xlu0.c.b16.cont [5/8] 0, 128
        %1469 = vxpose.xlu0.c.b16.cont [6/8] 0, 128
        %1470 = vxpose.xlu0.c.b16.cont [7/8] 0, 128
        %1471 = vxpose.xlu0.c.b16.end [8/8] 0, 128
        %v1472 = vpop.trf.xlu0
        %v1473 = vpop.trf.xlu0
        %v1474 = vpop.trf.xlu0
        %v1475 = vpop.trf.xlu0
        %v1476 = vpop.trf.xlu0
        %v1477 = vpop.trf.xlu0
        %v1478 = vpop.trf.xlu0
        %v1479 = vpop.trf.xlu0
        %1480 = vxpose.xlu0.c.b16.start [1/8] %v1149, 128
        %1481 = vxpose.xlu0.c.b16.cont [2/8] 0, 128
        %1482 = vxpose.xlu0.c.b16.cont [3/8] 0, 128
        %1483 = vxpose.xlu0.c.b16.cont [4/8] 0, 128
        %1484 = vxpose.xlu0.c.b16.cont [5/8] 0, 128
        %1485 = vxpose.xlu0.c.b16.cont [6/8] 0, 128
        %1486 = vxpose.xlu0.c.b16.cont [7/8] 0, 128
        %1487 = vxpose.xlu0.c.b16.end [8/8] 0, 128
        %v1488 = vpop.trf.xlu0
        %v1489 = vpop.trf.xlu0
        %v1490 = vpop.trf.xlu0
        %v1491 = vpop.trf.xlu0
        %v1492 = vpop.trf.xlu0
        %v1493 = vpop.trf.xlu0
        %v1494 = vpop.trf.xlu0
        %v1495 = vpop.trf.xlu0
        %1496 = vxpose.xlu0.c.b16.start [1/8] %v1205, 128
        %1497 = vxpose.xlu0.c.b16.cont [2/8] 0, 128
        %1498 = vxpose.xlu0.c.b16.cont [3/8] 0, 128
        %1499 = vxpose.xlu0.c.b16.cont [4/8] 0, 128
        %1500 = vxpose.xlu0.c.b16.cont [5/8] 0, 128
        %1501 = vxpose.xlu0.c.b16.cont [6/8] 0, 128
        %1502 = vxpose.xlu0.c.b16.cont [7/8] 0, 128
        %1503 = vxpose.xlu0.c.b16.end [8/8] 0, 128
        %v1504 = vpop.trf.xlu0
        %v1505 = vpop.trf.xlu0
        %v1506 = vpop.trf.xlu0
        %v1507 = vpop.trf.xlu0
        %v1508 = vpop.trf.xlu0
        %v1509 = vpop.trf.xlu0
        %v1510 = vpop.trf.xlu0
        %v1511 = vpop.trf.xlu0
        %1512 = vxpose.xlu0.c.b16.start [1/8] %v1143, 128
        %1513 = vxpose.xlu0.c.b16.cont [2/8] 0, 128
        %1514 = vxpose.xlu0.c.b16.cont [3/8] 0, 128
        %1515 = vxpose.xlu0.c.b16.cont [4/8] 0, 128
        %1516 = vxpose.xlu0.c.b16.cont [5/8] 0, 128
        %1517 = vxpose.xlu0.c.b16.cont [6/8] 0, 128
        %1518 = vxpose.xlu0.c.b16.cont [7/8] 0, 128
        %1519 = vxpose.xlu0.c.b16.end [8/8] 0, 128
        %v1520 = vpop.trf.xlu0
        %v1521 = vpop.trf.xlu0
        %v1522 = vpop.trf.xlu0
        %v1523 = vpop.trf.xlu0
        %v1524 = vpop.trf.xlu0
        %v1525 = vpop.trf.xlu0
        %v1526 = vpop.trf.xlu0
        %v1527 = vpop.trf.xlu0
        %1528 = vxpose.xlu0.c.b16.start [1/8] %v1199, 128
        %1529 = vxpose.xlu0.c.b16.cont [2/8] 0, 128
        %1530 = vxpose.xlu0.c.b16.cont [3/8] 0, 128
        %1531 = vxpose.xlu0.c.b16.cont [4/8] 0, 128
        %1532 = vxpose.xlu0.c.b16.cont [5/8] 0, 128
        %1533 = vxpose.xlu0.c.b16.cont [6/8] 0, 128
        %1534 = vxpose.xlu0.c.b16.cont [7/8] 0, 128
        %1535 = vxpose.xlu0.c.b16.end [8/8] 0, 128
        %v1536 = vpop.trf.xlu0
        %v1537 = vpop.trf.xlu0
        %v1538 = vpop.trf.xlu0
        %v1539 = vpop.trf.xlu0
        %v1540 = vpop.trf.xlu0
        %v1541 = vpop.trf.xlu0
        %v1542 = vpop.trf.xlu0
        %v1543 = vpop.trf.xlu0
        %1544 = vxpose.xlu0.c.b16.start [1/8] %v1151, 128
        %1545 = vxpose.xlu0.c.b16.cont [2/8] 0, 128
        %1546 = vxpose.xlu0.c.b16.cont [3/8] 0, 128
        %1547 = vxpose.xlu0.c.b16.cont [4/8] 0, 128
        %1548 = vxpose.xlu0.c.b16.cont [5/8] 0, 128
        %1549 = vxpose.xlu0.c.b16.cont [6/8] 0, 128
        %1550 = vxpose.xlu0.c.b16.cont [7/8] 0, 128
        %1551 = vxpose.xlu0.c.b16.end [8/8] 0, 128
        %v1552 = vpop.trf.xlu0
        %v1553 = vpop.trf.xlu0
        %v1554 = vpop.trf.xlu0
        %v1555 = vpop.trf.xlu0
        %v1556 = vpop.trf.xlu0
        %v1557 = vpop.trf.xlu0
        %v1558 = vpop.trf.xlu0
        %v1559 = vpop.trf.xlu0
        %1560 = vxpose.xlu0.c.b16.start [1/8] %v1207, 128
        %1561 = vxpose.xlu0.c.b16.cont [2/8] 0, 128
        %1562 = vxpose.xlu0.c.b16.cont [3/8] 0, 128
        %1563 = vxpose.xlu0.c.b16.cont [4/8] 0, 128
        %1564 = vxpose.xlu0.c.b16.cont [5/8] 0, 128
        %1565 = vxpose.xlu0.c.b16.cont [6/8] 0, 128
        %1566 = vxpose.xlu0.c.b16.cont [7/8] 0, 128
        %1567 = vxpose.xlu0.c.b16.end [8/8] 0, 128
        %v1568 = vpop.trf.xlu0
        %v1569 = vpop.trf.xlu0
        %v1570 = vpop.trf.xlu0
        %v1571 = vpop.trf.xlu0
        %v1572 = vpop.trf.xlu0
        %v1573 = vpop.trf.xlu0
        %v1574 = vpop.trf.xlu0
        %v1575 = vpop.trf.xlu0
        %1576 = vxpose.xlu0.c.b16.start [1/8] %v1239, 128
        %1577 = vxpose.xlu0.c.b16.cont [2/8] 0, 128
        %1578 = vxpose.xlu0.c.b16.cont [3/8] 0, 128
        %1579 = vxpose.xlu0.c.b16.cont [4/8] 0, 128
        %1580 = vxpose.xlu0.c.b16.cont [5/8] 0, 128
        %1581 = vxpose.xlu0.c.b16.cont [6/8] 0, 128
        %1582 = vxpose.xlu0.c.b16.cont [7/8] 0, 128
        %1583 = vxpose.xlu0.c.b16.end [8/8] 0, 128
        %v1584 = vpop.trf.xlu0
        %v1585 = vpop.trf.xlu0
        %v1586 = vpop.trf.xlu0
        %v1587 = vpop.trf.xlu0
        %v1588 = vpop.trf.xlu0
        %v1589 = vpop.trf.xlu0
        %v1590 = vpop.trf.xlu0
        %v1591 = vpop.trf.xlu0
        %1592 = vxpose.xlu0.c.b16.start [1/8] %v1295, 128
        %1593 = vxpose.xlu0.c.b16.cont [2/8] 0, 128
        %1594 = vxpose.xlu0.c.b16.cont [3/8] 0, 128
        %1595 = vxpose.xlu0.c.b16.cont [4/8] 0, 128
        %1596 = vxpose.xlu0.c.b16.cont [5/8] 0, 128
        %1597 = vxpose.xlu0.c.b16.cont [6/8] 0, 128
        %1598 = vxpose.xlu0.c.b16.cont [7/8] 0, 128
        %1599 = vxpose.xlu0.c.b16.end [8/8] 0, 128
        %v1600 = vpop.trf.xlu0
        %v1601 = vpop.trf.xlu0
        %v1602 = vpop.trf.xlu0
        %v1603 = vpop.trf.xlu0
        %v1604 = vpop.trf.xlu0
        %v1605 = vpop.trf.xlu0
        %v1606 = vpop.trf.xlu0
        %v1607 = vpop.trf.xlu0
        %1608 = vxpose.xlu0.c.b16.start [1/8] %v1257, 128
        %1609 = vxpose.xlu0.c.b16.cont [2/8] 0, 128
        %1610 = vxpose.xlu0.c.b16.cont [3/8] 0, 128
        %1611 = vxpose.xlu0.c.b16.cont [4/8] 0, 128
        %1612 = vxpose.xlu0.c.b16.cont [5/8] 0, 128
        %1613 = vxpose.xlu0.c.b16.cont [6/8] 0, 128
        %1614 = vxpose.xlu0.c.b16.cont [7/8] 0, 128
        %1615 = vxpose.xlu0.c.b16.end [8/8] 0, 128
        %v1616 = vpop.trf.xlu0
        %v1617 = vpop.trf.xlu0
        %v1618 = vpop.trf.xlu0
        %v1619 = vpop.trf.xlu0
        %v1620 = vpop.trf.xlu0
        %v1621 = vpop.trf.xlu0
        %v1622 = vpop.trf.xlu0
        %v1623 = vpop.trf.xlu0
        %1624 = vxpose.xlu0.c.b16.start [1/8] %v1313, 128
        %1625 = vxpose.xlu0.c.b16.cont [2/8] 0, 128
        %1626 = vxpose.xlu0.c.b16.cont [3/8] 0, 128
        %1627 = vxpose.xlu0.c.b16.cont [4/8] 0, 128
        %1628 = vxpose.xlu0.c.b16.cont [5/8] 0, 128
        %1629 = vxpose.xlu0.c.b16.cont [6/8] 0, 128
        %1630 = vxpose.xlu0.c.b16.cont [7/8] 0, 128
        %1631 = vxpose.xlu0.c.b16.end [8/8] 0, 128
        %v1632 = vpop.trf.xlu0
        %v1633 = vpop.trf.xlu0
        %v1634 = vpop.trf.xlu0
        %v1635 = vpop.trf.xlu0
        %v1636 = vpop.trf.xlu0
        %v1637 = vpop.trf.xlu0
        %v1638 = vpop.trf.xlu0
        %v1639 = vpop.trf.xlu0
        %1640 = vxpose.xlu0.c.b16.start [1/8] %v1243, 128
        %1641 = vxpose.xlu0.c.b16.cont [2/8] 0, 128
        %1642 = vxpose.xlu0.c.b16.cont [3/8] 0, 128
        %1643 = vxpose.xlu0.c.b16.cont [4/8] 0, 128
        %1644 = vxpose.xlu0.c.b16.cont [5/8] 0, 128
        %1645 = vxpose.xlu0.c.b16.cont [6/8] 0, 128
        %1646 = vxpose.xlu0.c.b16.cont [7/8] 0, 128
        %1647 = vxpose.xlu0.c.b16.end [8/8] 0, 128
        %v1648 = vpop.trf.xlu0
        %v1649 = vpop.trf.xlu0
        %v1650 = vpop.trf.xlu0
        %v1651 = vpop.trf.xlu0
        %v1652 = vpop.trf.xlu0
        %v1653 = vpop.trf.xlu0
        %v1654 = vpop.trf.xlu0
        %v1655 = vpop.trf.xlu0
        %1656 = vxpose.xlu0.c.b16.start [1/8] %v1299, 128
        %1657 = vxpose.xlu0.c.b16.cont [2/8] 0, 128
        %1658 = vxpose.xlu0.c.b16.cont [3/8] 0, 128
        %1659 = vxpose.xlu0.c.b16.cont [4/8] 0, 128
        %1660 = vxpose.xlu0.c.b16.cont [5/8] 0, 128
        %1661 = vxpose.xlu0.c.b16.cont [6/8] 0, 128
        %1662 = vxpose.xlu0.c.b16.cont [7/8] 0, 128
        %1663 = vxpose.xlu0.c.b16.end [8/8] 0, 128
        %v1664 = vpop.trf.xlu0
        %v1665 = vpop.trf.xlu0
        %v1666 = vpop.trf.xlu0
        %v1667 = vpop.trf.xlu0
        %v1668 = vpop.trf.xlu0
        %v1669 = vpop.trf.xlu0
        %v1670 = vpop.trf.xlu0
        %v1671 = vpop.trf.xlu0
        %1672 = vxpose.xlu0.c.b16.start [1/8] %v1259, 128
        %1673 = vxpose.xlu0.c.b16.cont [2/8] 0, 128
        %1674 = vxpose.xlu0.c.b16.cont [3/8] 0, 128
        %1675 = vxpose.xlu0.c.b16.cont [4/8] 0, 128
        %1676 = vxpose.xlu0.c.b16.cont [5/8] 0, 128
        %1677 = vxpose.xlu0.c.b16.cont [6/8] 0, 128
        %1678 = vxpose.xlu0.c.b16.cont [7/8] 0, 128
        %1679 = vxpose.xlu0.c.b16.end [8/8] 0, 128
        %v1680 = vpop.trf.xlu0
        %v1681 = vpop.trf.xlu0
        %v1682 = vpop.trf.xlu0
        %v1683 = vpop.trf.xlu0
        %v1684 = vpop.trf.xlu0
        %v1685 = vpop.trf.xlu0
        %v1686 = vpop.trf.xlu0
        %v1687 = vpop.trf.xlu0
        %1688 = vxpose.xlu0.c.b16.start [1/8] %v1315, 128
        %1689 = vxpose.xlu0.c.b16.cont [2/8] 0, 128
        %1690 = vxpose.xlu0.c.b16.cont [3/8] 0, 128
        %1691 = vxpose.xlu0.c.b16.cont [4/8] 0, 128
        %1692 = vxpose.xlu0.c.b16.cont [5/8] 0, 128
        %1693 = vxpose.xlu0.c.b16.cont [6/8] 0, 128
        %1694 = vxpose.xlu0.c.b16.cont [7/8] 0, 128
        %1695 = vxpose.xlu0.c.b16.end [8/8] 0, 128
        %v1696 = vpop.trf.xlu0
        %v1697 = vpop.trf.xlu0
        %v1698 = vpop.trf.xlu0
        %v1699 = vpop.trf.xlu0
        %v1700 = vpop.trf.xlu0
        %v1701 = vpop.trf.xlu0
        %v1702 = vpop.trf.xlu0
        %v1703 = vpop.trf.xlu0
        %1704 = vxpose.xlu0.c.b16.start [1/8] %v1251, 128
        %1705 = vxpose.xlu0.c.b16.cont [2/8] 0, 128
        %1706 = vxpose.xlu0.c.b16.cont [3/8] 0, 128
        %1707 = vxpose.xlu0.c.b16.cont [4/8] 0, 128
        %1708 = vxpose.xlu0.c.b16.cont [5/8] 0, 128
        %1709 = vxpose.xlu0.c.b16.cont [6/8] 0, 128
        %1710 = vxpose.xlu0.c.b16.cont [7/8] 0, 128
        %1711 = vxpose.xlu0.c.b16.end [8/8] 0, 128
        %v1712 = vpop.trf.xlu0
        %v1713 = vpop.trf.xlu0
        %v1714 = vpop.trf.xlu0
        %v1715 = vpop.trf.xlu0
        %v1716 = vpop.trf.xlu0
        %v1717 = vpop.trf.xlu0
        %v1718 = vpop.trf.xlu0
        %v1719 = vpop.trf.xlu0
        %1720 = vxpose.xlu0.c.b16.start [1/8] %v1307, 128
        %1721 = vxpose.xlu0.c.b16.cont [2/8] 0, 128
        %1722 = vxpose.xlu0.c.b16.cont [3/8] 0, 128
        %1723 = vxpose.xlu0.c.b16.cont [4/8] 0, 128
        %1724 = vxpose.xlu0.c.b16.cont [5/8] 0, 128
        %1725 = vxpose.xlu0.c.b16.cont [6/8] 0, 128
        %1726 = vxpose.xlu0.c.b16.cont [7/8] 0, 128
        %1727 = vxpose.xlu0.c.b16.end [8/8] 0, 128
        %v1728 = vpop.trf.xlu0
        %v1729 = vpop.trf.xlu0
        %v1730 = vpop.trf.xlu0
        %v1731 = vpop.trf.xlu0
        %v1732 = vpop.trf.xlu0
        %v1733 = vpop.trf.xlu0
        %v1734 = vpop.trf.xlu0
        %v1735 = vpop.trf.xlu0
        %1736 = vxpose.xlu0.c.b16.start [1/8] %v1261, 128
        %1737 = vxpose.xlu0.c.b16.cont [2/8] 0, 128
        %1738 = vxpose.xlu0.c.b16.cont [3/8] 0, 128
        %1739 = vxpose.xlu0.c.b16.cont [4/8] 0, 128
        %1740 = vxpose.xlu0.c.b16.cont [5/8] 0, 128
        %1741 = vxpose.xlu0.c.b16.cont [6/8] 0, 128
        %1742 = vxpose.xlu0.c.b16.cont [7/8] 0, 128
        %1743 = vxpose.xlu0.c.b16.end [8/8] 0, 128
        %v1744 = vpop.trf.xlu0
        %v1745 = vpop.trf.xlu0
        %v1746 = vpop.trf.xlu0
        %v1747 = vpop.trf.xlu0
        %v1748 = vpop.trf.xlu0
        %v1749 = vpop.trf.xlu0
        %v1750 = vpop.trf.xlu0
        %v1751 = vpop.trf.xlu0
        %1752 = vxpose.xlu0.c.b16.start [1/8] %v1317, 128
        %1753 = vxpose.xlu0.c.b16.cont [2/8] 0, 128
        %1754 = vxpose.xlu0.c.b16.cont [3/8] 0, 128
        %1755 = vxpose.xlu0.c.b16.cont [4/8] 0, 128
        %1756 = vxpose.xlu0.c.b16.cont [5/8] 0, 128
        %1757 = vxpose.xlu0.c.b16.cont [6/8] 0, 128
        %1758 = vxpose.xlu0.c.b16.cont [7/8] 0, 128
        %1759 = vxpose.xlu0.c.b16.end [8/8] 0, 128
        %v1760 = vpop.trf.xlu0
        %v1761 = vpop.trf.xlu0
        %v1762 = vpop.trf.xlu0
        %v1763 = vpop.trf.xlu0
        %v1764 = vpop.trf.xlu0
        %v1765 = vpop.trf.xlu0
        %v1766 = vpop.trf.xlu0
        %v1767 = vpop.trf.xlu0
        %1768 = vxpose.xlu0.c.b16.start [1/8] %v1255, 128
        %1769 = vxpose.xlu0.c.b16.cont [2/8] 0, 128
        %1770 = vxpose.xlu0.c.b16.cont [3/8] 0, 128
        %1771 = vxpose.xlu0.c.b16.cont [4/8] 0, 128
        %1772 = vxpose.xlu0.c.b16.cont [5/8] 0, 128
        %1773 = vxpose.xlu0.c.b16.cont [6/8] 0, 128
        %1774 = vxpose.xlu0.c.b16.cont [7/8] 0, 128
        %1775 = vxpose.xlu0.c.b16.end [8/8] 0, 128
        %v1776 = vpop.trf.xlu0
        %v1777 = vpop.trf.xlu0
        %v1778 = vpop.trf.xlu0
        %v1779 = vpop.trf.xlu0
        %v1780 = vpop.trf.xlu0
        %v1781 = vpop.trf.xlu0
        %v1782 = vpop.trf.xlu0
        %v1783 = vpop.trf.xlu0
        %1784 = vxpose.xlu0.c.b16.start [1/8] %v1311, 128
        %1785 = vxpose.xlu0.c.b16.cont [2/8] 0, 128
        %1786 = vxpose.xlu0.c.b16.cont [3/8] 0, 128
        %1787 = vxpose.xlu0.c.b16.cont [4/8] 0, 128
        %1788 = vxpose.xlu0.c.b16.cont [5/8] 0, 128
        %1789 = vxpose.xlu0.c.b16.cont [6/8] 0, 128
        %1790 = vxpose.xlu0.c.b16.cont [7/8] 0, 128
        %1791 = vxpose.xlu0.c.b16.end [8/8] 0, 128
        %v1792 = vpop.trf.xlu0
        %v1793 = vpop.trf.xlu0
        %v1794 = vpop.trf.xlu0
        %v1795 = vpop.trf.xlu0
        %v1796 = vpop.trf.xlu0
        %v1797 = vpop.trf.xlu0
        %v1798 = vpop.trf.xlu0
        %v1799 = vpop.trf.xlu0
        %1800 = vxpose.xlu0.c.b16.start [1/8] %v1263, 128
        %1801 = vxpose.xlu0.c.b16.cont [2/8] 0, 128
        %1802 = vxpose.xlu0.c.b16.cont [3/8] 0, 128
        %1803 = vxpose.xlu0.c.b16.cont [4/8] 0, 128
        %1804 = vxpose.xlu0.c.b16.cont [5/8] 0, 128
        %1805 = vxpose.xlu0.c.b16.cont [6/8] 0, 128
        %1806 = vxpose.xlu0.c.b16.cont [7/8] 0, 128
        %1807 = vxpose.xlu0.c.b16.end [8/8] 0, 128
        %v1808 = vpop.trf.xlu0
        %v1809 = vpop.trf.xlu0
        %v1810 = vpop.trf.xlu0
        %v1811 = vpop.trf.xlu0
        %v1812 = vpop.trf.xlu0
        %v1813 = vpop.trf.xlu0
        %v1814 = vpop.trf.xlu0
        %v1815 = vpop.trf.xlu0
        %1816 = vxpose.xlu0.c.b16.start [1/8] %v1319, 128
        %1817 = vxpose.xlu0.c.b16.cont [2/8] 0, 128
        %1818 = vxpose.xlu0.c.b16.cont [3/8] 0, 128
        %1819 = vxpose.xlu0.c.b16.cont [4/8] 0, 128
        %1820 = vxpose.xlu0.c.b16.cont [5/8] 0, 128
        %1821 = vxpose.xlu0.c.b16.cont [6/8] 0, 128
        %1822 = vxpose.xlu0.c.b16.cont [7/8] 0, 128
        %1823 = vxpose.xlu0.c.b16.end [8/8] 0, 128
        %v1824 = vpop.trf.xlu0
        %v1825 = vpop.trf.xlu0
        %v1826 = vpop.trf.xlu0
        %v1827 = vpop.trf.xlu0
        %v1828 = vpop.trf.xlu0
        %v1829 = vpop.trf.xlu0
        %v1830 = vpop.trf.xlu0
        %v1831 = vpop.trf.xlu0
        %v1832 = vrot.slane %v1392, 4
        %v1833 = vsel %vm852, %v1832, %v1328
        %v1835 = vunpack.c.l.s4 1983009808
        %v1836 = vunpack.c.0.s8 %v1835
        %v1837 = vperm.slane %v1833, %v1836
        %v1838 = vrot.slane %v1424, 4
        %v1839 = vsel %vm852, %v1838, %v1360
        %v1841 = vunpack.c.l.s4 1983009808
        %v1842 = vunpack.c.0.s8 %v1841
        %v1843 = vperm.slane %v1839, %v1842
        %v1844 = vrot.slane %v1520, 4
        %v1845 = vsel %vm852, %v1844, %v1456
        %v1847 = vunpack.c.l.s4 1983009808
        %v1848 = vunpack.c.0.s8 %v1847
        %v1849 = vperm.slane %v1845, %v1848
        %v1850 = vrot.slane %v1552, 4
        %v1851 = vsel %vm852, %v1850, %v1488
        %v1853 = vunpack.c.l.s4 1983009808
        %v1854 = vunpack.c.0.s8 %v1853
        %v1855 = vperm.slane %v1851, %v1854
        %v1856 = vrot.slane %v1843, 4
        %v1857 = vsel %vm852, %v1856, %v1837
        %v1859 = vunpack.c.l.s4 1934713408
        %v1860 = vunpack.c.0.s8 %v1859
        %v1861 = vperm.slane %v1857, %v1860
        %v1862 = vrot.slane %v1855, 4
        %v1863 = vsel %vm852, %v1862, %v1849
        %v1865 = vunpack.c.l.s4 1934713408
        %v1866 = vunpack.c.0.s8 %v1865
        %v1867 = vperm.slane %v1863, %v1866
        %v1868 = vrot.slane %v1867, 4
        %v1869 = vsel %vm852, %v1868, %v1861
        %v1870 = vrot.slane %v1861, 4
        %v1871 = vsel %vm852, %v1867, %v1870
        %v1872 = vrot.slane %v1408, 4
        %v1873 = vsel %vm852, %v1872, %v1344
        %v1875 = vunpack.c.l.s4 1983009808
        %v1876 = vunpack.c.0.s8 %v1875
        %v1877 = vperm.slane %v1873, %v1876
        %v1878 = vrot.slane %v1440, 4
        %v1879 = vsel %vm852, %v1878, %v1376
        %v1881 = vunpack.c.l.s4 1983009808
        %v1882 = vunpack.c.0.s8 %v1881
        %v1883 = vperm.slane %v1879, %v1882
        %v1884 = vrot.slane %v1536, 4
        %v1885 = vsel %vm852, %v1884, %v1472
        %v1887 = vunpack.c.l.s4 1983009808
        %v1888 = vunpack.c.0.s8 %v1887
        %v1889 = vperm.slane %v1885, %v1888
        %v1890 = vrot.slane %v1568, 4
        %v1891 = vsel %vm852, %v1890, %v1504
        %v1893 = vunpack.c.l.s4 1983009808
        %v1894 = vunpack.c.0.s8 %v1893
        %v1895 = vperm.slane %v1891, %v1894
        %v1896 = vrot.slane %v1883, 4
        %v1897 = vsel %vm852, %v1896, %v1877
        %v1899 = vunpack.c.l.s4 1934713408
        %v1900 = vunpack.c.0.s8 %v1899
        %v1901 = vperm.slane %v1897, %v1900
        %v1902 = vrot.slane %v1895, 4
        %v1903 = vsel %vm852, %v1902, %v1889
        %v1905 = vunpack.c.l.s4 1934713408
        %v1906 = vunpack.c.0.s8 %v1905
        %v1907 = vperm.slane %v1903, %v1906
        %v1908 = vrot.slane %v1907, 4
        %v1909 = vsel %vm852, %v1908, %v1901
        %v1910 = vrot.slane %v1901, 4
        %v1911 = vsel %vm852, %v1907, %v1910
        %v1912 = vrot.slane %v1648, 4
        %v1913 = vsel %vm852, %v1912, %v1584
        %v1915 = vunpack.c.l.s4 1983009808
        %v1916 = vunpack.c.0.s8 %v1915
        %v1917 = vperm.slane %v1913, %v1916
        %v1918 = vrot.slane %v1680, 4
        %v1919 = vsel %vm852, %v1918, %v1616
        %v1921 = vunpack.c.l.s4 1983009808
        %v1922 = vunpack.c.0.s8 %v1921
        %v1923 = vperm.slane %v1919, %v1922
        %v1924 = vrot.slane %v1776, 4
        %v1925 = vsel %vm852, %v1924, %v1712
        %v1927 = vunpack.c.l.s4 1983009808
        %v1928 = vunpack.c.0.s8 %v1927
        %v1929 = vperm.slane %v1925, %v1928
        %v1930 = vrot.slane %v1808, 4
        %v1931 = vsel %vm852, %v1930, %v1744
        %v1933 = vunpack.c.l.s4 1983009808
        %v1934 = vunpack.c.0.s8 %v1933
        %v1935 = vperm.slane %v1931, %v1934
        %v1936 = vrot.slane %v1923, 4
        %v1937 = vsel %vm852, %v1936, %v1917
        %v1939 = vunpack.c.l.s4 1934713408
        %v1940 = vunpack.c.0.s8 %v1939
        %v1941 = vperm.slane %v1937, %v1940
        %v1942 = vrot.slane %v1935, 4
        %v1943 = vsel %vm852, %v1942, %v1929
        %v1945 = vunpack.c.l.s4 1934713408
        %v1946 = vunpack.c.0.s8 %v1945
        %v1947 = vperm.slane %v1943, %v1946
        %v1948 = vrot.slane %v1947, 4
        %v1949 = vsel %vm852, %v1948, %v1941
        %v1950 = vrot.slane %v1941, 4
        %v1951 = vsel %vm852, %v1947, %v1950
        %v1952 = vrot.slane %v1664, 4
        %v1953 = vsel %vm852, %v1952, %v1600
        %v1955 = vunpack.c.l.s4 1983009808
        %v1956 = vunpack.c.0.s8 %v1955
        %v1957 = vperm.slane %v1953, %v1956
        %v1958 = vrot.slane %v1696, 4
        %v1959 = vsel %vm852, %v1958, %v1632
        %v1961 = vunpack.c.l.s4 1983009808
        %v1962 = vunpack.c.0.s8 %v1961
        %v1963 = vperm.slane %v1959, %v1962
        %v1964 = vrot.slane %v1792, 4
        %v1965 = vsel %vm852, %v1964, %v1728
        %v1967 = vunpack.c.l.s4 1983009808
        %v1968 = vunpack.c.0.s8 %v1967
        %v1969 = vperm.slane %v1965, %v1968
        %v1970 = vrot.slane %v1824, 4
        %v1971 = vsel %vm852, %v1970, %v1760
        %v1973 = vunpack.c.l.s4 1983009808
        %v1974 = vunpack.c.0.s8 %v1973
        %v1975 = vperm.slane %v1971, %v1974
        %v1976 = vrot.slane %v1963, 4
        %v1977 = vsel %vm852, %v1976, %v1957
        %v1979 = vunpack.c.l.s4 1934713408
        %v1980 = vunpack.c.0.s8 %v1979
        %v1981 = vperm.slane %v1977, %v1980
        %v1982 = vrot.slane %v1975, 4
        %v1983 = vsel %vm852, %v1982, %v1969
        %v1985 = vunpack.c.l.s4 1934713408
        %v1986 = vunpack.c.0.s8 %v1985
        %v1987 = vperm.slane %v1983, %v1986
        %v1988 = vrot.slane %v1987, 4
        %v1989 = vsel %vm852, %v1988, %v1981
        %v1990 = vrot.slane %v1981, 4
        %v1991 = vsel %vm852, %v1987, %v1990
        %v1994 = vpack.i.b16 %v1909, %v1869
        %v1996 = vshrl.u32 %v1869, 16
        %v1997 = vshrl.u32 %v1909, 16
        %v1998 = vpack.i.b16 %v1997, %v1996
        %v2002 = vpack.i.b16 %v1911, %v1871
        %v2004 = vshrl.u32 %v1871, 16
        %v2005 = vshrl.u32 %v1911, 16
        %v2006 = vpack.i.b16 %v2005, %v2004
        %v2010 = vpack.i.b16 %v1989, %v1949
        %v2012 = vshrl.u32 %v1949, 16
        %v2013 = vshrl.u32 %v1989, 16
        %v2014 = vpack.i.b16 %v2013, %v2012
        %v2018 = vpack.i.b16 %v1991, %v1951
        %v2020 = vshrl.u32 %v1951, 16
        %v2021 = vshrl.u32 %v1991, 16
        %v2022 = vpack.i.b16 %v2021, %v2020
        %vm2024 = vcmask 261120
        %v2026 = vsel %vm2024, %v894, 0
        %2028 = vmatpush.bf16.msra.mxu0 0
        %2029 = vmatpush.bf16.msra.mxu0 0
        %2030 = vmatpush.bf16.msra.mxu0 0
        %2031 = vmatpush.bf16.msra.mxu0 0
        %2032 = vmatpush.bf16.msra.mxu0 0
        %2033 = vmatpush.bf16.msra.mxu0 0
        %2034 = vmatpush.bf16.msra.mxu0 %v2010
        %2035 = vmatpush.bf16.msra.mxu0 %v1994
        %2036 = vmatmul.bf16.gmra.mxu0 %v2026
        %v2037 = vpop.f32.mrf.mxu0
        %v2038 = vadd.f32 0.0, %v2037
        %v2039 = vpop.f32.mrf.mxu0
        %2040 = vdwg.mxu0
        %v2042 = vsel %vm2024, %v897, 0
        %2044 = vmatpush.bf16.msra.mxu0 0
        %2045 = vmatpush.bf16.msra.mxu0 0
        %2046 = vmatpush.bf16.msra.mxu0 0
        %2047 = vmatpush.bf16.msra.mxu0 0
        %2048 = vmatpush.bf16.msra.mxu0 0
        %2049 = vmatpush.bf16.msra.mxu0 0
        %2050 = vmatpush.bf16.msra.mxu0 %v2014
        %2051 = vmatpush.bf16.msra.mxu0 %v1998
        %2052 = vmatmul.bf16.gmra.mxu0 %v2042
        %v2053 = vpop.f32.mrf.mxu0
        %v2054 = vadd.f32 0.0, %v2053
        %v2055 = vpop.f32.mrf.mxu0
        %2056 = vdwg.mxu0
        %v2058 = vsel %vm2024, %v900, 0
        %2060 = vmatpush.bf16.msra.mxu0 0
        %2061 = vmatpush.bf16.msra.mxu0 0
        %2062 = vmatpush.bf16.msra.mxu0 0
        %2063 = vmatpush.bf16.msra.mxu0 0
        %2064 = vmatpush.bf16.msra.mxu0 0
        %2065 = vmatpush.bf16.msra.mxu0 0
        %2066 = vmatpush.bf16.msra.mxu0 %v2018
        %2067 = vmatpush.bf16.msra.mxu0 %v2002
        %2068 = vmatmul.bf16.gmra.mxu0 %v2058
        %v2069 = vpop.f32.mrf.mxu0
        %v2070 = vadd.f32 0.0, %v2069
        %v2071 = vpop.f32.mrf.mxu0
        %2072 = vdwg.mxu0
        %v2074 = vsel %vm2024, %v903, 0
        %2076 = vmatpush.bf16.msra.mxu0 0
        %2077 = vmatpush.bf16.msra.mxu0 0
        %2078 = vmatpush.bf16.msra.mxu0 0
        %2079 = vmatpush.bf16.msra.mxu0 0
        %2080 = vmatpush.bf16.msra.mxu0 0
        %2081 = vmatpush.bf16.msra.mxu0 0
        %2082 = vmatpush.bf16.msra.mxu0 %v2022
        %2083 = vmatpush.bf16.msra.mxu0 %v2006
        %2084 = vmatmul.bf16.gmra.mxu0 %v2074
        %v2085 = vpop.f32.mrf.mxu0
        %v2086 = vadd.f32 0.0, %v2085
        %v2087 = vpop.f32.mrf.mxu0
        %2088 = vdwg.mxu0
        %vm2089 = vcmask 64512
        %v2090 = vsel %vm2089, %v2038, -inf
        %2091 = vmax.xlane.f32.xlu0 %v2090
        %v2092 = vpop.xlane.xlu0 %2091
        %v2093 = vsel %vm2089, %v2054, -inf
        %2094 = vmax.xlane.f32.xlu0 %v2093
        %v2095 = vpop.xlane.xlu0 %2094
        %v2096 = vsel %vm2089, %v2070, -inf
        %2097 = vmax.xlane.f32.xlu0 %v2096
        %v2098 = vpop.xlane.xlu0 %2097
        %v2099 = vsel %vm2089, %v2086, -inf
        %2100 = vmax.xlane.f32.xlu0 %v2099
        %v2101 = vpop.xlane.xlu0 %2100
        %v2102 = vsub.f32 %v2038, %v2092
        %v2103 = vsub.f32 %v2054, %v2095
        %v2104 = vsub.f32 %v2070, %v2098
        %v2105 = vsub.f32 %v2086, %v2101
        %v2106 = vmul.f32 %v2102, 1.442695
        %v2107 = vpow.pop %v2106
        %v2108 = vmul.f32 %v2103, 1.442695
        %v2109 = vpow.pop %v2108
        %v2110 = vmul.f32 %v2104, 1.442695
        %v2111 = vpow.pop %v2110
        %v2112 = vmul.f32 %v2105, 1.442695
        %v2113 = vpow.pop %v2112
        %v2114 = vsel %vm2089, %v2107, 0.0
        %2115 = vadd.xlane.f32.xlu0 %v2114
        %v2116 = vpop.xlane.xlu0 %2115
        %v2117 = vsel %vm2089, %v2109, 0.0
        %2118 = vadd.xlane.f32.xlu0 %v2117
        %v2119 = vpop.xlane.xlu0 %2118
        %v2120 = vsel %vm2089, %v2111, 0.0
        %2121 = vadd.xlane.f32.xlu0 %v2120
        %v2122 = vpop.xlane.xlu0 %2121
        %v2123 = vsel %vm2089, %v2113, 0.0
        %2124 = vadd.xlane.f32.xlu0 %v2123
        %v2125 = vpop.xlane.xlu0 %2124
        %v2126 = vrcp.pop %v2116
        %v2127 = vrcp.pop %v2119
        %v2128 = vrcp.pop %v2122
        %v2129 = vrcp.pop %v2125
        %v2130 = vmul.f32 %v2107, %v2126
        %v2131 = vmul.f32 %v2109, %v2127
        %v2132 = vmul.f32 %v2111, %v2128
        %v2133 = vmul.f32 %v2113, %v2129
        %v2134 = vpack.c.bf16 %v2130, %v2130
        %v2135 = vpack.c.bf16 %v2131, %v2131
        %v2136 = vpack.c.bf16 %v2132, %v2132
        %v2137 = vpack.c.bf16 %v2133, %v2133
        %v2138 = vpack.c.bf16 %v810, %v810
        %v2139 = vpack.c.bf16 %v828, %v828
        %v2140 = vpack.c.bf16 %v814, %v814
        %v2141 = vpack.c.bf16 %v830, %v830
        %v2142 = vpack.c.bf16 %v822, %v822
        %v2143 = vpack.c.bf16 %v832, %v832
        %v2144 = vpack.c.bf16 %v826, %v826
        %v2145 = vpack.c.bf16 %v834, %v834
        %2146 = vxpose.xlu0.c.b16.start [1/8] %v2138, 128
        %2147 = vxpose.xlu0.c.b16.cont [2/8] 0, 128
        %2148 = vxpose.xlu0.c.b16.cont [3/8] 0, 128
        %2149 = vxpose.xlu0.c.b16.cont [4/8] 0, 128
        %2150 = vxpose.xlu0.c.b16.cont [5/8] 0, 128
        %2151 = vxpose.xlu0.c.b16.cont [6/8] 0, 128
        %2152 = vxpose.xlu0.c.b16.cont [7/8] 0, 128
        %2153 = vxpose.xlu0.c.b16.end [8/8] 0, 128
        %v2154 = vpop.trf.xlu0
        %v2155 = vpop.trf.xlu0
        %v2156 = vpop.trf.xlu0
        %v2157 = vpop.trf.xlu0
        %v2158 = vpop.trf.xlu0
        %v2159 = vpop.trf.xlu0
        %v2160 = vpop.trf.xlu0
        %v2161 = vpop.trf.xlu0
        %2162 = vxpose.xlu0.c.b16.start [1/8] %v2139, 128
        %2163 = vxpose.xlu0.c.b16.cont [2/8] 0, 128
        %2164 = vxpose.xlu0.c.b16.cont [3/8] 0, 128
        %2165 = vxpose.xlu0.c.b16.cont [4/8] 0, 128
        %2166 = vxpose.xlu0.c.b16.cont [5/8] 0, 128
        %2167 = vxpose.xlu0.c.b16.cont [6/8] 0, 128
        %2168 = vxpose.xlu0.c.b16.cont [7/8] 0, 128
        %2169 = vxpose.xlu0.c.b16.end [8/8] 0, 128
        %v2170 = vpop.trf.xlu0
        %v2171 = vpop.trf.xlu0
        %v2172 = vpop.trf.xlu0
        %v2173 = vpop.trf.xlu0
        %v2174 = vpop.trf.xlu0
        %v2175 = vpop.trf.xlu0
        %v2176 = vpop.trf.xlu0
        %v2177 = vpop.trf.xlu0
        %2178 = vxpose.xlu0.c.b16.start [1/8] %v2140, 128
        %2179 = vxpose.xlu0.c.b16.cont [2/8] 0, 128
        %2180 = vxpose.xlu0.c.b16.cont [3/8] 0, 128
        %2181 = vxpose.xlu0.c.b16.cont [4/8] 0, 128
        %2182 = vxpose.xlu0.c.b16.cont [5/8] 0, 128
        %2183 = vxpose.xlu0.c.b16.cont [6/8] 0, 128
        %2184 = vxpose.xlu0.c.b16.cont [7/8] 0, 128
        %2185 = vxpose.xlu0.c.b16.end [8/8] 0, 128
        %v2186 = vpop.trf.xlu0
        %v2187 = vpop.trf.xlu0
        %v2188 = vpop.trf.xlu0
        %v2189 = vpop.trf.xlu0
        %v2190 = vpop.trf.xlu0
        %v2191 = vpop.trf.xlu0
        %v2192 = vpop.trf.xlu0
        %v2193 = vpop.trf.xlu0
        %2194 = vxpose.xlu0.c.b16.start [1/8] %v2141, 128
        %2195 = vxpose.xlu0.c.b16.cont [2/8] 0, 128
        %2196 = vxpose.xlu0.c.b16.cont [3/8] 0, 128
        %2197 = vxpose.xlu0.c.b16.cont [4/8] 0, 128
        %2198 = vxpose.xlu0.c.b16.cont [5/8] 0, 128
        %2199 = vxpose.xlu0.c.b16.cont [6/8] 0, 128
        %2200 = vxpose.xlu0.c.b16.cont [7/8] 0, 128
        %2201 = vxpose.xlu0.c.b16.end [8/8] 0, 128
        %v2202 = vpop.trf.xlu0
        %v2203 = vpop.trf.xlu0
        %v2204 = vpop.trf.xlu0
        %v2205 = vpop.trf.xlu0
        %v2206 = vpop.trf.xlu0
        %v2207 = vpop.trf.xlu0
        %v2208 = vpop.trf.xlu0
        %v2209 = vpop.trf.xlu0
        %2210 = vxpose.xlu0.c.b16.start [1/8] %v2142, 128
        %2211 = vxpose.xlu0.c.b16.cont [2/8] 0, 128
        %2212 = vxpose.xlu0.c.b16.cont [3/8] 0, 128
        %2213 = vxpose.xlu0.c.b16.cont [4/8] 0, 128
        %2214 = vxpose.xlu0.c.b16.cont [5/8] 0, 128
        %2215 = vxpose.xlu0.c.b16.cont [6/8] 0, 128
        %2216 = vxpose.xlu0.c.b16.cont [7/8] 0, 128
        %2217 = vxpose.xlu0.c.b16.end [8/8] 0, 128
        %v2218 = vpop.trf.xlu0
        %v2219 = vpop.trf.xlu0
        %v2220 = vpop.trf.xlu0
        %v2221 = vpop.trf.xlu0
        %v2222 = vpop.trf.xlu0
        %v2223 = vpop.trf.xlu0
        %v2224 = vpop.trf.xlu0
        %v2225 = vpop.trf.xlu0
        %2226 = vxpose.xlu0.c.b16.start [1/8] %v2143, 128
        %2227 = vxpose.xlu0.c.b16.cont [2/8] 0, 128
        %2228 = vxpose.xlu0.c.b16.cont [3/8] 0, 128
        %2229 = vxpose.xlu0.c.b16.cont [4/8] 0, 128
        %2230 = vxpose.xlu0.c.b16.cont [5/8] 0, 128
        %2231 = vxpose.xlu0.c.b16.cont [6/8] 0, 128
        %2232 = vxpose.xlu0.c.b16.cont [7/8] 0, 128
        %2233 = vxpose.xlu0.c.b16.end [8/8] 0, 128
        %v2234 = vpop.trf.xlu0
        %v2235 = vpop.trf.xlu0
        %v2236 = vpop.trf.xlu0
        %v2237 = vpop.trf.xlu0
        %v2238 = vpop.trf.xlu0
        %v2239 = vpop.trf.xlu0
        %v2240 = vpop.trf.xlu0
        %v2241 = vpop.trf.xlu0
        %2242 = vxpose.xlu0.c.b16.start [1/8] %v2144, 128
        %2243 = vxpose.xlu0.c.b16.cont [2/8] 0, 128
        %2244 = vxpose.xlu0.c.b16.cont [3/8] 0, 128
        %2245 = vxpose.xlu0.c.b16.cont [4/8] 0, 128
        %2246 = vxpose.xlu0.c.b16.cont [5/8] 0, 128
        %2247 = vxpose.xlu0.c.b16.cont [6/8] 0, 128
        %2248 = vxpose.xlu0.c.b16.cont [7/8] 0, 128
        %2249 = vxpose.xlu0.c.b16.end [8/8] 0, 128
        %v2250 = vpop.trf.xlu0
        %v2251 = vpop.trf.xlu0
        %v2252 = vpop.trf.xlu0
        %v2253 = vpop.trf.xlu0
        %v2254 = vpop.trf.xlu0
        %v2255 = vpop.trf.xlu0
        %v2256 = vpop.trf.xlu0
        %v2257 = vpop.trf.xlu0
        %2258 = vxpose.xlu0.c.b16.start [1/8] %v2145, 128
        %2259 = vxpose.xlu0.c.b16.cont [2/8] 0, 128
        %2260 = vxpose.xlu0.c.b16.cont [3/8] 0, 128
        %2261 = vxpose.xlu0.c.b16.cont [4/8] 0, 128
        %2262 = vxpose.xlu0.c.b16.cont [5/8] 0, 128
        %2263 = vxpose.xlu0.c.b16.cont [6/8] 0, 128
        %2264 = vxpose.xlu0.c.b16.cont [7/8] 0, 128
        %2265 = vxpose.xlu0.c.b16.end [8/8] 0, 128
        %v2266 = vpop.trf.xlu0
        %v2267 = vpop.trf.xlu0
        %v2268 = vpop.trf.xlu0
        %v2269 = vpop.trf.xlu0
        %v2270 = vpop.trf.xlu0
        %v2271 = vpop.trf.xlu0
        %v2272 = vpop.trf.xlu0
        %v2273 = vpop.trf.xlu0
        %v2276 = vpack.i.b16 %v2170, %v2154
        %v2278 = vshrl.u32 %v2154, 16
        %v2279 = vshrl.u32 %v2170, 16
        %v2280 = vpack.i.b16 %v2279, %v2278
        %v2284 = vpack.i.b16 %v2202, %v2186
        %v2286 = vshrl.u32 %v2186, 16
        %v2287 = vshrl.u32 %v2202, 16
        %v2288 = vpack.i.b16 %v2287, %v2286
        %v2292 = vpack.i.b16 %v2234, %v2218
        %v2294 = vshrl.u32 %v2218, 16
        %v2295 = vshrl.u32 %v2234, 16
        %v2296 = vpack.i.b16 %v2295, %v2294
        %v2300 = vpack.i.b16 %v2266, %v2250
        %v2302 = vshrl.u32 %v2250, 16
        %v2303 = vshrl.u32 %v2266, 16
        %v2304 = vpack.i.b16 %v2303, %v2302
        %v2308 = vpack.i.b16 %v2171, %v2155
        %v2310 = vshrl.u32 %v2155, 16
        %v2311 = vshrl.u32 %v2171, 16
        %v2312 = vpack.i.b16 %v2311, %v2310
        %v2316 = vpack.i.b16 %v2203, %v2187
        %v2318 = vshrl.u32 %v2187, 16
        %v2319 = vshrl.u32 %v2203, 16
        %v2320 = vpack.i.b16 %v2319, %v2318
        %v2324 = vpack.i.b16 %v2235, %v2219
        %v2326 = vshrl.u32 %v2219, 16
        %v2327 = vshrl.u32 %v2235, 16
        %v2328 = vpack.i.b16 %v2327, %v2326
        %v2332 = vpack.i.b16 %v2267, %v2251
        %v2334 = vshrl.u32 %v2251, 16
        %v2335 = vshrl.u32 %v2267, 16
        %v2336 = vpack.i.b16 %v2335, %v2334
        %v2338 = vrot.slane %v2292, 4
        %v2339 = vsel %vm852, %v2338, %v2276
        %v2340 = vrot.slane %v2276, 4
        %v2341 = vsel %vm852, %v2292, %v2340
        %v2343 = vunpack.c.l.s4 1983009808
        %v2344 = vunpack.c.0.s8 %v2343
        %v2345 = vperm.slane %v2339, %v2344
        %v2347 = vunpack.c.l.s4 1983009808
        %v2348 = vunpack.c.0.s8 %v2347
        %v2349 = vperm.slane %v2341, %v2348
        %v2350 = vrot.slane %v2300, 4
        %v2351 = vsel %vm852, %v2350, %v2284
        %v2352 = vrot.slane %v2284, 4
        %v2353 = vsel %vm852, %v2300, %v2352
        %v2355 = vunpack.c.l.s4 1983009808
        %v2356 = vunpack.c.0.s8 %v2355
        %v2357 = vperm.slane %v2351, %v2356
        %v2359 = vunpack.c.l.s4 1983009808
        %v2360 = vunpack.c.0.s8 %v2359
        %v2361 = vperm.slane %v2353, %v2360
        %v2362 = vrot.slane %v2357, 4
        %v2363 = vsel %vm852, %v2362, %v2345
        %v2364 = vrot.slane %v2345, 4
        %v2365 = vsel %vm852, %v2357, %v2364
        %v2367 = vunpack.c.l.s4 1934713408
        %v2368 = vunpack.c.0.s8 %v2367
        %v2369 = vperm.slane %v2363, %v2368
        %v2371 = vunpack.c.l.s4 1934713408
        %v2372 = vunpack.c.0.s8 %v2371
        %v2373 = vperm.slane %v2365, %v2372
        %v2374 = vrot.slane %v2361, 4
        %v2375 = vsel %vm852, %v2374, %v2349
        %v2376 = vrot.slane %v2349, 4
        %v2377 = vsel %vm852, %v2361, %v2376
        %v2379 = vunpack.c.l.s4 1934713408
        %v2380 = vunpack.c.0.s8 %v2379
        %v2381 = vperm.slane %v2375, %v2380
        %v2383 = vunpack.c.l.s4 1934713408
        %v2384 = vunpack.c.0.s8 %v2383
        %v2385 = vperm.slane %v2377, %v2384
        %v2386 = vrot.slane %v2369, 4
        %v2387 = vsel %vm852, 0, %v2386
        %v2388 = vrot.slane %v2373, 4
        %v2389 = vsel %vm852, 0, %v2388
        %v2390 = vrot.slane %v2381, 4
        %v2391 = vsel %vm852, 0, %v2390
        %v2392 = vrot.slane %v2385, 4
        %v2393 = vsel %vm852, 0, %v2392
        %v2394 = vrot.slane %v2296, 4
        %v2395 = vsel %vm852, %v2394, %v2280
        %v2396 = vrot.slane %v2280, 4
        %v2397 = vsel %vm852, %v2296, %v2396
        %v2399 = vunpack.c.l.s4 1983009808
        %v2400 = vunpack.c.0.s8 %v2399
        %v2401 = vperm.slane %v2395, %v2400
        %v2403 = vunpack.c.l.s4 1983009808
        %v2404 = vunpack.c.0.s8 %v2403
        %v2405 = vperm.slane %v2397, %v2404
        %v2406 = vrot.slane %v2304, 4
        %v2407 = vsel %vm852, %v2406, %v2288
        %v2408 = vrot.slane %v2288, 4
        %v2409 = vsel %vm852, %v2304, %v2408
        %v2411 = vunpack.c.l.s4 1983009808
        %v2412 = vunpack.c.0.s8 %v2411
        %v2413 = vperm.slane %v2407, %v2412
        %v2415 = vunpack.c.l.s4 1983009808
        %v2416 = vunpack.c.0.s8 %v2415
        %v2417 = vperm.slane %v2409, %v2416
        %v2418 = vrot.slane %v2413, 4
        %v2419 = vsel %vm852, %v2418, %v2401
        %v2420 = vrot.slane %v2401, 4
        %v2421 = vsel %vm852, %v2413, %v2420
        %v2423 = vunpack.c.l.s4 1934713408
        %v2424 = vunpack.c.0.s8 %v2423
        %v2425 = vperm.slane %v2419, %v2424
        %v2427 = vunpack.c.l.s4 1934713408
        %v2428 = vunpack.c.0.s8 %v2427
        %v2429 = vperm.slane %v2421, %v2428
        %v2430 = vrot.slane %v2417, 4
        %v2431 = vsel %vm852, %v2430, %v2405
        %v2432 = vrot.slane %v2405, 4
        %v2433 = vsel %vm852, %v2417, %v2432
        %v2435 = vunpack.c.l.s4 1934713408
        %v2436 = vunpack.c.0.s8 %v2435
        %v2437 = vperm.slane %v2431, %v2436
        %v2439 = vunpack.c.l.s4 1934713408
        %v2440 = vunpack.c.0.s8 %v2439
        %v2441 = vperm.slane %v2433, %v2440
        %v2442 = vrot.slane %v2425, 4
        %v2443 = vsel %vm852, 0, %v2442
        %v2444 = vrot.slane %v2429, 4
        %v2445 = vsel %vm852, 0, %v2444
        %v2446 = vrot.slane %v2437, 4
        %v2447 = vsel %vm852, 0, %v2446
        %v2448 = vrot.slane %v2441, 4
        %v2449 = vsel %vm852, 0, %v2448
        %v2450 = vrot.slane %v2324, 4
        %v2451 = vsel %vm852, %v2450, %v2308
        %v2452 = vrot.slane %v2308, 4
        %v2453 = vsel %vm852, %v2324, %v2452
        %v2455 = vunpack.c.l.s4 1983009808
        %v2456 = vunpack.c.0.s8 %v2455
        %v2457 = vperm.slane %v2451, %v2456
        %v2459 = vunpack.c.l.s4 1983009808
        %v2460 = vunpack.c.0.s8 %v2459
        %v2461 = vperm.slane %v2453, %v2460
        %v2462 = vrot.slane %v2332, 4
        %v2463 = vsel %vm852, %v2462, %v2316
        %v2464 = vrot.slane %v2316, 4
        %v2465 = vsel %vm852, %v2332, %v2464
        %v2467 = vunpack.c.l.s4 1983009808
        %v2468 = vunpack.c.0.s8 %v2467
        %v2469 = vperm.slane %v2463, %v2468
        %v2471 = vunpack.c.l.s4 1983009808
        %v2472 = vunpack.c.0.s8 %v2471
        %v2473 = vperm.slane %v2465, %v2472
        %v2474 = vrot.slane %v2469, 4
        %v2475 = vsel %vm852, %v2474, %v2457
        %v2476 = vrot.slane %v2457, 4
        %v2477 = vsel %vm852, %v2469, %v2476
        %v2479 = vunpack.c.l.s4 1934713408
        %v2480 = vunpack.c.0.s8 %v2479
        %v2481 = vperm.slane %v2475, %v2480
        %v2483 = vunpack.c.l.s4 1934713408
        %v2484 = vunpack.c.0.s8 %v2483
        %v2485 = vperm.slane %v2477, %v2484
        %v2486 = vrot.slane %v2473, 4
        %v2487 = vsel %vm852, %v2486, %v2461
        %v2488 = vrot.slane %v2461, 4
        %v2489 = vsel %vm852, %v2473, %v2488
        %v2491 = vunpack.c.l.s4 1934713408
        %v2492 = vunpack.c.0.s8 %v2491
        %v2493 = vperm.slane %v2487, %v2492
        %v2495 = vunpack.c.l.s4 1934713408
        %v2496 = vunpack.c.0.s8 %v2495
        %v2497 = vperm.slane %v2489, %v2496
        %v2498 = vrot.slane %v2481, 4
        %v2499 = vsel %vm852, 0, %v2498
        %v2500 = vrot.slane %v2485, 4
        %v2501 = vsel %vm852, 0, %v2500
        %v2502 = vrot.slane %v2493, 4
        %v2503 = vsel %vm852, 0, %v2502
        %v2504 = vrot.slane %v2497, 4
        %v2505 = vsel %vm852, 0, %v2504
        %v2506 = vrot.slane %v2328, 4
        %v2507 = vsel %vm852, %v2506, %v2312
        %v2508 = vrot.slane %v2312, 4
        %v2509 = vsel %vm852, %v2328, %v2508
        %v2511 = vunpack.c.l.s4 1983009808
        %v2512 = vunpack.c.0.s8 %v2511
        %v2513 = vperm.slane %v2507, %v2512
        %v2515 = vunpack.c.l.s4 1983009808
        %v2516 = vunpack.c.0.s8 %v2515
        %v2517 = vperm.slane %v2509, %v2516
        %v2518 = vrot.slane %v2336, 4
        %v2519 = vsel %vm852, %v2518, %v2320
        %v2520 = vrot.slane %v2320, 4
        %v2521 = vsel %vm852, %v2336, %v2520
        %v2523 = vunpack.c.l.s4 1983009808
        %v2524 = vunpack.c.0.s8 %v2523
        %v2525 = vperm.slane %v2519, %v2524
        %v2527 = vunpack.c.l.s4 1983009808
        %v2528 = vunpack.c.0.s8 %v2527
        %v2529 = vperm.slane %v2521, %v2528
        %v2530 = vrot.slane %v2525, 4
        %v2531 = vsel %vm852, %v2530, %v2513
        %v2532 = vrot.slane %v2513, 4
        %v2533 = vsel %vm852, %v2525, %v2532
        %v2535 = vunpack.c.l.s4 1934713408
        %v2536 = vunpack.c.0.s8 %v2535
        %v2537 = vperm.slane %v2531, %v2536
        %v2539 = vunpack.c.l.s4 1934713408
        %v2540 = vunpack.c.0.s8 %v2539
        %v2541 = vperm.slane %v2533, %v2540
        %v2542 = vrot.slane %v2529, 4
        %v2543 = vsel %vm852, %v2542, %v2517
        %v2544 = vrot.slane %v2517, 4
        %v2545 = vsel %vm852, %v2529, %v2544
        %v2547 = vunpack.c.l.s4 1934713408
        %v2548 = vunpack.c.0.s8 %v2547
        %v2549 = vperm.slane %v2543, %v2548
        %v2551 = vunpack.c.l.s4 1934713408
        %v2552 = vunpack.c.0.s8 %v2551
        %v2553 = vperm.slane %v2545, %v2552
        %v2554 = vrot.slane %v2537, 4
        %v2555 = vsel %vm852, 0, %v2554
        %v2556 = vrot.slane %v2541, 4
        %v2557 = vsel %vm852, 0, %v2556
        %v2558 = vrot.slane %v2549, 4
        %v2559 = vsel %vm852, 0, %v2558
        %v2560 = vrot.slane %v2553, 4
        %v2561 = vsel %vm852, 0, %v2560
        %2562 = vxpose.xlu0.c.b16.start [1/8] %v2369, 128
        %2563 = vxpose.xlu0.c.b16.cont [2/8] 0, 128
        %2564 = vxpose.xlu0.c.b16.cont [3/8] 0, 128
        %2565 = vxpose.xlu0.c.b16.cont [4/8] 0, 128
        %2566 = vxpose.xlu0.c.b16.cont [5/8] 0, 128
        %2567 = vxpose.xlu0.c.b16.cont [6/8] 0, 128
        %2568 = vxpose.xlu0.c.b16.cont [7/8] 0, 128
        %2569 = vxpose.xlu0.c.b16.end [8/8] 0, 128
        %v2570 = vpop.trf.xlu0
        %v2571 = vpop.trf.xlu0
        %v2572 = vpop.trf.xlu0
        %v2573 = vpop.trf.xlu0
        %v2574 = vpop.trf.xlu0
        %v2575 = vpop.trf.xlu0
        %v2576 = vpop.trf.xlu0
        %v2577 = vpop.trf.xlu0
        %2578 = vxpose.xlu0.c.b16.start [1/8] %v2425, 128
        %2579 = vxpose.xlu0.c.b16.cont [2/8] 0, 128
        %2580 = vxpose.xlu0.c.b16.cont [3/8] 0, 128
        %2581 = vxpose.xlu0.c.b16.cont [4/8] 0, 128
        %2582 = vxpose.xlu0.c.b16.cont [5/8] 0, 128
        %2583 = vxpose.xlu0.c.b16.cont [6/8] 0, 128
        %2584 = vxpose.xlu0.c.b16.cont [7/8] 0, 128
        %2585 = vxpose.xlu0.c.b16.end [8/8] 0, 128
        %v2586 = vpop.trf.xlu0
        %v2587 = vpop.trf.xlu0
        %v2588 = vpop.trf.xlu0
        %v2589 = vpop.trf.xlu0
        %v2590 = vpop.trf.xlu0
        %v2591 = vpop.trf.xlu0
        %v2592 = vpop.trf.xlu0
        %v2593 = vpop.trf.xlu0
        %2594 = vxpose.xlu0.c.b16.start [1/8] %v2387, 128
        %2595 = vxpose.xlu0.c.b16.cont [2/8] 0, 128
        %2596 = vxpose.xlu0.c.b16.cont [3/8] 0, 128
        %2597 = vxpose.xlu0.c.b16.cont [4/8] 0, 128
        %2598 = vxpose.xlu0.c.b16.cont [5/8] 0, 128
        %2599 = vxpose.xlu0.c.b16.cont [6/8] 0, 128
        %2600 = vxpose.xlu0.c.b16.cont [7/8] 0, 128
        %2601 = vxpose.xlu0.c.b16.end [8/8] 0, 128
        %v2602 = vpop.trf.xlu0
        %v2603 = vpop.trf.xlu0
        %v2604 = vpop.trf.xlu0
        %v2605 = vpop.trf.xlu0
        %v2606 = vpop.trf.xlu0
        %v2607 = vpop.trf.xlu0
        %v2608 = vpop.trf.xlu0
        %v2609 = vpop.trf.xlu0
        %2610 = vxpose.xlu0.c.b16.start [1/8] %v2443, 128
        %2611 = vxpose.xlu0.c.b16.cont [2/8] 0, 128
        %2612 = vxpose.xlu0.c.b16.cont [3/8] 0, 128
        %2613 = vxpose.xlu0.c.b16.cont [4/8] 0, 128
        %2614 = vxpose.xlu0.c.b16.cont [5/8] 0, 128
        %2615 = vxpose.xlu0.c.b16.cont [6/8] 0, 128
        %2616 = vxpose.xlu0.c.b16.cont [7/8] 0, 128
        %2617 = vxpose.xlu0.c.b16.end [8/8] 0, 128
        %v2618 = vpop.trf.xlu0
        %v2619 = vpop.trf.xlu0
        %v2620 = vpop.trf.xlu0
        %v2621 = vpop.trf.xlu0
        %v2622 = vpop.trf.xlu0
        %v2623 = vpop.trf.xlu0
        %v2624 = vpop.trf.xlu0
        %v2625 = vpop.trf.xlu0
        %2626 = vxpose.xlu0.c.b16.start [1/8] %v2373, 128
        %2627 = vxpose.xlu0.c.b16.cont [2/8] 0, 128
        %2628 = vxpose.xlu0.c.b16.cont [3/8] 0, 128
        %2629 = vxpose.xlu0.c.b16.cont [4/8] 0, 128
        %2630 = vxpose.xlu0.c.b16.cont [5/8] 0, 128
        %2631 = vxpose.xlu0.c.b16.cont [6/8] 0, 128
        %2632 = vxpose.xlu0.c.b16.cont [7/8] 0, 128
        %2633 = vxpose.xlu0.c.b16.end [8/8] 0, 128
        %v2634 = vpop.trf.xlu0
        %v2635 = vpop.trf.xlu0
        %v2636 = vpop.trf.xlu0
        %v2637 = vpop.trf.xlu0
        %v2638 = vpop.trf.xlu0
        %v2639 = vpop.trf.xlu0
        %v2640 = vpop.trf.xlu0
        %v2641 = vpop.trf.xlu0
        %2642 = vxpose.xlu0.c.b16.start [1/8] %v2429, 128
        %2643 = vxpose.xlu0.c.b16.cont [2/8] 0, 128
        %2644 = vxpose.xlu0.c.b16.cont [3/8] 0, 128
        %2645 = vxpose.xlu0.c.b16.cont [4/8] 0, 128
        %2646 = vxpose.xlu0.c.b16.cont [5/8] 0, 128
        %2647 = vxpose.xlu0.c.b16.cont [6/8] 0, 128
        %2648 = vxpose.xlu0.c.b16.cont [7/8] 0, 128
        %2649 = vxpose.xlu0.c.b16.end [8/8] 0, 128
        %v2650 = vpop.trf.xlu0
        %v2651 = vpop.trf.xlu0
        %v2652 = vpop.trf.xlu0
        %v2653 = vpop.trf.xlu0
        %v2654 = vpop.trf.xlu0
        %v2655 = vpop.trf.xlu0
        %v2656 = vpop.trf.xlu0
        %v2657 = vpop.trf.xlu0
        %2658 = vxpose.xlu0.c.b16.start [1/8] %v2389, 128
        %2659 = vxpose.xlu0.c.b16.cont [2/8] 0, 128
        %2660 = vxpose.xlu0.c.b16.cont [3/8] 0, 128
        %2661 = vxpose.xlu0.c.b16.cont [4/8] 0, 128
        %2662 = vxpose.xlu0.c.b16.cont [5/8] 0, 128
        %2663 = vxpose.xlu0.c.b16.cont [6/8] 0, 128
        %2664 = vxpose.xlu0.c.b16.cont [7/8] 0, 128
        %2665 = vxpose.xlu0.c.b16.end [8/8] 0, 128
        %v2666 = vpop.trf.xlu0
        %v2667 = vpop.trf.xlu0
        %v2668 = vpop.trf.xlu0
        %v2669 = vpop.trf.xlu0
        %v2670 = vpop.trf.xlu0
        %v2671 = vpop.trf.xlu0
        %v2672 = vpop.trf.xlu0
        %v2673 = vpop.trf.xlu0
        %2674 = vxpose.xlu0.c.b16.start [1/8] %v2445, 128
        %2675 = vxpose.xlu0.c.b16.cont [2/8] 0, 128
        %2676 = vxpose.xlu0.c.b16.cont [3/8] 0, 128
        %2677 = vxpose.xlu0.c.b16.cont [4/8] 0, 128
        %2678 = vxpose.xlu0.c.b16.cont [5/8] 0, 128
        %2679 = vxpose.xlu0.c.b16.cont [6/8] 0, 128
        %2680 = vxpose.xlu0.c.b16.cont [7/8] 0, 128
        %2681 = vxpose.xlu0.c.b16.end [8/8] 0, 128
        %v2682 = vpop.trf.xlu0
        %v2683 = vpop.trf.xlu0
        %v2684 = vpop.trf.xlu0
        %v2685 = vpop.trf.xlu0
        %v2686 = vpop.trf.xlu0
        %v2687 = vpop.trf.xlu0
        %v2688 = vpop.trf.xlu0
        %v2689 = vpop.trf.xlu0
        %2690 = vxpose.xlu0.c.b16.start [1/8] %v2381, 128
        %2691 = vxpose.xlu0.c.b16.cont [2/8] 0, 128
        %2692 = vxpose.xlu0.c.b16.cont [3/8] 0, 128
        %2693 = vxpose.xlu0.c.b16.cont [4/8] 0, 128
        %2694 = vxpose.xlu0.c.b16.cont [5/8] 0, 128
        %2695 = vxpose.xlu0.c.b16.cont [6/8] 0, 128
        %2696 = vxpose.xlu0.c.b16.cont [7/8] 0, 128
        %2697 = vxpose.xlu0.c.b16.end [8/8] 0, 128
        %v2698 = vpop.trf.xlu0
        %v2699 = vpop.trf.xlu0
        %v2700 = vpop.trf.xlu0
        %v2701 = vpop.trf.xlu0
        %v2702 = vpop.trf.xlu0
        %v2703 = vpop.trf.xlu0
        %v2704 = vpop.trf.xlu0
        %v2705 = vpop.trf.xlu0
        %2706 = vxpose.xlu0.c.b16.start [1/8] %v2437, 128
        %2707 = vxpose.xlu0.c.b16.cont [2/8] 0, 128
        %2708 = vxpose.xlu0.c.b16.cont [3/8] 0, 128
        %2709 = vxpose.xlu0.c.b16.cont [4/8] 0, 128
        %2710 = vxpose.xlu0.c.b16.cont [5/8] 0, 128
        %2711 = vxpose.xlu0.c.b16.cont [6/8] 0, 128
        %2712 = vxpose.xlu0.c.b16.cont [7/8] 0, 128
        %2713 = vxpose.xlu0.c.b16.end [8/8] 0, 128
        %v2714 = vpop.trf.xlu0
        %v2715 = vpop.trf.xlu0
        %v2716 = vpop.trf.xlu0
        %v2717 = vpop.trf.xlu0
        %v2718 = vpop.trf.xlu0
        %v2719 = vpop.trf.xlu0
        %v2720 = vpop.trf.xlu0
        %v2721 = vpop.trf.xlu0
        %2722 = vxpose.xlu0.c.b16.start [1/8] %v2391, 128
        %2723 = vxpose.xlu0.c.b16.cont [2/8] 0, 128
        %2724 = vxpose.xlu0.c.b16.cont [3/8] 0, 128
        %2725 = vxpose.xlu0.c.b16.cont [4/8] 0, 128
        %2726 = vxpose.xlu0.c.b16.cont [5/8] 0, 128
        %2727 = vxpose.xlu0.c.b16.cont [6/8] 0, 128
        %2728 = vxpose.xlu0.c.b16.cont [7/8] 0, 128
        %2729 = vxpose.xlu0.c.b16.end [8/8] 0, 128
        %v2730 = vpop.trf.xlu0
        %v2731 = vpop.trf.xlu0
        %v2732 = vpop.trf.xlu0
        %v2733 = vpop.trf.xlu0
        %v2734 = vpop.trf.xlu0
        %v2735 = vpop.trf.xlu0
        %v2736 = vpop.trf.xlu0
        %v2737 = vpop.trf.xlu0
        %2738 = vxpose.xlu0.c.b16.start [1/8] %v2447, 128
        %2739 = vxpose.xlu0.c.b16.cont [2/8] 0, 128
        %2740 = vxpose.xlu0.c.b16.cont [3/8] 0, 128
        %2741 = vxpose.xlu0.c.b16.cont [4/8] 0, 128
        %2742 = vxpose.xlu0.c.b16.cont [5/8] 0, 128
        %2743 = vxpose.xlu0.c.b16.cont [6/8] 0, 128
        %2744 = vxpose.xlu0.c.b16.cont [7/8] 0, 128
        %2745 = vxpose.xlu0.c.b16.end [8/8] 0, 128
        %v2746 = vpop.trf.xlu0
        %v2747 = vpop.trf.xlu0
        %v2748 = vpop.trf.xlu0
        %v2749 = vpop.trf.xlu0
        %v2750 = vpop.trf.xlu0
        %v2751 = vpop.trf.xlu0
        %v2752 = vpop.trf.xlu0
        %v2753 = vpop.trf.xlu0
        %2754 = vxpose.xlu0.c.b16.start [1/8] %v2385, 128
        %2755 = vxpose.xlu0.c.b16.cont [2/8] 0, 128
        %2756 = vxpose.xlu0.c.b16.cont [3/8] 0, 128
        %2757 = vxpose.xlu0.c.b16.cont [4/8] 0, 128
        %2758 = vxpose.xlu0.c.b16.cont [5/8] 0, 128
        %2759 = vxpose.xlu0.c.b16.cont [6/8] 0, 128
        %2760 = vxpose.xlu0.c.b16.cont [7/8] 0, 128
        %2761 = vxpose.xlu0.c.b16.end [8/8] 0, 128
        %v2762 = vpop.trf.xlu0
        %v2763 = vpop.trf.xlu0
        %v2764 = vpop.trf.xlu0
        %v2765 = vpop.trf.xlu0
        %v2766 = vpop.trf.xlu0
        %v2767 = vpop.trf.xlu0
        %v2768 = vpop.trf.xlu0
        %v2769 = vpop.trf.xlu0
        %2770 = vxpose.xlu0.c.b16.start [1/8] %v2441, 128
        %2771 = vxpose.xlu0.c.b16.cont [2/8] 0, 128
        %2772 = vxpose.xlu0.c.b16.cont [3/8] 0, 128
        %2773 = vxpose.xlu0.c.b16.cont [4/8] 0, 128
        %2774 = vxpose.xlu0.c.b16.cont [5/8] 0, 128
        %2775 = vxpose.xlu0.c.b16.cont [6/8] 0, 128
        %2776 = vxpose.xlu0.c.b16.cont [7/8] 0, 128
        %2777 = vxpose.xlu0.c.b16.end [8/8] 0, 128
        %v2778 = vpop.trf.xlu0
        %v2779 = vpop.trf.xlu0
        %v2780 = vpop.trf.xlu0
        %v2781 = vpop.trf.xlu0
        %v2782 = vpop.trf.xlu0
        %v2783 = vpop.trf.xlu0
        %v2784 = vpop.trf.xlu0
        %v2785 = vpop.trf.xlu0
        %2786 = vxpose.xlu0.c.b16.start [1/8] %v2393, 128
        %2787 = vxpose.xlu0.c.b16.cont [2/8] 0, 128
        %2788 = vxpose.xlu0.c.b16.cont [3/8] 0, 128
        %2789 = vxpose.xlu0.c.b16.cont [4/8] 0, 128
        %2790 = vxpose.xlu0.c.b16.cont [5/8] 0, 128
        %2791 = vxpose.xlu0.c.b16.cont [6/8] 0, 128
        %2792 = vxpose.xlu0.c.b16.cont [7/8] 0, 128
        %2793 = vxpose.xlu0.c.b16.end [8/8] 0, 128
        %v2794 = vpop.trf.xlu0
        %v2795 = vpop.trf.xlu0
        %v2796 = vpop.trf.xlu0
        %v2797 = vpop.trf.xlu0
        %v2798 = vpop.trf.xlu0
        %v2799 = vpop.trf.xlu0
        %v2800 = vpop.trf.xlu0
        %v2801 = vpop.trf.xlu0
        %2802 = vxpose.xlu0.c.b16.start [1/8] %v2449, 128
        %2803 = vxpose.xlu0.c.b16.cont [2/8] 0, 128
        %2804 = vxpose.xlu0.c.b16.cont [3/8] 0, 128
        %2805 = vxpose.xlu0.c.b16.cont [4/8] 0, 128
        %2806 = vxpose.xlu0.c.b16.cont [5/8] 0, 128
        %2807 = vxpose.xlu0.c.b16.cont [6/8] 0, 128
        %2808 = vxpose.xlu0.c.b16.cont [7/8] 0, 128
        %2809 = vxpose.xlu0.c.b16.end [8/8] 0, 128
        %v2810 = vpop.trf.xlu0
        %v2811 = vpop.trf.xlu0
        %v2812 = vpop.trf.xlu0
        %v2813 = vpop.trf.xlu0
        %v2814 = vpop.trf.xlu0
        %v2815 = vpop.trf.xlu0
        %v2816 = vpop.trf.xlu0
        %v2817 = vpop.trf.xlu0
        %2818 = vxpose.xlu0.c.b16.start [1/8] %v2481, 128
        %2819 = vxpose.xlu0.c.b16.cont [2/8] 0, 128
        %2820 = vxpose.xlu0.c.b16.cont [3/8] 0, 128
        %2821 = vxpose.xlu0.c.b16.cont [4/8] 0, 128
        %2822 = vxpose.xlu0.c.b16.cont [5/8] 0, 128
        %2823 = vxpose.xlu0.c.b16.cont [6/8] 0, 128
        %2824 = vxpose.xlu0.c.b16.cont [7/8] 0, 128
        %2825 = vxpose.xlu0.c.b16.end [8/8] 0, 128
        %v2826 = vpop.trf.xlu0
        %v2827 = vpop.trf.xlu0
        %v2828 = vpop.trf.xlu0
        %v2829 = vpop.trf.xlu0
        %v2830 = vpop.trf.xlu0
        %v2831 = vpop.trf.xlu0
        %v2832 = vpop.trf.xlu0
        %v2833 = vpop.trf.xlu0
        %2834 = vxpose.xlu0.c.b16.start [1/8] %v2537, 128
        %2835 = vxpose.xlu0.c.b16.cont [2/8] 0, 128
        %2836 = vxpose.xlu0.c.b16.cont [3/8] 0, 128
        %2837 = vxpose.xlu0.c.b16.cont [4/8] 0, 128
        %2838 = vxpose.xlu0.c.b16.cont [5/8] 0, 128
        %2839 = vxpose.xlu0.c.b16.cont [6/8] 0, 128
        %2840 = vxpose.xlu0.c.b16.cont [7/8] 0, 128
        %2841 = vxpose.xlu0.c.b16.end [8/8] 0, 128
        %v2842 = vpop.trf.xlu0
        %v2843 = vpop.trf.xlu0
        %v2844 = vpop.trf.xlu0
        %v2845 = vpop.trf.xlu0
        %v2846 = vpop.trf.xlu0
        %v2847 = vpop.trf.xlu0
        %v2848 = vpop.trf.xlu0
        %v2849 = vpop.trf.xlu0
        %2850 = vxpose.xlu0.c.b16.start [1/8] %v2499, 128
        %2851 = vxpose.xlu0.c.b16.cont [2/8] 0, 128
        %2852 = vxpose.xlu0.c.b16.cont [3/8] 0, 128
        %2853 = vxpose.xlu0.c.b16.cont [4/8] 0, 128
        %2854 = vxpose.xlu0.c.b16.cont [5/8] 0, 128
        %2855 = vxpose.xlu0.c.b16.cont [6/8] 0, 128
        %2856 = vxpose.xlu0.c.b16.cont [7/8] 0, 128
        %2857 = vxpose.xlu0.c.b16.end [8/8] 0, 128
        %v2858 = vpop.trf.xlu0
        %v2859 = vpop.trf.xlu0
        %v2860 = vpop.trf.xlu0
        %v2861 = vpop.trf.xlu0
        %v2862 = vpop.trf.xlu0
        %v2863 = vpop.trf.xlu0
        %v2864 = vpop.trf.xlu0
        %v2865 = vpop.trf.xlu0
        %2866 = vxpose.xlu0.c.b16.start [1/8] %v2555, 128
        %2867 = vxpose.xlu0.c.b16.cont [2/8] 0, 128
        %2868 = vxpose.xlu0.c.b16.cont [3/8] 0, 128
        %2869 = vxpose.xlu0.c.b16.cont [4/8] 0, 128
        %2870 = vxpose.xlu0.c.b16.cont [5/8] 0, 128
        %2871 = vxpose.xlu0.c.b16.cont [6/8] 0, 128
        %2872 = vxpose.xlu0.c.b16.cont [7/8] 0, 128
        %2873 = vxpose.xlu0.c.b16.end [8/8] 0, 128
        %v2874 = vpop.trf.xlu0
        %v2875 = vpop.trf.xlu0
        %v2876 = vpop.trf.xlu0
        %v2877 = vpop.trf.xlu0
        %v2878 = vpop.trf.xlu0
        %v2879 = vpop.trf.xlu0
        %v2880 = vpop.trf.xlu0
        %v2881 = vpop.trf.xlu0
        %2882 = vxpose.xlu0.c.b16.start [1/8] %v2485, 128
        %2883 = vxpose.xlu0.c.b16.cont [2/8] 0, 128
        %2884 = vxpose.xlu0.c.b16.cont [3/8] 0, 128
        %2885 = vxpose.xlu0.c.b16.cont [4/8] 0, 128
        %2886 = vxpose.xlu0.c.b16.cont [5/8] 0, 128
        %2887 = vxpose.xlu0.c.b16.cont [6/8] 0, 128
        %2888 = vxpose.xlu0.c.b16.cont [7/8] 0, 128
        %2889 = vxpose.xlu0.c.b16.end [8/8] 0, 128
        %v2890 = vpop.trf.xlu0
        %v2891 = vpop.trf.xlu0
        %v2892 = vpop.trf.xlu0
        %v2893 = vpop.trf.xlu0
        %v2894 = vpop.trf.xlu0
        %v2895 = vpop.trf.xlu0
        %v2896 = vpop.trf.xlu0
        %v2897 = vpop.trf.xlu0
        %2898 = vxpose.xlu0.c.b16.start [1/8] %v2541, 128
        %2899 = vxpose.xlu0.c.b16.cont [2/8] 0, 128
        %2900 = vxpose.xlu0.c.b16.cont [3/8] 0, 128
        %2901 = vxpose.xlu0.c.b16.cont [4/8] 0, 128
        %2902 = vxpose.xlu0.c.b16.cont [5/8] 0, 128
        %2903 = vxpose.xlu0.c.b16.cont [6/8] 0, 128
        %2904 = vxpose.xlu0.c.b16.cont [7/8] 0, 128
        %2905 = vxpose.xlu0.c.b16.end [8/8] 0, 128
        %v2906 = vpop.trf.xlu0
        %v2907 = vpop.trf.xlu0
        %v2908 = vpop.trf.xlu0
        %v2909 = vpop.trf.xlu0
        %v2910 = vpop.trf.xlu0
        %v2911 = vpop.trf.xlu0
        %v2912 = vpop.trf.xlu0
        %v2913 = vpop.trf.xlu0
        %2914 = vxpose.xlu0.c.b16.start [1/8] %v2501, 128
        %2915 = vxpose.xlu0.c.b16.cont [2/8] 0, 128
        %2916 = vxpose.xlu0.c.b16.cont [3/8] 0, 128
        %2917 = vxpose.xlu0.c.b16.cont [4/8] 0, 128
        %2918 = vxpose.xlu0.c.b16.cont [5/8] 0, 128
        %2919 = vxpose.xlu0.c.b16.cont [6/8] 0, 128
        %2920 = vxpose.xlu0.c.b16.cont [7/8] 0, 128
        %2921 = vxpose.xlu0.c.b16.end [8/8] 0, 128
        %v2922 = vpop.trf.xlu0
        %v2923 = vpop.trf.xlu0
        %v2924 = vpop.trf.xlu0
        %v2925 = vpop.trf.xlu0
        %v2926 = vpop.trf.xlu0
        %v2927 = vpop.trf.xlu0
        %v2928 = vpop.trf.xlu0
        %v2929 = vpop.trf.xlu0
        %2930 = vxpose.xlu0.c.b16.start [1/8] %v2557, 128
        %2931 = vxpose.xlu0.c.b16.cont [2/8] 0, 128
        %2932 = vxpose.xlu0.c.b16.cont [3/8] 0, 128
        %2933 = vxpose.xlu0.c.b16.cont [4/8] 0, 128
        %2934 = vxpose.xlu0.c.b16.cont [5/8] 0, 128
        %2935 = vxpose.xlu0.c.b16.cont [6/8] 0, 128
        %2936 = vxpose.xlu0.c.b16.cont [7/8] 0, 128
        %2937 = vxpose.xlu0.c.b16.end [8/8] 0, 128
        %v2938 = vpop.trf.xlu0
        %v2939 = vpop.trf.xlu0
        %v2940 = vpop.trf.xlu0
        %v2941 = vpop.trf.xlu0
        %v2942 = vpop.trf.xlu0
        %v2943 = vpop.trf.xlu0
        %v2944 = vpop.trf.xlu0
        %v2945 = vpop.trf.xlu0
        %2946 = vxpose.xlu0.c.b16.start [1/8] %v2493, 128
        %2947 = vxpose.xlu0.c.b16.cont [2/8] 0, 128
        %2948 = vxpose.xlu0.c.b16.cont [3/8] 0, 128
        %2949 = vxpose.xlu0.c.b16.cont [4/8] 0, 128
        %2950 = vxpose.xlu0.c.b16.cont [5/8] 0, 128
        %2951 = vxpose.xlu0.c.b16.cont [6/8] 0, 128
        %2952 = vxpose.xlu0.c.b16.cont [7/8] 0, 128
        %2953 = vxpose.xlu0.c.b16.end [8/8] 0, 128
        %v2954 = vpop.trf.xlu0
        %v2955 = vpop.trf.xlu0
        %v2956 = vpop.trf.xlu0
        %v2957 = vpop.trf.xlu0
        %v2958 = vpop.trf.xlu0
        %v2959 = vpop.trf.xlu0
        %v2960 = vpop.trf.xlu0
        %v2961 = vpop.trf.xlu0
        %2962 = vxpose.xlu0.c.b16.start [1/8] %v2549, 128
        %2963 = vxpose.xlu0.c.b16.cont [2/8] 0, 128
        %2964 = vxpose.xlu0.c.b16.cont [3/8] 0, 128
        %2965 = vxpose.xlu0.c.b16.cont [4/8] 0, 128
        %2966 = vxpose.xlu0.c.b16.cont [5/8] 0, 128
        %2967 = vxpose.xlu0.c.b16.cont [6/8] 0, 128
        %2968 = vxpose.xlu0.c.b16.cont [7/8] 0, 128
        %2969 = vxpose.xlu0.c.b16.end [8/8] 0, 128
        %v2970 = vpop.trf.xlu0
        %v2971 = vpop.trf.xlu0
        %v2972 = vpop.trf.xlu0
        %v2973 = vpop.trf.xlu0
        %v2974 = vpop.trf.xlu0
        %v2975 = vpop.trf.xlu0
        %v2976 = vpop.trf.xlu0
        %v2977 = vpop.trf.xlu0
        %2978 = vxpose.xlu0.c.b16.start [1/8] %v2503, 128
        %2979 = vxpose.xlu0.c.b16.cont [2/8] 0, 128
        %2980 = vxpose.xlu0.c.b16.cont [3/8] 0, 128
        %2981 = vxpose.xlu0.c.b16.cont [4/8] 0, 128
        %2982 = vxpose.xlu0.c.b16.cont [5/8] 0, 128
        %2983 = vxpose.xlu0.c.b16.cont [6/8] 0, 128
        %2984 = vxpose.xlu0.c.b16.cont [7/8] 0, 128
        %2985 = vxpose.xlu0.c.b16.end [8/8] 0, 128
        %v2986 = vpop.trf.xlu0
        %v2987 = vpop.trf.xlu0
        %v2988 = vpop.trf.xlu0
        %v2989 = vpop.trf.xlu0
        %v2990 = vpop.trf.xlu0
        %v2991 = vpop.trf.xlu0
        %v2992 = vpop.trf.xlu0
        %v2993 = vpop.trf.xlu0
        %2994 = vxpose.xlu0.c.b16.start [1/8] %v2559, 128
        %2995 = vxpose.xlu0.c.b16.cont [2/8] 0, 128
        %2996 = vxpose.xlu0.c.b16.cont [3/8] 0, 128
        %2997 = vxpose.xlu0.c.b16.cont [4/8] 0, 128
        %2998 = vxpose.xlu0.c.b16.cont [5/8] 0, 128
        %2999 = vxpose.xlu0.c.b16.cont [6/8] 0, 128
        %3000 = vxpose.xlu0.c.b16.cont [7/8] 0, 128
        %3001 = vxpose.xlu0.c.b16.end [8/8] 0, 128
        %v3002 = vpop.trf.xlu0
        %v3003 = vpop.trf.xlu0
        %v3004 = vpop.trf.xlu0
        %v3005 = vpop.trf.xlu0
        %v3006 = vpop.trf.xlu0
        %v3007 = vpop.trf.xlu0
        %v3008 = vpop.trf.xlu0
        %v3009 = vpop.trf.xlu0
        %3010 = vxpose.xlu0.c.b16.start [1/8] %v2497, 128
        %3011 = vxpose.xlu0.c.b16.cont [2/8] 0, 128
        %3012 = vxpose.xlu0.c.b16.cont [3/8] 0, 128
        %3013 = vxpose.xlu0.c.b16.cont [4/8] 0, 128
        %3014 = vxpose.xlu0.c.b16.cont [5/8] 0, 128
        %3015 = vxpose.xlu0.c.b16.cont [6/8] 0, 128
        %3016 = vxpose.xlu0.c.b16.cont [7/8] 0, 128
        %3017 = vxpose.xlu0.c.b16.end [8/8] 0, 128
        %v3018 = vpop.trf.xlu0
        %v3019 = vpop.trf.xlu0
        %v3020 = vpop.trf.xlu0
        %v3021 = vpop.trf.xlu0
        %v3022 = vpop.trf.xlu0
        %v3023 = vpop.trf.xlu0
        %v3024 = vpop.trf.xlu0
        %v3025 = vpop.trf.xlu0
        %3026 = vxpose.xlu0.c.b16.start [1/8] %v2553, 128
        %3027 = vxpose.xlu0.c.b16.cont [2/8] 0, 128
        %3028 = vxpose.xlu0.c.b16.cont [3/8] 0, 128
        %3029 = vxpose.xlu0.c.b16.cont [4/8] 0, 128
        %3030 = vxpose.xlu0.c.b16.cont [5/8] 0, 128
        %3031 = vxpose.xlu0.c.b16.cont [6/8] 0, 128
        %3032 = vxpose.xlu0.c.b16.cont [7/8] 0, 128
        %3033 = vxpose.xlu0.c.b16.end [8/8] 0, 128
        %v3034 = vpop.trf.xlu0
        %v3035 = vpop.trf.xlu0
        %v3036 = vpop.trf.xlu0
        %v3037 = vpop.trf.xlu0
        %v3038 = vpop.trf.xlu0
        %v3039 = vpop.trf.xlu0
        %v3040 = vpop.trf.xlu0
        %v3041 = vpop.trf.xlu0
        %3042 = vxpose.xlu0.c.b16.start [1/8] %v2505, 128
        %3043 = vxpose.xlu0.c.b16.cont [2/8] 0, 128
        %3044 = vxpose.xlu0.c.b16.cont [3/8] 0, 128
        %3045 = vxpose.xlu0.c.b16.cont [4/8] 0, 128
        %3046 = vxpose.xlu0.c.b16.cont [5/8] 0, 128
        %3047 = vxpose.xlu0.c.b16.cont [6/8] 0, 128
        %3048 = vxpose.xlu0.c.b16.cont [7/8] 0, 128
        %3049 = vxpose.xlu0.c.b16.end [8/8] 0, 128
        %v3050 = vpop.trf.xlu0
        %v3051 = vpop.trf.xlu0
        %v3052 = vpop.trf.xlu0
        %v3053 = vpop.trf.xlu0
        %v3054 = vpop.trf.xlu0
        %v3055 = vpop.trf.xlu0
        %v3056 = vpop.trf.xlu0
        %v3057 = vpop.trf.xlu0
        %3058 = vxpose.xlu0.c.b16.start [1/8] %v2561, 128
        %3059 = vxpose.xlu0.c.b16.cont [2/8] 0, 128
        %3060 = vxpose.xlu0.c.b16.cont [3/8] 0, 128
        %3061 = vxpose.xlu0.c.b16.cont [4/8] 0, 128
        %3062 = vxpose.xlu0.c.b16.cont [5/8] 0, 128
        %3063 = vxpose.xlu0.c.b16.cont [6/8] 0, 128
        %3064 = vxpose.xlu0.c.b16.cont [7/8] 0, 128
        %3065 = vxpose.xlu0.c.b16.end [8/8] 0, 128
        %v3066 = vpop.trf.xlu0
        %v3067 = vpop.trf.xlu0
        %v3068 = vpop.trf.xlu0
        %v3069 = vpop.trf.xlu0
        %v3070 = vpop.trf.xlu0
        %v3071 = vpop.trf.xlu0
        %v3072 = vpop.trf.xlu0
        %v3073 = vpop.trf.xlu0
        %v3074 = vrot.slane %v2634, 4
        %v3075 = vsel %vm852, %v3074, %v2570
        %v3077 = vunpack.c.l.s4 1983009808
        %v3078 = vunpack.c.0.s8 %v3077
        %v3079 = vperm.slane %v3075, %v3078
        %v3080 = vrot.slane %v2666, 4
        %v3081 = vsel %vm852, %v3080, %v2602
        %v3083 = vunpack.c.l.s4 1983009808
        %v3084 = vunpack.c.0.s8 %v3083
        %v3085 = vperm.slane %v3081, %v3084
        %v3086 = vrot.slane %v2762, 4
        %v3087 = vsel %vm852, %v3086, %v2698
        %v3089 = vunpack.c.l.s4 1983009808
        %v3090 = vunpack.c.0.s8 %v3089
        %v3091 = vperm.slane %v3087, %v3090
        %v3092 = vrot.slane %v2794, 4
        %v3093 = vsel %vm852, %v3092, %v2730
        %v3095 = vunpack.c.l.s4 1983009808
        %v3096 = vunpack.c.0.s8 %v3095
        %v3097 = vperm.slane %v3093, %v3096
        %v3098 = vrot.slane %v3085, 4
        %v3099 = vsel %vm852, %v3098, %v3079
        %v3101 = vunpack.c.l.s4 1934713408
        %v3102 = vunpack.c.0.s8 %v3101
        %v3103 = vperm.slane %v3099, %v3102
        %v3104 = vrot.slane %v3097, 4
        %v3105 = vsel %vm852, %v3104, %v3091
        %v3107 = vunpack.c.l.s4 1934713408
        %v3108 = vunpack.c.0.s8 %v3107
        %v3109 = vperm.slane %v3105, %v3108
        %v3110 = vrot.slane %v3109, 4
        %v3111 = vsel %vm852, %v3110, %v3103
        %v3112 = vrot.slane %v3103, 4
        %v3113 = vsel %vm852, %v3109, %v3112
        %v3114 = vrot.slane %v2650, 4
        %v3115 = vsel %vm852, %v3114, %v2586
        %v3117 = vunpack.c.l.s4 1983009808
        %v3118 = vunpack.c.0.s8 %v3117
        %v3119 = vperm.slane %v3115, %v3118
        %v3120 = vrot.slane %v2682, 4
        %v3121 = vsel %vm852, %v3120, %v2618
        %v3123 = vunpack.c.l.s4 1983009808
        %v3124 = vunpack.c.0.s8 %v3123
        %v3125 = vperm.slane %v3121, %v3124
        %v3126 = vrot.slane %v2778, 4
        %v3127 = vsel %vm852, %v3126, %v2714
        %v3129 = vunpack.c.l.s4 1983009808
        %v3130 = vunpack.c.0.s8 %v3129
        %v3131 = vperm.slane %v3127, %v3130
        %v3132 = vrot.slane %v2810, 4
        %v3133 = vsel %vm852, %v3132, %v2746
        %v3135 = vunpack.c.l.s4 1983009808
        %v3136 = vunpack.c.0.s8 %v3135
        %v3137 = vperm.slane %v3133, %v3136
        %v3138 = vrot.slane %v3125, 4
        %v3139 = vsel %vm852, %v3138, %v3119
        %v3141 = vunpack.c.l.s4 1934713408
        %v3142 = vunpack.c.0.s8 %v3141
        %v3143 = vperm.slane %v3139, %v3142
        %v3144 = vrot.slane %v3137, 4
        %v3145 = vsel %vm852, %v3144, %v3131
        %v3147 = vunpack.c.l.s4 1934713408
        %v3148 = vunpack.c.0.s8 %v3147
        %v3149 = vperm.slane %v3145, %v3148
        %v3150 = vrot.slane %v3149, 4
        %v3151 = vsel %vm852, %v3150, %v3143
        %v3152 = vrot.slane %v3143, 4
        %v3153 = vsel %vm852, %v3149, %v3152
        %v3154 = vrot.slane %v2890, 4
        %v3155 = vsel %vm852, %v3154, %v2826
        %v3157 = vunpack.c.l.s4 1983009808
        %v3158 = vunpack.c.0.s8 %v3157
        %v3159 = vperm.slane %v3155, %v3158
        %v3160 = vrot.slane %v2922, 4
        %v3161 = vsel %vm852, %v3160, %v2858
        %v3163 = vunpack.c.l.s4 1983009808
        %v3164 = vunpack.c.0.s8 %v3163
        %v3165 = vperm.slane %v3161, %v3164
        %v3166 = vrot.slane %v3018, 4
        %v3167 = vsel %vm852, %v3166, %v2954
        %v3169 = vunpack.c.l.s4 1983009808
        %v3170 = vunpack.c.0.s8 %v3169
        %v3171 = vperm.slane %v3167, %v3170
        %v3172 = vrot.slane %v3050, 4
        %v3173 = vsel %vm852, %v3172, %v2986
        %v3175 = vunpack.c.l.s4 1983009808
        %v3176 = vunpack.c.0.s8 %v3175
        %v3177 = vperm.slane %v3173, %v3176
        %v3178 = vrot.slane %v3165, 4
        %v3179 = vsel %vm852, %v3178, %v3159
        %v3181 = vunpack.c.l.s4 1934713408
        %v3182 = vunpack.c.0.s8 %v3181
        %v3183 = vperm.slane %v3179, %v3182
        %v3184 = vrot.slane %v3177, 4
        %v3185 = vsel %vm852, %v3184, %v3171
        %v3187 = vunpack.c.l.s4 1934713408
        %v3188 = vunpack.c.0.s8 %v3187
        %v3189 = vperm.slane %v3185, %v3188
        %v3190 = vrot.slane %v3189, 4
        %v3191 = vsel %vm852, %v3190, %v3183
        %v3192 = vrot.slane %v3183, 4
        %v3193 = vsel %vm852, %v3189, %v3192
        %v3194 = vrot.slane %v2906, 4
        %v3195 = vsel %vm852, %v3194, %v2842
        %v3197 = vunpack.c.l.s4 1983009808
        %v3198 = vunpack.c.0.s8 %v3197
        %v3199 = vperm.slane %v3195, %v3198
        %v3200 = vrot.slane %v2938, 4
        %v3201 = vsel %vm852, %v3200, %v2874
        %v3203 = vunpack.c.l.s4 1983009808
        %v3204 = vunpack.c.0.s8 %v3203
        %v3205 = vperm.slane %v3201, %v3204
        %v3206 = vrot.slane %v3034, 4
        %v3207 = vsel %vm852, %v3206, %v2970
        %v3209 = vunpack.c.l.s4 1983009808
        %v3210 = vunpack.c.0.s8 %v3209
        %v3211 = vperm.slane %v3207, %v3210
        %v3212 = vrot.slane %v3066, 4
        %v3213 = vsel %vm852, %v3212, %v3002
        %v3215 = vunpack.c.l.s4 1983009808
        %v3216 = vunpack.c.0.s8 %v3215
        %v3217 = vperm.slane %v3213, %v3216
        %v3218 = vrot.slane %v3205, 4
        %v3219 = vsel %vm852, %v3218, %v3199
        %v3221 = vunpack.c.l.s4 1934713408
        %v3222 = vunpack.c.0.s8 %v3221
        %v3223 = vperm.slane %v3219, %v3222
        %v3224 = vrot.slane %v3217, 4
        %v3225 = vsel %vm852, %v3224, %v3211
        %v3227 = vunpack.c.l.s4 1934713408
        %v3228 = vunpack.c.0.s8 %v3227
        %v3229 = vperm.slane %v3225, %v3228
        %v3230 = vrot.slane %v3229, 4
        %v3231 = vsel %vm852, %v3230, %v3223
        %v3232 = vrot.slane %v3223, 4
        %v3233 = vsel %vm852, %v3229, %v3232
        %v3236 = vpack.i.b16 %v3151, %v3111
        %v3237 = vshrl.u32 %v3111, 16
        %v3238 = vshrl.u32 %v3151, 16
        %v3239 = vpack.i.b16 %v3238, %v3237
        %v3242 = vpack.i.b16 %v3153, %v3113
        %v3243 = vshrl.u32 %v3113, 16
        %v3244 = vshrl.u32 %v3153, 16
        %v3245 = vpack.i.b16 %v3244, %v3243
        %v3248 = vpack.i.b16 %v3231, %v3191
        %v3249 = vshrl.u32 %v3191, 16
        %v3250 = vshrl.u32 %v3231, 16
        %v3251 = vpack.i.b16 %v3250, %v3249
        %v3254 = vpack.i.b16 %v3233, %v3193
        %v3255 = vshrl.u32 %v3193, 16
        %v3256 = vshrl.u32 %v3233, 16
        %v3257 = vpack.i.b16 %v3256, %v3255
        %v3259 = vsel %vm2089, %v3236, 0
        %v3262 = vsel %vm2089, %v3248, 0
        %v3265 = vsel %vm2089, %v2134, 0
        %3267 = vmatpush.bf16.xpose.msra.mxu0 0
        %3268 = vmatpush.bf16.xpose.msra.mxu0 0
        %3269 = vmatpush.bf16.xpose.msra.mxu0 0
        %3270 = vmatpush.bf16.xpose.msra.mxu0 0
        %3271 = vmatpush.bf16.xpose.msra.mxu0 0
        %3272 = vmatpush.bf16.xpose.msra.mxu0 0
        %3273 = vmatpush.bf16.xpose.msra.mxu0 0
        %3274 = vmatpush.bf16.xpose.msra.mxu0 %v3265
        %3275 = vmatmul.bf16.gmra.mxu0 %v3259
        %v3276 = vpop.f32.mrf.mxu0
        %v3277 = vadd.f32 0.0, %v3276
        %v3278 = vpop.f32.mrf.mxu0
        %v3279 = vadd.f32 0.0, %v3278
        %3280 = vmatmul.bf16.gmra.mxu0 %v3262
        %v3281 = vpop.f32.mrf.mxu0
        %v3282 = vadd.f32 0.0, %v3281
        %v3283 = vpop.f32.mrf.mxu0
        %v3284 = vadd.f32 0.0, %v3283
        %3285 = vdwg.mxu0
        %v3287 = vsel %vm2089, %v3239, 0
        %v3290 = vsel %vm2089, %v3251, 0
        %v3293 = vsel %vm2089, %v2135, 0
        %3295 = vmatpush.bf16.xpose.msra.mxu0 0
        %3296 = vmatpush.bf16.xpose.msra.mxu0 0
        %3297 = vmatpush.bf16.xpose.msra.mxu0 0
        %3298 = vmatpush.bf16.xpose.msra.mxu0 0
        %3299 = vmatpush.bf16.xpose.msra.mxu0 0
        %3300 = vmatpush.bf16.xpose.msra.mxu0 0
        %3301 = vmatpush.bf16.xpose.msra.mxu0 0
        %3302 = vmatpush.bf16.xpose.msra.mxu0 %v3293
        %3303 = vmatmul.bf16.gmra.mxu0 %v3287
        %v3304 = vpop.f32.mrf.mxu0
        %v3305 = vadd.f32 0.0, %v3304
        %v3306 = vpop.f32.mrf.mxu0
        %v3307 = vadd.f32 0.0, %v3306
        %3308 = vmatmul.bf16.gmra.mxu0 %v3290
        %v3309 = vpop.f32.mrf.mxu0
        %v3310 = vadd.f32 0.0, %v3309
        %v3311 = vpop.f32.mrf.mxu0
        %v3312 = vadd.f32 0.0, %v3311
        %3313 = vdwg.mxu0
        %v3315 = vsel %vm2089, %v3242, 0
        %v3318 = vsel %vm2089, %v3254, 0
        %v3321 = vsel %vm2089, %v2136, 0
        %3323 = vmatpush.bf16.xpose.msra.mxu0 0
        %3324 = vmatpush.bf16.xpose.msra.mxu0 0
        %3325 = vmatpush.bf16.xpose.msra.mxu0 0
        %3326 = vmatpush.bf16.xpose.msra.mxu0 0
        %3327 = vmatpush.bf16.xpose.msra.mxu0 0
        %3328 = vmatpush.bf16.xpose.msra.mxu0 0
        %3329 = vmatpush.bf16.xpose.msra.mxu0 0
        %3330 = vmatpush.bf16.xpose.msra.mxu0 %v3321
        %3331 = vmatmul.bf16.gmra.mxu0 %v3315
        %v3332 = vpop.f32.mrf.mxu0
        %v3333 = vadd.f32 0.0, %v3332
        %v3334 = vpop.f32.mrf.mxu0
        %v3335 = vadd.f32 0.0, %v3334
        %3336 = vmatmul.bf16.gmra.mxu0 %v3318
        %v3337 = vpop.f32.mrf.mxu0
        %v3338 = vadd.f32 0.0, %v3337
        %v3339 = vpop.f32.mrf.mxu0
        %v3340 = vadd.f32 0.0, %v3339
        %3341 = vdwg.mxu0
        %v3343 = vsel %vm2089, %v3245, 0
        %v3346 = vsel %vm2089, %v3257, 0
        %v3349 = vsel %vm2089, %v2137, 0
        %3351 = vmatpush.bf16.xpose.msra.mxu0 0
        %3352 = vmatpush.bf16.xpose.msra.mxu0 0
        %3353 = vmatpush.bf16.xpose.msra.mxu0 0
        %3354 = vmatpush.bf16.xpose.msra.mxu0 0
        %3355 = vmatpush.bf16.xpose.msra.mxu0 0
        %3356 = vmatpush.bf16.xpose.msra.mxu0 0
        %3357 = vmatpush.bf16.xpose.msra.mxu0 0
        %3358 = vmatpush.bf16.xpose.msra.mxu0 %v3349
        %3359 = vmatmul.bf16.gmra.mxu0 %v3343
        %v3360 = vpop.f32.mrf.mxu0
        %v3361 = vadd.f32 0.0, %v3360
        %v3362 = vpop.f32.mrf.mxu0
        %v3363 = vadd.f32 0.0, %v3362
        %3364 = vmatmul.bf16.gmra.mxu0 %v3346
        %v3365 = vpop.f32.mrf.mxu0
        %v3366 = vadd.f32 0.0, %v3365
        %v3367 = vpop.f32.mrf.mxu0
        %v3368 = vadd.f32 0.0, %v3367
        %3369 = vdwg.mxu0
        %3370 = vxpose.xlu0.b32.start [1/16] %v3277, 128
        %3371 = vxpose.xlu0.b32.cont [2/16] %v3279, 128
        %3372 = vxpose.xlu0.b32.cont [3/16] %v3282, 128
        %3373 = vxpose.xlu0.b32.cont [4/16] %v3284, 128
        %3374 = vxpose.xlu0.b32.cont [5/16] 0.0, 128
        %3375 = vxpose.xlu0.b32.cont [6/16] 0.0, 128
        %3376 = vxpose.xlu0.b32.cont [7/16] 0.0, 128
        %3377 = vxpose.xlu0.b32.cont [8/16] 0.0, 128
        %3378 = vxpose.xlu0.b32.cont [9/16] 0.0, 128
        %3379 = vxpose.xlu0.b32.cont [10/16] 0.0, 128
        %3380 = vxpose.xlu0.b32.cont [11/16] 0.0, 128
        %3381 = vxpose.xlu0.b32.cont [12/16] 0.0, 128
        %3382 = vxpose.xlu0.b32.cont [13/16] 0.0, 128
        %3383 = vxpose.xlu0.b32.cont [14/16] 0.0, 128
        %3384 = vxpose.xlu0.b32.cont [15/16] 0.0, 128
        %3385 = vxpose.xlu0.b32.end [16/16] 0.0, 128
        %v3386 = vpop.trf.xlu0
        %v3387 = vpop.trf.xlu0
        %v3388 = vpop.trf.xlu0
        %v3389 = vpop.trf.xlu0
        %v3390 = vpop.trf.xlu0
        %v3391 = vpop.trf.xlu0
        %v3392 = vpop.trf.xlu0
        %v3393 = vpop.trf.xlu0
        %v3394 = vpop.trf.xlu0
        %v3395 = vpop.trf.xlu0
        %v3396 = vpop.trf.xlu0
        %v3397 = vpop.trf.xlu0
        %v3398 = vpop.trf.xlu0
        %v3399 = vpop.trf.xlu0
        %v3400 = vpop.trf.xlu0
        %v3401 = vpop.trf.xlu0
        %3402 = vxpose.xlu0.b32.start [1/16] %v3305, 128
        %3403 = vxpose.xlu0.b32.cont [2/16] %v3307, 128
        %3404 = vxpose.xlu0.b32.cont [3/16] %v3310, 128
        %3405 = vxpose.xlu0.b32.cont [4/16] %v3312, 128
        %3406 = vxpose.xlu0.b32.cont [5/16] 0.0, 128
        %3407 = vxpose.xlu0.b32.cont [6/16] 0.0, 128
        %3408 = vxpose.xlu0.b32.cont [7/16] 0.0, 128
        %3409 = vxpose.xlu0.b32.cont [8/16] 0.0, 128
        %3410 = vxpose.xlu0.b32.cont [9/16] 0.0, 128
        %3411 = vxpose.xlu0.b32.cont [10/16] 0.0, 128
        %3412 = vxpose.xlu0.b32.cont [11/16] 0.0, 128
        %3413 = vxpose.xlu0.b32.cont [12/16] 0.0, 128
        %3414 = vxpose.xlu0.b32.cont [13/16] 0.0, 128
        %3415 = vxpose.xlu0.b32.cont [14/16] 0.0, 128
        %3416 = vxpose.xlu0.b32.cont [15/16] 0.0, 128
        %3417 = vxpose.xlu0.b32.end [16/16] 0.0, 128
        %v3418 = vpop.trf.xlu0
        %v3419 = vpop.trf.xlu0
        %v3420 = vpop.trf.xlu0
        %v3421 = vpop.trf.xlu0
        %v3422 = vpop.trf.xlu0
        %v3423 = vpop.trf.xlu0
        %v3424 = vpop.trf.xlu0
        %v3425 = vpop.trf.xlu0
        %v3426 = vpop.trf.xlu0
        %v3427 = vpop.trf.xlu0
        %v3428 = vpop.trf.xlu0
        %v3429 = vpop.trf.xlu0
        %v3430 = vpop.trf.xlu0
        %v3431 = vpop.trf.xlu0
        %v3432 = vpop.trf.xlu0
        %v3433 = vpop.trf.xlu0
        %3434 = vxpose.xlu0.b32.start [1/16] %v3333, 128
        %3435 = vxpose.xlu0.b32.cont [2/16] %v3335, 128
        %3436 = vxpose.xlu0.b32.cont [3/16] %v3338, 128
        %3437 = vxpose.xlu0.b32.cont [4/16] %v3340, 128
        %3438 = vxpose.xlu0.b32.cont [5/16] 0.0, 128
        %3439 = vxpose.xlu0.b32.cont [6/16] 0.0, 128
        %3440 = vxpose.xlu0.b32.cont [7/16] 0.0, 128
        %3441 = vxpose.xlu0.b32.cont [8/16] 0.0, 128
        %3442 = vxpose.xlu0.b32.cont [9/16] 0.0, 128
        %3443 = vxpose.xlu0.b32.cont [10/16] 0.0, 128
        %3444 = vxpose.xlu0.b32.cont [11/16] 0.0, 128
        %3445 = vxpose.xlu0.b32.cont [12/16] 0.0, 128
        %3446 = vxpose.xlu0.b32.cont [13/16] 0.0, 128
        %3447 = vxpose.xlu0.b32.cont [14/16] 0.0, 128
        %3448 = vxpose.xlu0.b32.cont [15/16] 0.0, 128
        %3449 = vxpose.xlu0.b32.end [16/16] 0.0, 128
        %v3450 = vpop.trf.xlu0
        %v3451 = vpop.trf.xlu0
        %v3452 = vpop.trf.xlu0
        %v3453 = vpop.trf.xlu0
        %v3454 = vpop.trf.xlu0
        %v3455 = vpop.trf.xlu0
        %v3456 = vpop.trf.xlu0
        %v3457 = vpop.trf.xlu0
        %v3458 = vpop.trf.xlu0
        %v3459 = vpop.trf.xlu0
        %v3460 = vpop.trf.xlu0
        %v3461 = vpop.trf.xlu0
        %v3462 = vpop.trf.xlu0
        %v3463 = vpop.trf.xlu0
        %v3464 = vpop.trf.xlu0
        %v3465 = vpop.trf.xlu0
        %3466 = vxpose.xlu0.b32.start [1/16] %v3361, 128
        %3467 = vxpose.xlu0.b32.cont [2/16] %v3363, 128
        %3468 = vxpose.xlu0.b32.cont [3/16] %v3366, 128
        %3469 = vxpose.xlu0.b32.cont [4/16] %v3368, 128
        %3470 = vxpose.xlu0.b32.cont [5/16] 0.0, 128
        %3471 = vxpose.xlu0.b32.cont [6/16] 0.0, 128
        %3472 = vxpose.xlu0.b32.cont [7/16] 0.0, 128
        %3473 = vxpose.xlu0.b32.cont [8/16] 0.0, 128
        %3474 = vxpose.xlu0.b32.cont [9/16] 0.0, 128
        %3475 = vxpose.xlu0.b32.cont [10/16] 0.0, 128
        %3476 = vxpose.xlu0.b32.cont [11/16] 0.0, 128
        %3477 = vxpose.xlu0.b32.cont [12/16] 0.0, 128
        %3478 = vxpose.xlu0.b32.cont [13/16] 0.0, 128
        %3479 = vxpose.xlu0.b32.cont [14/16] 0.0, 128
        %3480 = vxpose.xlu0.b32.cont [15/16] 0.0, 128
        %3481 = vxpose.xlu0.b32.end [16/16] 0.0, 128
        %v3482 = vpop.trf.xlu0
        %v3483 = vpop.trf.xlu0
        %v3484 = vpop.trf.xlu0
        %v3485 = vpop.trf.xlu0
        %v3486 = vpop.trf.xlu0
        %v3487 = vpop.trf.xlu0
        %v3488 = vpop.trf.xlu0
        %v3489 = vpop.trf.xlu0
        %v3490 = vpop.trf.xlu0
        %v3491 = vpop.trf.xlu0
        %v3492 = vpop.trf.xlu0
        %v3493 = vpop.trf.xlu0
        %v3494 = vpop.trf.xlu0
        %v3495 = vpop.trf.xlu0
        %v3496 = vpop.trf.xlu0
        %v3497 = vpop.trf.xlu0
        %v3498 = vrot.slane %v3450, 4
        %v3499 = vsel %vm647, %v3498, %v3386
        %v3500 = vrot.slane %v3386, 4
        %v3501 = vsel %vm647, %v3450, %v3500
        %v3503 = vunpack.c.l.s4 1983009808
        %v3504 = vunpack.c.0.s8 %v3503
        %v3505 = vperm.slane %v3499, %v3504
        %v3507 = vunpack.c.l.s4 1983009808
        %v3508 = vunpack.c.0.s8 %v3507
        %v3509 = vperm.slane %v3501, %v3508
        %v3510 = vrot.slane %v3482, 4
        %v3511 = vsel %vm647, %v3510, %v3418
        %v3512 = vrot.slane %v3418, 4
        %v3513 = vsel %vm647, %v3482, %v3512
        %v3515 = vunpack.c.l.s4 1983009808
        %v3516 = vunpack.c.0.s8 %v3515
        %v3517 = vperm.slane %v3511, %v3516
        %v3519 = vunpack.c.l.s4 1983009808
        %v3520 = vunpack.c.0.s8 %v3519
        %v3521 = vperm.slane %v3513, %v3520
        %v3522 = vrot.slane %v3517, 4
        %v3523 = vsel %vm647, %v3522, %v3505
        %v3524 = vrot.slane %v3505, 4
        %v3525 = vsel %vm647, %v3517, %v3524
        %v3527 = vunpack.c.l.s4 1934713408
        %v3528 = vunpack.c.0.s8 %v3527
        %v3529 = vperm.slane %v3523, %v3528
        %v3531 = vunpack.c.l.s4 1934713408
        %v3532 = vunpack.c.0.s8 %v3531
        %v3533 = vperm.slane %v3525, %v3532
        %v3534 = vrot.slane %v3521, 4
        %v3535 = vsel %vm647, %v3534, %v3509
        %v3536 = vrot.slane %v3509, 4
        %v3537 = vsel %vm647, %v3521, %v3536
        %v3539 = vunpack.c.l.s4 1934713408
        %v3540 = vunpack.c.0.s8 %v3539
        %v3541 = vperm.slane %v3535, %v3540
        %v3543 = vunpack.c.l.s4 1934713408
        %v3544 = vunpack.c.0.s8 %v3543
        %v3545 = vperm.slane %v3537, %v3544
        %v3546 = vrot.slane %v3529, 4
        %v3547 = vsel %vm647, 0.0, %v3546
        %v3548 = vrot.slane %v3533, 4
        %v3549 = vsel %vm647, 0.0, %v3548
        %v3550 = vrot.slane %v3541, 4
        %v3551 = vsel %vm647, 0.0, %v3550
        %v3552 = vrot.slane %v3545, 4
        %v3553 = vsel %vm647, 0.0, %v3552
        %v3554 = vsel %vm647, %v3548, %v3529
        %v3556 = vunpack.c.l.s4 1983009808
        %v3557 = vunpack.c.0.s8 %v3556
        %v3558 = vperm.slane %v3554, %v3557
        %v3559 = vrot.slane %v3549, 4
        %v3560 = vsel %vm647, %v3559, %v3547
        %v3562 = vunpack.c.l.s4 1983009808
        %v3563 = vunpack.c.0.s8 %v3562
        %v3564 = vperm.slane %v3560, %v3563
        %v3565 = vsel %vm647, %v3552, %v3541
        %v3567 = vunpack.c.l.s4 1983009808
        %v3568 = vunpack.c.0.s8 %v3567
        %v3569 = vperm.slane %v3565, %v3568
        %v3570 = vrot.slane %v3553, 4
        %v3571 = vsel %vm647, %v3570, %v3551
        %v3573 = vunpack.c.l.s4 1983009808
        %v3574 = vunpack.c.0.s8 %v3573
        %v3575 = vperm.slane %v3571, %v3574
        %v3576 = vrot.slane %v3564, 4
        %v3577 = vsel %vm647, %v3576, %v3558
        %v3578 = vrot.slane %v3558, 4
        %v3579 = vsel %vm647, %v3564, %v3578
        %v3581 = vunpack.c.l.s4 1934713408
        %v3582 = vunpack.c.0.s8 %v3581
        %v3583 = vperm.slane %v3577, %v3582
        %v3585 = vunpack.c.l.s4 1934713408
        %v3586 = vunpack.c.0.s8 %v3585
        %v3587 = vperm.slane %v3579, %v3586
        %v3588 = vrot.slane %v3575, 4
        %v3589 = vsel %vm647, %v3588, %v3569
        %v3590 = vrot.slane %v3569, 4
        %v3591 = vsel %vm647, %v3575, %v3590
        %v3593 = vunpack.c.l.s4 1934713408
        %v3594 = vunpack.c.0.s8 %v3593
        %v3595 = vperm.slane %v3589, %v3594
        %v3597 = vunpack.c.l.s4 1934713408
        %v3598 = vunpack.c.0.s8 %v3597
        %v3599 = vperm.slane %v3591, %v3598
        %v3600 = vrot.slane %v3595, 4
        %v3601 = vsel %vm647, %v3600, %v3583
        %v3602 = vrot.slane %v3583, 4
        %v3603 = vsel %vm647, %v3595, %v3602
        %v3604 = vrot.slane %v3599, 4
        %v3605 = vsel %vm647, %v3604, %v3587
        %v3606 = vrot.slane %v3587, 4
        %v3607 = vsel %vm647, %v3599, %v3606
        %3609 = vrot.lane.b32.xlu0 %v3603, 32
        %v3610 = vpop.permute.xlu0 %3609
        %3613 = vrot.lane.b32.xlu0 %v3605, 64
        %v3614 = vpop.permute.xlu0 %3613
        %3617 = vrot.lane.b32.xlu0 %v3607, 96
        %v3618 = vpop.permute.xlu0 %3617
        %v3620 = vsel %vm2024, %v3601, %v3610
        %vm3621 = vcmask 523264
        %v3622 = vsel %vm3621, %v3620, %v3614
        %vm3623 = vcmask 785408
        %v3624 = vsel %vm3623, %v3622, %v3618
        %v3625 = vpack.c.bf16 %v3624, %v3624
        %v3626 = vld [vmem:[#allocation6] sm:$0xf]
        %v3627 = vld [vmem:[#allocation6 + $0x4] sm:$0xf]
        %v3628 = vld [vmem:[#allocation6 + $0x8] sm:$0xf]
        %v3629 = vld [vmem:[#allocation6 + $0xc] sm:$0xf]
        %v3630 = vld [vmem:[#allocation6 + $0x10] sm:$0xf]
        %v3631 = vld [vmem:[#allocation6 + $0x14] sm:$0xf]
        %v3632 = vld [vmem:[#allocation6 + $0x18] sm:$0xf]
        %v3633 = vld [vmem:[#allocation6 + $0x1c] sm:$0xf]
        %v3634 = vld [vmem:[#allocation6 + $0x20] sm:$0xf]
        %v3635 = vld [vmem:[#allocation6 + $0x24] sm:$0xf]
        %v3636 = vld [vmem:[#allocation6 + $0x28] sm:$0xf]
        %v3637 = vld [vmem:[#allocation6 + $0x2c] sm:$0xf]
        %v3638 = vld [vmem:[#allocation6 + $0x30] sm:$0xf]
        %v3639 = vld [vmem:[#allocation6 + $0x34] sm:$0xf]
        %v3640 = vld [vmem:[#allocation6 + $0x38] sm:$0xf]
        %v3641 = vld [vmem:[#allocation6 + $0x3c] sm:$0xf]
        %v3642 = vld [vmem:[%s7] sm:$0x1]
        %v3644 = vperm.slane %v3642, 0
        %v3662 = vunpack.c.l.b16 %v3626
        %v3663 = vunpack.c.l.b16 %v3627
        %v3664 = vunpack.c.l.b16 %v3628
        %v3665 = vunpack.c.l.b16 %v3629
        %v3666 = vunpack.c.l.b16 %v3630
        %v3667 = vunpack.c.l.b16 %v3631
        %v3668 = vunpack.c.l.b16 %v3632
        %v3669 = vunpack.c.l.b16 %v3633
        %v3670 = vunpack.c.l.b16 %v3634
        %v3671 = vunpack.c.l.b16 %v3635
        %v3672 = vunpack.c.l.b16 %v3636
        %v3673 = vunpack.c.l.b16 %v3637
        %v3674 = vunpack.c.l.b16 %v3638
        %v3675 = vunpack.c.l.b16 %v3639
        %v3676 = vunpack.c.l.b16 %v3640
        %v3677 = vunpack.c.l.b16 %v3641
        %v3678 = vpack.c.b16 %v3663, %v3662
        %v3679 = vpack.c.b16 %v3665, %v3664
        %v3680 = vpack.c.b16 %v3667, %v3666
        %v3681 = vpack.c.b16 %v3669, %v3668
        %v3682 = vpack.c.b16 %v3671, %v3670
        %v3683 = vpack.c.b16 %v3673, %v3672
        %v3684 = vpack.c.b16 %v3675, %v3674
        %v3685 = vpack.c.b16 %v3677, %v3676
        %3694 = vmatpush.bf16.msra.mxu0 %v3685
        %3695 = vmatpush.bf16.msra.mxu0 %v3684
        %3696 = vmatpush.bf16.msra.mxu0 %v3683
        %3697 = vmatpush.bf16.msra.mxu0 %v3682
        %3698 = vmatpush.bf16.msra.mxu0 %v3681
        %3699 = vmatpush.bf16.msra.mxu0 %v3680
        %3700 = vmatpush.bf16.msra.mxu0 %v3679
        %3701 = vmatpush.bf16.msra.mxu0 %v3678
        %3702 = vmatmul.bf16.gmra.mxu0 %v3625
        %v3703 = vpop.f32.mrf.mxu0
        %v3704 = vadd.f32 %v3644, %v3703
        %v3705 = vpop.f32.mrf.mxu0
        %3706 = vdwg.mxu0
        %v3707 = vadd.f32 %v3704, %v423
        %v3708 = vld [vmem:[%s8] sm:$0x1]
        %v3709 = vld [vmem:[%s9] sm:$0x1]
        %3710 = vadd.xlane.f32.xlu0 %v3707
        %v3711 = vpop.xlane.xlu0 %3710
        %v3712 = vrcp.pop 128.0
        %v3713 = vmul.f32 128.0, %v3712
        %v3714 = vsub.f32 1.0, %v3713
        %v3715 = vmul.f32 %v3712, %v3714
        %v3716 = vadd.f32 %v3712, %v3715
        %vm3717 = vweird.f32 %v3712
        %v3718 = vsel %vm3717, %v3712, %v3716
        %v3719 = vmul.f32 %v3711, %v3718
        %v3720 = vsub.f32 %v3707, %v3719
        %v3721 = vmul.f32 %v3720, %v3720
        %3722 = vadd.xlane.f32.xlu0 %v3721
        %v3723 = vpop.xlane.xlu0 %3722
        %v3724 = vmul.f32 %v3723, %v3718
        %v3725 = vadd.f32 %v3724, 1e-05
        %v3726 = vrsqrt.pop %v3725
        %v3727 = vmul.f32 %v3726, %v3725
        %v3728 = vmul.f32 %v3727, %v3726
        %v3729 = vmul.f32 0.5, %v3728
        %v3730 = vsub.f32 1.5, %v3729
        %v3731 = vmul.f32 %v3726, %v3730
        %vm3732 = vweird.f32 %v3725
        %vm3733 = vweird.f32 %v3726
        %vm3734 = vmor %vm3732, %vm3733
        %v3735 = vsel %vm3734, %v3726, %v3731
        %v3736 = vmul.f32 %v3720, %v3735
        %v3738 = vperm.slane %v3708, 0
        %v3740 = vmul.f32 %v3736, %v3738
        %v3742 = vperm.slane %v3709, 0
        %v3744 = vadd.f32 %v3740, %v3742
        %3745 = vst [vmem:[%s421] sm:$0xff] %v3744
        %p3746 = scmp.lt.s32.totalorder %s23, 1
        %s3747 = scalar_select %p3746, %s23, 1
        %s3748 = smul.addr %s3747, 8
        %s3749 = scalar_lea.vmem %s10, %s3748
        // Predicated region
        $region73: #{audio_transformer_enc_dec.11} parent=59 // pred_check
          %p3750 = pneg %p261
        $region74: #{audio_transformer_enc_dec.11} parent=59 // pred_check_branch
          %3752 = sbr.rel (%p3750) target = $region76
        $region75: #{audio_transformer_enc_dec.11} parent=59 // pred_region
          _
        $region76: #{audio_transformer_enc_dec.11} parent=59 // pred_fallthru
          _
      $region60: #{audio_transformer_enc_dec.11} parent=5 // pred_fallthru
        _
      %p3753 = scmp.le.s32.totalorder 2, %s18
      // Predicated region
      $region77: #{audio_transformer_enc_dec.11} parent=5 // pred_check
        %p3754 = pneg %p3753
      $region78: #{audio_transformer_enc_dec.11} parent=5 // pred_check_branch
        %3756 = sbr.rel (%p3754) target = $region80
      $region79: #{audio_transformer_enc_dec.11} parent=5 // pred_region
        %s3757 = ssub.s32 %s18, 2
        // Predicated region
        $region81: #{audio_transformer_enc_dec.11} parent=79 // pred_check
          %p3758 = pneg %p267
        $region82: #{audio_transformer_enc_dec.11} parent=79 // pred_check_branch
          %3760 = sbr.rel (%p3758) target = $region84
        $region83: #{audio_transformer_enc_dec.11} parent=79 // pred_region
          %p3761 = scmp.lt.s32.totalorder %s24, 1
          %s3762 = scalar_select %p3761, %s24, 1
          %s3763 = smul.addr %s3762, 8
          %s3764 = scalar_lea.vmem %s10, %s3763
        $region84: #{audio_transformer_enc_dec.11} parent=79 // pred_fallthru
          _
      $region80: #{audio_transformer_enc_dec.11} parent=5 // pred_fallthru
        _
    $region6: #{audio_transformer_enc_dec.11} parent=1 // loop_footer
      %s22 = sadd.s32 1, %s18
    $region7: #{audio_transformer_enc_dec.11} parent=1 // loop_footer_branch
      %17 = sbr.rel target = $region3
    $region8: #{audio_transformer_enc_dec.11} parent=1 // loop_exit
      _
    %3765 = vsyncpa [#allocation3], 1
    %s3766 = scalar_lea.sflag [#allocation3], 1
    %3767 = vsyncpa %s3766, 1
    %3768 = vsyncpa [#allocation5], 1

</llo_original>
